<compile_context>
chip_gen: v7x
topology: tpu7x:2x2x1
jax: 0.10.0
libtpu: 0.0.40
codegen_flags: <defaults>
</compile_context>

<pallas_src>
import functools

import jax
import jax.numpy as jnp
from jax import lax
from jax.experimental import pallas as pl
from jax.experimental.pallas import tpu as pltpu


def _upblock_kernel(x_ref, w1_ref, s1_ref, b1_ref, w2_ref, s2_ref, b2_ref,
                    w3t_ref, o_ref, pad_ref, patch_ref, *, H, W):
    """Fused UpBlock body for one image.

    x_ref:     (1, H, W, Cin)        VMEM, NHWC input
    w1_ref:    (9*Cin, Cin)          VMEM, im2col weights (row = tap*Cin + c)
    s1_ref:    (1, Cin)              VMEM, folded-BN scale (conv1)
    b1_ref:    (1, Cin)              VMEM, folded-BN shift (conv1)
    w2_ref:    (9*Cin, Cin)          VMEM
    s2_ref:    (1, Cin)              VMEM
    b2_ref:    (1, Cin)              VMEM
    w3t_ref:   (Cout4, 9*Cin)        VMEM, final conv weights, pre-transposed
    o_ref:     (1, Cout4, H*W)       VMEM, lane-dense output (trailing 256)
    pad_ref:   (H+2, W+2, Cin)       VMEM scratch, zero-padded activation
    patch_ref: (H*W, 9*Cin)          VMEM scratch, im2col patch buffer
    """
    Cin = x_ref.shape[-1]

    def build_patches():
        # im2col staging: one shifted window per tap, written once into the
        # patch buffer, consumed by a single K = 9*Cin matmul.
        for dh in range(3):
            for dw in range(3):
                tap = dh * 3 + dw
                win = pad_ref[dh:dh + H, dw:dw + W, :].reshape(H * W, Cin)
                patch_ref[:, tap * Cin:(tap + 1) * Cin] = win

    # In-kernel zero padding: zero the whole strip once; borders stay zero,
    # the interior is overwritten before every conv.
    pad_ref[...] = jnp.zeros(pad_ref.shape, pad_ref.dtype)
    pad_ref[1:H + 1, 1:W + 1, :] = x_ref[0]

    # ---- conv1 + folded BN + ReLU (single K = 9*Cin matmul on the MXU) ----
    build_patches()
    y = jnp.dot(patch_ref[...], w1_ref[...], preferred_element_type=jnp.float32)
    y = jnp.maximum(y * s1_ref[...] + b1_ref[...], 0.0)
    pad_ref[1:H + 1, 1:W + 1, :] = y.reshape(H, W, Cin)   # stays in VMEM

    # ---- conv2 + folded BN + ReLU ----------------------------------------
    build_patches()
    y = jnp.dot(patch_ref[...], w2_ref[...], preferred_element_type=jnp.float32)
    y = jnp.maximum(y * s2_ref[...] + b2_ref[...], 0.0)
    pad_ref[1:H + 1, 1:W + 1, :] = y.reshape(H, W, Cin)

    # ---- conv3 (no BN / no ReLU), computed transposed ---------------------
    # (Cout4, H*W) = w3t @ patches^T  -> the HBM store is lane-dense (H*W on
    # the 128-lane axis) instead of a Cout4=16-wide masked store.
    build_patches()
    y3t = lax.dot_general(
        w3t_ref[...], patch_ref[...],
        dimension_numbers=(((1,), (1,)), ((), ())),
        preferred_element_type=jnp.float32)
    o_ref[0] = y3t.astype(o_ref.dtype)


def up_block_forward(x_nchw, params):
    """UpBlock forward. x_nchw: (N, in_ch, H, W) -> (N, out_ch, 2H, 2W)."""
    N, Cin, H, W = x_nchw.shape
    C4 = params["w3"].shape[-1]
    C = C4 // 4

    # NCHW -> NHWC (tiny layout op; a real pipeline would stay NHWC throughout)
    x = jnp.transpose(x_nchw, (0, 2, 3, 1)).astype(jnp.float32)

    # im2col weight layout: (9, Cin, Cout) -> (9*Cin, Cout), row = tap*Cin + c
    w1 = params["w1"].reshape(9 * Cin, Cin)
    w2 = params["w2"].reshape(9 * Cin, Cin)
    w3t = params["w3"].reshape(9 * Cin, C4).T          # (Cout4, 9*Cin)
    s1 = params["s1"].reshape(1, Cin)
    b1 = params["b1"].reshape(1, Cin)
    s2 = params["s2"].reshape(1, Cin)
    b2 = params["b2"].reshape(1, Cin)

    kernel = functools.partial(_upblock_kernel, H=H, W=W)
    y = pl.pallas_call(
        kernel,
        out_shape=jax.ShapeDtypeStruct((N, C4, H * W), jnp.float32),
        grid=(N,),
        in_specs=[
            pl.BlockSpec((1, H, W, Cin), lambda n: (n, 0, 0, 0)),
            pl.BlockSpec((9 * Cin, Cin), lambda n: (0, 0)),
            pl.BlockSpec((1, Cin), lambda n: (0, 0)),
            pl.BlockSpec((1, Cin), lambda n: (0, 0)),
            pl.BlockSpec((9 * Cin, Cin), lambda n: (0, 0)),
            pl.BlockSpec((1, Cin), lambda n: (0, 0)),
            pl.BlockSpec((1, Cin), lambda n: (0, 0)),
            pl.BlockSpec((C4, 9 * Cin), lambda n: (0, 0)),
        ],
        out_specs=pl.BlockSpec((1, C4, H * W), lambda n: (n, 0, 0)),
        scratch_shapes=[
            pltpu.VMEM((H + 2, W + 2, Cin), jnp.float32),   # padded activation
            pltpu.VMEM((H * W, 9 * Cin), jnp.float32),      # im2col patches
        ],
        compiler_params=pltpu.CompilerParams(
            dimension_semantics=("parallel",)),
    )(x, w1, s1, b1, w2, s2, b2, w3t)

    # PixelShuffle(2): y[n, c*4 + i*2 + j, h*W + w] -> out[n, c, 2h+i, 2w+j].
    # The kernel already emitted a lane-dense (N, Cout4, H*W) slab, so this is
    # just a tiny reshape/transpose of the output.
    y = y.reshape(N, C, 2, 2, H, W)
    y = jnp.transpose(y, (0, 1, 4, 2, 5, 3)).reshape(N, C, 2 * H, 2 * W)
    return y


def _fold_bn(gamma, beta, running_mean, running_var, eps=1e-5):
    scale = gamma / jnp.sqrt(running_var + eps)
    shift = beta - running_mean * scale
    return scale, shift


def _make_weight(key, cin, cout, scale=0.1):
    # stored tap-major: (9, Cin, Cout), tap index = dh*3 + dw
    return scale * jax.random.normal(key, (9, cin, cout), jnp.float32)


def _reference_forward(x_nchw, params):
    """Pure-JAX reference using lax.conv (NCHW), mirroring PyTorch exactly."""
    def conv(x, w_taps):
        cin, cout = w_taps.shape[1], w_taps.shape[2]
        # (9, Cin, Cout) -> (Cout, Cin, 3, 3)
        w = jnp.transpose(w_taps.reshape(3, 3, cin, cout), (3, 2, 0, 1))
        return lax.conv_general_dilated(
            x, w, window_strides=(1, 1), padding="SAME",
            dimension_numbers=("NCHW", "OIHW", "NCHW"))

    def bn_relu(x, s, b):
        return jnp.maximum(x * s[None, :, None, None] + b[None, :, None, None], 0.0)

    x = bn_relu(conv(x_nchw, params["w1"]), params["s1"], params["b1"])
    x = bn_relu(conv(x, params["w2"]), params["s2"], params["b2"])
    x = conv(x, params["w3"])
    # pixel shuffle r=2 in NCHW
    N, Crr, H, W = x.shape
    C = Crr // 4
    x = x.reshape(N, C, 2, 2, H, W)
    x = jnp.transpose(x, (0, 1, 4, 2, 5, 3)).reshape(N, C, 2 * H, 2 * W)
    return x


if __name__ == "__main__":
    in_ch, out_ch = 8, 4
    N, H, W = 2, 16, 16

    key = jax.random.PRNGKey(0)
    k = jax.random.split(key, 8)

    params = {
        "w1": _make_weight(k[0], in_ch, in_ch),
        "w2": _make_weight(k[1], in_ch, in_ch),
        "w3": _make_weight(k[2], in_ch, out_ch * 4),
    }
    # BatchNorm (inference): running_mean=0, running_var=1, deterministic affine
    g1 = 1.0 + 0.05 * jax.random.normal(k[3], (in_ch,), jnp.float32)
    b1 = 0.05 * jax.random.normal(k[4], (in_ch,), jnp.float32)
    g2 = 1.0 + 0.05 * jax.random.normal(k[5], (in_ch,), jnp.float32)
    b2 = 0.05 * jax.random.normal(k[6], (in_ch,), jnp.float32)
    zeros_c = jnp.zeros((in_ch,), jnp.float32)
    ones_c = jnp.ones((in_ch,), jnp.float32)
    params["s1"], params["b1"] = _fold_bn(g1, b1, zeros_c, ones_c)
    params["s2"], params["b2"] = _fold_bn(g2, b2, zeros_c, ones_c)

    x = jax.random.normal(k[7], (N, in_ch, H, W), jnp.float32)

    out = jax.jit(up_block_forward)(x, params)
    out = jax.block_until_ready(out)

    assert out.shape == (N, out_ch, 2 * H, 2 * W), out.shape

    ref = _reference_forward(x, params)
    assert jnp.allclose(out, ref, atol=2e-4, rtol=2e-4), \
        float(jnp.max(jnp.abs(out - ref)))

    print("KERNEL_OK")
</pallas_src>

<mosaic_0001>
module attributes {stable_mosaic.version = 11 : i64} {
  func.func @_upblock_kernel(%arg0: i32, %arg1: memref<1x16x16x8xf32, #tpu.memory_space<vmem>>, %arg2: memref<72x8xf32, #tpu.memory_space<vmem>>, %arg3: memref<1x8xf32, #tpu.memory_space<vmem>>, %arg4: memref<1x8xf32, #tpu.memory_space<vmem>>, %arg5: memref<72x8xf32, #tpu.memory_space<vmem>>, %arg6: memref<1x8xf32, #tpu.memory_space<vmem>>, %arg7: memref<1x8xf32, #tpu.memory_space<vmem>>, %arg8: memref<16x72xf32, #tpu.memory_space<vmem>>, %arg9: memref<1x16x256xf32, #tpu.memory_space<vmem>>, %arg10: memref<18x18x8xf32, #tpu.memory_space<vmem>>, %arg11: memref<256x72xf32, #tpu.memory_space<vmem>>) attributes {dimension_semantics = [#tpu.dimension_semantics<parallel>], iteration_bounds = array<i64: 2>, scalar_prefetch = 0 : i64, scratch_operands = 2 : i64, tpu.core_type = #tpu.core_type<tc>, window_params = [{transform_indices = @transform_0, window_bounds = array<i64: 1, 16, 16, 8>}, {pipeline_mode = #tpu.pipeline_mode<synchronous>, transform_indices = @transform_1, window_bounds = array<i64: 72, 8>}, {pipeline_mode = #tpu.pipeline_mode<synchronous>, transform_indices = @transform_2, window_bounds = array<i64: 1, 8>}, {pipeline_mode = #tpu.pipeline_mode<synchronous>, transform_indices = @transform_3, window_bounds = array<i64: 1, 8>}, {pipeline_mode = #tpu.pipeline_mode<synchronous>, transform_indices = @transform_4, window_bounds = array<i64: 72, 8>}, {pipeline_mode = #tpu.pipeline_mode<synchronous>, transform_indices = @transform_5, window_bounds = array<i64: 1, 8>}, {pipeline_mode = #tpu.pipeline_mode<synchronous>, transform_indices = @transform_6, window_bounds = array<i64: 1, 8>}, {pipeline_mode = #tpu.pipeline_mode<synchronous>, transform_indices = @transform_7, window_bounds = array<i64: 16, 72>}, {transform_indices = @transform_8, window_bounds = array<i64: 1, 16, 256>}]} {
    %cst = arith.constant 0.000000e+00 : f32
    %0 = vector.broadcast %cst : f32 to vector<18x18x8xf32>
    %c0 = arith.constant 0 : index
    %c0_0 = arith.constant 0 : index
    %c0_1 = arith.constant 0 : index
    %1 = vector.load %arg10[%c0, %c0_0, %c0_1] : memref<18x18x8xf32, #tpu.memory_space<vmem>>, vector<18x18x8xf32>
    tpu.vector_store %arg10[%c0, %c0_0, %c0_1], %0 {strides = array<i32>} : memref<18x18x8xf32, #tpu.memory_space<vmem>>, vector<18x18x8xf32>,
    %c0_2 = arith.constant 0 : index
    %c0_3 = arith.constant 0 : index
    %c0_4 = arith.constant 0 : index
    %c0_5 = arith.constant 0 : index
    %2 = vector.load %arg1[%c0_2, %c0_3, %c0_4, %c0_5] : memref<1x16x16x8xf32, #tpu.memory_space<vmem>>, vector<1x16x16x8xf32>
    %3 = vector.shape_cast %2 : vector<1x16x16x8xf32> to vector<16x16x8xf32>
    %c1 = arith.constant 1 : index
    %c1_6 = arith.constant 1 : index
    %c0_7 = arith.constant 0 : index
    %4 = vector.load %arg10[%c1, %c1_6, %c0_7] : memref<18x18x8xf32, #tpu.memory_space<vmem>>, vector<16x16x8xf32>
    tpu.vector_store %arg10[%c1, %c1_6, %c0_7], %3 {strides = array<i32>} : memref<18x18x8xf32, #tpu.memory_space<vmem>>, vector<16x16x8xf32>,
    %c0_8 = arith.constant 0 : index
    %c0_9 = arith.constant 0 : index
    %c0_10 = arith.constant 0 : index
    %5 = vector.load %arg10[%c0_8, %c0_9, %c0_10] : memref<18x18x8xf32, #tpu.memory_space<vmem>>, vector<16x16x8xf32>
    %6 = vector.shape_cast %5 : vector<16x16x8xf32> to vector<256x8xf32>
    %c0_11 = arith.constant 0 : index
    %c0_12 = arith.constant 0 : index
    %7 = vector.load %arg11[%c0_11, %c0_12] : memref<256x72xf32, #tpu.memory_space<vmem>>, vector<256x8xf32>
    tpu.vector_store %arg11[%c0_11, %c0_12], %6 {strides = array<i32>} : memref<256x72xf32, #tpu.memory_space<vmem>>, vector<256x8xf32>,
    %c0_13 = arith.constant 0 : index
    %c1_14 = arith.constant 1 : index
    %c0_15 = arith.constant 0 : index
    %8 = vector.load %arg10[%c0_13, %c1_14, %c0_15] : memref<18x18x8xf32, #tpu.memory_space<vmem>>, vector<16x16x8xf32>
    %9 = vector.shape_cast %8 : vector<16x16x8xf32> to vector<256x8xf32>
    %c0_16 = arith.constant 0 : index
    %c8 = arith.constant 8 : index
    %10 = vector.load %arg11[%c0_16, %c8] : memref<256x72xf32, #tpu.memory_space<vmem>>, vector<256x8xf32>
    tpu.vector_store %arg11[%c0_16, %c8], %9 {strides = array<i32>} : memref<256x72xf32, #tpu.memory_space<vmem>>, vector<256x8xf32>,
    %c0_17 = arith.constant 0 : index
    %c2 = arith.constant 2 : index
    %c0_18 = arith.constant 0 : index
    %11 = vector.load %arg10[%c0_17, %c2, %c0_18] : memref<18x18x8xf32, #tpu.memory_space<vmem>>, vector<16x16x8xf32>
    %12 = vector.shape_cast %11 : vector<16x16x8xf32> to vector<256x8xf32>
    %c0_19 = arith.constant 0 : index
    %c16 = arith.constant 16 : index
    %13 = vector.load %arg11[%c0_19, %c16] : memref<256x72xf32, #tpu.memory_space<vmem>>, vector<256x8xf32>
    tpu.vector_store %arg11[%c0_19, %c16], %12 {strides = array<i32>} : memref<256x72xf32, #tpu.memory_space<vmem>>, vector<256x8xf32>,
    %c1_20 = arith.constant 1 : index
    %c0_21 = arith.constant 0 : index
    %c0_22 = arith.constant 0 : index
    %14 = vector.load %arg10[%c1_20, %c0_21, %c0_22] : memref<18x18x8xf32, #tpu.memory_space<vmem>>, vector<16x16x8xf32>
    %15 = vector.shape_cast %14 : vector<16x16x8xf32> to vector<256x8xf32>
    %c0_23 = arith.constant 0 : index
    %c24 = arith.constant 24 : index
    %16 = vector.load %arg11[%c0_23, %c24] : memref<256x72xf32, #tpu.memory_space<vmem>>, vector<256x8xf32>
    tpu.vector_store %arg11[%c0_23, %c24], %15 {strides = array<i32>} : memref<256x72xf32, #tpu.memory_space<vmem>>, vector<256x8xf32>,
    %c1_24 = arith.constant 1 : index
    %c1_25 = arith.constant 1 : index
    %c0_26 = arith.constant 0 : index
    %17 = vector.load %arg10[%c1_24, %c1_25, %c0_26] : memref<18x18x8xf32, #tpu.memory_space<vmem>>, vector<16x16x8xf32>
    %18 = vector.shape_cast %17 : vector<16x16x8xf32> to vector<256x8xf32>
    %c0_27 = arith.constant 0 : index
    %c32 = arith.constant 32 : index
    %19 = vector.load %arg11[%c0_27, %c32] : memref<256x72xf32, #tpu.memory_space<vmem>>, vector<256x8xf32>
    tpu.vector_store %arg11[%c0_27, %c32], %18 {strides = array<i32>} : memref<256x72xf32, #tpu.memory_space<vmem>>, vector<256x8xf32>,
    %c1_28 = arith.constant 1 : index
    %c2_29 = arith.constant 2 : index
    %c0_30 = arith.constant 0 : index
    %20 = vector.load %arg10[%c1_28, %c2_29, %c0_30] : memref<18x18x8xf32, #tpu.memory_space<vmem>>, vector<16x16x8xf32>
    %21 = vector.shape_cast %20 : vector<16x16x8xf32> to vector<256x8xf32>
    %c0_31 = arith.constant 0 : index
    %c40 = arith.constant 40 : index
    %22 = vector.load %arg11[%c0_31, %c40] : memref<256x72xf32, #tpu.memory_space<vmem>>, vector<256x8xf32>
    tpu.vector_store %arg11[%c0_31, %c40], %21 {strides = array<i32>} : memref<256x72xf32, #tpu.memory_space<vmem>>, vector<256x8xf32>,
    %c2_32 = arith.constant 2 : index
    %c0_33 = arith.constant 0 : index
    %c0_34 = arith.constant 0 : index
    %23 = vector.load %arg10[%c2_32, %c0_33, %c0_34] : memref<18x18x8xf32, #tpu.memory_space<vmem>>, vector<16x16x8xf32>
    %24 = vector.shape_cast %23 : vector<16x16x8xf32> to vector<256x8xf32>
    %c0_35 = arith.constant 0 : index
    %c48 = arith.constant 48 : index
    %25 = vector.load %arg11[%c0_35, %c48] : memref<256x72xf32, #tpu.memory_space<vmem>>, vector<256x8xf32>
    tpu.vector_store %arg11[%c0_35, %c48], %24 {strides = array<i32>} : memref<256x72xf32, #tpu.memory_space<vmem>>, vector<256x8xf32>,
    %c2_36 = arith.constant 2 : index
    %c1_37 = arith.constant 1 : index
    %c0_38 = arith.constant 0 : index
    %26 = vector.load %arg10[%c2_36, %c1_37, %c0_38] : memref<18x18x8xf32, #tpu.memory_space<vmem>>, vector<16x16x8xf32>
    %27 = vector.shape_cast %26 : vector<16x16x8xf32> to vector<256x8xf32>
    %c0_39 = arith.constant 0 : index
    %c56 = arith.constant 56 : index
    %28 = vector.load %arg11[%c0_39, %c56] : memref<256x72xf32, #tpu.memory_space<vmem>>, vector<256x8xf32>
    tpu.vector_store %arg11[%c0_39, %c56], %27 {strides = array<i32>} : memref<256x72xf32, #tpu.memory_space<vmem>>, vector<256x8xf32>,
    %c2_40 = arith.constant 2 : index
    %c2_41 = arith.constant 2 : index
    %c0_42 = arith.constant 0 : index
    %29 = vector.load %arg10[%c2_40, %c2_41, %c0_42] : memref<18x18x8xf32, #tpu.memory_space<vmem>>, vector<16x16x8xf32>
    %30 = vector.shape_cast %29 : vector<16x16x8xf32> to vector<256x8xf32>
    %c0_43 = arith.constant 0 : index
    %c64 = arith.constant 64 : index
    %31 = vector.load %arg11[%c0_43, %c64] : memref<256x72xf32, #tpu.memory_space<vmem>>, vector<256x8xf32>
    tpu.vector_store %arg11[%c0_43, %c64], %30 {strides = array<i32>} : memref<256x72xf32, #tpu.memory_space<vmem>>, vector<256x8xf32>,
    %c0_44 = arith.constant 0 : index
    %c0_45 = arith.constant 0 : index
    %32 = vector.load %arg11[%c0_44, %c0_45] : memref<256x72xf32, #tpu.memory_space<vmem>>, vector<256x72xf32>
    %c0_46 = arith.constant 0 : index
    %c0_47 = arith.constant 0 : index
    %33 = vector.load %arg2[%c0_46, %c0_47] : memref<72x8xf32, #tpu.memory_space<vmem>>, vector<72x8xf32>
    %cst_48 = arith.constant dense<0.000000e+00> : vector<256x8xf32>
    %34 = tpu.matmul %32, %33, %cst_48 {dimension_numbers = #tpu.dot_dimension_numbers<[1], [0], [0], [1], [0, 0, 1, 1], [], []>} : vector<256x72xf32>, vector<72x8xf32>, vector<256x8xf32> -> vector<256x8xf32>
    %c0_49 = arith.constant 0 : index
    %c0_50 = arith.constant 0 : index
    %35 = vector.load %arg3[%c0_49, %c0_50] : memref<1x8xf32, #tpu.memory_space<vmem>>, vector<1x8xf32>
    %36 = vector.broadcast %35 : vector<1x8xf32> to vector<256x8xf32>
    %37 = arith.mulf %34, %36 : vector<256x8xf32>
    %c0_51 = arith.constant 0 : index
    %c0_52 = arith.constant 0 : index
    %38 = vector.load %arg4[%c0_51, %c0_52] : memref<1x8xf32, #tpu.memory_space<vmem>>, vector<1x8xf32>
    %39 = vector.broadcast %38 : vector<1x8xf32> to vector<256x8xf32>
    %40 = arith.addf %37, %39 : vector<256x8xf32>
    %cst_53 = arith.constant 0.000000e+00 : f32
    %41 = vector.broadcast %cst_53 : f32 to vector<256x8xf32>
    %42 = arith.maximumf %40, %41 : vector<256x8xf32>
    %43 = vector.shape_cast %42 : vector<256x8xf32> to vector<16x16x8xf32>
    %c1_54 = arith.constant 1 : index
    %c1_55 = arith.constant 1 : index
    %c0_56 = arith.constant 0 : index
    %44 = vector.load %arg10[%c1_54, %c1_55, %c0_56] : memref<18x18x8xf32, #tpu.memory_space<vmem>>, vector<16x16x8xf32>
    tpu.vector_store %arg10[%c1_54, %c1_55, %c0_56], %43 {strides = array<i32>} : memref<18x18x8xf32, #tpu.memory_space<vmem>>, vector<16x16x8xf32>,
    %c0_57 = arith.constant 0 : index
    %c0_58 = arith.constant 0 : index
    %c0_59 = arith.constant 0 : index
    %45 = vector.load %arg10[%c0_57, %c0_58, %c0_59] : memref<18x18x8xf32, #tpu.memory_space<vmem>>, vector<16x16x8xf32>
    %46 = vector.shape_cast %45 : vector<16x16x8xf32> to vector<256x8xf32>
    %c0_60 = arith.constant 0 : index
    %c0_61 = arith.constant 0 : index
    %47 = vector.load %arg11[%c0_60, %c0_61] : memref<256x72xf32, #tpu.memory_space<vmem>>, vector<256x8xf32>
    tpu.vector_store %arg11[%c0_60, %c0_61], %46 {strides = array<i32>} : memref<256x72xf32, #tpu.memory_space<vmem>>, vector<256x8xf32>,
    %c0_62 = arith.constant 0 : index
    %c1_63 = arith.constant 1 : index
    %c0_64 = arith.constant 0 : index
    %48 = vector.load %arg10[%c0_62, %c1_63, %c0_64] : memref<18x18x8xf32, #tpu.memory_space<vmem>>, vector<16x16x8xf32>
    %49 = vector.shape_cast %48 : vector<16x16x8xf32> to vector<256x8xf32>
    %c0_65 = arith.constant 0 : index
    %c8_66 = arith.constant 8 : index
    %50 = vector.load %arg11[%c0_65, %c8_66] : memref<256x72xf32, #tpu.memory_space<vmem>>, vector<256x8xf32>
    tpu.vector_store %arg11[%c0_65, %c8_66], %49 {strides = array<i32>} : memref<256x72xf32, #tpu.memory_space<vmem>>, vector<256x8xf32>,
    %c0_67 = arith.constant 0 : index
    %c2_68 = arith.constant 2 : index
    %c0_69 = arith.constant 0 : index
    %51 = vector.load %arg10[%c0_67, %c2_68, %c0_69] : memref<18x18x8xf32, #tpu.memory_space<vmem>>, vector<16x16x8xf32>
    %52 = vector.shape_cast %51 : vector<16x16x8xf32> to vector<256x8xf32>
    %c0_70 = arith.constant 0 : index
    %c16_71 = arith.constant 16 : index
    %53 = vector.load %arg11[%c0_70, %c16_71] : memref<256x72xf32, #tpu.memory_space<vmem>>, vector<256x8xf32>
    tpu.vector_store %arg11[%c0_70, %c16_71], %52 {strides = array<i32>} : memref<256x72xf32, #tpu.memory_space<vmem>>, vector<256x8xf32>,
    %c1_72 = arith.constant 1 : index
    %c0_73 = arith.constant 0 : index
    %c0_74 = arith.constant 0 : index
    %54 = vector.load %arg10[%c1_72, %c0_73, %c0_74] : memref<18x18x8xf32, #tpu.memory_space<vmem>>, vector<16x16x8xf32>
    %55 = vector.shape_cast %54 : vector<16x16x8xf32> to vector<256x8xf32>
    %c0_75 = arith.constant 0 : index
    %c24_76 = arith.constant 24 : index
    %56 = vector.load %arg11[%c0_75, %c24_76] : memref<256x72xf32, #tpu.memory_space<vmem>>, vector<256x8xf32>
    tpu.vector_store %arg11[%c0_75, %c24_76], %55 {strides = array<i32>} : memref<256x72xf32, #tpu.memory_space<vmem>>, vector<256x8xf32>,
    %c1_77 = arith.constant 1 : index
    %c1_78 = arith.constant 1 : index
    %c0_79 = arith.constant 0 : index
    %57 = vector.load %arg10[%c1_77, %c1_78, %c0_79] : memref<18x18x8xf32, #tpu.memory_space<vmem>>, vector<16x16x8xf32>
    %58 = vector.shape_cast %57 : vector<16x16x8xf32> to vector<256x8xf32>
    %c0_80 = arith.constant 0 : index
    %c32_81 = arith.constant 32 : index
    %59 = vector.load %arg11[%c0_80, %c32_81] : memref<256x72xf32, #tpu.memory_space<vmem>>, vector<256x8xf32>
    tpu.vector_store %arg11[%c0_80, %c32_81], %58 {strides = array<i32>} : memref<256x72xf32, #tpu.memory_space<vmem>>, vector<256x8xf32>,
    %c1_82 = arith.constant 1 : index
    %c2_83 = arith.constant 2 : index
    %c0_84 = arith.constant 0 : index
    %60 = vector.load %arg10[%c1_82, %c2_83, %c0_84] : memref<18x18x8xf32, #tpu.memory_space<vmem>>, vector<16x16x8xf32>
    %61 = vector.shape_cast %60 : vector<16x16x8xf32> to vector<256x8xf32>
    %c0_85 = arith.constant 0 : index
    %c40_86 = arith.constant 40 : index
    %62 = vector.load %arg11[%c0_85, %c40_86] : memref<256x72xf32, #tpu.memory_space<vmem>>, vector<256x8xf32>
    tpu.vector_store %arg11[%c0_85, %c40_86], %61 {strides = array<i32>} : memref<256x72xf32, #tpu.memory_space<vmem>>, vector<256x8xf32>,
    %c2_87 = arith.constant 2 : index
    %c0_88 = arith.constant 0 : index
    %c0_89 = arith.constant 0 : index
    %63 = vector.load %arg10[%c2_87, %c0_88, %c0_89] : memref<18x18x8xf32, #tpu.memory_space<vmem>>, vector<16x16x8xf32>
    %64 = vector.shape_cast %63 : vector<16x16x8xf32> to vector<256x8xf32>
    %c0_90 = arith.constant 0 : index
    %c48_91 = arith.constant 48 : index
    %65 = vector.load %arg11[%c0_90, %c48_91] : memref<256x72xf32, #tpu.memory_space<vmem>>, vector<256x8xf32>
    tpu.vector_store %arg11[%c0_90, %c48_91], %64 {strides = array<i32>} : memref<256x72xf32, #tpu.memory_space<vmem>>, vector<256x8xf32>,
    %c2_92 = arith.constant 2 : index
    %c1_93 = arith.constant 1 : index
    %c0_94 = arith.constant 0 : index
    %66 = vector.load %arg10[%c2_92, %c1_93, %c0_94] : memref<18x18x8xf32, #tpu.memory_space<vmem>>, vector<16x16x8xf32>
    %67 = vector.shape_cast %66 : vector<16x16x8xf32> to vector<256x8xf32>
    %c0_95 = arith.constant 0 : index
    %c56_96 = arith.constant 56 : index
    %68 = vector.load %arg11[%c0_95, %c56_96] : memref<256x72xf32, #tpu.memory_space<vmem>>, vector<256x8xf32>
    tpu.vector_store %arg11[%c0_95, %c56_96], %67 {strides = array<i32>} : memref<256x72xf32, #tpu.memory_space<vmem>>, vector<256x8xf32>,
    %c2_97 = arith.constant 2 : index
    %c2_98 = arith.constant 2 : index
    %c0_99 = arith.constant 0 : index
    %69 = vector.load %arg10[%c2_97, %c2_98, %c0_99] : memref<18x18x8xf32, #tpu.memory_space<vmem>>, vector<16x16x8xf32>
    %70 = vector.shape_cast %69 : vector<16x16x8xf32> to vector<256x8xf32>
    %c0_100 = arith.constant 0 : index
    %c64_101 = arith.constant 64 : index
    %71 = vector.load %arg11[%c0_100, %c64_101] : memref<256x72xf32, #tpu.memory_space<vmem>>, vector<256x8xf32>
    tpu.vector_store %arg11[%c0_100, %c64_101], %70 {strides = array<i32>} : memref<256x72xf32, #tpu.memory_space<vmem>>, vector<256x8xf32>,
    %c0_102 = arith.constant 0 : index
    %c0_103 = arith.constant 0 : index
    %72 = vector.load %arg11[%c0_102, %c0_103] : memref<256x72xf32, #tpu.memory_space<vmem>>, vector<256x72xf32>
    %c0_104 = arith.constant 0 : index
    %c0_105 = arith.constant 0 : index
    %73 = vector.load %arg5[%c0_104, %c0_105] : memref<72x8xf32, #tpu.memory_space<vmem>>, vector<72x8xf32>
    %cst_106 = arith.constant dense<0.000000e+00> : vector<256x8xf32>
    %74 = tpu.matmul %72, %73, %cst_106 {dimension_numbers = #tpu.dot_dimension_numbers<[1], [0], [0], [1], [0, 0, 1, 1], [], []>} : vector<256x72xf32>, vector<72x8xf32>, vector<256x8xf32> -> vector<256x8xf32>
    %c0_107 = arith.constant 0 : index
    %c0_108 = arith.constant 0 : index
    %75 = vector.load %arg6[%c0_107, %c0_108] : memref<1x8xf32, #tpu.memory_space<vmem>>, vector<1x8xf32>
    %76 = vector.broadcast %75 : vector<1x8xf32> to vector<256x8xf32>
    %77 = arith.mulf %74, %76 : vector<256x8xf32>
    %c0_109 = arith.constant 0 : index
    %c0_110 = arith.constant 0 : index
    %78 = vector.load %arg7[%c0_109, %c0_110] : memref<1x8xf32, #tpu.memory_space<vmem>>, vector<1x8xf32>
    %79 = vector.broadcast %78 : vector<1x8xf32> to vector<256x8xf32>
    %80 = arith.addf %77, %79 : vector<256x8xf32>
    %cst_111 = arith.constant 0.000000e+00 : f32
    %81 = vector.broadcast %cst_111 : f32 to vector<256x8xf32>
    %82 = arith.maximumf %80, %81 : vector<256x8xf32>
    %83 = vector.shape_cast %82 : vector<256x8xf32> to vector<16x16x8xf32>
    %c1_112 = arith.constant 1 : index
    %c1_113 = arith.constant 1 : index
    %c0_114 = arith.constant 0 : index
    %84 = vector.load %arg10[%c1_112, %c1_113, %c0_114] : memref<18x18x8xf32, #tpu.memory_space<vmem>>, vector<16x16x8xf32>
    tpu.vector_store %arg10[%c1_112, %c1_113, %c0_114], %83 {strides = array<i32>} : memref<18x18x8xf32, #tpu.memory_space<vmem>>, vector<16x16x8xf32>,
    %c0_115 = arith.constant 0 : index
    %c0_116 = arith.constant 0 : index
    %c0_117 = arith.constant 0 : index
    %85 = vector.load %arg10[%c0_115, %c0_116, %c0_117] : memref<18x18x8xf32, #tpu.memory_space<vmem>>, vector<16x16x8xf32>
    %86 = vector.shape_cast %85 : vector<16x16x8xf32> to vector<256x8xf32>
    %c0_118 = arith.constant 0 : index
    %c0_119 = arith.constant 0 : index
    %87 = vector.load %arg11[%c0_118, %c0_119] : memref<256x72xf32, #tpu.memory_space<vmem>>, vector<256x8xf32>
    tpu.vector_store %arg11[%c0_118, %c0_119], %86 {strides = array<i32>} : memref<256x72xf32, #tpu.memory_space<vmem>>, vector<256x8xf32>,
    %c0_120 = arith.constant 0 : index
    %c1_121 = arith.constant 1 : index
    %c0_122 = arith.constant 0 : index
    %88 = vector.load %arg10[%c0_120, %c1_121, %c0_122] : memref<18x18x8xf32, #tpu.memory_space<vmem>>, vector<16x16x8xf32>
    %89 = vector.shape_cast %88 : vector<16x16x8xf32> to vector<256x8xf32>
    %c0_123 = arith.constant 0 : index
    %c8_124 = arith.constant 8 : index
    %90 = vector.load %arg11[%c0_123, %c8_124] : memref<256x72xf32, #tpu.memory_space<vmem>>, vector<256x8xf32>
    tpu.vector_store %arg11[%c0_123, %c8_124], %89 {strides = array<i32>} : memref<256x72xf32, #tpu.memory_space<vmem>>, vector<256x8xf32>,
    %c0_125 = arith.constant 0 : index
    %c2_126 = arith.constant 2 : index
    %c0_127 = arith.constant 0 : index
    %91 = vector.load %arg10[%c0_125, %c2_126, %c0_127] : memref<18x18x8xf32, #tpu.memory_space<vmem>>, vector<16x16x8xf32>
    %92 = vector.shape_cast %91 : vector<16x16x8xf32> to vector<256x8xf32>
    %c0_128 = arith.constant 0 : index
    %c16_129 = arith.constant 16 : index
    %93 = vector.load %arg11[%c0_128, %c16_129] : memref<256x72xf32, #tpu.memory_space<vmem>>, vector<256x8xf32>
    tpu.vector_store %arg11[%c0_128, %c16_129], %92 {strides = array<i32>} : memref<256x72xf32, #tpu.memory_space<vmem>>, vector<256x8xf32>,
    %c1_130 = arith.constant 1 : index
    %c0_131 = arith.constant 0 : index
    %c0_132 = arith.constant 0 : index
    %94 = vector.load %arg10[%c1_130, %c0_131, %c0_132] : memref<18x18x8xf32, #tpu.memory_space<vmem>>, vector<16x16x8xf32>
    %95 = vector.shape_cast %94 : vector<16x16x8xf32> to vector<256x8xf32>
    %c0_133 = arith.constant 0 : index
    %c24_134 = arith.constant 24 : index
    %96 = vector.load %arg11[%c0_133, %c24_134] : memref<256x72xf32, #tpu.memory_space<vmem>>, vector<256x8xf32>
    tpu.vector_store %arg11[%c0_133, %c24_134], %95 {strides = array<i32>} : memref<256x72xf32, #tpu.memory_space<vmem>>, vector<256x8xf32>,
    %c1_135 = arith.constant 1 : index
    %c1_136 = arith.constant 1 : index
    %c0_137 = arith.constant 0 : index
    %97 = vector.load %arg10[%c1_135, %c1_136, %c0_137] : memref<18x18x8xf32, #tpu.memory_space<vmem>>, vector<16x16x8xf32>
    %98 = vector.shape_cast %97 : vector<16x16x8xf32> to vector<256x8xf32>
    %c0_138 = arith.constant 0 : index
    %c32_139 = arith.constant 32 : index
    %99 = vector.load %arg11[%c0_138, %c32_139] : memref<256x72xf32, #tpu.memory_space<vmem>>, vector<256x8xf32>
    tpu.vector_store %arg11[%c0_138, %c32_139], %98 {strides = array<i32>} : memref<256x72xf32, #tpu.memory_space<vmem>>, vector<256x8xf32>,
    %c1_140 = arith.constant 1 : index
    %c2_141 = arith.constant 2 : index
    %c0_142 = arith.constant 0 : index
    %100 = vector.load %arg10[%c1_140, %c2_141, %c0_142] : memref<18x18x8xf32, #tpu.memory_space<vmem>>, vector<16x16x8xf32>
    %101 = vector.shape_cast %100 : vector<16x16x8xf32> to vector<256x8xf32>
    %c0_143 = arith.constant 0 : index
    %c40_144 = arith.constant 40 : index
    %102 = vector.load %arg11[%c0_143, %c40_144] : memref<256x72xf32, #tpu.memory_space<vmem>>, vector<256x8xf32>
    tpu.vector_store %arg11[%c0_143, %c40_144], %101 {strides = array<i32>} : memref<256x72xf32, #tpu.memory_space<vmem>>, vector<256x8xf32>,
    %c2_145 = arith.constant 2 : index
    %c0_146 = arith.constant 0 : index
    %c0_147 = arith.constant 0 : index
    %103 = vector.load %arg10[%c2_145, %c0_146, %c0_147] : memref<18x18x8xf32, #tpu.memory_space<vmem>>, vector<16x16x8xf32>
    %104 = vector.shape_cast %103 : vector<16x16x8xf32> to vector<256x8xf32>
    %c0_148 = arith.constant 0 : index
    %c48_149 = arith.constant 48 : index
    %105 = vector.load %arg11[%c0_148, %c48_149] : memref<256x72xf32, #tpu.memory_space<vmem>>, vector<256x8xf32>
    tpu.vector_store %arg11[%c0_148, %c48_149], %104 {strides = array<i32>} : memref<256x72xf32, #tpu.memory_space<vmem>>, vector<256x8xf32>,
    %c2_150 = arith.constant 2 : index
    %c1_151 = arith.constant 1 : index
    %c0_152 = arith.constant 0 : index
    %106 = vector.load %arg10[%c2_150, %c1_151, %c0_152] : memref<18x18x8xf32, #tpu.memory_space<vmem>>, vector<16x16x8xf32>
    %107 = vector.shape_cast %106 : vector<16x16x8xf32> to vector<256x8xf32>
    %c0_153 = arith.constant 0 : index
    %c56_154 = arith.constant 56 : index
    %108 = vector.load %arg11[%c0_153, %c56_154] : memref<256x72xf32, #tpu.memory_space<vmem>>, vector<256x8xf32>
    tpu.vector_store %arg11[%c0_153, %c56_154], %107 {strides = array<i32>} : memref<256x72xf32, #tpu.memory_space<vmem>>, vector<256x8xf32>,
    %c2_155 = arith.constant 2 : index
    %c2_156 = arith.constant 2 : index
    %c0_157 = arith.constant 0 : index
    %109 = vector.load %arg10[%c2_155, %c2_156, %c0_157] : memref<18x18x8xf32, #tpu.memory_space<vmem>>, vector<16x16x8xf32>
    %110 = vector.shape_cast %109 : vector<16x16x8xf32> to vector<256x8xf32>
    %c0_158 = arith.constant 0 : index
    %c64_159 = arith.constant 64 : index
    %111 = vector.load %arg11[%c0_158, %c64_159] : memref<256x72xf32, #tpu.memory_space<vmem>>, vector<256x8xf32>
    tpu.vector_store %arg11[%c0_158, %c64_159], %110 {strides = array<i32>} : memref<256x72xf32, #tpu.memory_space<vmem>>, vector<256x8xf32>,
    %c0_160 = arith.constant 0 : index
    %c0_161 = arith.constant 0 : index
    %112 = vector.load %arg8[%c0_160, %c0_161] : memref<16x72xf32, #tpu.memory_space<vmem>>, vector<16x72xf32>
    %c0_162 = arith.constant 0 : index
    %c0_163 = arith.constant 0 : index
    %113 = vector.load %arg11[%c0_162, %c0_163] : memref<256x72xf32, #tpu.memory_space<vmem>>, vector<256x72xf32>
    %cst_164 = arith.constant dense<0.000000e+00> : vector<16x256xf32>
    %114 = tpu.matmul %112, %113, %cst_164 {dimension_numbers = #tpu.dot_dimension_numbers<[1], [1], [0], [0], [0, 0, 1, 0], [], []>} : vector<16x72xf32>, vector<256x72xf32>, vector<16x256xf32> -> vector<16x256xf32>
    %c0_165 = arith.constant 0 : index
    %c0_166 = arith.constant 0 : index
    %c0_167 = arith.constant 0 : index
    %115 = vector.load %arg9[%c0_165, %c0_166, %c0_167] : memref<1x16x256xf32, #tpu.memory_space<vmem>>, vector<1x16x256xf32>
    %116 = vector.shape_cast %115 : vector<1x16x256xf32> to vector<16x256xf32>
    %117 = vector.shape_cast %114 : vector<16x256xf32> to vector<1x16x256xf32>
    tpu.vector_store %arg9[%c0_165, %c0_166, %c0_167], %117 {strides = array<i32>} : memref<1x16x256xf32, #tpu.memory_space<vmem>>, vector<1x16x256xf32>,
    return
  }
  func.func @transform_0(%arg0: i32) -> (i32, i32, i32, i32) {
    %c0_i32 = arith.constant 0 : i32
    %c0_i32_0 = arith.constant 0 : i32
    %c0_i32_1 = arith.constant 0 : i32
    %c0_i32_2 = arith.constant 0 : i32
    return %arg0, %c0_i32, %c0_i32_0, %c0_i32_1 : i32, i32, i32, i32
  }
  func.func @transform_1(%arg0: i32) -> (i32, i32) {
    %c0_i32 = arith.constant 0 : i32
    %c0_i32_0 = arith.constant 0 : i32
    %c0_i32_1 = arith.constant 0 : i32
    return %c0_i32, %c0_i32_0 : i32, i32
  }
  func.func @transform_2(%arg0: i32) -> (i32, i32) {
    %c0_i32 = arith.constant 0 : i32
    %c0_i32_0 = arith.constant 0 : i32
    %c0_i32_1 = arith.constant 0 : i32
    return %c0_i32, %c0_i32_0 : i32, i32
  }
  func.func @transform_3(%arg0: i32) -> (i32, i32) {
    %c0_i32 = arith.constant 0 : i32
    %c0_i32_0 = arith.constant 0 : i32
    %c0_i32_1 = arith.constant 0 : i32
    return %c0_i32, %c0_i32_0 : i32, i32
  }
  func.func @transform_4(%arg0: i32) -> (i32, i32) {
    %c0_i32 = arith.constant 0 : i32
    %c0_i32_0 = arith.constant 0 : i32
    %c0_i32_1 = arith.constant 0 : i32
    return %c0_i32, %c0_i32_0 : i32, i32
  }
  func.func @transform_5(%arg0: i32) -> (i32, i32) {
    %c0_i32 = arith.constant 0 : i32
    %c0_i32_0 = arith.constant 0 : i32
    %c0_i32_1 = arith.constant 0 : i32
    return %c0_i32, %c0_i32_0 : i32, i32
  }
  func.func @transform_6(%arg0: i32) -> (i32, i32) {
    %c0_i32 = arith.constant 0 : i32
    %c0_i32_0 = arith.constant 0 : i32
    %c0_i32_1 = arith.constant 0 : i32
    return %c0_i32, %c0_i32_0 : i32, i32
  }
  func.func @transform_7(%arg0: i32) -> (i32, i32) {
    %c0_i32 = arith.constant 0 : i32
    %c0_i32_0 = arith.constant 0 : i32
    %c0_i32_1 = arith.constant 0 : i32
    return %c0_i32, %c0_i32_0 : i32, i32
  }
  func.func @transform_8(%arg0: i32) -> (i32, i32, i32) {
    %c0_i32 = arith.constant 0 : i32
    %c0_i32_0 = arith.constant 0 : i32
    %c0_i32_1 = arith.constant 0 : i32
    return %arg0, %c0_i32, %c0_i32_0 : i32, i32, i32
  }
}

</mosaic_0001>

<llo_original>
// kernel: up_block_forward.1
$region0: #{up_block_forward.1}
  #allocation0 [shape = 'u32[]', space=smem, size = 0x4, offset = 0x4, fixed_abs, tag = 'smem constant byte address 0x4 - core index']
  #allocation1 [shape = 'u32[144,128]{1,0:T(1,128)}', space=vmem, size = 0x12000, scoped, tag = 'internal scratch']
  #allocation2 [shape = 'f32[18,18,8]{2,1,0:T(8,128)}', space=vmem, size = 0x36000, scoped, tag = 'scratch operand']
  #allocation3 [shape = 'f32[256,72]{1,0:T(8,128)}', space=vmem, size = 0x20000, scoped, tag = 'scratch operand']
  %s0 = inlined_call_operand.vmem [shape: f32[2,16,16,8], index: 0, kind: input, shape index: {}]
  %s1 = inlined_call_operand.vmem [shape: f32[72,8], index: 1, kind: input, shape index: {}]
  %s2 = inlined_call_operand.vmem [shape: f32[1,8], index: 2, kind: input, shape index: {}]
  %s3 = inlined_call_operand.vmem [shape: f32[1,8], index: 3, kind: input, shape index: {}]
  %s4 = inlined_call_operand.vmem [shape: f32[72,8], index: 4, kind: input, shape index: {}]
  %s5 = inlined_call_operand.vmem [shape: f32[1,8], index: 5, kind: input, shape index: {}]
  %s6 = inlined_call_operand.vmem [shape: f32[1,8], index: 6, kind: input, shape index: {}]
  %s7 = inlined_call_operand.vmem [shape: f32[16,72], index: 7, kind: input, shape index: {}]
  %s8 = inlined_call_operand.vmem [shape: f32[2,16,256], index: 8, kind: output, shape index: {}]
  %s9 = sld [smem:[#allocation0]]
  $region65: #{up_block_forward.1} parent=0
    _
  %s11 = ssub.s32 1, %s9
  %s12 = scalar_select 0, %s11, %s9
  loop: start=0, step=1, limit=4
  $region2: #{up_block_forward.1} parent=0 // loop_pre_header
    _
  $region3: #{up_block_forward.1} parent=0 // loop_header
    %s14 = sphi 0, %s18
    %p15 = scmp.ge.s32.totalorder %s14, 4
    %s24 = sphi 0, %s26
    %s27 = sphi 0, %s24
    %s28 = sphi 0, %s27
    %s44 = sphi 0, %s28
    %s48 = sphi 0, %s48
    %s50 = sphi 0, %s48
    %s51 = sphi 0, %s50
    %s65 = sphi 0, %s51
    %s69 = sphi 0, %s69
    %s71 = sphi 0, %s69
    %s72 = sphi 0, %s71
    %s86 = sphi 0, %s72
    %s90 = sphi 0, %s90
    %s92 = sphi 0, %s90
    %s93 = sphi 0, %s92
    %s107 = sphi 0, %s93
    %s111 = sphi 0, %s111
    %s113 = sphi 0, %s111
    %s114 = sphi 0, %s113
    %s128 = sphi 0, %s114
    %s132 = sphi 0, %s132
    %s134 = sphi 0, %s132
    %s135 = sphi 0, %s134
    %s149 = sphi 0, %s135
    %s153 = sphi 0, %s153
    %s155 = sphi 0, %s153
    %s156 = sphi 0, %s155
    %s170 = sphi 0, %s156
    %s174 = sphi 0, %s174
    %s176 = sphi 0, %s174
    %s177 = sphi 0, %s176
    %s191 = sphi 0, %s177
    %s197 = sphi 0, %s199
    %s200 = sphi 0, %s197
    %s201 = sphi 0, %s200
    %s217 = sphi 0, %s201
  $region4: #{up_block_forward.1} parent=0 // loop_header_branch
    %17 = sbr.rel (%p15) target = $region8
  $region5: #{up_block_forward.1} parent=0 // loop_body
    %s19 = ssub.s32 %s14, 1
    %s20 = ssub.s32 %s14, 2
    %s21 = sadd.s32 %s14, 1
    %s22 = ssub.s32 %s14, %s21
    %p23 = scmp.eq.s32.totalorder %s22, 0
    %s25 = sadd.s32 %s24, 1
    %s26 = scalar_select %p23, %s24, %s25
    %p29 = pneg %p23
    %p30 = scmp.eq.s32.totalorder %s14, 1
    %p31 = por %p29, %p30
    %p32 = scmp.ne.s32.totalorder %s24, %s27
    %p33 = scmp.eq.s32.totalorder %s14, 0
    %p34 = por %p32, %p33
    %p35 = scmp.ne.s32.totalorder %s24, %s27
    %p36 = scmp.eq.s32.totalorder %s19, 1
    %p37 = por %p35, %p36
    %p38 = scmp.ne.s32.totalorder %s27, %s28
    %p39 = scmp.eq.s32.totalorder %s19, 0
    %p40 = por %p38, %p39
    %p41 = scmp.ne.s32.totalorder %s27, %s28
    %p42 = scmp.eq.s32.totalorder %s20, 1
    %p43 = por %p41, %p42
    %p45 = scmp.ne.s32.totalorder %s28, %s44
    %p46 = scmp.eq.s32.totalorder %s20, 0
    %p47 = por %p45, %p46
    %s49 = sadd.s32 %s48, 1
    %p52 = scmp.eq.s32.totalorder %s14, 1
    %p53 = scmp.ne.s32.totalorder %s48, %s50
    %p54 = scmp.eq.s32.totalorder %s14, 0
    %p55 = por %p53, %p54
    %p56 = scmp.ne.s32.totalorder %s48, %s50
    %p57 = scmp.eq.s32.totalorder %s19, 1
    %p58 = por %p56, %p57
    %p59 = scmp.ne.s32.totalorder %s50, %s51
    %p60 = scmp.eq.s32.totalorder %s19, 0
    %p61 = por %p59, %p60
    %p62 = scmp.ne.s32.totalorder %s50, %s51
    %p63 = scmp.eq.s32.totalorder %s20, 1
    %p64 = por %p62, %p63
    %p66 = scmp.ne.s32.totalorder %s51, %s65
    %p67 = scmp.eq.s32.totalorder %s20, 0
    %p68 = por %p66, %p67
    %s70 = sadd.s32 %s69, 1
    %p73 = scmp.eq.s32.totalorder %s14, 1
    %p74 = scmp.ne.s32.totalorder %s69, %s71
    %p75 = scmp.eq.s32.totalorder %s14, 0
    %p76 = por %p74, %p75
    %p77 = scmp.ne.s32.totalorder %s69, %s71
    %p78 = scmp.eq.s32.totalorder %s19, 1
    %p79 = por %p77, %p78
    %p80 = scmp.ne.s32.totalorder %s71, %s72
    %p81 = scmp.eq.s32.totalorder %s19, 0
    %p82 = por %p80, %p81
    %p83 = scmp.ne.s32.totalorder %s71, %s72
    %p84 = scmp.eq.s32.totalorder %s20, 1
    %p85 = por %p83, %p84
    %p87 = scmp.ne.s32.totalorder %s72, %s86
    %p88 = scmp.eq.s32.totalorder %s20, 0
    %p89 = por %p87, %p88
    %s91 = sadd.s32 %s90, 1
    %p94 = scmp.eq.s32.totalorder %s14, 1
    %p95 = scmp.ne.s32.totalorder %s90, %s92
    %p96 = scmp.eq.s32.totalorder %s14, 0
    %p97 = por %p95, %p96
    %p98 = scmp.ne.s32.totalorder %s90, %s92
    %p99 = scmp.eq.s32.totalorder %s19, 1
    %p100 = por %p98, %p99
    %p101 = scmp.ne.s32.totalorder %s92, %s93
    %p102 = scmp.eq.s32.totalorder %s19, 0
    %p103 = por %p101, %p102
    %p104 = scmp.ne.s32.totalorder %s92, %s93
    %p105 = scmp.eq.s32.totalorder %s20, 1
    %p106 = por %p104, %p105
    %p108 = scmp.ne.s32.totalorder %s93, %s107
    %p109 = scmp.eq.s32.totalorder %s20, 0
    %p110 = por %p108, %p109
    %s112 = sadd.s32 %s111, 1
    %p115 = scmp.eq.s32.totalorder %s14, 1
    %p116 = scmp.ne.s32.totalorder %s111, %s113
    %p117 = scmp.eq.s32.totalorder %s14, 0
    %p118 = por %p116, %p117
    %p119 = scmp.ne.s32.totalorder %s111, %s113
    %p120 = scmp.eq.s32.totalorder %s19, 1
    %p121 = por %p119, %p120
    %p122 = scmp.ne.s32.totalorder %s113, %s114
    %p123 = scmp.eq.s32.totalorder %s19, 0
    %p124 = por %p122, %p123
    %p125 = scmp.ne.s32.totalorder %s113, %s114
    %p126 = scmp.eq.s32.totalorder %s20, 1
    %p127 = por %p125, %p126
    %p129 = scmp.ne.s32.totalorder %s114, %s128
    %p130 = scmp.eq.s32.totalorder %s20, 0
    %p131 = por %p129, %p130
    %s133 = sadd.s32 %s132, 1
    %p136 = scmp.eq.s32.totalorder %s14, 1
    %p137 = scmp.ne.s32.totalorder %s132, %s134
    %p138 = scmp.eq.s32.totalorder %s14, 0
    %p139 = por %p137, %p138
    %p140 = scmp.ne.s32.totalorder %s132, %s134
    %p141 = scmp.eq.s32.totalorder %s19, 1
    %p142 = por %p140, %p141
    %p143 = scmp.ne.s32.totalorder %s134, %s135
    %p144 = scmp.eq.s32.totalorder %s19, 0
    %p145 = por %p143, %p144
    %p146 = scmp.ne.s32.totalorder %s134, %s135
    %p147 = scmp.eq.s32.totalorder %s20, 1
    %p148 = por %p146, %p147
    %p150 = scmp.ne.s32.totalorder %s135, %s149
    %p151 = scmp.eq.s32.totalorder %s20, 0
    %p152 = por %p150, %p151
    %s154 = sadd.s32 %s153, 1
    %p157 = scmp.eq.s32.totalorder %s14, 1
    %p158 = scmp.ne.s32.totalorder %s153, %s155
    %p159 = scmp.eq.s32.totalorder %s14, 0
    %p160 = por %p158, %p159
    %p161 = scmp.ne.s32.totalorder %s153, %s155
    %p162 = scmp.eq.s32.totalorder %s19, 1
    %p163 = por %p161, %p162
    %p164 = scmp.ne.s32.totalorder %s155, %s156
    %p165 = scmp.eq.s32.totalorder %s19, 0
    %p166 = por %p164, %p165
    %p167 = scmp.ne.s32.totalorder %s155, %s156
    %p168 = scmp.eq.s32.totalorder %s20, 1
    %p169 = por %p167, %p168
    %p171 = scmp.ne.s32.totalorder %s156, %s170
    %p172 = scmp.eq.s32.totalorder %s20, 0
    %p173 = por %p171, %p172
    %s175 = sadd.s32 %s174, 1
    %p178 = scmp.eq.s32.totalorder %s14, 1
    %p179 = scmp.ne.s32.totalorder %s174, %s176
    %p180 = scmp.eq.s32.totalorder %s14, 0
    %p181 = por %p179, %p180
    %p182 = scmp.ne.s32.totalorder %s174, %s176
    %p183 = scmp.eq.s32.totalorder %s19, 1
    %p184 = por %p182, %p183
    %p185 = scmp.ne.s32.totalorder %s176, %s177
    %p186 = scmp.eq.s32.totalorder %s19, 0
    %p187 = por %p185, %p186
    %p188 = scmp.ne.s32.totalorder %s176, %s177
    %p189 = scmp.eq.s32.totalorder %s20, 1
    %p190 = por %p188, %p189
    %p192 = scmp.ne.s32.totalorder %s177, %s191
    %p193 = scmp.eq.s32.totalorder %s20, 0
    %p194 = por %p192, %p193
    %s195 = ssub.s32 %s14, %s21
    %p196 = scmp.eq.s32.totalorder %s195, 0
    %s198 = sadd.s32 %s197, 1
    %s199 = scalar_select %p196, %s197, %s198
    %p202 = pneg %p196
    %p203 = scmp.eq.s32.totalorder %s14, 1
    %p204 = por %p202, %p203
    %p205 = scmp.ne.s32.totalorder %s197, %s200
    %p206 = scmp.eq.s32.totalorder %s14, 0
    %p207 = por %p205, %p206
    %p208 = scmp.ne.s32.totalorder %s197, %s200
    %p209 = scmp.eq.s32.totalorder %s19, 1
    %p210 = por %p208, %p209
    %p211 = scmp.ne.s32.totalorder %s200, %s201
    %p212 = scmp.eq.s32.totalorder %s19, 0
    %p213 = por %p211, %p212
    %p214 = scmp.ne.s32.totalorder %s200, %s201
    %p215 = scmp.eq.s32.totalorder %s20, 1
    %p216 = por %p214, %p215
    %p218 = scmp.ne.s32.totalorder %s201, %s217
    %p219 = scmp.eq.s32.totalorder %s20, 0
    %p220 = por %p218, %p219
    %p221 = scmp.le.s32.totalorder 1, %s14
    %p222 = scmp.lt.s32.totalorder %s14, 3
    %p223 = pnand %p221, %p222
    %p224 = pneg %p223
    // Predicated region
    $region9: #{up_block_forward.1} parent=5 // pred_check
      _
    $region10: #{up_block_forward.1} parent=5 // pred_check_branch
      %226 = sbr.rel (%p223) target = $region12
    $region11: #{up_block_forward.1} parent=5 // pred_region
      %s227 = ssub.s32 %s14, 1
      // Predicated region
      $region13: #{up_block_forward.1} parent=11 // pred_check
        %p228 = pneg %p61
      $region14: #{up_block_forward.1} parent=11 // pred_check_branch
        %230 = sbr.rel (%p228) target = $region16
      $region15: #{up_block_forward.1} parent=11 // pred_region
        _
      $region16: #{up_block_forward.1} parent=11 // pred_fallthru
        _
      // Predicated region
      $region17: #{up_block_forward.1} parent=11 // pred_check
        %p231 = pneg %p82
      $region18: #{up_block_forward.1} parent=11 // pred_check_branch
        %233 = sbr.rel (%p231) target = $region20
      $region19: #{up_block_forward.1} parent=11 // pred_region
        _
      $region20: #{up_block_forward.1} parent=11 // pred_fallthru
        _
      // Predicated region
      $region21: #{up_block_forward.1} parent=11 // pred_check
        %p234 = pneg %p103
      $region22: #{up_block_forward.1} parent=11 // pred_check_branch
        %236 = sbr.rel (%p234) target = $region24
      $region23: #{up_block_forward.1} parent=11 // pred_region
        _
      $region24: #{up_block_forward.1} parent=11 // pred_fallthru
        _
      // Predicated region
      $region25: #{up_block_forward.1} parent=11 // pred_check
        %p237 = pneg %p124
      $region26: #{up_block_forward.1} parent=11 // pred_check_branch
        %239 = sbr.rel (%p237) target = $region28
      $region27: #{up_block_forward.1} parent=11 // pred_region
        _
      $region28: #{up_block_forward.1} parent=11 // pred_fallthru
        _
      // Predicated region
      $region29: #{up_block_forward.1} parent=11 // pred_check
        %p240 = pneg %p145
      $region30: #{up_block_forward.1} parent=11 // pred_check_branch
        %242 = sbr.rel (%p240) target = $region32
      $region31: #{up_block_forward.1} parent=11 // pred_region
        _
      $region32: #{up_block_forward.1} parent=11 // pred_fallthru
        _
      // Predicated region
      $region33: #{up_block_forward.1} parent=11 // pred_check
        %p243 = pneg %p166
      $region34: #{up_block_forward.1} parent=11 // pred_check_branch
        %245 = sbr.rel (%p243) target = $region36
      $region35: #{up_block_forward.1} parent=11 // pred_region
        _
      $region36: #{up_block_forward.1} parent=11 // pred_fallthru
        _
      // Predicated region
      $region37: #{up_block_forward.1} parent=11 // pred_check
        %p246 = pneg %p187
      $region38: #{up_block_forward.1} parent=11 // pred_check_branch
        %248 = sbr.rel (%p246) target = $region40
      $region39: #{up_block_forward.1} parent=11 // pred_region
        _
      $region40: #{up_block_forward.1} parent=11 // pred_fallthru
        _
    $region12: #{up_block_forward.1} parent=5 // pred_fallthru
      _
    %p249 = scmp.lt.s32.totalorder %s14, 2
    // Predicated region
    $region41: #{up_block_forward.1} parent=5 // pred_check
      %p250 = pneg %p249
    $region42: #{up_block_forward.1} parent=5 // pred_check_branch
      %252 = sbr.rel (%p250) target = $region44
    $region43: #{up_block_forward.1} parent=5 // pred_region
      // Predicated region
      $region45: #{up_block_forward.1} parent=43 // pred_check
        %p253 = pneg %p34
      $region46: #{up_block_forward.1} parent=43 // pred_check_branch
        %255 = sbr.rel (%p253) target = $region48
      $region47: #{up_block_forward.1} parent=43 // pred_region
        %p256 = scmp.lt.s32.totalorder %s14, 1
        %s257 = scalar_select %p256, %s14, 1
        %s258 = smul.addr %s257, 32
        %s259 = smul.addr %s258, 8
        %s260 = scalar_lea.vmem %s0, %s259
      $region48: #{up_block_forward.1} parent=43 // pred_fallthru
        _
    $region44: #{up_block_forward.1} parent=5 // pred_fallthru
      _
    %p261 = scmp.le.s32.totalorder 1, %s14
    %p262 = scmp.lt.s32.totalorder %s14, 3
    %p263 = pnand %p261, %p262
    %p264 = pneg %p263
    // Predicated region
    $region49: #{up_block_forward.1} parent=5 // pred_check
      _
    $region50: #{up_block_forward.1} parent=5 // pred_check_branch
      %266 = sbr.rel (%p263) target = $region52
    $region51: #{up_block_forward.1} parent=5 // pred_region
      %s267 = ssub.s32 %s14, 1
      %p268 = scmp.lt.s32.totalorder %s19, 1
      %s269 = scalar_select %p268, %s19, 1
      %s270 = smul.addr %s269, 32
      %s271 = smul.addr %s270, 8
      %s272 = scalar_lea.vmem %s0, %s271
      %p273 = pneg %p40
      %p274 = pneg %p37
      %p275 = pneg %p61
      %p276 = pneg %p58
      %p277 = pneg %p82
      %p278 = pneg %p79
      %p279 = pneg %p103
      %p280 = pneg %p100
      %p281 = pneg %p124
      %p282 = pneg %p121
      %p283 = pneg %p145
      %p284 = pneg %p142
      %p285 = pneg %p166
      %p286 = pneg %p163
      %p287 = pneg %p187
      %p288 = pneg %p184
      %p289 = pneg %p213
      %p290 = pneg %p210
      %p291 = scmp.lt.s32.totalorder %s19, 1
      %s292 = scalar_select %p291, %s19, 1
      %s293 = smul.addr %s292, 4
      %s294 = smul.addr %s293, 8
      %s295 = scalar_lea.vmem %s8, %s294
      %p296 = scmp.lt.s32.totalorder %s19, 1
      %s297 = scalar_select %p296, %s19, 1
      %s298 = smul.addr %s297, 32
      %s299 = smul.addr %s298, 8
      %s300 = scalar_lea.vmem %s0, %s299
      %p301 = scmp.lt.s32.totalorder %s19, 1
      %s302 = scalar_select %p301, %s19, 1
      %s303 = smul.addr %s302, 4
      %s304 = smul.addr %s303, 8
      %s305 = scalar_lea.vmem %s8, %s304
      %vm306 = vcmask 64512
      %307 = vst.msk [vmem:[#allocation2] sm:$0xff] %vm306, 0.0
      %308 = vst.msk [vmem:[#allocation2 + $0x8] sm:$0xff] %vm306, 0.0
      %vm309 = vcmask 58368
      %310 = vst.msk [vmem:[#allocation2 + $0x10] sm:$0x3] %vm309, 0.0
      %311 = vst.msk [vmem:[#allocation2 + $0x18] sm:$0xff] %vm306, 0.0
      %312 = vst.msk [vmem:[#allocation2 + $0x20] sm:$0xff] %vm306, 0.0
      %313 = vst.msk [vmem:[#allocation2 + $0x28] sm:$0x3] %vm309, 0.0
      %314 = vst.msk [vmem:[#allocation2 + $0x30] sm:$0xff] %vm306, 0.0
      %315 = vst.msk [vmem:[#allocation2 + $0x38] sm:$0xff] %vm306, 0.0
      %316 = vst.msk [vmem:[#allocation2 + $0x40] sm:$0x3] %vm309, 0.0
      %317 = vst.msk [vmem:[#allocation2 + $0x48] sm:$0xff] %vm306, 0.0
      %318 = vst.msk [vmem:[#allocation2 + $0x50] sm:$0xff] %vm306, 0.0
      %319 = vst.msk [vmem:[#allocation2 + $0x58] sm:$0x3] %vm309, 0.0
      %320 = vst.msk [vmem:[#allocation2 + $0x60] sm:$0xff] %vm306, 0.0
      %321 = vst.msk [vmem:[#allocation2 + $0x68] sm:$0xff] %vm306, 0.0
      %322 = vst.msk [vmem:[#allocation2 + $0x70] sm:$0x3] %vm309, 0.0
      %323 = vst.msk [vmem:[#allocation2 + $0x78] sm:$0xff] %vm306, 0.0
      %324 = vst.msk [vmem:[#allocation2 + $0x80] sm:$0xff] %vm306, 0.0
      %325 = vst.msk [vmem:[#allocation2 + $0x88] sm:$0x3] %vm309, 0.0
      %326 = vst.msk [vmem:[#allocation2 + $0x90] sm:$0xff] %vm306, 0.0
      %327 = vst.msk [vmem:[#allocation2 + $0x98] sm:$0xff] %vm306, 0.0
      %328 = vst.msk [vmem:[#allocation2 + $0xa0] sm:$0x3] %vm309, 0.0
      %329 = vst.msk [vmem:[#allocation2 + $0xa8] sm:$0xff] %vm306, 0.0
      %330 = vst.msk [vmem:[#allocation2 + $0xb0] sm:$0xff] %vm306, 0.0
      %331 = vst.msk [vmem:[#allocation2 + $0xb8] sm:$0x3] %vm309, 0.0
      %332 = vst.msk [vmem:[#allocation2 + $0xc0] sm:$0xff] %vm306, 0.0
      %333 = vst.msk [vmem:[#allocation2 + $0xc8] sm:$0xff] %vm306, 0.0
      %334 = vst.msk [vmem:[#allocation2 + $0xd0] sm:$0x3] %vm309, 0.0
      %335 = vst.msk [vmem:[#allocation2 + $0xd8] sm:$0xff] %vm306, 0.0
      %336 = vst.msk [vmem:[#allocation2 + $0xe0] sm:$0xff] %vm306, 0.0
      %337 = vst.msk [vmem:[#allocation2 + $0xe8] sm:$0x3] %vm309, 0.0
      %338 = vst.msk [vmem:[#allocation2 + $0xf0] sm:$0xff] %vm306, 0.0
      %339 = vst.msk [vmem:[#allocation2 + $0xf8] sm:$0xff] %vm306, 0.0
      %340 = vst.msk [vmem:[#allocation2 + $0x100] sm:$0x3] %vm309, 0.0
      %341 = vst.msk [vmem:[#allocation2 + $0x108] sm:$0xff] %vm306, 0.0
      %342 = vst.msk [vmem:[#allocation2 + $0x110] sm:$0xff] %vm306, 0.0
      %343 = vst.msk [vmem:[#allocation2 + $0x118] sm:$0x3] %vm309, 0.0
      %344 = vst.msk [vmem:[#allocation2 + $0x120] sm:$0xff] %vm306, 0.0
      %345 = vst.msk [vmem:[#allocation2 + $0x128] sm:$0xff] %vm306, 0.0
      %346 = vst.msk [vmem:[#allocation2 + $0x130] sm:$0x3] %vm309, 0.0
      %347 = vst.msk [vmem:[#allocation2 + $0x138] sm:$0xff] %vm306, 0.0
      %348 = vst.msk [vmem:[#allocation2 + $0x140] sm:$0xff] %vm306, 0.0
      %349 = vst.msk [vmem:[#allocation2 + $0x148] sm:$0x3] %vm309, 0.0
      %350 = vst.msk [vmem:[#allocation2 + $0x150] sm:$0xff] %vm306, 0.0
      %351 = vst.msk [vmem:[#allocation2 + $0x158] sm:$0xff] %vm306, 0.0
      %352 = vst.msk [vmem:[#allocation2 + $0x160] sm:$0x3] %vm309, 0.0
      %353 = vst.msk [vmem:[#allocation2 + $0x168] sm:$0xff] %vm306, 0.0
      %354 = vst.msk [vmem:[#allocation2 + $0x170] sm:$0xff] %vm306, 0.0
      %355 = vst.msk [vmem:[#allocation2 + $0x178] sm:$0x3] %vm309, 0.0
      %356 = vst.msk [vmem:[#allocation2 + $0x180] sm:$0xff] %vm306, 0.0
      %357 = vst.msk [vmem:[#allocation2 + $0x188] sm:$0xff] %vm306, 0.0
      %358 = vst.msk [vmem:[#allocation2 + $0x190] sm:$0x3] %vm309, 0.0
      %359 = vst.msk [vmem:[#allocation2 + $0x198] sm:$0xff] %vm306, 0.0
      %360 = vst.msk [vmem:[#allocation2 + $0x1a0] sm:$0xff] %vm306, 0.0
      %361 = vst.msk [vmem:[#allocation2 + $0x1a8] sm:$0x3] %vm309, 0.0
      %v362 = vld [vmem:[%s300] sm:$0xff]
      %v363 = vld [vmem:[%s300 + $0x8] sm:$0xff]
      %v364 = vld [vmem:[%s300 + $0x10] sm:$0xff]
      %v365 = vld [vmem:[%s300 + $0x18] sm:$0xff]
      %v366 = vld [vmem:[%s300 + $0x20] sm:$0xff]
      %v367 = vld [vmem:[%s300 + $0x28] sm:$0xff]
      %v368 = vld [vmem:[%s300 + $0x30] sm:$0xff]
      %v369 = vld [vmem:[%s300 + $0x38] sm:$0xff]
      %v370 = vld [vmem:[%s300 + $0x40] sm:$0xff]
      %v371 = vld [vmem:[%s300 + $0x48] sm:$0xff]
      %v372 = vld [vmem:[%s300 + $0x50] sm:$0xff]
      %v373 = vld [vmem:[%s300 + $0x58] sm:$0xff]
      %v374 = vld [vmem:[%s300 + $0x60] sm:$0xff]
      %v375 = vld [vmem:[%s300 + $0x68] sm:$0xff]
      %v376 = vld [vmem:[%s300 + $0x70] sm:$0xff]
      %v377 = vld [vmem:[%s300 + $0x78] sm:$0xff]
      %v378 = vld [vmem:[%s300 + $0x80] sm:$0xff]
      %v379 = vld [vmem:[%s300 + $0x88] sm:$0xff]
      %v380 = vld [vmem:[%s300 + $0x90] sm:$0xff]
      %v381 = vld [vmem:[%s300 + $0x98] sm:$0xff]
      %v382 = vld [vmem:[%s300 + $0xa0] sm:$0xff]
      %v383 = vld [vmem:[%s300 + $0xa8] sm:$0xff]
      %v384 = vld [vmem:[%s300 + $0xb0] sm:$0xff]
      %v385 = vld [vmem:[%s300 + $0xb8] sm:$0xff]
      %v386 = vld [vmem:[%s300 + $0xc0] sm:$0xff]
      %v387 = vld [vmem:[%s300 + $0xc8] sm:$0xff]
      %v388 = vld [vmem:[%s300 + $0xd0] sm:$0xff]
      %v389 = vld [vmem:[%s300 + $0xd8] sm:$0xff]
      %v390 = vld [vmem:[%s300 + $0xe0] sm:$0xff]
      %v391 = vld [vmem:[%s300 + $0xe8] sm:$0xff]
      %v392 = vld [vmem:[%s300 + $0xf0] sm:$0xff]
      %v393 = vld [vmem:[%s300 + $0xf8] sm:$0xff]
      %s394 = scalar_lea.vmem [#allocation2], 24
      %395 = vst.msk [vmem:[%s394 + $0x1] sm:$0xff] %vm306, %v362
      %396 = vst.msk [vmem:[%s394 + $0x9] sm:$0xff] %vm306, %v363
      %397 = vst.msk [vmem:[%s394 + $0x19] sm:$0xff] %vm306, %v364
      %398 = vst.msk [vmem:[%s394 + $0x21] sm:$0xff] %vm306, %v365
      %399 = vst.msk [vmem:[%s394 + $0x31] sm:$0xff] %vm306, %v366
      %400 = vst.msk [vmem:[%s394 + $0x39] sm:$0xff] %vm306, %v367
      %401 = vst.msk [vmem:[%s394 + $0x49] sm:$0xff] %vm306, %v368
      %402 = vst.msk [vmem:[%s394 + $0x51] sm:$0xff] %vm306, %v369
      %403 = vst.msk [vmem:[%s394 + $0x61] sm:$0xff] %vm306, %v370
      %404 = vst.msk [vmem:[%s394 + $0x69] sm:$0xff] %vm306, %v371
      %405 = vst.msk [vmem:[%s394 + $0x79] sm:$0xff] %vm306, %v372
      %406 = vst.msk [vmem:[%s394 + $0x81] sm:$0xff] %vm306, %v373
      %407 = vst.msk [vmem:[%s394 + $0x91] sm:$0xff] %vm306, %v374
      %408 = vst.msk [vmem:[%s394 + $0x99] sm:$0xff] %vm306, %v375
      %409 = vst.msk [vmem:[%s394 + $0xa9] sm:$0xff] %vm306, %v376
      %410 = vst.msk [vmem:[%s394 + $0xb1] sm:$0xff] %vm306, %v377
      %411 = vst.msk [vmem:[%s394 + $0xc1] sm:$0xff] %vm306, %v378
      %412 = vst.msk [vmem:[%s394 + $0xc9] sm:$0xff] %vm306, %v379
      %413 = vst.msk [vmem:[%s394 + $0xd9] sm:$0xff] %vm306, %v380
      %414 = vst.msk [vmem:[%s394 + $0xe1] sm:$0xff] %vm306, %v381
      %415 = vst.msk [vmem:[%s394 + $0xf1] sm:$0xff] %vm306, %v382
      %416 = vst.msk [vmem:[%s394 + $0xf9] sm:$0xff] %vm306, %v383
      %417 = vst.msk [vmem:[%s394 + $0x109] sm:$0xff] %vm306, %v384
      %418 = vst.msk [vmem:[%s394 + $0x111] sm:$0xff] %vm306, %v385
      %419 = vst.msk [vmem:[%s394 + $0x121] sm:$0xff] %vm306, %v386
      %420 = vst.msk [vmem:[%s394 + $0x129] sm:$0xff] %vm306, %v387
      %421 = vst.msk [vmem:[%s394 + $0x139] sm:$0xff] %vm306, %v388
      %422 = vst.msk [vmem:[%s394 + $0x141] sm:$0xff] %vm306, %v389
      %423 = vst.msk [vmem:[%s394 + $0x151] sm:$0xff] %vm306, %v390
      %424 = vst.msk [vmem:[%s394 + $0x159] sm:$0xff] %vm306, %v391
      %425 = vst.msk [vmem:[%s394 + $0x169] sm:$0xff] %vm306, %v392
      %426 = vst.msk [vmem:[%s394 + $0x171] sm:$0xff] %vm306, %v393
      %v427 = vld [vmem:[#allocation2] sm:$0xff]
      %v428 = vld [vmem:[#allocation2 + $0x8] sm:$0xff]
      %v429 = vld [vmem:[#allocation2 + $0x18] sm:$0xff]
      %v430 = vld [vmem:[#allocation2 + $0x20] sm:$0xff]
      %v431 = vld [vmem:[#allocation2 + $0x30] sm:$0xff]
      %v432 = vld [vmem:[#allocation2 + $0x38] sm:$0xff]
      %v433 = vld [vmem:[#allocation2 + $0x48] sm:$0xff]
      %v434 = vld [vmem:[#allocation2 + $0x50] sm:$0xff]
      %v435 = vld [vmem:[#allocation2 + $0x60] sm:$0xff]
      %v436 = vld [vmem:[#allocation2 + $0x68] sm:$0xff]
      %v437 = vld [vmem:[#allocation2 + $0x78] sm:$0xff]
      %v438 = vld [vmem:[#allocation2 + $0x80] sm:$0xff]
      %v439 = vld [vmem:[#allocation2 + $0x90] sm:$0xff]
      %v440 = vld [vmem:[#allocation2 + $0x98] sm:$0xff]
      %v441 = vld [vmem:[#allocation2 + $0xa8] sm:$0xff]
      %v442 = vld [vmem:[#allocation2 + $0xb0] sm:$0xff]
      %v443 = vld [vmem:[#allocation2 + $0xc0] sm:$0xff]
      %v444 = vld [vmem:[#allocation2 + $0xc8] sm:$0xff]
      %v445 = vld [vmem:[#allocation2 + $0xd8] sm:$0xff]
      %v446 = vld [vmem:[#allocation2 + $0xe0] sm:$0xff]
      %v447 = vld [vmem:[#allocation2 + $0xf0] sm:$0xff]
      %v448 = vld [vmem:[#allocation2 + $0xf8] sm:$0xff]
      %v449 = vld [vmem:[#allocation2 + $0x108] sm:$0xff]
      %v450 = vld [vmem:[#allocation2 + $0x110] sm:$0xff]
      %v451 = vld [vmem:[#allocation2 + $0x120] sm:$0xff]
      %v452 = vld [vmem:[#allocation2 + $0x128] sm:$0xff]
      %v453 = vld [vmem:[#allocation2 + $0x138] sm:$0xff]
      %v454 = vld [vmem:[#allocation2 + $0x140] sm:$0xff]
      %v455 = vld [vmem:[#allocation2 + $0x150] sm:$0xff]
      %v456 = vld [vmem:[#allocation2 + $0x158] sm:$0xff]
      %v457 = vld [vmem:[#allocation2 + $0x168] sm:$0xff]
      %v458 = vld [vmem:[#allocation2 + $0x170] sm:$0xff]
      %459 = vst.msk [vmem:[#allocation3] sm:$0xff] %vm306, %v427
      %460 = vst.msk [vmem:[#allocation3 + $0x8] sm:$0xff] %vm306, %v428
      %461 = vst.msk [vmem:[#allocation3 + $0x10] sm:$0xff] %vm306, %v429
      %462 = vst.msk [vmem:[#allocation3 + $0x18] sm:$0xff] %vm306, %v430
      %463 = vst.msk [vmem:[#allocation3 + $0x20] sm:$0xff] %vm306, %v431
      %464 = vst.msk [vmem:[#allocation3 + $0x28] sm:$0xff] %vm306, %v432
      %465 = vst.msk [vmem:[#allocation3 + $0x30] sm:$0xff] %vm306, %v433
      %466 = vst.msk [vmem:[#allocation3 + $0x38] sm:$0xff] %vm306, %v434
      %467 = vst.msk [vmem:[#allocation3 + $0x40] sm:$0xff] %vm306, %v435
      %468 = vst.msk [vmem:[#allocation3 + $0x48] sm:$0xff] %vm306, %v436
      %469 = vst.msk [vmem:[#allocation3 + $0x50] sm:$0xff] %vm306, %v437
      %470 = vst.msk [vmem:[#allocation3 + $0x58] sm:$0xff] %vm306, %v438
      %471 = vst.msk [vmem:[#allocation3 + $0x60] sm:$0xff] %vm306, %v439
      %472 = vst.msk [vmem:[#allocation3 + $0x68] sm:$0xff] %vm306, %v440
      %473 = vst.msk [vmem:[#allocation3 + $0x70] sm:$0xff] %vm306, %v441
      %474 = vst.msk [vmem:[#allocation3 + $0x78] sm:$0xff] %vm306, %v442
      %475 = vst.msk [vmem:[#allocation3 + $0x80] sm:$0xff] %vm306, %v443
      %476 = vst.msk [vmem:[#allocation3 + $0x88] sm:$0xff] %vm306, %v444
      %477 = vst.msk [vmem:[#allocation3 + $0x90] sm:$0xff] %vm306, %v445
      %478 = vst.msk [vmem:[#allocation3 + $0x98] sm:$0xff] %vm306, %v446
      %479 = vst.msk [vmem:[#allocation3 + $0xa0] sm:$0xff] %vm306, %v447
      %480 = vst.msk [vmem:[#allocation3 + $0xa8] sm:$0xff] %vm306, %v448
      %481 = vst.msk [vmem:[#allocation3 + $0xb0] sm:$0xff] %vm306, %v449
      %482 = vst.msk [vmem:[#allocation3 + $0xb8] sm:$0xff] %vm306, %v450
      %483 = vst.msk [vmem:[#allocation3 + $0xc0] sm:$0xff] %vm306, %v451
      %484 = vst.msk [vmem:[#allocation3 + $0xc8] sm:$0xff] %vm306, %v452
      %485 = vst.msk [vmem:[#allocation3 + $0xd0] sm:$0xff] %vm306, %v453
      %486 = vst.msk [vmem:[#allocation3 + $0xd8] sm:$0xff] %vm306, %v454
      %487 = vst.msk [vmem:[#allocation3 + $0xe0] sm:$0xff] %vm306, %v455
      %488 = vst.msk [vmem:[#allocation3 + $0xe8] sm:$0xff] %vm306, %v456
      %489 = vst.msk [vmem:[#allocation3 + $0xf0] sm:$0xff] %vm306, %v457
      %490 = vst.msk [vmem:[#allocation3 + $0xf8] sm:$0xff] %vm306, %v458
      %v491 = vld [vmem:[#allocation2 + $0x1] sm:$0xff]
      %v492 = vld [vmem:[#allocation2 + $0x9] sm:$0xff]
      %v493 = vld [vmem:[#allocation2 + $0x19] sm:$0xff]
      %v494 = vld [vmem:[#allocation2 + $0x21] sm:$0xff]
      %v495 = vld [vmem:[#allocation2 + $0x31] sm:$0xff]
      %v496 = vld [vmem:[#allocation2 + $0x39] sm:$0xff]
      %v497 = vld [vmem:[#allocation2 + $0x49] sm:$0xff]
      %v498 = vld [vmem:[#allocation2 + $0x51] sm:$0xff]
      %v499 = vld [vmem:[#allocation2 + $0x61] sm:$0xff]
      %v500 = vld [vmem:[#allocation2 + $0x69] sm:$0xff]
      %v501 = vld [vmem:[#allocation2 + $0x79] sm:$0xff]
      %v502 = vld [vmem:[#allocation2 + $0x81] sm:$0xff]
      %v503 = vld [vmem:[#allocation2 + $0x91] sm:$0xff]
      %v504 = vld [vmem:[#allocation2 + $0x99] sm:$0xff]
      %v505 = vld [vmem:[#allocation2 + $0xa9] sm:$0xff]
      %v506 = vld [vmem:[#allocation2 + $0xb1] sm:$0xff]
      %v507 = vld [vmem:[#allocation2 + $0xc1] sm:$0xff]
      %v508 = vld [vmem:[#allocation2 + $0xc9] sm:$0xff]
      %v509 = vld [vmem:[#allocation2 + $0xd9] sm:$0xff]
      %v510 = vld [vmem:[#allocation2 + $0xe1] sm:$0xff]
      %v511 = vld [vmem:[#allocation2 + $0xf1] sm:$0xff]
      %v512 = vld [vmem:[#allocation2 + $0xf9] sm:$0xff]
      %v513 = vld [vmem:[#allocation2 + $0x109] sm:$0xff]
      %v514 = vld [vmem:[#allocation2 + $0x111] sm:$0xff]
      %v515 = vld [vmem:[#allocation2 + $0x121] sm:$0xff]
      %v516 = vld [vmem:[#allocation2 + $0x129] sm:$0xff]
      %v517 = vld [vmem:[#allocation2 + $0x139] sm:$0xff]
      %v518 = vld [vmem:[#allocation2 + $0x141] sm:$0xff]
      %v519 = vld [vmem:[#allocation2 + $0x151] sm:$0xff]
      %v520 = vld [vmem:[#allocation2 + $0x159] sm:$0xff]
      %v521 = vld [vmem:[#allocation2 + $0x169] sm:$0xff]
      %v522 = vld [vmem:[#allocation2 + $0x171] sm:$0xff]
      %555 = vrot.lane.b32.xlu0 %v491, 8
      %v556 = vpop.permute.xlu0 %555
      %557 = vrot.lane.b32.xlu0 %v492, 8
      %v558 = vpop.permute.xlu0 %557
      %559 = vrot.lane.b32.xlu0 %v493, 8
      %v560 = vpop.permute.xlu0 %559
      %561 = vrot.lane.b32.xlu0 %v494, 8
      %v562 = vpop.permute.xlu0 %561
      %563 = vrot.lane.b32.xlu0 %v495, 8
      %v564 = vpop.permute.xlu0 %563
      %565 = vrot.lane.b32.xlu0 %v496, 8
      %v566 = vpop.permute.xlu0 %565
      %567 = vrot.lane.b32.xlu0 %v497, 8
      %v568 = vpop.permute.xlu0 %567
      %569 = vrot.lane.b32.xlu0 %v498, 8
      %v570 = vpop.permute.xlu0 %569
      %571 = vrot.lane.b32.xlu0 %v499, 8
      %v572 = vpop.permute.xlu0 %571
      %573 = vrot.lane.b32.xlu0 %v500, 8
      %v574 = vpop.permute.xlu0 %573
      %575 = vrot.lane.b32.xlu0 %v501, 8
      %v576 = vpop.permute.xlu0 %575
      %577 = vrot.lane.b32.xlu0 %v502, 8
      %v578 = vpop.permute.xlu0 %577
      %579 = vrot.lane.b32.xlu0 %v503, 8
      %v580 = vpop.permute.xlu0 %579
      %581 = vrot.lane.b32.xlu0 %v504, 8
      %v582 = vpop.permute.xlu0 %581
      %583 = vrot.lane.b32.xlu0 %v505, 8
      %v584 = vpop.permute.xlu0 %583
      %585 = vrot.lane.b32.xlu0 %v506, 8
      %v586 = vpop.permute.xlu0 %585
      %587 = vrot.lane.b32.xlu0 %v507, 8
      %v588 = vpop.permute.xlu0 %587
      %589 = vrot.lane.b32.xlu0 %v508, 8
      %v590 = vpop.permute.xlu0 %589
      %591 = vrot.lane.b32.xlu0 %v509, 8
      %v592 = vpop.permute.xlu0 %591
      %593 = vrot.lane.b32.xlu0 %v510, 8
      %v594 = vpop.permute.xlu0 %593
      %595 = vrot.lane.b32.xlu0 %v511, 8
      %v596 = vpop.permute.xlu0 %595
      %597 = vrot.lane.b32.xlu0 %v512, 8
      %v598 = vpop.permute.xlu0 %597
      %599 = vrot.lane.b32.xlu0 %v513, 8
      %v600 = vpop.permute.xlu0 %599
      %601 = vrot.lane.b32.xlu0 %v514, 8
      %v602 = vpop.permute.xlu0 %601
      %603 = vrot.lane.b32.xlu0 %v515, 8
      %v604 = vpop.permute.xlu0 %603
      %605 = vrot.lane.b32.xlu0 %v516, 8
      %v606 = vpop.permute.xlu0 %605
      %607 = vrot.lane.b32.xlu0 %v517, 8
      %v608 = vpop.permute.xlu0 %607
      %609 = vrot.lane.b32.xlu0 %v518, 8
      %v610 = vpop.permute.xlu0 %609
      %611 = vrot.lane.b32.xlu0 %v519, 8
      %v612 = vpop.permute.xlu0 %611
      %613 = vrot.lane.b32.xlu0 %v520, 8
      %v614 = vpop.permute.xlu0 %613
      %615 = vrot.lane.b32.xlu0 %v521, 8
      %v616 = vpop.permute.xlu0 %615
      %617 = vrot.lane.b32.xlu0 %v522, 8
      %v618 = vpop.permute.xlu0 %617
      %vm651 = vcmask 130112
      %652 = vst.msk [vmem:[#allocation3] sm:$0xff] %vm651, %v556
      %653 = vst.msk [vmem:[#allocation3 + $0x8] sm:$0xff] %vm651, %v558
      %654 = vst.msk [vmem:[#allocation3 + $0x10] sm:$0xff] %vm651, %v560
      %655 = vst.msk [vmem:[#allocation3 + $0x18] sm:$0xff] %vm651, %v562
      %656 = vst.msk [vmem:[#allocation3 + $0x20] sm:$0xff] %vm651, %v564
      %657 = vst.msk [vmem:[#allocation3 + $0x28] sm:$0xff] %vm651, %v566
      %658 = vst.msk [vmem:[#allocation3 + $0x30] sm:$0xff] %vm651, %v568
      %659 = vst.msk [vmem:[#allocation3 + $0x38] sm:$0xff] %vm651, %v570
      %660 = vst.msk [vmem:[#allocation3 + $0x40] sm:$0xff] %vm651, %v572
      %661 = vst.msk [vmem:[#allocation3 + $0x48] sm:$0xff] %vm651, %v574
      %662 = vst.msk [vmem:[#allocation3 + $0x50] sm:$0xff] %vm651, %v576
      %663 = vst.msk [vmem:[#allocation3 + $0x58] sm:$0xff] %vm651, %v578
      %664 = vst.msk [vmem:[#allocation3 + $0x60] sm:$0xff] %vm651, %v580
      %665 = vst.msk [vmem:[#allocation3 + $0x68] sm:$0xff] %vm651, %v582
      %666 = vst.msk [vmem:[#allocation3 + $0x70] sm:$0xff] %vm651, %v584
      %667 = vst.msk [vmem:[#allocation3 + $0x78] sm:$0xff] %vm651, %v586
      %668 = vst.msk [vmem:[#allocation3 + $0x80] sm:$0xff] %vm651, %v588
      %669 = vst.msk [vmem:[#allocation3 + $0x88] sm:$0xff] %vm651, %v590
      %670 = vst.msk [vmem:[#allocation3 + $0x90] sm:$0xff] %vm651, %v592
      %671 = vst.msk [vmem:[#allocation3 + $0x98] sm:$0xff] %vm651, %v594
      %672 = vst.msk [vmem:[#allocation3 + $0xa0] sm:$0xff] %vm651, %v596
      %673 = vst.msk [vmem:[#allocation3 + $0xa8] sm:$0xff] %vm651, %v598
      %674 = vst.msk [vmem:[#allocation3 + $0xb0] sm:$0xff] %vm651, %v600
      %675 = vst.msk [vmem:[#allocation3 + $0xb8] sm:$0xff] %vm651, %v602
      %676 = vst.msk [vmem:[#allocation3 + $0xc0] sm:$0xff] %vm651, %v604
      %677 = vst.msk [vmem:[#allocation3 + $0xc8] sm:$0xff] %vm651, %v606
      %678 = vst.msk [vmem:[#allocation3 + $0xd0] sm:$0xff] %vm651, %v608
      %679 = vst.msk [vmem:[#allocation3 + $0xd8] sm:$0xff] %vm651, %v610
      %680 = vst.msk [vmem:[#allocation3 + $0xe0] sm:$0xff] %vm651, %v612
      %681 = vst.msk [vmem:[#allocation3 + $0xe8] sm:$0xff] %vm651, %v614
      %682 = vst.msk [vmem:[#allocation3 + $0xf0] sm:$0xff] %vm651, %v616
      %683 = vst.msk [vmem:[#allocation3 + $0xf8] sm:$0xff] %vm651, %v618
      %v684 = vld [vmem:[#allocation2 + $0x2] sm:$0xff]
      %v685 = vld [vmem:[#allocation2 + $0xa] sm:$0xff]
      %v686 = vld [vmem:[#allocation2 + $0x1a] sm:$0xff]
      %v687 = vld [vmem:[#allocation2 + $0x22] sm:$0xff]
      %v688 = vld [vmem:[#allocation2 + $0x32] sm:$0xff]
      %v689 = vld [vmem:[#allocation2 + $0x3a] sm:$0xff]
      %v690 = vld [vmem:[#allocation2 + $0x4a] sm:$0xff]
      %v691 = vld [vmem:[#allocation2 + $0x52] sm:$0xff]
      %v692 = vld [vmem:[#allocation2 + $0x62] sm:$0xff]
      %v693 = vld [vmem:[#allocation2 + $0x6a] sm:$0xff]
      %v694 = vld [vmem:[#allocation2 + $0x7a] sm:$0xff]
      %v695 = vld [vmem:[#allocation2 + $0x82] sm:$0xff]
      %v696 = vld [vmem:[#allocation2 + $0x92] sm:$0xff]
      %v697 = vld [vmem:[#allocation2 + $0x9a] sm:$0xff]
      %v698 = vld [vmem:[#allocation2 + $0xaa] sm:$0xff]
      %v699 = vld [vmem:[#allocation2 + $0xb2] sm:$0xff]
      %v700 = vld [vmem:[#allocation2 + $0xc2] sm:$0xff]
      %v701 = vld [vmem:[#allocation2 + $0xca] sm:$0xff]
      %v702 = vld [vmem:[#allocation2 + $0xda] sm:$0xff]
      %v703 = vld [vmem:[#allocation2 + $0xe2] sm:$0xff]
      %v704 = vld [vmem:[#allocation2 + $0xf2] sm:$0xff]
      %v705 = vld [vmem:[#allocation2 + $0xfa] sm:$0xff]
      %v706 = vld [vmem:[#allocation2 + $0x10a] sm:$0xff]
      %v707 = vld [vmem:[#allocation2 + $0x112] sm:$0xff]
      %v708 = vld [vmem:[#allocation2 + $0x122] sm:$0xff]
      %v709 = vld [vmem:[#allocation2 + $0x12a] sm:$0xff]
      %v710 = vld [vmem:[#allocation2 + $0x13a] sm:$0xff]
      %v711 = vld [vmem:[#allocation2 + $0x142] sm:$0xff]
      %v712 = vld [vmem:[#allocation2 + $0x152] sm:$0xff]
      %v713 = vld [vmem:[#allocation2 + $0x15a] sm:$0xff]
      %v714 = vld [vmem:[#allocation2 + $0x16a] sm:$0xff]
      %v715 = vld [vmem:[#allocation2 + $0x172] sm:$0xff]
      %748 = vrot.lane.b32.xlu0 %v684, 16
      %v749 = vpop.permute.xlu0 %748
      %750 = vrot.lane.b32.xlu0 %v685, 16
      %v751 = vpop.permute.xlu0 %750
      %752 = vrot.lane.b32.xlu0 %v686, 16
      %v753 = vpop.permute.xlu0 %752
      %754 = vrot.lane.b32.xlu0 %v687, 16
      %v755 = vpop.permute.xlu0 %754
      %756 = vrot.lane.b32.xlu0 %v688, 16
      %v757 = vpop.permute.xlu0 %756
      %758 = vrot.lane.b32.xlu0 %v689, 16
      %v759 = vpop.permute.xlu0 %758
      %760 = vrot.lane.b32.xlu0 %v690, 16
      %v761 = vpop.permute.xlu0 %760
      %762 = vrot.lane.b32.xlu0 %v691, 16
      %v763 = vpop.permute.xlu0 %762
      %764 = vrot.lane.b32.xlu0 %v692, 16
      %v765 = vpop.permute.xlu0 %764
      %766 = vrot.lane.b32.xlu0 %v693, 16
      %v767 = vpop.permute.xlu0 %766
      %768 = vrot.lane.b32.xlu0 %v694, 16
      %v769 = vpop.permute.xlu0 %768
      %770 = vrot.lane.b32.xlu0 %v695, 16
      %v771 = vpop.permute.xlu0 %770
      %772 = vrot.lane.b32.xlu0 %v696, 16
      %v773 = vpop.permute.xlu0 %772
      %774 = vrot.lane.b32.xlu0 %v697, 16
      %v775 = vpop.permute.xlu0 %774
      %776 = vrot.lane.b32.xlu0 %v698, 16
      %v777 = vpop.permute.xlu0 %776
      %778 = vrot.lane.b32.xlu0 %v699, 16
      %v779 = vpop.permute.xlu0 %778
      %780 = vrot.lane.b32.xlu0 %v700, 16
      %v781 = vpop.permute.xlu0 %780
      %782 = vrot.lane.b32.xlu0 %v701, 16
      %v783 = vpop.permute.xlu0 %782
      %784 = vrot.lane.b32.xlu0 %v702, 16
      %v785 = vpop.permute.xlu0 %784
      %786 = vrot.lane.b32.xlu0 %v703, 16
      %v787 = vpop.permute.xlu0 %786
      %788 = vrot.lane.b32.xlu0 %v704, 16
      %v789 = vpop.permute.xlu0 %788
      %790 = vrot.lane.b32.xlu0 %v705, 16
      %v791 = vpop.permute.xlu0 %790
      %792 = vrot.lane.b32.xlu0 %v706, 16
      %v793 = vpop.permute.xlu0 %792
      %794 = vrot.lane.b32.xlu0 %v707, 16
      %v795 = vpop.permute.xlu0 %794
      %796 = vrot.lane.b32.xlu0 %v708, 16
      %v797 = vpop.permute.xlu0 %796
      %798 = vrot.lane.b32.xlu0 %v709, 16
      %v799 = vpop.permute.xlu0 %798
      %800 = vrot.lane.b32.xlu0 %v710, 16
      %v801 = vpop.permute.xlu0 %800
      %802 = vrot.lane.b32.xlu0 %v711, 16
      %v803 = vpop.permute.xlu0 %802
      %804 = vrot.lane.b32.xlu0 %v712, 16
      %v805 = vpop.permute.xlu0 %804
      %806 = vrot.lane.b32.xlu0 %v713, 16
      %v807 = vpop.permute.xlu0 %806
      %808 = vrot.lane.b32.xlu0 %v714, 16
      %v809 = vpop.permute.xlu0 %808
      %810 = vrot.lane.b32.xlu0 %v715, 16
      %v811 = vpop.permute.xlu0 %810
      %vm844 = vcmask 195712
      %845 = vst.msk [vmem:[#allocation3] sm:$0xff] %vm844, %v749
      %846 = vst.msk [vmem:[#allocation3 + $0x8] sm:$0xff] %vm844, %v751
      %847 = vst.msk [vmem:[#allocation3 + $0x10] sm:$0xff] %vm844, %v753
      %848 = vst.msk [vmem:[#allocation3 + $0x18] sm:$0xff] %vm844, %v755
      %849 = vst.msk [vmem:[#allocation3 + $0x20] sm:$0xff] %vm844, %v757
      %850 = vst.msk [vmem:[#allocation3 + $0x28] sm:$0xff] %vm844, %v759
      %851 = vst.msk [vmem:[#allocation3 + $0x30] sm:$0xff] %vm844, %v761
      %852 = vst.msk [vmem:[#allocation3 + $0x38] sm:$0xff] %vm844, %v763
      %853 = vst.msk [vmem:[#allocation3 + $0x40] sm:$0xff] %vm844, %v765
      %854 = vst.msk [vmem:[#allocation3 + $0x48] sm:$0xff] %vm844, %v767
      %855 = vst.msk [vmem:[#allocation3 + $0x50] sm:$0xff] %vm844, %v769
      %856 = vst.msk [vmem:[#allocation3 + $0x58] sm:$0xff] %vm844, %v771
      %857 = vst.msk [vmem:[#allocation3 + $0x60] sm:$0xff] %vm844, %v773
      %858 = vst.msk [vmem:[#allocation3 + $0x68] sm:$0xff] %vm844, %v775
      %859 = vst.msk [vmem:[#allocation3 + $0x70] sm:$0xff] %vm844, %v777
      %860 = vst.msk [vmem:[#allocation3 + $0x78] sm:$0xff] %vm844, %v779
      %861 = vst.msk [vmem:[#allocation3 + $0x80] sm:$0xff] %vm844, %v781
      %862 = vst.msk [vmem:[#allocation3 + $0x88] sm:$0xff] %vm844, %v783
      %863 = vst.msk [vmem:[#allocation3 + $0x90] sm:$0xff] %vm844, %v785
      %864 = vst.msk [vmem:[#allocation3 + $0x98] sm:$0xff] %vm844, %v787
      %865 = vst.msk [vmem:[#allocation3 + $0xa0] sm:$0xff] %vm844, %v789
      %866 = vst.msk [vmem:[#allocation3 + $0xa8] sm:$0xff] %vm844, %v791
      %867 = vst.msk [vmem:[#allocation3 + $0xb0] sm:$0xff] %vm844, %v793
      %868 = vst.msk [vmem:[#allocation3 + $0xb8] sm:$0xff] %vm844, %v795
      %869 = vst.msk [vmem:[#allocation3 + $0xc0] sm:$0xff] %vm844, %v797
      %870 = vst.msk [vmem:[#allocation3 + $0xc8] sm:$0xff] %vm844, %v799
      %871 = vst.msk [vmem:[#allocation3 + $0xd0] sm:$0xff] %vm844, %v801
      %872 = vst.msk [vmem:[#allocation3 + $0xd8] sm:$0xff] %vm844, %v803
      %873 = vst.msk [vmem:[#allocation3 + $0xe0] sm:$0xff] %vm844, %v805
      %874 = vst.msk [vmem:[#allocation3 + $0xe8] sm:$0xff] %vm844, %v807
      %875 = vst.msk [vmem:[#allocation3 + $0xf0] sm:$0xff] %vm844, %v809
      %876 = vst.msk [vmem:[#allocation3 + $0xf8] sm:$0xff] %vm844, %v811
      %v877 = vld [vmem:[%s394] sm:$0xff]
      %v878 = vld [vmem:[%s394 + $0x8] sm:$0xff]
      %v879 = vld [vmem:[%s394 + $0x18] sm:$0xff]
      %v880 = vld [vmem:[%s394 + $0x20] sm:$0xff]
      %v881 = vld [vmem:[%s394 + $0x30] sm:$0xff]
      %v882 = vld [vmem:[%s394 + $0x38] sm:$0xff]
      %v883 = vld [vmem:[%s394 + $0x48] sm:$0xff]
      %v884 = vld [vmem:[%s394 + $0x50] sm:$0xff]
      %v885 = vld [vmem:[%s394 + $0x60] sm:$0xff]
      %v886 = vld [vmem:[%s394 + $0x68] sm:$0xff]
      %v887 = vld [vmem:[%s394 + $0x78] sm:$0xff]
      %v888 = vld [vmem:[%s394 + $0x80] sm:$0xff]
      %v889 = vld [vmem:[%s394 + $0x90] sm:$0xff]
      %v890 = vld [vmem:[%s394 + $0x98] sm:$0xff]
      %v891 = vld [vmem:[%s394 + $0xa8] sm:$0xff]
      %v892 = vld [vmem:[%s394 + $0xb0] sm:$0xff]
      %v893 = vld [vmem:[%s394 + $0xc0] sm:$0xff]
      %v894 = vld [vmem:[%s394 + $0xc8] sm:$0xff]
      %v895 = vld [vmem:[%s394 + $0xd8] sm:$0xff]
      %v896 = vld [vmem:[%s394 + $0xe0] sm:$0xff]
      %v897 = vld [vmem:[%s394 + $0xf0] sm:$0xff]
      %v898 = vld [vmem:[%s394 + $0xf8] sm:$0xff]
      %v899 = vld [vmem:[%s394 + $0x108] sm:$0xff]
      %v900 = vld [vmem:[%s394 + $0x110] sm:$0xff]
      %v901 = vld [vmem:[%s394 + $0x120] sm:$0xff]
      %v902 = vld [vmem:[%s394 + $0x128] sm:$0xff]
      %v903 = vld [vmem:[%s394 + $0x138] sm:$0xff]
      %v904 = vld [vmem:[%s394 + $0x140] sm:$0xff]
      %v905 = vld [vmem:[%s394 + $0x150] sm:$0xff]
      %v906 = vld [vmem:[%s394 + $0x158] sm:$0xff]
      %v907 = vld [vmem:[%s394 + $0x168] sm:$0xff]
      %v908 = vld [vmem:[%s394 + $0x170] sm:$0xff]
      %941 = vrot.lane.b32.xlu0 %v877, 24
      %v942 = vpop.permute.xlu0 %941
      %943 = vrot.lane.b32.xlu0 %v878, 24
      %v944 = vpop.permute.xlu0 %943
      %945 = vrot.lane.b32.xlu0 %v879, 24
      %v946 = vpop.permute.xlu0 %945
      %947 = vrot.lane.b32.xlu0 %v880, 24
      %v948 = vpop.permute.xlu0 %947
      %949 = vrot.lane.b32.xlu0 %v881, 24
      %v950 = vpop.permute.xlu0 %949
      %951 = vrot.lane.b32.xlu0 %v882, 24
      %v952 = vpop.permute.xlu0 %951
      %953 = vrot.lane.b32.xlu0 %v883, 24
      %v954 = vpop.permute.xlu0 %953
      %955 = vrot.lane.b32.xlu0 %v884, 24
      %v956 = vpop.permute.xlu0 %955
      %957 = vrot.lane.b32.xlu0 %v885, 24
      %v958 = vpop.permute.xlu0 %957
      %959 = vrot.lane.b32.xlu0 %v886, 24
      %v960 = vpop.permute.xlu0 %959
      %961 = vrot.lane.b32.xlu0 %v887, 24
      %v962 = vpop.permute.xlu0 %961
      %963 = vrot.lane.b32.xlu0 %v888, 24
      %v964 = vpop.permute.xlu0 %963
      %965 = vrot.lane.b32.xlu0 %v889, 24
      %v966 = vpop.permute.xlu0 %965
      %967 = vrot.lane.b32.xlu0 %v890, 24
      %v968 = vpop.permute.xlu0 %967
      %969 = vrot.lane.b32.xlu0 %v891, 24
      %v970 = vpop.permute.xlu0 %969
      %971 = vrot.lane.b32.xlu0 %v892, 24
      %v972 = vpop.permute.xlu0 %971
      %973 = vrot.lane.b32.xlu0 %v893, 24
      %v974 = vpop.permute.xlu0 %973
      %975 = vrot.lane.b32.xlu0 %v894, 24
      %v976 = vpop.permute.xlu0 %975
      %977 = vrot.lane.b32.xlu0 %v895, 24
      %v978 = vpop.permute.xlu0 %977
      %979 = vrot.lane.b32.xlu0 %v896, 24
      %v980 = vpop.permute.xlu0 %979
      %981 = vrot.lane.b32.xlu0 %v897, 24
      %v982 = vpop.permute.xlu0 %981
      %983 = vrot.lane.b32.xlu0 %v898, 24
      %v984 = vpop.permute.xlu0 %983
      %985 = vrot.lane.b32.xlu0 %v899, 24
      %v986 = vpop.permute.xlu0 %985
      %987 = vrot.lane.b32.xlu0 %v900, 24
      %v988 = vpop.permute.xlu0 %987
      %989 = vrot.lane.b32.xlu0 %v901, 24
      %v990 = vpop.permute.xlu0 %989
      %991 = vrot.lane.b32.xlu0 %v902, 24
      %v992 = vpop.permute.xlu0 %991
      %993 = vrot.lane.b32.xlu0 %v903, 24
      %v994 = vpop.permute.xlu0 %993
      %995 = vrot.lane.b32.xlu0 %v904, 24
      %v996 = vpop.permute.xlu0 %995
      %997 = vrot.lane.b32.xlu0 %v905, 24
      %v998 = vpop.permute.xlu0 %997
      %999 = vrot.lane.b32.xlu0 %v906, 24
      %v1000 = vpop.permute.xlu0 %999
      %1001 = vrot.lane.b32.xlu0 %v907, 24
      %v1002 = vpop.permute.xlu0 %1001
      %1003 = vrot.lane.b32.xlu0 %v908, 24
      %v1004 = vpop.permute.xlu0 %1003
      %vm1037 = vcmask 261312
      %1038 = vst.msk [vmem:[#allocation3] sm:$0xff] %vm1037, %v942
      %1039 = vst.msk [vmem:[#allocation3 + $0x8] sm:$0xff] %vm1037, %v944
      %1040 = vst.msk [vmem:[#allocation3 + $0x10] sm:$0xff] %vm1037, %v946
      %1041 = vst.msk [vmem:[#allocation3 + $0x18] sm:$0xff] %vm1037, %v948
      %1042 = vst.msk [vmem:[#allocation3 + $0x20] sm:$0xff] %vm1037, %v950
      %1043 = vst.msk [vmem:[#allocation3 + $0x28] sm:$0xff] %vm1037, %v952
      %1044 = vst.msk [vmem:[#allocation3 + $0x30] sm:$0xff] %vm1037, %v954
      %1045 = vst.msk [vmem:[#allocation3 + $0x38] sm:$0xff] %vm1037, %v956
      %1046 = vst.msk [vmem:[#allocation3 + $0x40] sm:$0xff] %vm1037, %v958
      %1047 = vst.msk [vmem:[#allocation3 + $0x48] sm:$0xff] %vm1037, %v960
      %1048 = vst.msk [vmem:[#allocation3 + $0x50] sm:$0xff] %vm1037, %v962
      %1049 = vst.msk [vmem:[#allocation3 + $0x58] sm:$0xff] %vm1037, %v964
      %1050 = vst.msk [vmem:[#allocation3 + $0x60] sm:$0xff] %vm1037, %v966
      %1051 = vst.msk [vmem:[#allocation3 + $0x68] sm:$0xff] %vm1037, %v968
      %1052 = vst.msk [vmem:[#allocation3 + $0x70] sm:$0xff] %vm1037, %v970
      %1053 = vst.msk [vmem:[#allocation3 + $0x78] sm:$0xff] %vm1037, %v972
      %1054 = vst.msk [vmem:[#allocation3 + $0x80] sm:$0xff] %vm1037, %v974
      %1055 = vst.msk [vmem:[#allocation3 + $0x88] sm:$0xff] %vm1037, %v976
      %1056 = vst.msk [vmem:[#allocation3 + $0x90] sm:$0xff] %vm1037, %v978
      %1057 = vst.msk [vmem:[#allocation3 + $0x98] sm:$0xff] %vm1037, %v980
      %1058 = vst.msk [vmem:[#allocation3 + $0xa0] sm:$0xff] %vm1037, %v982
      %1059 = vst.msk [vmem:[#allocation3 + $0xa8] sm:$0xff] %vm1037, %v984
      %1060 = vst.msk [vmem:[#allocation3 + $0xb0] sm:$0xff] %vm1037, %v986
      %1061 = vst.msk [vmem:[#allocation3 + $0xb8] sm:$0xff] %vm1037, %v988
      %1062 = vst.msk [vmem:[#allocation3 + $0xc0] sm:$0xff] %vm1037, %v990
      %1063 = vst.msk [vmem:[#allocation3 + $0xc8] sm:$0xff] %vm1037, %v992
      %1064 = vst.msk [vmem:[#allocation3 + $0xd0] sm:$0xff] %vm1037, %v994
      %1065 = vst.msk [vmem:[#allocation3 + $0xd8] sm:$0xff] %vm1037, %v996
      %1066 = vst.msk [vmem:[#allocation3 + $0xe0] sm:$0xff] %vm1037, %v998
      %1067 = vst.msk [vmem:[#allocation3 + $0xe8] sm:$0xff] %vm1037, %v1000
      %1068 = vst.msk [vmem:[#allocation3 + $0xf0] sm:$0xff] %vm1037, %v1002
      %1069 = vst.msk [vmem:[#allocation3 + $0xf8] sm:$0xff] %vm1037, %v1004
      %v1070 = vld [vmem:[%s394 + $0x1] sm:$0xff]
      %v1071 = vld [vmem:[%s394 + $0x9] sm:$0xff]
      %v1072 = vld [vmem:[%s394 + $0x19] sm:$0xff]
      %v1073 = vld [vmem:[%s394 + $0x21] sm:$0xff]
      %v1074 = vld [vmem:[%s394 + $0x31] sm:$0xff]
      %v1075 = vld [vmem:[%s394 + $0x39] sm:$0xff]
      %v1076 = vld [vmem:[%s394 + $0x49] sm:$0xff]
      %v1077 = vld [vmem:[%s394 + $0x51] sm:$0xff]
      %v1078 = vld [vmem:[%s394 + $0x61] sm:$0xff]
      %v1079 = vld [vmem:[%s394 + $0x69] sm:$0xff]
      %v1080 = vld [vmem:[%s394 + $0x79] sm:$0xff]
      %v1081 = vld [vmem:[%s394 + $0x81] sm:$0xff]
      %v1082 = vld [vmem:[%s394 + $0x91] sm:$0xff]
      %v1083 = vld [vmem:[%s394 + $0x99] sm:$0xff]
      %v1084 = vld [vmem:[%s394 + $0xa9] sm:$0xff]
      %v1085 = vld [vmem:[%s394 + $0xb1] sm:$0xff]
      %v1086 = vld [vmem:[%s394 + $0xc1] sm:$0xff]
      %v1087 = vld [vmem:[%s394 + $0xc9] sm:$0xff]
      %v1088 = vld [vmem:[%s394 + $0xd9] sm:$0xff]
      %v1089 = vld [vmem:[%s394 + $0xe1] sm:$0xff]
      %v1090 = vld [vmem:[%s394 + $0xf1] sm:$0xff]
      %v1091 = vld [vmem:[%s394 + $0xf9] sm:$0xff]
      %v1092 = vld [vmem:[%s394 + $0x109] sm:$0xff]
      %v1093 = vld [vmem:[%s394 + $0x111] sm:$0xff]
      %v1094 = vld [vmem:[%s394 + $0x121] sm:$0xff]
      %v1095 = vld [vmem:[%s394 + $0x129] sm:$0xff]
      %v1096 = vld [vmem:[%s394 + $0x139] sm:$0xff]
      %v1097 = vld [vmem:[%s394 + $0x141] sm:$0xff]
      %v1098 = vld [vmem:[%s394 + $0x151] sm:$0xff]
      %v1099 = vld [vmem:[%s394 + $0x159] sm:$0xff]
      %v1100 = vld [vmem:[%s394 + $0x169] sm:$0xff]
      %v1101 = vld [vmem:[%s394 + $0x171] sm:$0xff]
      %1134 = vrot.lane.b32.xlu0 %v1070, 32
      %v1135 = vpop.permute.xlu0 %1134
      %1136 = vrot.lane.b32.xlu0 %v1071, 32
      %v1137 = vpop.permute.xlu0 %1136
      %1138 = vrot.lane.b32.xlu0 %v1072, 32
      %v1139 = vpop.permute.xlu0 %1138
      %1140 = vrot.lane.b32.xlu0 %v1073, 32
      %v1141 = vpop.permute.xlu0 %1140
      %1142 = vrot.lane.b32.xlu0 %v1074, 32
      %v1143 = vpop.permute.xlu0 %1142
      %1144 = vrot.lane.b32.xlu0 %v1075, 32
      %v1145 = vpop.permute.xlu0 %1144
      %1146 = vrot.lane.b32.xlu0 %v1076, 32
      %v1147 = vpop.permute.xlu0 %1146
      %1148 = vrot.lane.b32.xlu0 %v1077, 32
      %v1149 = vpop.permute.xlu0 %1148
      %1150 = vrot.lane.b32.xlu0 %v1078, 32
      %v1151 = vpop.permute.xlu0 %1150
      %1152 = vrot.lane.b32.xlu0 %v1079, 32
      %v1153 = vpop.permute.xlu0 %1152
      %1154 = vrot.lane.b32.xlu0 %v1080, 32
      %v1155 = vpop.permute.xlu0 %1154
      %1156 = vrot.lane.b32.xlu0 %v1081, 32
      %v1157 = vpop.permute.xlu0 %1156
      %1158 = vrot.lane.b32.xlu0 %v1082, 32
      %v1159 = vpop.permute.xlu0 %1158
      %1160 = vrot.lane.b32.xlu0 %v1083, 32
      %v1161 = vpop.permute.xlu0 %1160
      %1162 = vrot.lane.b32.xlu0 %v1084, 32
      %v1163 = vpop.permute.xlu0 %1162
      %1164 = vrot.lane.b32.xlu0 %v1085, 32
      %v1165 = vpop.permute.xlu0 %1164
      %1166 = vrot.lane.b32.xlu0 %v1086, 32
      %v1167 = vpop.permute.xlu0 %1166
      %1168 = vrot.lane.b32.xlu0 %v1087, 32
      %v1169 = vpop.permute.xlu0 %1168
      %1170 = vrot.lane.b32.xlu0 %v1088, 32
      %v1171 = vpop.permute.xlu0 %1170
      %1172 = vrot.lane.b32.xlu0 %v1089, 32
      %v1173 = vpop.permute.xlu0 %1172
      %1174 = vrot.lane.b32.xlu0 %v1090, 32
      %v1175 = vpop.permute.xlu0 %1174
      %1176 = vrot.lane.b32.xlu0 %v1091, 32
      %v1177 = vpop.permute.xlu0 %1176
      %1178 = vrot.lane.b32.xlu0 %v1092, 32
      %v1179 = vpop.permute.xlu0 %1178
      %1180 = vrot.lane.b32.xlu0 %v1093, 32
      %v1181 = vpop.permute.xlu0 %1180
      %1182 = vrot.lane.b32.xlu0 %v1094, 32
      %v1183 = vpop.permute.xlu0 %1182
      %1184 = vrot.lane.b32.xlu0 %v1095, 32
      %v1185 = vpop.permute.xlu0 %1184
      %1186 = vrot.lane.b32.xlu0 %v1096, 32
      %v1187 = vpop.permute.xlu0 %1186
      %1188 = vrot.lane.b32.xlu0 %v1097, 32
      %v1189 = vpop.permute.xlu0 %1188
      %1190 = vrot.lane.b32.xlu0 %v1098, 32
      %v1191 = vpop.permute.xlu0 %1190
      %1192 = vrot.lane.b32.xlu0 %v1099, 32
      %v1193 = vpop.permute.xlu0 %1192
      %1194 = vrot.lane.b32.xlu0 %v1100, 32
      %v1195 = vpop.permute.xlu0 %1194
      %1196 = vrot.lane.b32.xlu0 %v1101, 32
      %v1197 = vpop.permute.xlu0 %1196
      %vm1230 = vcmask 326912
      %1231 = vst.msk [vmem:[#allocation3] sm:$0xff] %vm1230, %v1135
      %1232 = vst.msk [vmem:[#allocation3 + $0x8] sm:$0xff] %vm1230, %v1137
      %1233 = vst.msk [vmem:[#allocation3 + $0x10] sm:$0xff] %vm1230, %v1139
      %1234 = vst.msk [vmem:[#allocation3 + $0x18] sm:$0xff] %vm1230, %v1141
      %1235 = vst.msk [vmem:[#allocation3 + $0x20] sm:$0xff] %vm1230, %v1143
      %1236 = vst.msk [vmem:[#allocation3 + $0x28] sm:$0xff] %vm1230, %v1145
      %1237 = vst.msk [vmem:[#allocation3 + $0x30] sm:$0xff] %vm1230, %v1147
      %1238 = vst.msk [vmem:[#allocation3 + $0x38] sm:$0xff] %vm1230, %v1149
      %1239 = vst.msk [vmem:[#allocation3 + $0x40] sm:$0xff] %vm1230, %v1151
      %1240 = vst.msk [vmem:[#allocation3 + $0x48] sm:$0xff] %vm1230, %v1153
      %1241 = vst.msk [vmem:[#allocation3 + $0x50] sm:$0xff] %vm1230, %v1155
      %1242 = vst.msk [vmem:[#allocation3 + $0x58] sm:$0xff] %vm1230, %v1157
      %1243 = vst.msk [vmem:[#allocation3 + $0x60] sm:$0xff] %vm1230, %v1159
      %1244 = vst.msk [vmem:[#allocation3 + $0x68] sm:$0xff] %vm1230, %v1161
      %1245 = vst.msk [vmem:[#allocation3 + $0x70] sm:$0xff] %vm1230, %v1163
      %1246 = vst.msk [vmem:[#allocation3 + $0x78] sm:$0xff] %vm1230, %v1165
      %1247 = vst.msk [vmem:[#allocation3 + $0x80] sm:$0xff] %vm1230, %v1167
      %1248 = vst.msk [vmem:[#allocation3 + $0x88] sm:$0xff] %vm1230, %v1169
      %1249 = vst.msk [vmem:[#allocation3 + $0x90] sm:$0xff] %vm1230, %v1171
      %1250 = vst.msk [vmem:[#allocation3 + $0x98] sm:$0xff] %vm1230, %v1173
      %1251 = vst.msk [vmem:[#allocation3 + $0xa0] sm:$0xff] %vm1230, %v1175
      %1252 = vst.msk [vmem:[#allocation3 + $0xa8] sm:$0xff] %vm1230, %v1177
      %1253 = vst.msk [vmem:[#allocation3 + $0xb0] sm:$0xff] %vm1230, %v1179
      %1254 = vst.msk [vmem:[#allocation3 + $0xb8] sm:$0xff] %vm1230, %v1181
      %1255 = vst.msk [vmem:[#allocation3 + $0xc0] sm:$0xff] %vm1230, %v1183
      %1256 = vst.msk [vmem:[#allocation3 + $0xc8] sm:$0xff] %vm1230, %v1185
      %1257 = vst.msk [vmem:[#allocation3 + $0xd0] sm:$0xff] %vm1230, %v1187
      %1258 = vst.msk [vmem:[#allocation3 + $0xd8] sm:$0xff] %vm1230, %v1189
      %1259 = vst.msk [vmem:[#allocation3 + $0xe0] sm:$0xff] %vm1230, %v1191
      %1260 = vst.msk [vmem:[#allocation3 + $0xe8] sm:$0xff] %vm1230, %v1193
      %1261 = vst.msk [vmem:[#allocation3 + $0xf0] sm:$0xff] %vm1230, %v1195
      %1262 = vst.msk [vmem:[#allocation3 + $0xf8] sm:$0xff] %vm1230, %v1197
      %v1263 = vld [vmem:[%s394 + $0x2] sm:$0xff]
      %v1264 = vld [vmem:[%s394 + $0xa] sm:$0xff]
      %v1265 = vld [vmem:[%s394 + $0x1a] sm:$0xff]
      %v1266 = vld [vmem:[%s394 + $0x22] sm:$0xff]
      %v1267 = vld [vmem:[%s394 + $0x32] sm:$0xff]
      %v1268 = vld [vmem:[%s394 + $0x3a] sm:$0xff]
      %v1269 = vld [vmem:[%s394 + $0x4a] sm:$0xff]
      %v1270 = vld [vmem:[%s394 + $0x52] sm:$0xff]
      %v1271 = vld [vmem:[%s394 + $0x62] sm:$0xff]
      %v1272 = vld [vmem:[%s394 + $0x6a] sm:$0xff]
      %v1273 = vld [vmem:[%s394 + $0x7a] sm:$0xff]
      %v1274 = vld [vmem:[%s394 + $0x82] sm:$0xff]
      %v1275 = vld [vmem:[%s394 + $0x92] sm:$0xff]
      %v1276 = vld [vmem:[%s394 + $0x9a] sm:$0xff]
      %v1277 = vld [vmem:[%s394 + $0xaa] sm:$0xff]
      %v1278 = vld [vmem:[%s394 + $0xb2] sm:$0xff]
      %v1279 = vld [vmem:[%s394 + $0xc2] sm:$0xff]
      %v1280 = vld [vmem:[%s394 + $0xca] sm:$0xff]
      %v1281 = vld [vmem:[%s394 + $0xda] sm:$0xff]
      %v1282 = vld [vmem:[%s394 + $0xe2] sm:$0xff]
      %v1283 = vld [vmem:[%s394 + $0xf2] sm:$0xff]
      %v1284 = vld [vmem:[%s394 + $0xfa] sm:$0xff]
      %v1285 = vld [vmem:[%s394 + $0x10a] sm:$0xff]
      %v1286 = vld [vmem:[%s394 + $0x112] sm:$0xff]
      %v1287 = vld [vmem:[%s394 + $0x122] sm:$0xff]
      %v1288 = vld [vmem:[%s394 + $0x12a] sm:$0xff]
      %v1289 = vld [vmem:[%s394 + $0x13a] sm:$0xff]
      %v1290 = vld [vmem:[%s394 + $0x142] sm:$0xff]
      %v1291 = vld [vmem:[%s394 + $0x152] sm:$0xff]
      %v1292 = vld [vmem:[%s394 + $0x15a] sm:$0xff]
      %v1293 = vld [vmem:[%s394 + $0x16a] sm:$0xff]
      %v1294 = vld [vmem:[%s394 + $0x172] sm:$0xff]
      %1327 = vrot.lane.b32.xlu0 %v1263, 40
      %v1328 = vpop.permute.xlu0 %1327
      %1329 = vrot.lane.b32.xlu0 %v1264, 40
      %v1330 = vpop.permute.xlu0 %1329
      %1331 = vrot.lane.b32.xlu0 %v1265, 40
      %v1332 = vpop.permute.xlu0 %1331
      %1333 = vrot.lane.b32.xlu0 %v1266, 40
      %v1334 = vpop.permute.xlu0 %1333
      %1335 = vrot.lane.b32.xlu0 %v1267, 40
      %v1336 = vpop.permute.xlu0 %1335
      %1337 = vrot.lane.b32.xlu0 %v1268, 40
      %v1338 = vpop.permute.xlu0 %1337
      %1339 = vrot.lane.b32.xlu0 %v1269, 40
      %v1340 = vpop.permute.xlu0 %1339
      %1341 = vrot.lane.b32.xlu0 %v1270, 40
      %v1342 = vpop.permute.xlu0 %1341
      %1343 = vrot.lane.b32.xlu0 %v1271, 40
      %v1344 = vpop.permute.xlu0 %1343
      %1345 = vrot.lane.b32.xlu0 %v1272, 40
      %v1346 = vpop.permute.xlu0 %1345
      %1347 = vrot.lane.b32.xlu0 %v1273, 40
      %v1348 = vpop.permute.xlu0 %1347
      %1349 = vrot.lane.b32.xlu0 %v1274, 40
      %v1350 = vpop.permute.xlu0 %1349
      %1351 = vrot.lane.b32.xlu0 %v1275, 40
      %v1352 = vpop.permute.xlu0 %1351
      %1353 = vrot.lane.b32.xlu0 %v1276, 40
      %v1354 = vpop.permute.xlu0 %1353
      %1355 = vrot.lane.b32.xlu0 %v1277, 40
      %v1356 = vpop.permute.xlu0 %1355
      %1357 = vrot.lane.b32.xlu0 %v1278, 40
      %v1358 = vpop.permute.xlu0 %1357
      %1359 = vrot.lane.b32.xlu0 %v1279, 40
      %v1360 = vpop.permute.xlu0 %1359
      %1361 = vrot.lane.b32.xlu0 %v1280, 40
      %v1362 = vpop.permute.xlu0 %1361
      %1363 = vrot.lane.b32.xlu0 %v1281, 40
      %v1364 = vpop.permute.xlu0 %1363
      %1365 = vrot.lane.b32.xlu0 %v1282, 40
      %v1366 = vpop.permute.xlu0 %1365
      %1367 = vrot.lane.b32.xlu0 %v1283, 40
      %v1368 = vpop.permute.xlu0 %1367
      %1369 = vrot.lane.b32.xlu0 %v1284, 40
      %v1370 = vpop.permute.xlu0 %1369
      %1371 = vrot.lane.b32.xlu0 %v1285, 40
      %v1372 = vpop.permute.xlu0 %1371
      %1373 = vrot.lane.b32.xlu0 %v1286, 40
      %v1374 = vpop.permute.xlu0 %1373
      %1375 = vrot.lane.b32.xlu0 %v1287, 40
      %v1376 = vpop.permute.xlu0 %1375
      %1377 = vrot.lane.b32.xlu0 %v1288, 40
      %v1378 = vpop.permute.xlu0 %1377
      %1379 = vrot.lane.b32.xlu0 %v1289, 40
      %v1380 = vpop.permute.xlu0 %1379
      %1381 = vrot.lane.b32.xlu0 %v1290, 40
      %v1382 = vpop.permute.xlu0 %1381
      %1383 = vrot.lane.b32.xlu0 %v1291, 40
      %v1384 = vpop.permute.xlu0 %1383
      %1385 = vrot.lane.b32.xlu0 %v1292, 40
      %v1386 = vpop.permute.xlu0 %1385
      %1387 = vrot.lane.b32.xlu0 %v1293, 40
      %v1388 = vpop.permute.xlu0 %1387
      %1389 = vrot.lane.b32.xlu0 %v1294, 40
      %v1390 = vpop.permute.xlu0 %1389
      %vm1423 = vcmask 392512
      %1424 = vst.msk [vmem:[#allocation3] sm:$0xff] %vm1423, %v1328
      %1425 = vst.msk [vmem:[#allocation3 + $0x8] sm:$0xff] %vm1423, %v1330
      %1426 = vst.msk [vmem:[#allocation3 + $0x10] sm:$0xff] %vm1423, %v1332
      %1427 = vst.msk [vmem:[#allocation3 + $0x18] sm:$0xff] %vm1423, %v1334
      %1428 = vst.msk [vmem:[#allocation3 + $0x20] sm:$0xff] %vm1423, %v1336
      %1429 = vst.msk [vmem:[#allocation3 + $0x28] sm:$0xff] %vm1423, %v1338
      %1430 = vst.msk [vmem:[#allocation3 + $0x30] sm:$0xff] %vm1423, %v1340
      %1431 = vst.msk [vmem:[#allocation3 + $0x38] sm:$0xff] %vm1423, %v1342
      %1432 = vst.msk [vmem:[#allocation3 + $0x40] sm:$0xff] %vm1423, %v1344
      %1433 = vst.msk [vmem:[#allocation3 + $0x48] sm:$0xff] %vm1423, %v1346
      %1434 = vst.msk [vmem:[#allocation3 + $0x50] sm:$0xff] %vm1423, %v1348
      %1435 = vst.msk [vmem:[#allocation3 + $0x58] sm:$0xff] %vm1423, %v1350
      %1436 = vst.msk [vmem:[#allocation3 + $0x60] sm:$0xff] %vm1423, %v1352
      %1437 = vst.msk [vmem:[#allocation3 + $0x68] sm:$0xff] %vm1423, %v1354
      %1438 = vst.msk [vmem:[#allocation3 + $0x70] sm:$0xff] %vm1423, %v1356
      %1439 = vst.msk [vmem:[#allocation3 + $0x78] sm:$0xff] %vm1423, %v1358
      %1440 = vst.msk [vmem:[#allocation3 + $0x80] sm:$0xff] %vm1423, %v1360
      %1441 = vst.msk [vmem:[#allocation3 + $0x88] sm:$0xff] %vm1423, %v1362
      %1442 = vst.msk [vmem:[#allocation3 + $0x90] sm:$0xff] %vm1423, %v1364
      %1443 = vst.msk [vmem:[#allocation3 + $0x98] sm:$0xff] %vm1423, %v1366
      %1444 = vst.msk [vmem:[#allocation3 + $0xa0] sm:$0xff] %vm1423, %v1368
      %1445 = vst.msk [vmem:[#allocation3 + $0xa8] sm:$0xff] %vm1423, %v1370
      %1446 = vst.msk [vmem:[#allocation3 + $0xb0] sm:$0xff] %vm1423, %v1372
      %1447 = vst.msk [vmem:[#allocation3 + $0xb8] sm:$0xff] %vm1423, %v1374
      %1448 = vst.msk [vmem:[#allocation3 + $0xc0] sm:$0xff] %vm1423, %v1376
      %1449 = vst.msk [vmem:[#allocation3 + $0xc8] sm:$0xff] %vm1423, %v1378
      %1450 = vst.msk [vmem:[#allocation3 + $0xd0] sm:$0xff] %vm1423, %v1380
      %1451 = vst.msk [vmem:[#allocation3 + $0xd8] sm:$0xff] %vm1423, %v1382
      %1452 = vst.msk [vmem:[#allocation3 + $0xe0] sm:$0xff] %vm1423, %v1384
      %1453 = vst.msk [vmem:[#allocation3 + $0xe8] sm:$0xff] %vm1423, %v1386
      %1454 = vst.msk [vmem:[#allocation3 + $0xf0] sm:$0xff] %vm1423, %v1388
      %1455 = vst.msk [vmem:[#allocation3 + $0xf8] sm:$0xff] %vm1423, %v1390
      %s1456 = scalar_lea.vmem [#allocation2], 48
      %v1457 = vld [vmem:[%s1456] sm:$0xff]
      %v1458 = vld [vmem:[%s1456 + $0x8] sm:$0xff]
      %v1459 = vld [vmem:[%s1456 + $0x18] sm:$0xff]
      %v1460 = vld [vmem:[%s1456 + $0x20] sm:$0xff]
      %v1461 = vld [vmem:[%s1456 + $0x30] sm:$0xff]
      %v1462 = vld [vmem:[%s1456 + $0x38] sm:$0xff]
      %v1463 = vld [vmem:[%s1456 + $0x48] sm:$0xff]
      %v1464 = vld [vmem:[%s1456 + $0x50] sm:$0xff]
      %v1465 = vld [vmem:[%s1456 + $0x60] sm:$0xff]
      %v1466 = vld [vmem:[%s1456 + $0x68] sm:$0xff]
      %v1467 = vld [vmem:[%s1456 + $0x78] sm:$0xff]
      %v1468 = vld [vmem:[%s1456 + $0x80] sm:$0xff]
      %v1469 = vld [vmem:[%s1456 + $0x90] sm:$0xff]
      %v1470 = vld [vmem:[%s1456 + $0x98] sm:$0xff]
      %v1471 = vld [vmem:[%s1456 + $0xa8] sm:$0xff]
      %v1472 = vld [vmem:[%s1456 + $0xb0] sm:$0xff]
      %v1473 = vld [vmem:[%s1456 + $0xc0] sm:$0xff]
      %v1474 = vld [vmem:[%s1456 + $0xc8] sm:$0xff]
      %v1475 = vld [vmem:[%s1456 + $0xd8] sm:$0xff]
      %v1476 = vld [vmem:[%s1456 + $0xe0] sm:$0xff]
      %v1477 = vld [vmem:[%s1456 + $0xf0] sm:$0xff]
      %v1478 = vld [vmem:[%s1456 + $0xf8] sm:$0xff]
      %v1479 = vld [vmem:[%s1456 + $0x108] sm:$0xff]
      %v1480 = vld [vmem:[%s1456 + $0x110] sm:$0xff]
      %v1481 = vld [vmem:[%s1456 + $0x120] sm:$0xff]
      %v1482 = vld [vmem:[%s1456 + $0x128] sm:$0xff]
      %v1483 = vld [vmem:[%s1456 + $0x138] sm:$0xff]
      %v1484 = vld [vmem:[%s1456 + $0x140] sm:$0xff]
      %v1485 = vld [vmem:[%s1456 + $0x150] sm:$0xff]
      %v1486 = vld [vmem:[%s1456 + $0x158] sm:$0xff]
      %v1487 = vld [vmem:[%s1456 + $0x168] sm:$0xff]
      %v1488 = vld [vmem:[%s1456 + $0x170] sm:$0xff]
      %1521 = vrot.lane.b32.xlu0 %v1457, 48
      %v1522 = vpop.permute.xlu0 %1521
      %1523 = vrot.lane.b32.xlu0 %v1458, 48
      %v1524 = vpop.permute.xlu0 %1523
      %1525 = vrot.lane.b32.xlu0 %v1459, 48
      %v1526 = vpop.permute.xlu0 %1525
      %1527 = vrot.lane.b32.xlu0 %v1460, 48
      %v1528 = vpop.permute.xlu0 %1527
      %1529 = vrot.lane.b32.xlu0 %v1461, 48
      %v1530 = vpop.permute.xlu0 %1529
      %1531 = vrot.lane.b32.xlu0 %v1462, 48
      %v1532 = vpop.permute.xlu0 %1531
      %1533 = vrot.lane.b32.xlu0 %v1463, 48
      %v1534 = vpop.permute.xlu0 %1533
      %1535 = vrot.lane.b32.xlu0 %v1464, 48
      %v1536 = vpop.permute.xlu0 %1535
      %1537 = vrot.lane.b32.xlu0 %v1465, 48
      %v1538 = vpop.permute.xlu0 %1537
      %1539 = vrot.lane.b32.xlu0 %v1466, 48
      %v1540 = vpop.permute.xlu0 %1539
      %1541 = vrot.lane.b32.xlu0 %v1467, 48
      %v1542 = vpop.permute.xlu0 %1541
      %1543 = vrot.lane.b32.xlu0 %v1468, 48
      %v1544 = vpop.permute.xlu0 %1543
      %1545 = vrot.lane.b32.xlu0 %v1469, 48
      %v1546 = vpop.permute.xlu0 %1545
      %1547 = vrot.lane.b32.xlu0 %v1470, 48
      %v1548 = vpop.permute.xlu0 %1547
      %1549 = vrot.lane.b32.xlu0 %v1471, 48
      %v1550 = vpop.permute.xlu0 %1549
      %1551 = vrot.lane.b32.xlu0 %v1472, 48
      %v1552 = vpop.permute.xlu0 %1551
      %1553 = vrot.lane.b32.xlu0 %v1473, 48
      %v1554 = vpop.permute.xlu0 %1553
      %1555 = vrot.lane.b32.xlu0 %v1474, 48
      %v1556 = vpop.permute.xlu0 %1555
      %1557 = vrot.lane.b32.xlu0 %v1475, 48
      %v1558 = vpop.permute.xlu0 %1557
      %1559 = vrot.lane.b32.xlu0 %v1476, 48
      %v1560 = vpop.permute.xlu0 %1559
      %1561 = vrot.lane.b32.xlu0 %v1477, 48
      %v1562 = vpop.permute.xlu0 %1561
      %1563 = vrot.lane.b32.xlu0 %v1478, 48
      %v1564 = vpop.permute.xlu0 %1563
      %1565 = vrot.lane.b32.xlu0 %v1479, 48
      %v1566 = vpop.permute.xlu0 %1565
      %1567 = vrot.lane.b32.xlu0 %v1480, 48
      %v1568 = vpop.permute.xlu0 %1567
      %1569 = vrot.lane.b32.xlu0 %v1481, 48
      %v1570 = vpop.permute.xlu0 %1569
      %1571 = vrot.lane.b32.xlu0 %v1482, 48
      %v1572 = vpop.permute.xlu0 %1571
      %1573 = vrot.lane.b32.xlu0 %v1483, 48
      %v1574 = vpop.permute.xlu0 %1573
      %1575 = vrot.lane.b32.xlu0 %v1484, 48
      %v1576 = vpop.permute.xlu0 %1575
      %1577 = vrot.lane.b32.xlu0 %v1485, 48
      %v1578 = vpop.permute.xlu0 %1577
      %1579 = vrot.lane.b32.xlu0 %v1486, 48
      %v1580 = vpop.permute.xlu0 %1579
      %1581 = vrot.lane.b32.xlu0 %v1487, 48
      %v1582 = vpop.permute.xlu0 %1581
      %1583 = vrot.lane.b32.xlu0 %v1488, 48
      %v1584 = vpop.permute.xlu0 %1583
      %vm1617 = vcmask 458112
      %1618 = vst.msk [vmem:[#allocation3] sm:$0xff] %vm1617, %v1522
      %1619 = vst.msk [vmem:[#allocation3 + $0x8] sm:$0xff] %vm1617, %v1524
      %1620 = vst.msk [vmem:[#allocation3 + $0x10] sm:$0xff] %vm1617, %v1526
      %1621 = vst.msk [vmem:[#allocation3 + $0x18] sm:$0xff] %vm1617, %v1528
      %1622 = vst.msk [vmem:[#allocation3 + $0x20] sm:$0xff] %vm1617, %v1530
      %1623 = vst.msk [vmem:[#allocation3 + $0x28] sm:$0xff] %vm1617, %v1532
      %1624 = vst.msk [vmem:[#allocation3 + $0x30] sm:$0xff] %vm1617, %v1534
      %1625 = vst.msk [vmem:[#allocation3 + $0x38] sm:$0xff] %vm1617, %v1536
      %1626 = vst.msk [vmem:[#allocation3 + $0x40] sm:$0xff] %vm1617, %v1538
      %1627 = vst.msk [vmem:[#allocation3 + $0x48] sm:$0xff] %vm1617, %v1540
      %1628 = vst.msk [vmem:[#allocation3 + $0x50] sm:$0xff] %vm1617, %v1542
      %1629 = vst.msk [vmem:[#allocation3 + $0x58] sm:$0xff] %vm1617, %v1544
      %1630 = vst.msk [vmem:[#allocation3 + $0x60] sm:$0xff] %vm1617, %v1546
      %1631 = vst.msk [vmem:[#allocation3 + $0x68] sm:$0xff] %vm1617, %v1548
      %1632 = vst.msk [vmem:[#allocation3 + $0x70] sm:$0xff] %vm1617, %v1550
      %1633 = vst.msk [vmem:[#allocation3 + $0x78] sm:$0xff] %vm1617, %v1552
      %1634 = vst.msk [vmem:[#allocation3 + $0x80] sm:$0xff] %vm1617, %v1554
      %1635 = vst.msk [vmem:[#allocation3 + $0x88] sm:$0xff] %vm1617, %v1556
      %1636 = vst.msk [vmem:[#allocation3 + $0x90] sm:$0xff] %vm1617, %v1558
      %1637 = vst.msk [vmem:[#allocation3 + $0x98] sm:$0xff] %vm1617, %v1560
      %1638 = vst.msk [vmem:[#allocation3 + $0xa0] sm:$0xff] %vm1617, %v1562
      %1639 = vst.msk [vmem:[#allocation3 + $0xa8] sm:$0xff] %vm1617, %v1564
      %1640 = vst.msk [vmem:[#allocation3 + $0xb0] sm:$0xff] %vm1617, %v1566
      %1641 = vst.msk [vmem:[#allocation3 + $0xb8] sm:$0xff] %vm1617, %v1568
      %1642 = vst.msk [vmem:[#allocation3 + $0xc0] sm:$0xff] %vm1617, %v1570
      %1643 = vst.msk [vmem:[#allocation3 + $0xc8] sm:$0xff] %vm1617, %v1572
      %1644 = vst.msk [vmem:[#allocation3 + $0xd0] sm:$0xff] %vm1617, %v1574
      %1645 = vst.msk [vmem:[#allocation3 + $0xd8] sm:$0xff] %vm1617, %v1576
      %1646 = vst.msk [vmem:[#allocation3 + $0xe0] sm:$0xff] %vm1617, %v1578
      %1647 = vst.msk [vmem:[#allocation3 + $0xe8] sm:$0xff] %vm1617, %v1580
      %1648 = vst.msk [vmem:[#allocation3 + $0xf0] sm:$0xff] %vm1617, %v1582
      %1649 = vst.msk [vmem:[#allocation3 + $0xf8] sm:$0xff] %vm1617, %v1584
      %v1650 = vld [vmem:[%s1456 + $0x1] sm:$0xff]
      %v1651 = vld [vmem:[%s1456 + $0x9] sm:$0xff]
      %v1652 = vld [vmem:[%s1456 + $0x19] sm:$0xff]
      %v1653 = vld [vmem:[%s1456 + $0x21] sm:$0xff]
      %v1654 = vld [vmem:[%s1456 + $0x31] sm:$0xff]
      %v1655 = vld [vmem:[%s1456 + $0x39] sm:$0xff]
      %v1656 = vld [vmem:[%s1456 + $0x49] sm:$0xff]
      %v1657 = vld [vmem:[%s1456 + $0x51] sm:$0xff]
      %v1658 = vld [vmem:[%s1456 + $0x61] sm:$0xff]
      %v1659 = vld [vmem:[%s1456 + $0x69] sm:$0xff]
      %v1660 = vld [vmem:[%s1456 + $0x79] sm:$0xff]
      %v1661 = vld [vmem:[%s1456 + $0x81] sm:$0xff]
      %v1662 = vld [vmem:[%s1456 + $0x91] sm:$0xff]
      %v1663 = vld [vmem:[%s1456 + $0x99] sm:$0xff]
      %v1664 = vld [vmem:[%s1456 + $0xa9] sm:$0xff]
      %v1665 = vld [vmem:[%s1456 + $0xb1] sm:$0xff]
      %v1666 = vld [vmem:[%s1456 + $0xc1] sm:$0xff]
      %v1667 = vld [vmem:[%s1456 + $0xc9] sm:$0xff]
      %v1668 = vld [vmem:[%s1456 + $0xd9] sm:$0xff]
      %v1669 = vld [vmem:[%s1456 + $0xe1] sm:$0xff]
      %v1670 = vld [vmem:[%s1456 + $0xf1] sm:$0xff]
      %v1671 = vld [vmem:[%s1456 + $0xf9] sm:$0xff]
      %v1672 = vld [vmem:[%s1456 + $0x109] sm:$0xff]
      %v1673 = vld [vmem:[%s1456 + $0x111] sm:$0xff]
      %v1674 = vld [vmem:[%s1456 + $0x121] sm:$0xff]
      %v1675 = vld [vmem:[%s1456 + $0x129] sm:$0xff]
      %v1676 = vld [vmem:[%s1456 + $0x139] sm:$0xff]
      %v1677 = vld [vmem:[%s1456 + $0x141] sm:$0xff]
      %v1678 = vld [vmem:[%s1456 + $0x151] sm:$0xff]
      %v1679 = vld [vmem:[%s1456 + $0x159] sm:$0xff]
      %v1680 = vld [vmem:[%s1456 + $0x169] sm:$0xff]
      %v1681 = vld [vmem:[%s1456 + $0x171] sm:$0xff]
      %1714 = vrot.lane.b32.xlu0 %v1650, 56
      %v1715 = vpop.permute.xlu0 %1714
      %1716 = vrot.lane.b32.xlu0 %v1651, 56
      %v1717 = vpop.permute.xlu0 %1716
      %1718 = vrot.lane.b32.xlu0 %v1652, 56
      %v1719 = vpop.permute.xlu0 %1718
      %1720 = vrot.lane.b32.xlu0 %v1653, 56
      %v1721 = vpop.permute.xlu0 %1720
      %1722 = vrot.lane.b32.xlu0 %v1654, 56
      %v1723 = vpop.permute.xlu0 %1722
      %1724 = vrot.lane.b32.xlu0 %v1655, 56
      %v1725 = vpop.permute.xlu0 %1724
      %1726 = vrot.lane.b32.xlu0 %v1656, 56
      %v1727 = vpop.permute.xlu0 %1726
      %1728 = vrot.lane.b32.xlu0 %v1657, 56
      %v1729 = vpop.permute.xlu0 %1728
      %1730 = vrot.lane.b32.xlu0 %v1658, 56
      %v1731 = vpop.permute.xlu0 %1730
      %1732 = vrot.lane.b32.xlu0 %v1659, 56
      %v1733 = vpop.permute.xlu0 %1732
      %1734 = vrot.lane.b32.xlu0 %v1660, 56
      %v1735 = vpop.permute.xlu0 %1734
      %1736 = vrot.lane.b32.xlu0 %v1661, 56
      %v1737 = vpop.permute.xlu0 %1736
      %1738 = vrot.lane.b32.xlu0 %v1662, 56
      %v1739 = vpop.permute.xlu0 %1738
      %1740 = vrot.lane.b32.xlu0 %v1663, 56
      %v1741 = vpop.permute.xlu0 %1740
      %1742 = vrot.lane.b32.xlu0 %v1664, 56
      %v1743 = vpop.permute.xlu0 %1742
      %1744 = vrot.lane.b32.xlu0 %v1665, 56
      %v1745 = vpop.permute.xlu0 %1744
      %1746 = vrot.lane.b32.xlu0 %v1666, 56
      %v1747 = vpop.permute.xlu0 %1746
      %1748 = vrot.lane.b32.xlu0 %v1667, 56
      %v1749 = vpop.permute.xlu0 %1748
      %1750 = vrot.lane.b32.xlu0 %v1668, 56
      %v1751 = vpop.permute.xlu0 %1750
      %1752 = vrot.lane.b32.xlu0 %v1669, 56
      %v1753 = vpop.permute.xlu0 %1752
      %1754 = vrot.lane.b32.xlu0 %v1670, 56
      %v1755 = vpop.permute.xlu0 %1754
      %1756 = vrot.lane.b32.xlu0 %v1671, 56
      %v1757 = vpop.permute.xlu0 %1756
      %1758 = vrot.lane.b32.xlu0 %v1672, 56
      %v1759 = vpop.permute.xlu0 %1758
      %1760 = vrot.lane.b32.xlu0 %v1673, 56
      %v1761 = vpop.permute.xlu0 %1760
      %1762 = vrot.lane.b32.xlu0 %v1674, 56
      %v1763 = vpop.permute.xlu0 %1762
      %1764 = vrot.lane.b32.xlu0 %v1675, 56
      %v1765 = vpop.permute.xlu0 %1764
      %1766 = vrot.lane.b32.xlu0 %v1676, 56
      %v1767 = vpop.permute.xlu0 %1766
      %1768 = vrot.lane.b32.xlu0 %v1677, 56
      %v1769 = vpop.permute.xlu0 %1768
      %1770 = vrot.lane.b32.xlu0 %v1678, 56
      %v1771 = vpop.permute.xlu0 %1770
      %1772 = vrot.lane.b32.xlu0 %v1679, 56
      %v1773 = vpop.permute.xlu0 %1772
      %1774 = vrot.lane.b32.xlu0 %v1680, 56
      %v1775 = vpop.permute.xlu0 %1774
      %1776 = vrot.lane.b32.xlu0 %v1681, 56
      %v1777 = vpop.permute.xlu0 %1776
      %vm1810 = vcmask 523712
      %1811 = vst.msk [vmem:[#allocation3] sm:$0xff] %vm1810, %v1715
      %1812 = vst.msk [vmem:[#allocation3 + $0x8] sm:$0xff] %vm1810, %v1717
      %1813 = vst.msk [vmem:[#allocation3 + $0x10] sm:$0xff] %vm1810, %v1719
      %1814 = vst.msk [vmem:[#allocation3 + $0x18] sm:$0xff] %vm1810, %v1721
      %1815 = vst.msk [vmem:[#allocation3 + $0x20] sm:$0xff] %vm1810, %v1723
      %1816 = vst.msk [vmem:[#allocation3 + $0x28] sm:$0xff] %vm1810, %v1725
      %1817 = vst.msk [vmem:[#allocation3 + $0x30] sm:$0xff] %vm1810, %v1727
      %1818 = vst.msk [vmem:[#allocation3 + $0x38] sm:$0xff] %vm1810, %v1729
      %1819 = vst.msk [vmem:[#allocation3 + $0x40] sm:$0xff] %vm1810, %v1731
      %1820 = vst.msk [vmem:[#allocation3 + $0x48] sm:$0xff] %vm1810, %v1733
      %1821 = vst.msk [vmem:[#allocation3 + $0x50] sm:$0xff] %vm1810, %v1735
      %1822 = vst.msk [vmem:[#allocation3 + $0x58] sm:$0xff] %vm1810, %v1737
      %1823 = vst.msk [vmem:[#allocation3 + $0x60] sm:$0xff] %vm1810, %v1739
      %1824 = vst.msk [vmem:[#allocation3 + $0x68] sm:$0xff] %vm1810, %v1741
      %1825 = vst.msk [vmem:[#allocation3 + $0x70] sm:$0xff] %vm1810, %v1743
      %1826 = vst.msk [vmem:[#allocation3 + $0x78] sm:$0xff] %vm1810, %v1745
      %1827 = vst.msk [vmem:[#allocation3 + $0x80] sm:$0xff] %vm1810, %v1747
      %1828 = vst.msk [vmem:[#allocation3 + $0x88] sm:$0xff] %vm1810, %v1749
      %1829 = vst.msk [vmem:[#allocation3 + $0x90] sm:$0xff] %vm1810, %v1751
      %1830 = vst.msk [vmem:[#allocation3 + $0x98] sm:$0xff] %vm1810, %v1753
      %1831 = vst.msk [vmem:[#allocation3 + $0xa0] sm:$0xff] %vm1810, %v1755
      %1832 = vst.msk [vmem:[#allocation3 + $0xa8] sm:$0xff] %vm1810, %v1757
      %1833 = vst.msk [vmem:[#allocation3 + $0xb0] sm:$0xff] %vm1810, %v1759
      %1834 = vst.msk [vmem:[#allocation3 + $0xb8] sm:$0xff] %vm1810, %v1761
      %1835 = vst.msk [vmem:[#allocation3 + $0xc0] sm:$0xff] %vm1810, %v1763
      %1836 = vst.msk [vmem:[#allocation3 + $0xc8] sm:$0xff] %vm1810, %v1765
      %1837 = vst.msk [vmem:[#allocation3 + $0xd0] sm:$0xff] %vm1810, %v1767
      %1838 = vst.msk [vmem:[#allocation3 + $0xd8] sm:$0xff] %vm1810, %v1769
      %1839 = vst.msk [vmem:[#allocation3 + $0xe0] sm:$0xff] %vm1810, %v1771
      %1840 = vst.msk [vmem:[#allocation3 + $0xe8] sm:$0xff] %vm1810, %v1773
      %1841 = vst.msk [vmem:[#allocation3 + $0xf0] sm:$0xff] %vm1810, %v1775
      %1842 = vst.msk [vmem:[#allocation3 + $0xf8] sm:$0xff] %vm1810, %v1777
      %v1843 = vld [vmem:[%s1456 + $0x2] sm:$0xff]
      %v1844 = vld [vmem:[%s1456 + $0xa] sm:$0xff]
      %v1845 = vld [vmem:[%s1456 + $0x1a] sm:$0xff]
      %v1846 = vld [vmem:[%s1456 + $0x22] sm:$0xff]
      %v1847 = vld [vmem:[%s1456 + $0x32] sm:$0xff]
      %v1848 = vld [vmem:[%s1456 + $0x3a] sm:$0xff]
      %v1849 = vld [vmem:[%s1456 + $0x4a] sm:$0xff]
      %v1850 = vld [vmem:[%s1456 + $0x52] sm:$0xff]
      %v1851 = vld [vmem:[%s1456 + $0x62] sm:$0xff]
      %v1852 = vld [vmem:[%s1456 + $0x6a] sm:$0xff]
      %v1853 = vld [vmem:[%s1456 + $0x7a] sm:$0xff]
      %v1854 = vld [vmem:[%s1456 + $0x82] sm:$0xff]
      %v1855 = vld [vmem:[%s1456 + $0x92] sm:$0xff]
      %v1856 = vld [vmem:[%s1456 + $0x9a] sm:$0xff]
      %v1857 = vld [vmem:[%s1456 + $0xaa] sm:$0xff]
      %v1858 = vld [vmem:[%s1456 + $0xb2] sm:$0xff]
      %v1859 = vld [vmem:[%s1456 + $0xc2] sm:$0xff]
      %v1860 = vld [vmem:[%s1456 + $0xca] sm:$0xff]
      %v1861 = vld [vmem:[%s1456 + $0xda] sm:$0xff]
      %v1862 = vld [vmem:[%s1456 + $0xe2] sm:$0xff]
      %v1863 = vld [vmem:[%s1456 + $0xf2] sm:$0xff]
      %v1864 = vld [vmem:[%s1456 + $0xfa] sm:$0xff]
      %v1865 = vld [vmem:[%s1456 + $0x10a] sm:$0xff]
      %v1866 = vld [vmem:[%s1456 + $0x112] sm:$0xff]
      %v1867 = vld [vmem:[%s1456 + $0x122] sm:$0xff]
      %v1868 = vld [vmem:[%s1456 + $0x12a] sm:$0xff]
      %v1869 = vld [vmem:[%s1456 + $0x13a] sm:$0xff]
      %v1870 = vld [vmem:[%s1456 + $0x142] sm:$0xff]
      %v1871 = vld [vmem:[%s1456 + $0x152] sm:$0xff]
      %v1872 = vld [vmem:[%s1456 + $0x15a] sm:$0xff]
      %v1873 = vld [vmem:[%s1456 + $0x16a] sm:$0xff]
      %v1874 = vld [vmem:[%s1456 + $0x172] sm:$0xff]
      %1907 = vrot.lane.b32.xlu0 %v1843, 64
      %v1908 = vpop.permute.xlu0 %1907
      %1909 = vrot.lane.b32.xlu0 %v1844, 64
      %v1910 = vpop.permute.xlu0 %1909
      %1911 = vrot.lane.b32.xlu0 %v1845, 64
      %v1912 = vpop.permute.xlu0 %1911
      %1913 = vrot.lane.b32.xlu0 %v1846, 64
      %v1914 = vpop.permute.xlu0 %1913
      %1915 = vrot.lane.b32.xlu0 %v1847, 64
      %v1916 = vpop.permute.xlu0 %1915
      %1917 = vrot.lane.b32.xlu0 %v1848, 64
      %v1918 = vpop.permute.xlu0 %1917
      %1919 = vrot.lane.b32.xlu0 %v1849, 64
      %v1920 = vpop.permute.xlu0 %1919
      %1921 = vrot.lane.b32.xlu0 %v1850, 64
      %v1922 = vpop.permute.xlu0 %1921
      %1923 = vrot.lane.b32.xlu0 %v1851, 64
      %v1924 = vpop.permute.xlu0 %1923
      %1925 = vrot.lane.b32.xlu0 %v1852, 64
      %v1926 = vpop.permute.xlu0 %1925
      %1927 = vrot.lane.b32.xlu0 %v1853, 64
      %v1928 = vpop.permute.xlu0 %1927
      %1929 = vrot.lane.b32.xlu0 %v1854, 64
      %v1930 = vpop.permute.xlu0 %1929
      %1931 = vrot.lane.b32.xlu0 %v1855, 64
      %v1932 = vpop.permute.xlu0 %1931
      %1933 = vrot.lane.b32.xlu0 %v1856, 64
      %v1934 = vpop.permute.xlu0 %1933
      %1935 = vrot.lane.b32.xlu0 %v1857, 64
      %v1936 = vpop.permute.xlu0 %1935
      %1937 = vrot.lane.b32.xlu0 %v1858, 64
      %v1938 = vpop.permute.xlu0 %1937
      %1939 = vrot.lane.b32.xlu0 %v1859, 64
      %v1940 = vpop.permute.xlu0 %1939
      %1941 = vrot.lane.b32.xlu0 %v1860, 64
      %v1942 = vpop.permute.xlu0 %1941
      %1943 = vrot.lane.b32.xlu0 %v1861, 64
      %v1944 = vpop.permute.xlu0 %1943
      %1945 = vrot.lane.b32.xlu0 %v1862, 64
      %v1946 = vpop.permute.xlu0 %1945
      %1947 = vrot.lane.b32.xlu0 %v1863, 64
      %v1948 = vpop.permute.xlu0 %1947
      %1949 = vrot.lane.b32.xlu0 %v1864, 64
      %v1950 = vpop.permute.xlu0 %1949
      %1951 = vrot.lane.b32.xlu0 %v1865, 64
      %v1952 = vpop.permute.xlu0 %1951
      %1953 = vrot.lane.b32.xlu0 %v1866, 64
      %v1954 = vpop.permute.xlu0 %1953
      %1955 = vrot.lane.b32.xlu0 %v1867, 64
      %v1956 = vpop.permute.xlu0 %1955
      %1957 = vrot.lane.b32.xlu0 %v1868, 64
      %v1958 = vpop.permute.xlu0 %1957
      %1959 = vrot.lane.b32.xlu0 %v1869, 64
      %v1960 = vpop.permute.xlu0 %1959
      %1961 = vrot.lane.b32.xlu0 %v1870, 64
      %v1962 = vpop.permute.xlu0 %1961
      %1963 = vrot.lane.b32.xlu0 %v1871, 64
      %v1964 = vpop.permute.xlu0 %1963
      %1965 = vrot.lane.b32.xlu0 %v1872, 64
      %v1966 = vpop.permute.xlu0 %1965
      %1967 = vrot.lane.b32.xlu0 %v1873, 64
      %v1968 = vpop.permute.xlu0 %1967
      %1969 = vrot.lane.b32.xlu0 %v1874, 64
      %v1970 = vpop.permute.xlu0 %1969
      %vm2003 = vcmask 589312
      %2004 = vst.msk [vmem:[#allocation3] sm:$0xff] %vm2003, %v1908
      %2005 = vst.msk [vmem:[#allocation3 + $0x8] sm:$0xff] %vm2003, %v1910
      %2006 = vst.msk [vmem:[#allocation3 + $0x10] sm:$0xff] %vm2003, %v1912
      %2007 = vst.msk [vmem:[#allocation3 + $0x18] sm:$0xff] %vm2003, %v1914
      %2008 = vst.msk [vmem:[#allocation3 + $0x20] sm:$0xff] %vm2003, %v1916
      %2009 = vst.msk [vmem:[#allocation3 + $0x28] sm:$0xff] %vm2003, %v1918
      %2010 = vst.msk [vmem:[#allocation3 + $0x30] sm:$0xff] %vm2003, %v1920
      %2011 = vst.msk [vmem:[#allocation3 + $0x38] sm:$0xff] %vm2003, %v1922
      %2012 = vst.msk [vmem:[#allocation3 + $0x40] sm:$0xff] %vm2003, %v1924
      %2013 = vst.msk [vmem:[#allocation3 + $0x48] sm:$0xff] %vm2003, %v1926
      %2014 = vst.msk [vmem:[#allocation3 + $0x50] sm:$0xff] %vm2003, %v1928
      %2015 = vst.msk [vmem:[#allocation3 + $0x58] sm:$0xff] %vm2003, %v1930
      %2016 = vst.msk [vmem:[#allocation3 + $0x60] sm:$0xff] %vm2003, %v1932
      %2017 = vst.msk [vmem:[#allocation3 + $0x68] sm:$0xff] %vm2003, %v1934
      %2018 = vst.msk [vmem:[#allocation3 + $0x70] sm:$0xff] %vm2003, %v1936
      %2019 = vst.msk [vmem:[#allocation3 + $0x78] sm:$0xff] %vm2003, %v1938
      %2020 = vst.msk [vmem:[#allocation3 + $0x80] sm:$0xff] %vm2003, %v1940
      %2021 = vst.msk [vmem:[#allocation3 + $0x88] sm:$0xff] %vm2003, %v1942
      %2022 = vst.msk [vmem:[#allocation3 + $0x90] sm:$0xff] %vm2003, %v1944
      %2023 = vst.msk [vmem:[#allocation3 + $0x98] sm:$0xff] %vm2003, %v1946
      %2024 = vst.msk [vmem:[#allocation3 + $0xa0] sm:$0xff] %vm2003, %v1948
      %2025 = vst.msk [vmem:[#allocation3 + $0xa8] sm:$0xff] %vm2003, %v1950
      %2026 = vst.msk [vmem:[#allocation3 + $0xb0] sm:$0xff] %vm2003, %v1952
      %2027 = vst.msk [vmem:[#allocation3 + $0xb8] sm:$0xff] %vm2003, %v1954
      %2028 = vst.msk [vmem:[#allocation3 + $0xc0] sm:$0xff] %vm2003, %v1956
      %2029 = vst.msk [vmem:[#allocation3 + $0xc8] sm:$0xff] %vm2003, %v1958
      %2030 = vst.msk [vmem:[#allocation3 + $0xd0] sm:$0xff] %vm2003, %v1960
      %2031 = vst.msk [vmem:[#allocation3 + $0xd8] sm:$0xff] %vm2003, %v1962
      %2032 = vst.msk [vmem:[#allocation3 + $0xe0] sm:$0xff] %vm2003, %v1964
      %2033 = vst.msk [vmem:[#allocation3 + $0xe8] sm:$0xff] %vm2003, %v1966
      %2034 = vst.msk [vmem:[#allocation3 + $0xf0] sm:$0xff] %vm2003, %v1968
      %2035 = vst.msk [vmem:[#allocation3 + $0xf8] sm:$0xff] %vm2003, %v1970
      %v2036 = vld [vmem:[#allocation3] sm:$0xff]
      %v2037 = vld [vmem:[#allocation3 + $0x8] sm:$0xff]
      %v2038 = vld [vmem:[#allocation3 + $0x10] sm:$0xff]
      %v2039 = vld [vmem:[#allocation3 + $0x18] sm:$0xff]
      %v2040 = vld [vmem:[#allocation3 + $0x20] sm:$0xff]
      %v2041 = vld [vmem:[#allocation3 + $0x28] sm:$0xff]
      %v2042 = vld [vmem:[#allocation3 + $0x30] sm:$0xff]
      %v2043 = vld [vmem:[#allocation3 + $0x38] sm:$0xff]
      %v2044 = vld [vmem:[#allocation3 + $0x40] sm:$0xff]
      %v2045 = vld [vmem:[#allocation3 + $0x48] sm:$0xff]
      %v2046 = vld [vmem:[#allocation3 + $0x50] sm:$0xff]
      %v2047 = vld [vmem:[#allocation3 + $0x58] sm:$0xff]
      %v2048 = vld [vmem:[#allocation3 + $0x60] sm:$0xff]
      %v2049 = vld [vmem:[#allocation3 + $0x68] sm:$0xff]
      %v2050 = vld [vmem:[#allocation3 + $0x70] sm:$0xff]
      %v2051 = vld [vmem:[#allocation3 + $0x78] sm:$0xff]
      %v2052 = vld [vmem:[#allocation3 + $0x80] sm:$0xff]
      %v2053 = vld [vmem:[#allocation3 + $0x88] sm:$0xff]
      %v2054 = vld [vmem:[#allocation3 + $0x90] sm:$0xff]
      %v2055 = vld [vmem:[#allocation3 + $0x98] sm:$0xff]
      %v2056 = vld [vmem:[#allocation3 + $0xa0] sm:$0xff]
      %v2057 = vld [vmem:[#allocation3 + $0xa8] sm:$0xff]
      %v2058 = vld [vmem:[#allocation3 + $0xb0] sm:$0xff]
      %v2059 = vld [vmem:[#allocation3 + $0xb8] sm:$0xff]
      %v2060 = vld [vmem:[#allocation3 + $0xc0] sm:$0xff]
      %v2061 = vld [vmem:[#allocation3 + $0xc8] sm:$0xff]
      %v2062 = vld [vmem:[#allocation3 + $0xd0] sm:$0xff]
      %v2063 = vld [vmem:[#allocation3 + $0xd8] sm:$0xff]
      %v2064 = vld [vmem:[#allocation3 + $0xe0] sm:$0xff]
      %v2065 = vld [vmem:[#allocation3 + $0xe8] sm:$0xff]
      %v2066 = vld [vmem:[#allocation3 + $0xf0] sm:$0xff]
      %v2067 = vld [vmem:[#allocation3 + $0xf8] sm:$0xff]
      %v2068 = vld [vmem:[%s1] sm:$0xff]
      %v2069 = vld [vmem:[%s1 + $0x8] sm:$0xff]
      %v2070 = vld [vmem:[%s1 + $0x10] sm:$0xff]
      %v2071 = vld [vmem:[%s1 + $0x18] sm:$0xff]
      %v2072 = vld [vmem:[%s1 + $0x20] sm:$0xff]
      %v2073 = vld [vmem:[%s1 + $0x28] sm:$0xff]
      %v2074 = vld [vmem:[%s1 + $0x30] sm:$0xff]
      %v2075 = vld [vmem:[%s1 + $0x38] sm:$0xff]
      %v2076 = vld [vmem:[%s1 + $0x40] sm:$0xff]
      %vm2077 = vcmask 588800
      %v2079 = vsel %vm2077, %v2036, 0
      %v2082 = vsel %vm2077, %v2037, 0
      %v2085 = vsel %vm2077, %v2038, 0
      %v2088 = vsel %vm2077, %v2039, 0
      %v2091 = vsel %vm2077, %v2040, 0
      %v2094 = vsel %vm2077, %v2041, 0
      %v2097 = vsel %vm2077, %v2042, 0
      %v2100 = vsel %vm2077, %v2043, 0
      %v2103 = vsel %vm2077, %v2044, 0
      %v2106 = vsel %vm2077, %v2045, 0
      %v2109 = vsel %vm2077, %v2046, 0
      %v2112 = vsel %vm2077, %v2047, 0
      %v2115 = vsel %vm2077, %v2048, 0
      %v2118 = vsel %vm2077, %v2049, 0
      %v2121 = vsel %vm2077, %v2050, 0
      %v2124 = vsel %vm2077, %v2051, 0
      %v2127 = vsel %vm2077, %v2052, 0
      %v2130 = vsel %vm2077, %v2053, 0
      %v2133 = vsel %vm2077, %v2054, 0
      %v2136 = vsel %vm2077, %v2055, 0
      %v2139 = vsel %vm2077, %v2056, 0
      %v2142 = vsel %vm2077, %v2057, 0
      %v2145 = vsel %vm2077, %v2058, 0
      %v2148 = vsel %vm2077, %v2059, 0
      %v2151 = vsel %vm2077, %v2060, 0
      %v2154 = vsel %vm2077, %v2061, 0
      %v2157 = vsel %vm2077, %v2062, 0
      %v2160 = vsel %vm2077, %v2063, 0
      %v2163 = vsel %vm2077, %v2064, 0
      %v2166 = vsel %vm2077, %v2065, 0
      %v2169 = vsel %vm2077, %v2066, 0
      %v2172 = vsel %vm2077, %v2067, 0
      %2174 = vmatprep.subr.mxu0 0.0
      %2175 = vmatpush1.msra.mxu0 %v2068
      %2176 = vmatprep.subr.mxu0 0.0
      %2177 = vmatpush1.msra.mxu0 %v2069
      %2178 = vmatprep.subr.mxu0 0.0
      %2179 = vmatpush1.msra.mxu0 %v2070
      %2180 = vmatprep.subr.mxu0 0.0
      %2181 = vmatpush1.msra.mxu0 %v2071
      %2182 = vmatprep.subr.mxu0 0.0
      %2183 = vmatpush1.msra.mxu0 %v2072
      %2184 = vmatprep.subr.mxu0 0.0
      %2185 = vmatpush1.msra.mxu0 %v2073
      %2186 = vmatprep.subr.mxu0 0.0
      %2187 = vmatpush1.msra.mxu0 %v2074
      %2188 = vmatprep.subr.mxu0 0.0
      %2189 = vmatpush1.msra.mxu0 %v2075
      %2190 = vmatprep.subr.mxu0 0.0
      %2191 = vmatpush1.msra.mxu0 %v2076
      %2192 = vmatprep.subr.mxu0 0.0
      %2193 = vmatpush1.msra.mxu0 0.0
      %2194 = vmatprep.subr.mxu0 0.0
      %2195 = vmatpush1.msra.mxu0 0.0
      %2196 = vmatprep.subr.mxu0 0.0
      %2197 = vmatpush1.msra.mxu0 0.0
      %2198 = vmatprep.subr.mxu0 0.0
      %2199 = vmatpush1.msra.mxu0 0.0
      %2200 = vmatprep.subr.mxu0 0.0
      %2201 = vmatpush1.msra.mxu0 0.0
      %2202 = vmatprep.subr.mxu0 0.0
      %2203 = vmatpush1.msra.mxu0 0.0
      %2204 = vmatprep.subr.mxu0 0.0
      %2205 = vmatpush1.msra.mxu0 0.0
      %2206 = vmatprep.subr.mxu0 0.0
      %2207 = vmatpush1.msra.mxu0 0.0
      %2208 = vmatprep.subr.mxu0 0.0
      %2209 = vmatpush1.msra.mxu0 0.0
      %2210 = vmatprep.subr.mxu0 0.0
      %2211 = vmatpush1.msra.mxu0 0.0
      %2212 = vmatprep.subr.mxu0 0.0
      %2213 = vmatpush1.msra.mxu0 0.0
      %2214 = vmatprep.subr.mxu0 0.0
      %2215 = vmatpush1.msra.mxu0 0.0
      %2216 = vmatprep.subr.mxu0 0.0
      %2217 = vmatpush1.msra.mxu0 0.0
      %2218 = vmatprep.subr.mxu0 0.0
      %2219 = vmatpush1.msra.mxu0 0.0
      %2220 = vmatprep.subr.mxu0 0.0
      %2221 = vmatpush1.msra.mxu0 0.0
      %2222 = vmatprep.subr.mxu0 0.0
      %2223 = vmatpush1.msra.mxu0 0.0
      %2224 = vmatprep.subr.mxu0 0.0
      %2225 = vmatpush1.msra.mxu0 0.0
      %2226 = vmatprep.subr.mxu0 0.0
      %2227 = vmatpush1.msra.mxu0 0.0
      %2228 = vmatprep.subr.mxu0 0.0
      %2229 = vmatpush1.msra.mxu0 0.0
      %2230 = vmatprep.subr.mxu0 0.0
      %2231 = vmatpush1.msra.mxu0 0.0
      %2232 = vmatprep.subr.mxu0 0.0
      %2233 = vmatpush1.msra.mxu0 0.0
      %2234 = vmatprep.subr.mxu0 0.0
      %2235 = vmatpush1.msra.mxu0 0.0
      %2236 = vmatprep.subr.mxu0 0.0
      %2237 = vmatpush1.msra.mxu0 0.0
      %2238 = vmatprep.mubr.f32.mxu0 0.0
      %2239 = vmatmul.mubr.f32.gmra.mrb[0].mxu0 %v2079
      %v2240 = vpop.f32.mrb[0].mxu0
      %v2241 = vadd.f32 0.0, %v2240
      %v2242 = vpop.f32.mrb[0].mxu0
      %2243 = vmatprep.mubr.f32.mxu0 0.0
      %2244 = vmatmul.mubr.f32.gmra.mrb[0].mxu0 %v2082
      %v2245 = vpop.f32.mrb[0].mxu0
      %v2246 = vadd.f32 0.0, %v2245
      %v2247 = vpop.f32.mrb[0].mxu0
      %2248 = vmatprep.mubr.f32.mxu0 0.0
      %2249 = vmatmul.mubr.f32.gmra.mrb[0].mxu0 %v2085
      %v2250 = vpop.f32.mrb[0].mxu0
      %v2251 = vadd.f32 0.0, %v2250
      %v2252 = vpop.f32.mrb[0].mxu0
      %2253 = vmatprep.mubr.f32.mxu0 0.0
      %2254 = vmatmul.mubr.f32.gmra.mrb[0].mxu0 %v2088
      %v2255 = vpop.f32.mrb[0].mxu0
      %v2256 = vadd.f32 0.0, %v2255
      %v2257 = vpop.f32.mrb[0].mxu0
      %2258 = vmatprep.mubr.f32.mxu0 0.0
      %2259 = vmatmul.mubr.f32.gmra.mrb[0].mxu0 %v2091
      %v2260 = vpop.f32.mrb[0].mxu0
      %v2261 = vadd.f32 0.0, %v2260
      %v2262 = vpop.f32.mrb[0].mxu0
      %2263 = vmatprep.mubr.f32.mxu0 0.0
      %2264 = vmatmul.mubr.f32.gmra.mrb[0].mxu0 %v2094
      %v2265 = vpop.f32.mrb[0].mxu0
      %v2266 = vadd.f32 0.0, %v2265
      %v2267 = vpop.f32.mrb[0].mxu0
      %2268 = vmatprep.mubr.f32.mxu0 0.0
      %2269 = vmatmul.mubr.f32.gmra.mrb[0].mxu0 %v2097
      %v2270 = vpop.f32.mrb[0].mxu0
      %v2271 = vadd.f32 0.0, %v2270
      %v2272 = vpop.f32.mrb[0].mxu0
      %2273 = vmatprep.mubr.f32.mxu0 0.0
      %2274 = vmatmul.mubr.f32.gmra.mrb[0].mxu0 %v2100
      %v2275 = vpop.f32.mrb[0].mxu0
      %v2276 = vadd.f32 0.0, %v2275
      %v2277 = vpop.f32.mrb[0].mxu0
      %2278 = vmatprep.mubr.f32.mxu0 0.0
      %2279 = vmatmul.mubr.f32.gmra.mrb[0].mxu0 %v2103
      %v2280 = vpop.f32.mrb[0].mxu0
      %v2281 = vadd.f32 0.0, %v2280
      %v2282 = vpop.f32.mrb[0].mxu0
      %2283 = vmatprep.mubr.f32.mxu0 0.0
      %2284 = vmatmul.mubr.f32.gmra.mrb[0].mxu0 %v2106
      %v2285 = vpop.f32.mrb[0].mxu0
      %v2286 = vadd.f32 0.0, %v2285
      %v2287 = vpop.f32.mrb[0].mxu0
      %2288 = vmatprep.mubr.f32.mxu0 0.0
      %2289 = vmatmul.mubr.f32.gmra.mrb[0].mxu0 %v2109
      %v2290 = vpop.f32.mrb[0].mxu0
      %v2291 = vadd.f32 0.0, %v2290
      %v2292 = vpop.f32.mrb[0].mxu0
      %2293 = vmatprep.mubr.f32.mxu0 0.0
      %2294 = vmatmul.mubr.f32.gmra.mrb[0].mxu0 %v2112
      %v2295 = vpop.f32.mrb[0].mxu0
      %v2296 = vadd.f32 0.0, %v2295
      %v2297 = vpop.f32.mrb[0].mxu0
      %2298 = vmatprep.mubr.f32.mxu0 0.0
      %2299 = vmatmul.mubr.f32.gmra.mrb[0].mxu0 %v2115
      %v2300 = vpop.f32.mrb[0].mxu0
      %v2301 = vadd.f32 0.0, %v2300
      %v2302 = vpop.f32.mrb[0].mxu0
      %2303 = vmatprep.mubr.f32.mxu0 0.0
      %2304 = vmatmul.mubr.f32.gmra.mrb[0].mxu0 %v2118
      %v2305 = vpop.f32.mrb[0].mxu0
      %v2306 = vadd.f32 0.0, %v2305
      %v2307 = vpop.f32.mrb[0].mxu0
      %2308 = vmatprep.mubr.f32.mxu0 0.0
      %2309 = vmatmul.mubr.f32.gmra.mrb[0].mxu0 %v2121
      %v2310 = vpop.f32.mrb[0].mxu0
      %v2311 = vadd.f32 0.0, %v2310
      %v2312 = vpop.f32.mrb[0].mxu0
      %2313 = vmatprep.mubr.f32.mxu0 0.0
      %2314 = vmatmul.mubr.f32.gmra.mrb[0].mxu0 %v2124
      %v2315 = vpop.f32.mrb[0].mxu0
      %v2316 = vadd.f32 0.0, %v2315
      %v2317 = vpop.f32.mrb[0].mxu0
      %2318 = vmatprep.mubr.f32.mxu0 0.0
      %2319 = vmatmul.mubr.f32.gmra.mrb[0].mxu0 %v2127
      %v2320 = vpop.f32.mrb[0].mxu0
      %v2321 = vadd.f32 0.0, %v2320
      %v2322 = vpop.f32.mrb[0].mxu0
      %2323 = vmatprep.mubr.f32.mxu0 0.0
      %2324 = vmatmul.mubr.f32.gmra.mrb[0].mxu0 %v2130
      %v2325 = vpop.f32.mrb[0].mxu0
      %v2326 = vadd.f32 0.0, %v2325
      %v2327 = vpop.f32.mrb[0].mxu0
      %2328 = vmatprep.mubr.f32.mxu0 0.0
      %2329 = vmatmul.mubr.f32.gmra.mrb[0].mxu0 %v2133
      %v2330 = vpop.f32.mrb[0].mxu0
      %v2331 = vadd.f32 0.0, %v2330
      %v2332 = vpop.f32.mrb[0].mxu0
      %2333 = vmatprep.mubr.f32.mxu0 0.0
      %2334 = vmatmul.mubr.f32.gmra.mrb[0].mxu0 %v2136
      %v2335 = vpop.f32.mrb[0].mxu0
      %v2336 = vadd.f32 0.0, %v2335
      %v2337 = vpop.f32.mrb[0].mxu0
      %2338 = vmatprep.mubr.f32.mxu0 0.0
      %2339 = vmatmul.mubr.f32.gmra.mrb[0].mxu0 %v2139
      %v2340 = vpop.f32.mrb[0].mxu0
      %v2341 = vadd.f32 0.0, %v2340
      %v2342 = vpop.f32.mrb[0].mxu0
      %2343 = vmatprep.mubr.f32.mxu0 0.0
      %2344 = vmatmul.mubr.f32.gmra.mrb[0].mxu0 %v2142
      %v2345 = vpop.f32.mrb[0].mxu0
      %v2346 = vadd.f32 0.0, %v2345
      %v2347 = vpop.f32.mrb[0].mxu0
      %2348 = vmatprep.mubr.f32.mxu0 0.0
      %2349 = vmatmul.mubr.f32.gmra.mrb[0].mxu0 %v2145
      %v2350 = vpop.f32.mrb[0].mxu0
      %v2351 = vadd.f32 0.0, %v2350
      %v2352 = vpop.f32.mrb[0].mxu0
      %2353 = vmatprep.mubr.f32.mxu0 0.0
      %2354 = vmatmul.mubr.f32.gmra.mrb[0].mxu0 %v2148
      %v2355 = vpop.f32.mrb[0].mxu0
      %v2356 = vadd.f32 0.0, %v2355
      %v2357 = vpop.f32.mrb[0].mxu0
      %2358 = vmatprep.mubr.f32.mxu0 0.0
      %2359 = vmatmul.mubr.f32.gmra.mrb[0].mxu0 %v2151
      %v2360 = vpop.f32.mrb[0].mxu0
      %v2361 = vadd.f32 0.0, %v2360
      %v2362 = vpop.f32.mrb[0].mxu0
      %2363 = vmatprep.mubr.f32.mxu0 0.0
      %2364 = vmatmul.mubr.f32.gmra.mrb[0].mxu0 %v2154
      %v2365 = vpop.f32.mrb[0].mxu0
      %v2366 = vadd.f32 0.0, %v2365
      %v2367 = vpop.f32.mrb[0].mxu0
      %2368 = vmatprep.mubr.f32.mxu0 0.0
      %2369 = vmatmul.mubr.f32.gmra.mrb[0].mxu0 %v2157
      %v2370 = vpop.f32.mrb[0].mxu0
      %v2371 = vadd.f32 0.0, %v2370
      %v2372 = vpop.f32.mrb[0].mxu0
      %2373 = vmatprep.mubr.f32.mxu0 0.0
      %2374 = vmatmul.mubr.f32.gmra.mrb[0].mxu0 %v2160
      %v2375 = vpop.f32.mrb[0].mxu0
      %v2376 = vadd.f32 0.0, %v2375
      %v2377 = vpop.f32.mrb[0].mxu0
      %2378 = vmatprep.mubr.f32.mxu0 0.0
      %2379 = vmatmul.mubr.f32.gmra.mrb[0].mxu0 %v2163
      %v2380 = vpop.f32.mrb[0].mxu0
      %v2381 = vadd.f32 0.0, %v2380
      %v2382 = vpop.f32.mrb[0].mxu0
      %2383 = vmatprep.mubr.f32.mxu0 0.0
      %2384 = vmatmul.mubr.f32.gmra.mrb[0].mxu0 %v2166
      %v2385 = vpop.f32.mrb[0].mxu0
      %v2386 = vadd.f32 0.0, %v2385
      %v2387 = vpop.f32.mrb[0].mxu0
      %2388 = vmatprep.mubr.f32.mxu0 0.0
      %2389 = vmatmul.mubr.f32.gmra.mrb[0].mxu0 %v2169
      %v2390 = vpop.f32.mrb[0].mxu0
      %v2391 = vadd.f32 0.0, %v2390
      %v2392 = vpop.f32.mrb[0].mxu0
      %2393 = vmatprep.mubr.f32.mxu0 0.0
      %2394 = vmatmul.mubr.f32.gmra.mrb[0].mxu0 %v2172
      %v2395 = vpop.f32.mrb[0].mxu0
      %v2396 = vadd.f32 0.0, %v2395
      %v2397 = vpop.f32.mrb[0].mxu0
      %2398 = vdwg.mxu0
      %v2399 = vld [vmem:[%s2] sm:$0x1]
      %v2401 = vlaneseq
      %v2402 = vshrl.u32 %v2401, 7
      %v2403 = vsub.s32 0, %v2402
      %v2404 = vrot.slane %v2399, %v2403
      %v2406 = vmul.f32 %v2241, %v2404
      %v2407 = vmul.f32 %v2246, %v2404
      %v2408 = vmul.f32 %v2251, %v2404
      %v2409 = vmul.f32 %v2256, %v2404
      %v2410 = vmul.f32 %v2261, %v2404
      %v2411 = vmul.f32 %v2266, %v2404
      %v2412 = vmul.f32 %v2271, %v2404
      %v2413 = vmul.f32 %v2276, %v2404
      %v2414 = vmul.f32 %v2281, %v2404
      %v2415 = vmul.f32 %v2286, %v2404
      %v2416 = vmul.f32 %v2291, %v2404
      %v2417 = vmul.f32 %v2296, %v2404
      %v2418 = vmul.f32 %v2301, %v2404
      %v2419 = vmul.f32 %v2306, %v2404
      %v2420 = vmul.f32 %v2311, %v2404
      %v2421 = vmul.f32 %v2316, %v2404
      %v2422 = vmul.f32 %v2321, %v2404
      %v2423 = vmul.f32 %v2326, %v2404
      %v2424 = vmul.f32 %v2331, %v2404
      %v2425 = vmul.f32 %v2336, %v2404
      %v2426 = vmul.f32 %v2341, %v2404
      %v2427 = vmul.f32 %v2346, %v2404
      %v2428 = vmul.f32 %v2351, %v2404
      %v2429 = vmul.f32 %v2356, %v2404
      %v2430 = vmul.f32 %v2361, %v2404
      %v2431 = vmul.f32 %v2366, %v2404
      %v2432 = vmul.f32 %v2371, %v2404
      %v2433 = vmul.f32 %v2376, %v2404
      %v2434 = vmul.f32 %v2381, %v2404
      %v2435 = vmul.f32 %v2386, %v2404
      %v2436 = vmul.f32 %v2391, %v2404
      %v2437 = vmul.f32 %v2396, %v2404
      %v2438 = vld [vmem:[%s3] sm:$0x1]
      %v2440 = vlaneseq
      %v2441 = vshrl.u32 %v2440, 7
      %v2442 = vsub.s32 0, %v2441
      %v2443 = vrot.slane %v2438, %v2442
      %v2445 = vadd.f32 %v2406, %v2443
      %v2446 = vadd.f32 %v2407, %v2443
      %v2447 = vadd.f32 %v2408, %v2443
      %v2448 = vadd.f32 %v2409, %v2443
      %v2449 = vadd.f32 %v2410, %v2443
      %v2450 = vadd.f32 %v2411, %v2443
      %v2451 = vadd.f32 %v2412, %v2443
      %v2452 = vadd.f32 %v2413, %v2443
      %v2453 = vadd.f32 %v2414, %v2443
      %v2454 = vadd.f32 %v2415, %v2443
      %v2455 = vadd.f32 %v2416, %v2443
      %v2456 = vadd.f32 %v2417, %v2443
      %v2457 = vadd.f32 %v2418, %v2443
      %v2458 = vadd.f32 %v2419, %v2443
      %v2459 = vadd.f32 %v2420, %v2443
      %v2460 = vadd.f32 %v2421, %v2443
      %v2461 = vadd.f32 %v2422, %v2443
      %v2462 = vadd.f32 %v2423, %v2443
      %v2463 = vadd.f32 %v2424, %v2443
      %v2464 = vadd.f32 %v2425, %v2443
      %v2465 = vadd.f32 %v2426, %v2443
      %v2466 = vadd.f32 %v2427, %v2443
      %v2467 = vadd.f32 %v2428, %v2443
      %v2468 = vadd.f32 %v2429, %v2443
      %v2469 = vadd.f32 %v2430, %v2443
      %v2470 = vadd.f32 %v2431, %v2443
      %v2471 = vadd.f32 %v2432, %v2443
      %v2472 = vadd.f32 %v2433, %v2443
      %v2473 = vadd.f32 %v2434, %v2443
      %v2474 = vadd.f32 %v2435, %v2443
      %v2475 = vadd.f32 %v2436, %v2443
      %v2476 = vadd.f32 %v2437, %v2443
      %v2477 = vmax.f32 %v2445, 0.0
      %v2478 = vmax.f32 %v2446, 0.0
      %v2479 = vmax.f32 %v2447, 0.0
      %v2480 = vmax.f32 %v2448, 0.0
      %v2481 = vmax.f32 %v2449, 0.0
      %v2482 = vmax.f32 %v2450, 0.0
      %v2483 = vmax.f32 %v2451, 0.0
      %v2484 = vmax.f32 %v2452, 0.0
      %v2485 = vmax.f32 %v2453, 0.0
      %v2486 = vmax.f32 %v2454, 0.0
      %v2487 = vmax.f32 %v2455, 0.0
      %v2488 = vmax.f32 %v2456, 0.0
      %v2489 = vmax.f32 %v2457, 0.0
      %v2490 = vmax.f32 %v2458, 0.0
      %v2491 = vmax.f32 %v2459, 0.0
      %v2492 = vmax.f32 %v2460, 0.0
      %v2493 = vmax.f32 %v2461, 0.0
      %v2494 = vmax.f32 %v2462, 0.0
      %v2495 = vmax.f32 %v2463, 0.0
      %v2496 = vmax.f32 %v2464, 0.0
      %v2497 = vmax.f32 %v2465, 0.0
      %v2498 = vmax.f32 %v2466, 0.0
      %v2499 = vmax.f32 %v2467, 0.0
      %v2500 = vmax.f32 %v2468, 0.0
      %v2501 = vmax.f32 %v2469, 0.0
      %v2502 = vmax.f32 %v2470, 0.0
      %v2503 = vmax.f32 %v2471, 0.0
      %v2504 = vmax.f32 %v2472, 0.0
      %v2505 = vmax.f32 %v2473, 0.0
      %v2506 = vmax.f32 %v2474, 0.0
      %v2507 = vmax.f32 %v2475, 0.0
      %v2508 = vmax.f32 %v2476, 0.0
      %2509 = vst.msk [vmem:[%s394 + $0x1] sm:$0xff] %vm306, %v2477
      %2510 = vst.msk [vmem:[%s394 + $0x9] sm:$0xff] %vm306, %v2478
      %2511 = vst.msk [vmem:[%s394 + $0x19] sm:$0xff] %vm306, %v2479
      %2512 = vst.msk [vmem:[%s394 + $0x21] sm:$0xff] %vm306, %v2480
      %2513 = vst.msk [vmem:[%s394 + $0x31] sm:$0xff] %vm306, %v2481
      %2514 = vst.msk [vmem:[%s394 + $0x39] sm:$0xff] %vm306, %v2482
      %2515 = vst.msk [vmem:[%s394 + $0x49] sm:$0xff] %vm306, %v2483
      %2516 = vst.msk [vmem:[%s394 + $0x51] sm:$0xff] %vm306, %v2484
      %2517 = vst.msk [vmem:[%s394 + $0x61] sm:$0xff] %vm306, %v2485
      %2518 = vst.msk [vmem:[%s394 + $0x69] sm:$0xff] %vm306, %v2486
      %2519 = vst.msk [vmem:[%s394 + $0x79] sm:$0xff] %vm306, %v2487
      %2520 = vst.msk [vmem:[%s394 + $0x81] sm:$0xff] %vm306, %v2488
      %2521 = vst.msk [vmem:[%s394 + $0x91] sm:$0xff] %vm306, %v2489
      %2522 = vst.msk [vmem:[%s394 + $0x99] sm:$0xff] %vm306, %v2490
      %2523 = vst.msk [vmem:[%s394 + $0xa9] sm:$0xff] %vm306, %v2491
      %2524 = vst.msk [vmem:[%s394 + $0xb1] sm:$0xff] %vm306, %v2492
      %2525 = vst.msk [vmem:[%s394 + $0xc1] sm:$0xff] %vm306, %v2493
      %2526 = vst.msk [vmem:[%s394 + $0xc9] sm:$0xff] %vm306, %v2494
      %2527 = vst.msk [vmem:[%s394 + $0xd9] sm:$0xff] %vm306, %v2495
      %2528 = vst.msk [vmem:[%s394 + $0xe1] sm:$0xff] %vm306, %v2496
      %2529 = vst.msk [vmem:[%s394 + $0xf1] sm:$0xff] %vm306, %v2497
      %2530 = vst.msk [vmem:[%s394 + $0xf9] sm:$0xff] %vm306, %v2498
      %2531 = vst.msk [vmem:[%s394 + $0x109] sm:$0xff] %vm306, %v2499
      %2532 = vst.msk [vmem:[%s394 + $0x111] sm:$0xff] %vm306, %v2500
      %2533 = vst.msk [vmem:[%s394 + $0x121] sm:$0xff] %vm306, %v2501
      %2534 = vst.msk [vmem:[%s394 + $0x129] sm:$0xff] %vm306, %v2502
      %2535 = vst.msk [vmem:[%s394 + $0x139] sm:$0xff] %vm306, %v2503
      %2536 = vst.msk [vmem:[%s394 + $0x141] sm:$0xff] %vm306, %v2504
      %2537 = vst.msk [vmem:[%s394 + $0x151] sm:$0xff] %vm306, %v2505
      %2538 = vst.msk [vmem:[%s394 + $0x159] sm:$0xff] %vm306, %v2506
      %2539 = vst.msk [vmem:[%s394 + $0x169] sm:$0xff] %vm306, %v2507
      %2540 = vst.msk [vmem:[%s394 + $0x171] sm:$0xff] %vm306, %v2508
      %v2541 = vld [vmem:[#allocation2] sm:$0xff]
      %v2542 = vld [vmem:[#allocation2 + $0x8] sm:$0xff]
      %v2543 = vld [vmem:[#allocation2 + $0x18] sm:$0xff]
      %v2544 = vld [vmem:[#allocation2 + $0x20] sm:$0xff]
      %v2545 = vld [vmem:[#allocation2 + $0x30] sm:$0xff]
      %v2546 = vld [vmem:[#allocation2 + $0x38] sm:$0xff]
      %v2547 = vld [vmem:[#allocation2 + $0x48] sm:$0xff]
      %v2548 = vld [vmem:[#allocation2 + $0x50] sm:$0xff]
      %v2549 = vld [vmem:[#allocation2 + $0x60] sm:$0xff]
      %v2550 = vld [vmem:[#allocation2 + $0x68] sm:$0xff]
      %v2551 = vld [vmem:[#allocation2 + $0x78] sm:$0xff]
      %v2552 = vld [vmem:[#allocation2 + $0x80] sm:$0xff]
      %v2553 = vld [vmem:[#allocation2 + $0x90] sm:$0xff]
      %v2554 = vld [vmem:[#allocation2 + $0x98] sm:$0xff]
      %v2555 = vld [vmem:[#allocation2 + $0xa8] sm:$0xff]
      %v2556 = vld [vmem:[#allocation2 + $0xb0] sm:$0xff]
      %v2557 = vld [vmem:[#allocation2 + $0xc0] sm:$0xff]
      %v2558 = vld [vmem:[#allocation2 + $0xc8] sm:$0xff]
      %v2559 = vld [vmem:[#allocation2 + $0xd8] sm:$0xff]
      %v2560 = vld [vmem:[#allocation2 + $0xe0] sm:$0xff]
      %v2561 = vld [vmem:[#allocation2 + $0xf0] sm:$0xff]
      %v2562 = vld [vmem:[#allocation2 + $0xf8] sm:$0xff]
      %v2563 = vld [vmem:[#allocation2 + $0x108] sm:$0xff]
      %v2564 = vld [vmem:[#allocation2 + $0x110] sm:$0xff]
      %v2565 = vld [vmem:[#allocation2 + $0x120] sm:$0xff]
      %v2566 = vld [vmem:[#allocation2 + $0x128] sm:$0xff]
      %v2567 = vld [vmem:[#allocation2 + $0x138] sm:$0xff]
      %v2568 = vld [vmem:[#allocation2 + $0x140] sm:$0xff]
      %v2569 = vld [vmem:[#allocation2 + $0x150] sm:$0xff]
      %v2570 = vld [vmem:[#allocation2 + $0x158] sm:$0xff]
      %v2571 = vld [vmem:[#allocation2 + $0x168] sm:$0xff]
      %v2572 = vld [vmem:[#allocation2 + $0x170] sm:$0xff]
      %2573 = vst.msk [vmem:[#allocation3] sm:$0xff] %vm306, %v2541
      %2574 = vst.msk [vmem:[#allocation3 + $0x8] sm:$0xff] %vm306, %v2542
      %2575 = vst.msk [vmem:[#allocation3 + $0x10] sm:$0xff] %vm306, %v2543
      %2576 = vst.msk [vmem:[#allocation3 + $0x18] sm:$0xff] %vm306, %v2544
      %2577 = vst.msk [vmem:[#allocation3 + $0x20] sm:$0xff] %vm306, %v2545
      %2578 = vst.msk [vmem:[#allocation3 + $0x28] sm:$0xff] %vm306, %v2546
      %2579 = vst.msk [vmem:[#allocation3 + $0x30] sm:$0xff] %vm306, %v2547
      %2580 = vst.msk [vmem:[#allocation3 + $0x38] sm:$0xff] %vm306, %v2548
      %2581 = vst.msk [vmem:[#allocation3 + $0x40] sm:$0xff] %vm306, %v2549
      %2582 = vst.msk [vmem:[#allocation3 + $0x48] sm:$0xff] %vm306, %v2550
      %2583 = vst.msk [vmem:[#allocation3 + $0x50] sm:$0xff] %vm306, %v2551
      %2584 = vst.msk [vmem:[#allocation3 + $0x58] sm:$0xff] %vm306, %v2552
      %2585 = vst.msk [vmem:[#allocation3 + $0x60] sm:$0xff] %vm306, %v2553
      %2586 = vst.msk [vmem:[#allocation3 + $0x68] sm:$0xff] %vm306, %v2554
      %2587 = vst.msk [vmem:[#allocation3 + $0x70] sm:$0xff] %vm306, %v2555
      %2588 = vst.msk [vmem:[#allocation3 + $0x78] sm:$0xff] %vm306, %v2556
      %2589 = vst.msk [vmem:[#allocation3 + $0x80] sm:$0xff] %vm306, %v2557
      %2590 = vst.msk [vmem:[#allocation3 + $0x88] sm:$0xff] %vm306, %v2558
      %2591 = vst.msk [vmem:[#allocation3 + $0x90] sm:$0xff] %vm306, %v2559
      %2592 = vst.msk [vmem:[#allocation3 + $0x98] sm:$0xff] %vm306, %v2560
      %2593 = vst.msk [vmem:[#allocation3 + $0xa0] sm:$0xff] %vm306, %v2561
      %2594 = vst.msk [vmem:[#allocation3 + $0xa8] sm:$0xff] %vm306, %v2562
      %2595 = vst.msk [vmem:[#allocation3 + $0xb0] sm:$0xff] %vm306, %v2563
      %2596 = vst.msk [vmem:[#allocation3 + $0xb8] sm:$0xff] %vm306, %v2564
      %2597 = vst.msk [vmem:[#allocation3 + $0xc0] sm:$0xff] %vm306, %v2565
      %2598 = vst.msk [vmem:[#allocation3 + $0xc8] sm:$0xff] %vm306, %v2566
      %2599 = vst.msk [vmem:[#allocation3 + $0xd0] sm:$0xff] %vm306, %v2567
      %2600 = vst.msk [vmem:[#allocation3 + $0xd8] sm:$0xff] %vm306, %v2568
      %2601 = vst.msk [vmem:[#allocation3 + $0xe0] sm:$0xff] %vm306, %v2569
      %2602 = vst.msk [vmem:[#allocation3 + $0xe8] sm:$0xff] %vm306, %v2570
      %2603 = vst.msk [vmem:[#allocation3 + $0xf0] sm:$0xff] %vm306, %v2571
      %2604 = vst.msk [vmem:[#allocation3 + $0xf8] sm:$0xff] %vm306, %v2572
      %v2605 = vld [vmem:[#allocation2 + $0x1] sm:$0xff]
      %v2606 = vld [vmem:[#allocation2 + $0x9] sm:$0xff]
      %v2607 = vld [vmem:[#allocation2 + $0x19] sm:$0xff]
      %v2608 = vld [vmem:[#allocation2 + $0x21] sm:$0xff]
      %v2609 = vld [vmem:[#allocation2 + $0x31] sm:$0xff]
      %v2610 = vld [vmem:[#allocation2 + $0x39] sm:$0xff]
      %v2611 = vld [vmem:[#allocation2 + $0x49] sm:$0xff]
      %v2612 = vld [vmem:[#allocation2 + $0x51] sm:$0xff]
      %v2613 = vld [vmem:[#allocation2 + $0x61] sm:$0xff]
      %v2614 = vld [vmem:[#allocation2 + $0x69] sm:$0xff]
      %v2615 = vld [vmem:[#allocation2 + $0x79] sm:$0xff]
      %v2616 = vld [vmem:[#allocation2 + $0x81] sm:$0xff]
      %v2617 = vld [vmem:[#allocation2 + $0x91] sm:$0xff]
      %v2618 = vld [vmem:[#allocation2 + $0x99] sm:$0xff]
      %v2619 = vld [vmem:[#allocation2 + $0xa9] sm:$0xff]
      %v2620 = vld [vmem:[#allocation2 + $0xb1] sm:$0xff]
      %v2621 = vld [vmem:[#allocation2 + $0xc1] sm:$0xff]
      %v2622 = vld [vmem:[#allocation2 + $0xc9] sm:$0xff]
      %v2623 = vld [vmem:[#allocation2 + $0xd9] sm:$0xff]
      %v2624 = vld [vmem:[#allocation2 + $0xe1] sm:$0xff]
      %v2625 = vld [vmem:[#allocation2 + $0xf1] sm:$0xff]
      %v2626 = vld [vmem:[#allocation2 + $0xf9] sm:$0xff]
      %v2627 = vld [vmem:[#allocation2 + $0x109] sm:$0xff]
      %v2628 = vld [vmem:[#allocation2 + $0x111] sm:$0xff]
      %v2629 = vld [vmem:[#allocation2 + $0x121] sm:$0xff]
      %v2630 = vld [vmem:[#allocation2 + $0x129] sm:$0xff]
      %v2631 = vld [vmem:[#allocation2 + $0x139] sm:$0xff]
      %v2632 = vld [vmem:[#allocation2 + $0x141] sm:$0xff]
      %v2633 = vld [vmem:[#allocation2 + $0x151] sm:$0xff]
      %v2634 = vld [vmem:[#allocation2 + $0x159] sm:$0xff]
      %v2635 = vld [vmem:[#allocation2 + $0x169] sm:$0xff]
      %v2636 = vld [vmem:[#allocation2 + $0x171] sm:$0xff]
      %2669 = vrot.lane.b32.xlu0 %v2605, 8
      %v2670 = vpop.permute.xlu0 %2669
      %2671 = vrot.lane.b32.xlu0 %v2606, 8
      %v2672 = vpop.permute.xlu0 %2671
      %2673 = vrot.lane.b32.xlu0 %v2607, 8
      %v2674 = vpop.permute.xlu0 %2673
      %2675 = vrot.lane.b32.xlu0 %v2608, 8
      %v2676 = vpop.permute.xlu0 %2675
      %2677 = vrot.lane.b32.xlu0 %v2609, 8
      %v2678 = vpop.permute.xlu0 %2677
      %2679 = vrot.lane.b32.xlu0 %v2610, 8
      %v2680 = vpop.permute.xlu0 %2679
      %2681 = vrot.lane.b32.xlu0 %v2611, 8
      %v2682 = vpop.permute.xlu0 %2681
      %2683 = vrot.lane.b32.xlu0 %v2612, 8
      %v2684 = vpop.permute.xlu0 %2683
      %2685 = vrot.lane.b32.xlu0 %v2613, 8
      %v2686 = vpop.permute.xlu0 %2685
      %2687 = vrot.lane.b32.xlu0 %v2614, 8
      %v2688 = vpop.permute.xlu0 %2687
      %2689 = vrot.lane.b32.xlu0 %v2615, 8
      %v2690 = vpop.permute.xlu0 %2689
      %2691 = vrot.lane.b32.xlu0 %v2616, 8
      %v2692 = vpop.permute.xlu0 %2691
      %2693 = vrot.lane.b32.xlu0 %v2617, 8
      %v2694 = vpop.permute.xlu0 %2693
      %2695 = vrot.lane.b32.xlu0 %v2618, 8
      %v2696 = vpop.permute.xlu0 %2695
      %2697 = vrot.lane.b32.xlu0 %v2619, 8
      %v2698 = vpop.permute.xlu0 %2697
      %2699 = vrot.lane.b32.xlu0 %v2620, 8
      %v2700 = vpop.permute.xlu0 %2699
      %2701 = vrot.lane.b32.xlu0 %v2621, 8
      %v2702 = vpop.permute.xlu0 %2701
      %2703 = vrot.lane.b32.xlu0 %v2622, 8
      %v2704 = vpop.permute.xlu0 %2703
      %2705 = vrot.lane.b32.xlu0 %v2623, 8
      %v2706 = vpop.permute.xlu0 %2705
      %2707 = vrot.lane.b32.xlu0 %v2624, 8
      %v2708 = vpop.permute.xlu0 %2707
      %2709 = vrot.lane.b32.xlu0 %v2625, 8
      %v2710 = vpop.permute.xlu0 %2709
      %2711 = vrot.lane.b32.xlu0 %v2626, 8
      %v2712 = vpop.permute.xlu0 %2711
      %2713 = vrot.lane.b32.xlu0 %v2627, 8
      %v2714 = vpop.permute.xlu0 %2713
      %2715 = vrot.lane.b32.xlu0 %v2628, 8
      %v2716 = vpop.permute.xlu0 %2715
      %2717 = vrot.lane.b32.xlu0 %v2629, 8
      %v2718 = vpop.permute.xlu0 %2717
      %2719 = vrot.lane.b32.xlu0 %v2630, 8
      %v2720 = vpop.permute.xlu0 %2719
      %2721 = vrot.lane.b32.xlu0 %v2631, 8
      %v2722 = vpop.permute.xlu0 %2721
      %2723 = vrot.lane.b32.xlu0 %v2632, 8
      %v2724 = vpop.permute.xlu0 %2723
      %2725 = vrot.lane.b32.xlu0 %v2633, 8
      %v2726 = vpop.permute.xlu0 %2725
      %2727 = vrot.lane.b32.xlu0 %v2634, 8
      %v2728 = vpop.permute.xlu0 %2727
      %2729 = vrot.lane.b32.xlu0 %v2635, 8
      %v2730 = vpop.permute.xlu0 %2729
      %2731 = vrot.lane.b32.xlu0 %v2636, 8
      %v2732 = vpop.permute.xlu0 %2731
      %2765 = vst.msk [vmem:[#allocation3] sm:$0xff] %vm651, %v2670
      %2766 = vst.msk [vmem:[#allocation3 + $0x8] sm:$0xff] %vm651, %v2672
      %2767 = vst.msk [vmem:[#allocation3 + $0x10] sm:$0xff] %vm651, %v2674
      %2768 = vst.msk [vmem:[#allocation3 + $0x18] sm:$0xff] %vm651, %v2676
      %2769 = vst.msk [vmem:[#allocation3 + $0x20] sm:$0xff] %vm651, %v2678
      %2770 = vst.msk [vmem:[#allocation3 + $0x28] sm:$0xff] %vm651, %v2680
      %2771 = vst.msk [vmem:[#allocation3 + $0x30] sm:$0xff] %vm651, %v2682
      %2772 = vst.msk [vmem:[#allocation3 + $0x38] sm:$0xff] %vm651, %v2684
      %2773 = vst.msk [vmem:[#allocation3 + $0x40] sm:$0xff] %vm651, %v2686
      %2774 = vst.msk [vmem:[#allocation3 + $0x48] sm:$0xff] %vm651, %v2688
      %2775 = vst.msk [vmem:[#allocation3 + $0x50] sm:$0xff] %vm651, %v2690
      %2776 = vst.msk [vmem:[#allocation3 + $0x58] sm:$0xff] %vm651, %v2692
      %2777 = vst.msk [vmem:[#allocation3 + $0x60] sm:$0xff] %vm651, %v2694
      %2778 = vst.msk [vmem:[#allocation3 + $0x68] sm:$0xff] %vm651, %v2696
      %2779 = vst.msk [vmem:[#allocation3 + $0x70] sm:$0xff] %vm651, %v2698
      %2780 = vst.msk [vmem:[#allocation3 + $0x78] sm:$0xff] %vm651, %v2700
      %2781 = vst.msk [vmem:[#allocation3 + $0x80] sm:$0xff] %vm651, %v2702
      %2782 = vst.msk [vmem:[#allocation3 + $0x88] sm:$0xff] %vm651, %v2704
      %2783 = vst.msk [vmem:[#allocation3 + $0x90] sm:$0xff] %vm651, %v2706
      %2784 = vst.msk [vmem:[#allocation3 + $0x98] sm:$0xff] %vm651, %v2708
      %2785 = vst.msk [vmem:[#allocation3 + $0xa0] sm:$0xff] %vm651, %v2710
      %2786 = vst.msk [vmem:[#allocation3 + $0xa8] sm:$0xff] %vm651, %v2712
      %2787 = vst.msk [vmem:[#allocation3 + $0xb0] sm:$0xff] %vm651, %v2714
      %2788 = vst.msk [vmem:[#allocation3 + $0xb8] sm:$0xff] %vm651, %v2716
      %2789 = vst.msk [vmem:[#allocation3 + $0xc0] sm:$0xff] %vm651, %v2718
      %2790 = vst.msk [vmem:[#allocation3 + $0xc8] sm:$0xff] %vm651, %v2720
      %2791 = vst.msk [vmem:[#allocation3 + $0xd0] sm:$0xff] %vm651, %v2722
      %2792 = vst.msk [vmem:[#allocation3 + $0xd8] sm:$0xff] %vm651, %v2724
      %2793 = vst.msk [vmem:[#allocation3 + $0xe0] sm:$0xff] %vm651, %v2726
      %2794 = vst.msk [vmem:[#allocation3 + $0xe8] sm:$0xff] %vm651, %v2728
      %2795 = vst.msk [vmem:[#allocation3 + $0xf0] sm:$0xff] %vm651, %v2730
      %2796 = vst.msk [vmem:[#allocation3 + $0xf8] sm:$0xff] %vm651, %v2732
      %v2797 = vld [vmem:[#allocation2 + $0x2] sm:$0xff]
      %v2798 = vld [vmem:[#allocation2 + $0xa] sm:$0xff]
      %v2799 = vld [vmem:[#allocation2 + $0x1a] sm:$0xff]
      %v2800 = vld [vmem:[#allocation2 + $0x22] sm:$0xff]
      %v2801 = vld [vmem:[#allocation2 + $0x32] sm:$0xff]
      %v2802 = vld [vmem:[#allocation2 + $0x3a] sm:$0xff]
      %v2803 = vld [vmem:[#allocation2 + $0x4a] sm:$0xff]
      %v2804 = vld [vmem:[#allocation2 + $0x52] sm:$0xff]
      %v2805 = vld [vmem:[#allocation2 + $0x62] sm:$0xff]
      %v2806 = vld [vmem:[#allocation2 + $0x6a] sm:$0xff]
      %v2807 = vld [vmem:[#allocation2 + $0x7a] sm:$0xff]
      %v2808 = vld [vmem:[#allocation2 + $0x82] sm:$0xff]
      %v2809 = vld [vmem:[#allocation2 + $0x92] sm:$0xff]
      %v2810 = vld [vmem:[#allocation2 + $0x9a] sm:$0xff]
      %v2811 = vld [vmem:[#allocation2 + $0xaa] sm:$0xff]
      %v2812 = vld [vmem:[#allocation2 + $0xb2] sm:$0xff]
      %v2813 = vld [vmem:[#allocation2 + $0xc2] sm:$0xff]
      %v2814 = vld [vmem:[#allocation2 + $0xca] sm:$0xff]
      %v2815 = vld [vmem:[#allocation2 + $0xda] sm:$0xff]
      %v2816 = vld [vmem:[#allocation2 + $0xe2] sm:$0xff]
      %v2817 = vld [vmem:[#allocation2 + $0xf2] sm:$0xff]
      %v2818 = vld [vmem:[#allocation2 + $0xfa] sm:$0xff]
      %v2819 = vld [vmem:[#allocation2 + $0x10a] sm:$0xff]
      %v2820 = vld [vmem:[#allocation2 + $0x112] sm:$0xff]
      %v2821 = vld [vmem:[#allocation2 + $0x122] sm:$0xff]
      %v2822 = vld [vmem:[#allocation2 + $0x12a] sm:$0xff]
      %v2823 = vld [vmem:[#allocation2 + $0x13a] sm:$0xff]
      %v2824 = vld [vmem:[#allocation2 + $0x142] sm:$0xff]
      %v2825 = vld [vmem:[#allocation2 + $0x152] sm:$0xff]
      %v2826 = vld [vmem:[#allocation2 + $0x15a] sm:$0xff]
      %v2827 = vld [vmem:[#allocation2 + $0x16a] sm:$0xff]
      %v2828 = vld [vmem:[#allocation2 + $0x172] sm:$0xff]
      %2861 = vrot.lane.b32.xlu0 %v2797, 16
      %v2862 = vpop.permute.xlu0 %2861
      %2863 = vrot.lane.b32.xlu0 %v2798, 16
      %v2864 = vpop.permute.xlu0 %2863
      %2865 = vrot.lane.b32.xlu0 %v2799, 16
      %v2866 = vpop.permute.xlu0 %2865
      %2867 = vrot.lane.b32.xlu0 %v2800, 16
      %v2868 = vpop.permute.xlu0 %2867
      %2869 = vrot.lane.b32.xlu0 %v2801, 16
      %v2870 = vpop.permute.xlu0 %2869
      %2871 = vrot.lane.b32.xlu0 %v2802, 16
      %v2872 = vpop.permute.xlu0 %2871
      %2873 = vrot.lane.b32.xlu0 %v2803, 16
      %v2874 = vpop.permute.xlu0 %2873
      %2875 = vrot.lane.b32.xlu0 %v2804, 16
      %v2876 = vpop.permute.xlu0 %2875
      %2877 = vrot.lane.b32.xlu0 %v2805, 16
      %v2878 = vpop.permute.xlu0 %2877
      %2879 = vrot.lane.b32.xlu0 %v2806, 16
      %v2880 = vpop.permute.xlu0 %2879
      %2881 = vrot.lane.b32.xlu0 %v2807, 16
      %v2882 = vpop.permute.xlu0 %2881
      %2883 = vrot.lane.b32.xlu0 %v2808, 16
      %v2884 = vpop.permute.xlu0 %2883
      %2885 = vrot.lane.b32.xlu0 %v2809, 16
      %v2886 = vpop.permute.xlu0 %2885
      %2887 = vrot.lane.b32.xlu0 %v2810, 16
      %v2888 = vpop.permute.xlu0 %2887
      %2889 = vrot.lane.b32.xlu0 %v2811, 16
      %v2890 = vpop.permute.xlu0 %2889
      %2891 = vrot.lane.b32.xlu0 %v2812, 16
      %v2892 = vpop.permute.xlu0 %2891
      %2893 = vrot.lane.b32.xlu0 %v2813, 16
      %v2894 = vpop.permute.xlu0 %2893
      %2895 = vrot.lane.b32.xlu0 %v2814, 16
      %v2896 = vpop.permute.xlu0 %2895
      %2897 = vrot.lane.b32.xlu0 %v2815, 16
      %v2898 = vpop.permute.xlu0 %2897
      %2899 = vrot.lane.b32.xlu0 %v2816, 16
      %v2900 = vpop.permute.xlu0 %2899
      %2901 = vrot.lane.b32.xlu0 %v2817, 16
      %v2902 = vpop.permute.xlu0 %2901
      %2903 = vrot.lane.b32.xlu0 %v2818, 16
      %v2904 = vpop.permute.xlu0 %2903
      %2905 = vrot.lane.b32.xlu0 %v2819, 16
      %v2906 = vpop.permute.xlu0 %2905
      %2907 = vrot.lane.b32.xlu0 %v2820, 16
      %v2908 = vpop.permute.xlu0 %2907
      %2909 = vrot.lane.b32.xlu0 %v2821, 16
      %v2910 = vpop.permute.xlu0 %2909
      %2911 = vrot.lane.b32.xlu0 %v2822, 16
      %v2912 = vpop.permute.xlu0 %2911
      %2913 = vrot.lane.b32.xlu0 %v2823, 16
      %v2914 = vpop.permute.xlu0 %2913
      %2915 = vrot.lane.b32.xlu0 %v2824, 16
      %v2916 = vpop.permute.xlu0 %2915
      %2917 = vrot.lane.b32.xlu0 %v2825, 16
      %v2918 = vpop.permute.xlu0 %2917
      %2919 = vrot.lane.b32.xlu0 %v2826, 16
      %v2920 = vpop.permute.xlu0 %2919
      %2921 = vrot.lane.b32.xlu0 %v2827, 16
      %v2922 = vpop.permute.xlu0 %2921
      %2923 = vrot.lane.b32.xlu0 %v2828, 16
      %v2924 = vpop.permute.xlu0 %2923
      %2957 = vst.msk [vmem:[#allocation3] sm:$0xff] %vm844, %v2862
      %2958 = vst.msk [vmem:[#allocation3 + $0x8] sm:$0xff] %vm844, %v2864
      %2959 = vst.msk [vmem:[#allocation3 + $0x10] sm:$0xff] %vm844, %v2866
      %2960 = vst.msk [vmem:[#allocation3 + $0x18] sm:$0xff] %vm844, %v2868
      %2961 = vst.msk [vmem:[#allocation3 + $0x20] sm:$0xff] %vm844, %v2870
      %2962 = vst.msk [vmem:[#allocation3 + $0x28] sm:$0xff] %vm844, %v2872
      %2963 = vst.msk [vmem:[#allocation3 + $0x30] sm:$0xff] %vm844, %v2874
      %2964 = vst.msk [vmem:[#allocation3 + $0x38] sm:$0xff] %vm844, %v2876
      %2965 = vst.msk [vmem:[#allocation3 + $0x40] sm:$0xff] %vm844, %v2878
      %2966 = vst.msk [vmem:[#allocation3 + $0x48] sm:$0xff] %vm844, %v2880
      %2967 = vst.msk [vmem:[#allocation3 + $0x50] sm:$0xff] %vm844, %v2882
      %2968 = vst.msk [vmem:[#allocation3 + $0x58] sm:$0xff] %vm844, %v2884
      %2969 = vst.msk [vmem:[#allocation3 + $0x60] sm:$0xff] %vm844, %v2886
      %2970 = vst.msk [vmem:[#allocation3 + $0x68] sm:$0xff] %vm844, %v2888
      %2971 = vst.msk [vmem:[#allocation3 + $0x70] sm:$0xff] %vm844, %v2890
      %2972 = vst.msk [vmem:[#allocation3 + $0x78] sm:$0xff] %vm844, %v2892
      %2973 = vst.msk [vmem:[#allocation3 + $0x80] sm:$0xff] %vm844, %v2894
      %2974 = vst.msk [vmem:[#allocation3 + $0x88] sm:$0xff] %vm844, %v2896
      %2975 = vst.msk [vmem:[#allocation3 + $0x90] sm:$0xff] %vm844, %v2898
      %2976 = vst.msk [vmem:[#allocation3 + $0x98] sm:$0xff] %vm844, %v2900
      %2977 = vst.msk [vmem:[#allocation3 + $0xa0] sm:$0xff] %vm844, %v2902
      %2978 = vst.msk [vmem:[#allocation3 + $0xa8] sm:$0xff] %vm844, %v2904
      %2979 = vst.msk [vmem:[#allocation3 + $0xb0] sm:$0xff] %vm844, %v2906
      %2980 = vst.msk [vmem:[#allocation3 + $0xb8] sm:$0xff] %vm844, %v2908
      %2981 = vst.msk [vmem:[#allocation3 + $0xc0] sm:$0xff] %vm844, %v2910
      %2982 = vst.msk [vmem:[#allocation3 + $0xc8] sm:$0xff] %vm844, %v2912
      %2983 = vst.msk [vmem:[#allocation3 + $0xd0] sm:$0xff] %vm844, %v2914
      %2984 = vst.msk [vmem:[#allocation3 + $0xd8] sm:$0xff] %vm844, %v2916
      %2985 = vst.msk [vmem:[#allocation3 + $0xe0] sm:$0xff] %vm844, %v2918
      %2986 = vst.msk [vmem:[#allocation3 + $0xe8] sm:$0xff] %vm844, %v2920
      %2987 = vst.msk [vmem:[#allocation3 + $0xf0] sm:$0xff] %vm844, %v2922
      %2988 = vst.msk [vmem:[#allocation3 + $0xf8] sm:$0xff] %vm844, %v2924
      %v2989 = vld [vmem:[%s394] sm:$0xff]
      %v2990 = vld [vmem:[%s394 + $0x8] sm:$0xff]
      %v2991 = vld [vmem:[%s394 + $0x18] sm:$0xff]
      %v2992 = vld [vmem:[%s394 + $0x20] sm:$0xff]
      %v2993 = vld [vmem:[%s394 + $0x30] sm:$0xff]
      %v2994 = vld [vmem:[%s394 + $0x38] sm:$0xff]
      %v2995 = vld [vmem:[%s394 + $0x48] sm:$0xff]
      %v2996 = vld [vmem:[%s394 + $0x50] sm:$0xff]
      %v2997 = vld [vmem:[%s394 + $0x60] sm:$0xff]
      %v2998 = vld [vmem:[%s394 + $0x68] sm:$0xff]
      %v2999 = vld [vmem:[%s394 + $0x78] sm:$0xff]
      %v3000 = vld [vmem:[%s394 + $0x80] sm:$0xff]
      %v3001 = vld [vmem:[%s394 + $0x90] sm:$0xff]
      %v3002 = vld [vmem:[%s394 + $0x98] sm:$0xff]
      %v3003 = vld [vmem:[%s394 + $0xa8] sm:$0xff]
      %v3004 = vld [vmem:[%s394 + $0xb0] sm:$0xff]
      %v3005 = vld [vmem:[%s394 + $0xc0] sm:$0xff]
      %v3006 = vld [vmem:[%s394 + $0xc8] sm:$0xff]
      %v3007 = vld [vmem:[%s394 + $0xd8] sm:$0xff]
      %v3008 = vld [vmem:[%s394 + $0xe0] sm:$0xff]
      %v3009 = vld [vmem:[%s394 + $0xf0] sm:$0xff]
      %v3010 = vld [vmem:[%s394 + $0xf8] sm:$0xff]
      %v3011 = vld [vmem:[%s394 + $0x108] sm:$0xff]
      %v3012 = vld [vmem:[%s394 + $0x110] sm:$0xff]
      %v3013 = vld [vmem:[%s394 + $0x120] sm:$0xff]
      %v3014 = vld [vmem:[%s394 + $0x128] sm:$0xff]
      %v3015 = vld [vmem:[%s394 + $0x138] sm:$0xff]
      %v3016 = vld [vmem:[%s394 + $0x140] sm:$0xff]
      %v3017 = vld [vmem:[%s394 + $0x150] sm:$0xff]
      %v3018 = vld [vmem:[%s394 + $0x158] sm:$0xff]
      %v3019 = vld [vmem:[%s394 + $0x168] sm:$0xff]
      %v3020 = vld [vmem:[%s394 + $0x170] sm:$0xff]
      %3053 = vrot.lane.b32.xlu0 %v2989, 24
      %v3054 = vpop.permute.xlu0 %3053
      %3055 = vrot.lane.b32.xlu0 %v2990, 24
      %v3056 = vpop.permute.xlu0 %3055
      %3057 = vrot.lane.b32.xlu0 %v2991, 24
      %v3058 = vpop.permute.xlu0 %3057
      %3059 = vrot.lane.b32.xlu0 %v2992, 24
      %v3060 = vpop.permute.xlu0 %3059
      %3061 = vrot.lane.b32.xlu0 %v2993, 24
      %v3062 = vpop.permute.xlu0 %3061
      %3063 = vrot.lane.b32.xlu0 %v2994, 24
      %v3064 = vpop.permute.xlu0 %3063
      %3065 = vrot.lane.b32.xlu0 %v2995, 24
      %v3066 = vpop.permute.xlu0 %3065
      %3067 = vrot.lane.b32.xlu0 %v2996, 24
      %v3068 = vpop.permute.xlu0 %3067
      %3069 = vrot.lane.b32.xlu0 %v2997, 24
      %v3070 = vpop.permute.xlu0 %3069
      %3071 = vrot.lane.b32.xlu0 %v2998, 24
      %v3072 = vpop.permute.xlu0 %3071
      %3073 = vrot.lane.b32.xlu0 %v2999, 24
      %v3074 = vpop.permute.xlu0 %3073
      %3075 = vrot.lane.b32.xlu0 %v3000, 24
      %v3076 = vpop.permute.xlu0 %3075
      %3077 = vrot.lane.b32.xlu0 %v3001, 24
      %v3078 = vpop.permute.xlu0 %3077
      %3079 = vrot.lane.b32.xlu0 %v3002, 24
      %v3080 = vpop.permute.xlu0 %3079
      %3081 = vrot.lane.b32.xlu0 %v3003, 24
      %v3082 = vpop.permute.xlu0 %3081
      %3083 = vrot.lane.b32.xlu0 %v3004, 24
      %v3084 = vpop.permute.xlu0 %3083
      %3085 = vrot.lane.b32.xlu0 %v3005, 24
      %v3086 = vpop.permute.xlu0 %3085
      %3087 = vrot.lane.b32.xlu0 %v3006, 24
      %v3088 = vpop.permute.xlu0 %3087
      %3089 = vrot.lane.b32.xlu0 %v3007, 24
      %v3090 = vpop.permute.xlu0 %3089
      %3091 = vrot.lane.b32.xlu0 %v3008, 24
      %v3092 = vpop.permute.xlu0 %3091
      %3093 = vrot.lane.b32.xlu0 %v3009, 24
      %v3094 = vpop.permute.xlu0 %3093
      %3095 = vrot.lane.b32.xlu0 %v3010, 24
      %v3096 = vpop.permute.xlu0 %3095
      %3097 = vrot.lane.b32.xlu0 %v3011, 24
      %v3098 = vpop.permute.xlu0 %3097
      %3099 = vrot.lane.b32.xlu0 %v3012, 24
      %v3100 = vpop.permute.xlu0 %3099
      %3101 = vrot.lane.b32.xlu0 %v3013, 24
      %v3102 = vpop.permute.xlu0 %3101
      %3103 = vrot.lane.b32.xlu0 %v3014, 24
      %v3104 = vpop.permute.xlu0 %3103
      %3105 = vrot.lane.b32.xlu0 %v3015, 24
      %v3106 = vpop.permute.xlu0 %3105
      %3107 = vrot.lane.b32.xlu0 %v3016, 24
      %v3108 = vpop.permute.xlu0 %3107
      %3109 = vrot.lane.b32.xlu0 %v3017, 24
      %v3110 = vpop.permute.xlu0 %3109
      %3111 = vrot.lane.b32.xlu0 %v3018, 24
      %v3112 = vpop.permute.xlu0 %3111
      %3113 = vrot.lane.b32.xlu0 %v3019, 24
      %v3114 = vpop.permute.xlu0 %3113
      %3115 = vrot.lane.b32.xlu0 %v3020, 24
      %v3116 = vpop.permute.xlu0 %3115
      %3149 = vst.msk [vmem:[#allocation3] sm:$0xff] %vm1037, %v3054
      %3150 = vst.msk [vmem:[#allocation3 + $0x8] sm:$0xff] %vm1037, %v3056
      %3151 = vst.msk [vmem:[#allocation3 + $0x10] sm:$0xff] %vm1037, %v3058
      %3152 = vst.msk [vmem:[#allocation3 + $0x18] sm:$0xff] %vm1037, %v3060
      %3153 = vst.msk [vmem:[#allocation3 + $0x20] sm:$0xff] %vm1037, %v3062
      %3154 = vst.msk [vmem:[#allocation3 + $0x28] sm:$0xff] %vm1037, %v3064
      %3155 = vst.msk [vmem:[#allocation3 + $0x30] sm:$0xff] %vm1037, %v3066
      %3156 = vst.msk [vmem:[#allocation3 + $0x38] sm:$0xff] %vm1037, %v3068
      %3157 = vst.msk [vmem:[#allocation3 + $0x40] sm:$0xff] %vm1037, %v3070
      %3158 = vst.msk [vmem:[#allocation3 + $0x48] sm:$0xff] %vm1037, %v3072
      %3159 = vst.msk [vmem:[#allocation3 + $0x50] sm:$0xff] %vm1037, %v3074
      %3160 = vst.msk [vmem:[#allocation3 + $0x58] sm:$0xff] %vm1037, %v3076
      %3161 = vst.msk [vmem:[#allocation3 + $0x60] sm:$0xff] %vm1037, %v3078
      %3162 = vst.msk [vmem:[#allocation3 + $0x68] sm:$0xff] %vm1037, %v3080
      %3163 = vst.msk [vmem:[#allocation3 + $0x70] sm:$0xff] %vm1037, %v3082
      %3164 = vst.msk [vmem:[#allocation3 + $0x78] sm:$0xff] %vm1037, %v3084
      %3165 = vst.msk [vmem:[#allocation3 + $0x80] sm:$0xff] %vm1037, %v3086
      %3166 = vst.msk [vmem:[#allocation3 + $0x88] sm:$0xff] %vm1037, %v3088
      %3167 = vst.msk [vmem:[#allocation3 + $0x90] sm:$0xff] %vm1037, %v3090
      %3168 = vst.msk [vmem:[#allocation3 + $0x98] sm:$0xff] %vm1037, %v3092
      %3169 = vst.msk [vmem:[#allocation3 + $0xa0] sm:$0xff] %vm1037, %v3094
      %3170 = vst.msk [vmem:[#allocation3 + $0xa8] sm:$0xff] %vm1037, %v3096
      %3171 = vst.msk [vmem:[#allocation3 + $0xb0] sm:$0xff] %vm1037, %v3098
      %3172 = vst.msk [vmem:[#allocation3 + $0xb8] sm:$0xff] %vm1037, %v3100
      %3173 = vst.msk [vmem:[#allocation3 + $0xc0] sm:$0xff] %vm1037, %v3102
      %3174 = vst.msk [vmem:[#allocation3 + $0xc8] sm:$0xff] %vm1037, %v3104
      %3175 = vst.msk [vmem:[#allocation3 + $0xd0] sm:$0xff] %vm1037, %v3106
      %3176 = vst.msk [vmem:[#allocation3 + $0xd8] sm:$0xff] %vm1037, %v3108
      %3177 = vst.msk [vmem:[#allocation3 + $0xe0] sm:$0xff] %vm1037, %v3110
      %3178 = vst.msk [vmem:[#allocation3 + $0xe8] sm:$0xff] %vm1037, %v3112
      %3179 = vst.msk [vmem:[#allocation3 + $0xf0] sm:$0xff] %vm1037, %v3114
      %3180 = vst.msk [vmem:[#allocation3 + $0xf8] sm:$0xff] %vm1037, %v3116
      %v3181 = vld [vmem:[%s394 + $0x1] sm:$0xff]
      %v3182 = vld [vmem:[%s394 + $0x9] sm:$0xff]
      %v3183 = vld [vmem:[%s394 + $0x19] sm:$0xff]
      %v3184 = vld [vmem:[%s394 + $0x21] sm:$0xff]
      %v3185 = vld [vmem:[%s394 + $0x31] sm:$0xff]
      %v3186 = vld [vmem:[%s394 + $0x39] sm:$0xff]
      %v3187 = vld [vmem:[%s394 + $0x49] sm:$0xff]
      %v3188 = vld [vmem:[%s394 + $0x51] sm:$0xff]
      %v3189 = vld [vmem:[%s394 + $0x61] sm:$0xff]
      %v3190 = vld [vmem:[%s394 + $0x69] sm:$0xff]
      %v3191 = vld [vmem:[%s394 + $0x79] sm:$0xff]
      %v3192 = vld [vmem:[%s394 + $0x81] sm:$0xff]
      %v3193 = vld [vmem:[%s394 + $0x91] sm:$0xff]
      %v3194 = vld [vmem:[%s394 + $0x99] sm:$0xff]
      %v3195 = vld [vmem:[%s394 + $0xa9] sm:$0xff]
      %v3196 = vld [vmem:[%s394 + $0xb1] sm:$0xff]
      %v3197 = vld [vmem:[%s394 + $0xc1] sm:$0xff]
      %v3198 = vld [vmem:[%s394 + $0xc9] sm:$0xff]
      %v3199 = vld [vmem:[%s394 + $0xd9] sm:$0xff]
      %v3200 = vld [vmem:[%s394 + $0xe1] sm:$0xff]
      %v3201 = vld [vmem:[%s394 + $0xf1] sm:$0xff]
      %v3202 = vld [vmem:[%s394 + $0xf9] sm:$0xff]
      %v3203 = vld [vmem:[%s394 + $0x109] sm:$0xff]
      %v3204 = vld [vmem:[%s394 + $0x111] sm:$0xff]
      %v3205 = vld [vmem:[%s394 + $0x121] sm:$0xff]
      %v3206 = vld [vmem:[%s394 + $0x129] sm:$0xff]
      %v3207 = vld [vmem:[%s394 + $0x139] sm:$0xff]
      %v3208 = vld [vmem:[%s394 + $0x141] sm:$0xff]
      %v3209 = vld [vmem:[%s394 + $0x151] sm:$0xff]
      %v3210 = vld [vmem:[%s394 + $0x159] sm:$0xff]
      %v3211 = vld [vmem:[%s394 + $0x169] sm:$0xff]
      %v3212 = vld [vmem:[%s394 + $0x171] sm:$0xff]
      %3245 = vrot.lane.b32.xlu0 %v3181, 32
      %v3246 = vpop.permute.xlu0 %3245
      %3247 = vrot.lane.b32.xlu0 %v3182, 32
      %v3248 = vpop.permute.xlu0 %3247
      %3249 = vrot.lane.b32.xlu0 %v3183, 32
      %v3250 = vpop.permute.xlu0 %3249
      %3251 = vrot.lane.b32.xlu0 %v3184, 32
      %v3252 = vpop.permute.xlu0 %3251
      %3253 = vrot.lane.b32.xlu0 %v3185, 32
      %v3254 = vpop.permute.xlu0 %3253
      %3255 = vrot.lane.b32.xlu0 %v3186, 32
      %v3256 = vpop.permute.xlu0 %3255
      %3257 = vrot.lane.b32.xlu0 %v3187, 32
      %v3258 = vpop.permute.xlu0 %3257
      %3259 = vrot.lane.b32.xlu0 %v3188, 32
      %v3260 = vpop.permute.xlu0 %3259
      %3261 = vrot.lane.b32.xlu0 %v3189, 32
      %v3262 = vpop.permute.xlu0 %3261
      %3263 = vrot.lane.b32.xlu0 %v3190, 32
      %v3264 = vpop.permute.xlu0 %3263
      %3265 = vrot.lane.b32.xlu0 %v3191, 32
      %v3266 = vpop.permute.xlu0 %3265
      %3267 = vrot.lane.b32.xlu0 %v3192, 32
      %v3268 = vpop.permute.xlu0 %3267
      %3269 = vrot.lane.b32.xlu0 %v3193, 32
      %v3270 = vpop.permute.xlu0 %3269
      %3271 = vrot.lane.b32.xlu0 %v3194, 32
      %v3272 = vpop.permute.xlu0 %3271
      %3273 = vrot.lane.b32.xlu0 %v3195, 32
      %v3274 = vpop.permute.xlu0 %3273
      %3275 = vrot.lane.b32.xlu0 %v3196, 32
      %v3276 = vpop.permute.xlu0 %3275
      %3277 = vrot.lane.b32.xlu0 %v3197, 32
      %v3278 = vpop.permute.xlu0 %3277
      %3279 = vrot.lane.b32.xlu0 %v3198, 32
      %v3280 = vpop.permute.xlu0 %3279
      %3281 = vrot.lane.b32.xlu0 %v3199, 32
      %v3282 = vpop.permute.xlu0 %3281
      %3283 = vrot.lane.b32.xlu0 %v3200, 32
      %v3284 = vpop.permute.xlu0 %3283
      %3285 = vrot.lane.b32.xlu0 %v3201, 32
      %v3286 = vpop.permute.xlu0 %3285
      %3287 = vrot.lane.b32.xlu0 %v3202, 32
      %v3288 = vpop.permute.xlu0 %3287
      %3289 = vrot.lane.b32.xlu0 %v3203, 32
      %v3290 = vpop.permute.xlu0 %3289
      %3291 = vrot.lane.b32.xlu0 %v3204, 32
      %v3292 = vpop.permute.xlu0 %3291
      %3293 = vrot.lane.b32.xlu0 %v3205, 32
      %v3294 = vpop.permute.xlu0 %3293
      %3295 = vrot.lane.b32.xlu0 %v3206, 32
      %v3296 = vpop.permute.xlu0 %3295
      %3297 = vrot.lane.b32.xlu0 %v3207, 32
      %v3298 = vpop.permute.xlu0 %3297
      %3299 = vrot.lane.b32.xlu0 %v3208, 32
      %v3300 = vpop.permute.xlu0 %3299
      %3301 = vrot.lane.b32.xlu0 %v3209, 32
      %v3302 = vpop.permute.xlu0 %3301
      %3303 = vrot.lane.b32.xlu0 %v3210, 32
      %v3304 = vpop.permute.xlu0 %3303
      %3305 = vrot.lane.b32.xlu0 %v3211, 32
      %v3306 = vpop.permute.xlu0 %3305
      %3307 = vrot.lane.b32.xlu0 %v3212, 32
      %v3308 = vpop.permute.xlu0 %3307
      %3341 = vst.msk [vmem:[#allocation3] sm:$0xff] %vm1230, %v3246
      %3342 = vst.msk [vmem:[#allocation3 + $0x8] sm:$0xff] %vm1230, %v3248
      %3343 = vst.msk [vmem:[#allocation3 + $0x10] sm:$0xff] %vm1230, %v3250
      %3344 = vst.msk [vmem:[#allocation3 + $0x18] sm:$0xff] %vm1230, %v3252
      %3345 = vst.msk [vmem:[#allocation3 + $0x20] sm:$0xff] %vm1230, %v3254
      %3346 = vst.msk [vmem:[#allocation3 + $0x28] sm:$0xff] %vm1230, %v3256
      %3347 = vst.msk [vmem:[#allocation3 + $0x30] sm:$0xff] %vm1230, %v3258
      %3348 = vst.msk [vmem:[#allocation3 + $0x38] sm:$0xff] %vm1230, %v3260
      %3349 = vst.msk [vmem:[#allocation3 + $0x40] sm:$0xff] %vm1230, %v3262
      %3350 = vst.msk [vmem:[#allocation3 + $0x48] sm:$0xff] %vm1230, %v3264
      %3351 = vst.msk [vmem:[#allocation3 + $0x50] sm:$0xff] %vm1230, %v3266
      %3352 = vst.msk [vmem:[#allocation3 + $0x58] sm:$0xff] %vm1230, %v3268
      %3353 = vst.msk [vmem:[#allocation3 + $0x60] sm:$0xff] %vm1230, %v3270
      %3354 = vst.msk [vmem:[#allocation3 + $0x68] sm:$0xff] %vm1230, %v3272
      %3355 = vst.msk [vmem:[#allocation3 + $0x70] sm:$0xff] %vm1230, %v3274
      %3356 = vst.msk [vmem:[#allocation3 + $0x78] sm:$0xff] %vm1230, %v3276
      %3357 = vst.msk [vmem:[#allocation3 + $0x80] sm:$0xff] %vm1230, %v3278
      %3358 = vst.msk [vmem:[#allocation3 + $0x88] sm:$0xff] %vm1230, %v3280
      %3359 = vst.msk [vmem:[#allocation3 + $0x90] sm:$0xff] %vm1230, %v3282
      %3360 = vst.msk [vmem:[#allocation3 + $0x98] sm:$0xff] %vm1230, %v3284
      %3361 = vst.msk [vmem:[#allocation3 + $0xa0] sm:$0xff] %vm1230, %v3286
      %3362 = vst.msk [vmem:[#allocation3 + $0xa8] sm:$0xff] %vm1230, %v3288
      %3363 = vst.msk [vmem:[#allocation3 + $0xb0] sm:$0xff] %vm1230, %v3290
      %3364 = vst.msk [vmem:[#allocation3 + $0xb8] sm:$0xff] %vm1230, %v3292
      %3365 = vst.msk [vmem:[#allocation3 + $0xc0] sm:$0xff] %vm1230, %v3294
      %3366 = vst.msk [vmem:[#allocation3 + $0xc8] sm:$0xff] %vm1230, %v3296
      %3367 = vst.msk [vmem:[#allocation3 + $0xd0] sm:$0xff] %vm1230, %v3298
      %3368 = vst.msk [vmem:[#allocation3 + $0xd8] sm:$0xff] %vm1230, %v3300
      %3369 = vst.msk [vmem:[#allocation3 + $0xe0] sm:$0xff] %vm1230, %v3302
      %3370 = vst.msk [vmem:[#allocation3 + $0xe8] sm:$0xff] %vm1230, %v3304
      %3371 = vst.msk [vmem:[#allocation3 + $0xf0] sm:$0xff] %vm1230, %v3306
      %3372 = vst.msk [vmem:[#allocation3 + $0xf8] sm:$0xff] %vm1230, %v3308
      %v3373 = vld [vmem:[%s394 + $0x2] sm:$0xff]
      %v3374 = vld [vmem:[%s394 + $0xa] sm:$0xff]
      %v3375 = vld [vmem:[%s394 + $0x1a] sm:$0xff]
      %v3376 = vld [vmem:[%s394 + $0x22] sm:$0xff]
      %v3377 = vld [vmem:[%s394 + $0x32] sm:$0xff]
      %v3378 = vld [vmem:[%s394 + $0x3a] sm:$0xff]
      %v3379 = vld [vmem:[%s394 + $0x4a] sm:$0xff]
      %v3380 = vld [vmem:[%s394 + $0x52] sm:$0xff]
      %v3381 = vld [vmem:[%s394 + $0x62] sm:$0xff]
      %v3382 = vld [vmem:[%s394 + $0x6a] sm:$0xff]
      %v3383 = vld [vmem:[%s394 + $0x7a] sm:$0xff]
      %v3384 = vld [vmem:[%s394 + $0x82] sm:$0xff]
      %v3385 = vld [vmem:[%s394 + $0x92] sm:$0xff]
      %v3386 = vld [vmem:[%s394 + $0x9a] sm:$0xff]
      %v3387 = vld [vmem:[%s394 + $0xaa] sm:$0xff]
      %v3388 = vld [vmem:[%s394 + $0xb2] sm:$0xff]
      %v3389 = vld [vmem:[%s394 + $0xc2] sm:$0xff]
      %v3390 = vld [vmem:[%s394 + $0xca] sm:$0xff]
      %v3391 = vld [vmem:[%s394 + $0xda] sm:$0xff]
      %v3392 = vld [vmem:[%s394 + $0xe2] sm:$0xff]
      %v3393 = vld [vmem:[%s394 + $0xf2] sm:$0xff]
      %v3394 = vld [vmem:[%s394 + $0xfa] sm:$0xff]
      %v3395 = vld [vmem:[%s394 + $0x10a] sm:$0xff]
      %v3396 = vld [vmem:[%s394 + $0x112] sm:$0xff]
      %v3397 = vld [vmem:[%s394 + $0x122] sm:$0xff]
      %v3398 = vld [vmem:[%s394 + $0x12a] sm:$0xff]
      %v3399 = vld [vmem:[%s394 + $0x13a] sm:$0xff]
      %v3400 = vld [vmem:[%s394 + $0x142] sm:$0xff]
      %v3401 = vld [vmem:[%s394 + $0x152] sm:$0xff]
      %v3402 = vld [vmem:[%s394 + $0x15a] sm:$0xff]
      %v3403 = vld [vmem:[%s394 + $0x16a] sm:$0xff]
      %v3404 = vld [vmem:[%s394 + $0x172] sm:$0xff]
      %3437 = vrot.lane.b32.xlu0 %v3373, 40
      %v3438 = vpop.permute.xlu0 %3437
      %3439 = vrot.lane.b32.xlu0 %v3374, 40
      %v3440 = vpop.permute.xlu0 %3439
      %3441 = vrot.lane.b32.xlu0 %v3375, 40
      %v3442 = vpop.permute.xlu0 %3441
      %3443 = vrot.lane.b32.xlu0 %v3376, 40
      %v3444 = vpop.permute.xlu0 %3443
      %3445 = vrot.lane.b32.xlu0 %v3377, 40
      %v3446 = vpop.permute.xlu0 %3445
      %3447 = vrot.lane.b32.xlu0 %v3378, 40
      %v3448 = vpop.permute.xlu0 %3447
      %3449 = vrot.lane.b32.xlu0 %v3379, 40
      %v3450 = vpop.permute.xlu0 %3449
      %3451 = vrot.lane.b32.xlu0 %v3380, 40
      %v3452 = vpop.permute.xlu0 %3451
      %3453 = vrot.lane.b32.xlu0 %v3381, 40
      %v3454 = vpop.permute.xlu0 %3453
      %3455 = vrot.lane.b32.xlu0 %v3382, 40
      %v3456 = vpop.permute.xlu0 %3455
      %3457 = vrot.lane.b32.xlu0 %v3383, 40
      %v3458 = vpop.permute.xlu0 %3457
      %3459 = vrot.lane.b32.xlu0 %v3384, 40
      %v3460 = vpop.permute.xlu0 %3459
      %3461 = vrot.lane.b32.xlu0 %v3385, 40
      %v3462 = vpop.permute.xlu0 %3461
      %3463 = vrot.lane.b32.xlu0 %v3386, 40
      %v3464 = vpop.permute.xlu0 %3463
      %3465 = vrot.lane.b32.xlu0 %v3387, 40
      %v3466 = vpop.permute.xlu0 %3465
      %3467 = vrot.lane.b32.xlu0 %v3388, 40
      %v3468 = vpop.permute.xlu0 %3467
      %3469 = vrot.lane.b32.xlu0 %v3389, 40
      %v3470 = vpop.permute.xlu0 %3469
      %3471 = vrot.lane.b32.xlu0 %v3390, 40
      %v3472 = vpop.permute.xlu0 %3471
      %3473 = vrot.lane.b32.xlu0 %v3391, 40
      %v3474 = vpop.permute.xlu0 %3473
      %3475 = vrot.lane.b32.xlu0 %v3392, 40
      %v3476 = vpop.permute.xlu0 %3475
      %3477 = vrot.lane.b32.xlu0 %v3393, 40
      %v3478 = vpop.permute.xlu0 %3477
      %3479 = vrot.lane.b32.xlu0 %v3394, 40
      %v3480 = vpop.permute.xlu0 %3479
      %3481 = vrot.lane.b32.xlu0 %v3395, 40
      %v3482 = vpop.permute.xlu0 %3481
      %3483 = vrot.lane.b32.xlu0 %v3396, 40
      %v3484 = vpop.permute.xlu0 %3483
      %3485 = vrot.lane.b32.xlu0 %v3397, 40
      %v3486 = vpop.permute.xlu0 %3485
      %3487 = vrot.lane.b32.xlu0 %v3398, 40
      %v3488 = vpop.permute.xlu0 %3487
      %3489 = vrot.lane.b32.xlu0 %v3399, 40
      %v3490 = vpop.permute.xlu0 %3489
      %3491 = vrot.lane.b32.xlu0 %v3400, 40
      %v3492 = vpop.permute.xlu0 %3491
      %3493 = vrot.lane.b32.xlu0 %v3401, 40
      %v3494 = vpop.permute.xlu0 %3493
      %3495 = vrot.lane.b32.xlu0 %v3402, 40
      %v3496 = vpop.permute.xlu0 %3495
      %3497 = vrot.lane.b32.xlu0 %v3403, 40
      %v3498 = vpop.permute.xlu0 %3497
      %3499 = vrot.lane.b32.xlu0 %v3404, 40
      %v3500 = vpop.permute.xlu0 %3499
      %3533 = vst.msk [vmem:[#allocation3] sm:$0xff] %vm1423, %v3438
      %3534 = vst.msk [vmem:[#allocation3 + $0x8] sm:$0xff] %vm1423, %v3440
      %3535 = vst.msk [vmem:[#allocation3 + $0x10] sm:$0xff] %vm1423, %v3442
      %3536 = vst.msk [vmem:[#allocation3 + $0x18] sm:$0xff] %vm1423, %v3444
      %3537 = vst.msk [vmem:[#allocation3 + $0x20] sm:$0xff] %vm1423, %v3446
      %3538 = vst.msk [vmem:[#allocation3 + $0x28] sm:$0xff] %vm1423, %v3448
      %3539 = vst.msk [vmem:[#allocation3 + $0x30] sm:$0xff] %vm1423, %v3450
      %3540 = vst.msk [vmem:[#allocation3 + $0x38] sm:$0xff] %vm1423, %v3452
      %3541 = vst.msk [vmem:[#allocation3 + $0x40] sm:$0xff] %vm1423, %v3454
      %3542 = vst.msk [vmem:[#allocation3 + $0x48] sm:$0xff] %vm1423, %v3456
      %3543 = vst.msk [vmem:[#allocation3 + $0x50] sm:$0xff] %vm1423, %v3458
      %3544 = vst.msk [vmem:[#allocation3 + $0x58] sm:$0xff] %vm1423, %v3460
      %3545 = vst.msk [vmem:[#allocation3 + $0x60] sm:$0xff] %vm1423, %v3462
      %3546 = vst.msk [vmem:[#allocation3 + $0x68] sm:$0xff] %vm1423, %v3464
      %3547 = vst.msk [vmem:[#allocation3 + $0x70] sm:$0xff] %vm1423, %v3466
      %3548 = vst.msk [vmem:[#allocation3 + $0x78] sm:$0xff] %vm1423, %v3468
      %3549 = vst.msk [vmem:[#allocation3 + $0x80] sm:$0xff] %vm1423, %v3470
      %3550 = vst.msk [vmem:[#allocation3 + $0x88] sm:$0xff] %vm1423, %v3472
      %3551 = vst.msk [vmem:[#allocation3 + $0x90] sm:$0xff] %vm1423, %v3474
      %3552 = vst.msk [vmem:[#allocation3 + $0x98] sm:$0xff] %vm1423, %v3476
      %3553 = vst.msk [vmem:[#allocation3 + $0xa0] sm:$0xff] %vm1423, %v3478
      %3554 = vst.msk [vmem:[#allocation3 + $0xa8] sm:$0xff] %vm1423, %v3480
      %3555 = vst.msk [vmem:[#allocation3 + $0xb0] sm:$0xff] %vm1423, %v3482
      %3556 = vst.msk [vmem:[#allocation3 + $0xb8] sm:$0xff] %vm1423, %v3484
      %3557 = vst.msk [vmem:[#allocation3 + $0xc0] sm:$0xff] %vm1423, %v3486
      %3558 = vst.msk [vmem:[#allocation3 + $0xc8] sm:$0xff] %vm1423, %v3488
      %3559 = vst.msk [vmem:[#allocation3 + $0xd0] sm:$0xff] %vm1423, %v3490
      %3560 = vst.msk [vmem:[#allocation3 + $0xd8] sm:$0xff] %vm1423, %v3492
      %3561 = vst.msk [vmem:[#allocation3 + $0xe0] sm:$0xff] %vm1423, %v3494
      %3562 = vst.msk [vmem:[#allocation3 + $0xe8] sm:$0xff] %vm1423, %v3496
      %3563 = vst.msk [vmem:[#allocation3 + $0xf0] sm:$0xff] %vm1423, %v3498
      %3564 = vst.msk [vmem:[#allocation3 + $0xf8] sm:$0xff] %vm1423, %v3500
      %v3565 = vld [vmem:[%s1456] sm:$0xff]
      %v3566 = vld [vmem:[%s1456 + $0x8] sm:$0xff]
      %v3567 = vld [vmem:[%s1456 + $0x18] sm:$0xff]
      %v3568 = vld [vmem:[%s1456 + $0x20] sm:$0xff]
      %v3569 = vld [vmem:[%s1456 + $0x30] sm:$0xff]
      %v3570 = vld [vmem:[%s1456 + $0x38] sm:$0xff]
      %v3571 = vld [vmem:[%s1456 + $0x48] sm:$0xff]
      %v3572 = vld [vmem:[%s1456 + $0x50] sm:$0xff]
      %v3573 = vld [vmem:[%s1456 + $0x60] sm:$0xff]
      %v3574 = vld [vmem:[%s1456 + $0x68] sm:$0xff]
      %v3575 = vld [vmem:[%s1456 + $0x78] sm:$0xff]
      %v3576 = vld [vmem:[%s1456 + $0x80] sm:$0xff]
      %v3577 = vld [vmem:[%s1456 + $0x90] sm:$0xff]
      %v3578 = vld [vmem:[%s1456 + $0x98] sm:$0xff]
      %v3579 = vld [vmem:[%s1456 + $0xa8] sm:$0xff]
      %v3580 = vld [vmem:[%s1456 + $0xb0] sm:$0xff]
      %v3581 = vld [vmem:[%s1456 + $0xc0] sm:$0xff]
      %v3582 = vld [vmem:[%s1456 + $0xc8] sm:$0xff]
      %v3583 = vld [vmem:[%s1456 + $0xd8] sm:$0xff]
      %v3584 = vld [vmem:[%s1456 + $0xe0] sm:$0xff]
      %v3585 = vld [vmem:[%s1456 + $0xf0] sm:$0xff]
      %v3586 = vld [vmem:[%s1456 + $0xf8] sm:$0xff]
      %v3587 = vld [vmem:[%s1456 + $0x108] sm:$0xff]
      %v3588 = vld [vmem:[%s1456 + $0x110] sm:$0xff]
      %v3589 = vld [vmem:[%s1456 + $0x120] sm:$0xff]
      %v3590 = vld [vmem:[%s1456 + $0x128] sm:$0xff]
      %v3591 = vld [vmem:[%s1456 + $0x138] sm:$0xff]
      %v3592 = vld [vmem:[%s1456 + $0x140] sm:$0xff]
      %v3593 = vld [vmem:[%s1456 + $0x150] sm:$0xff]
      %v3594 = vld [vmem:[%s1456 + $0x158] sm:$0xff]
      %v3595 = vld [vmem:[%s1456 + $0x168] sm:$0xff]
      %v3596 = vld [vmem:[%s1456 + $0x170] sm:$0xff]
      %3629 = vrot.lane.b32.xlu0 %v3565, 48
      %v3630 = vpop.permute.xlu0 %3629
      %3631 = vrot.lane.b32.xlu0 %v3566, 48
      %v3632 = vpop.permute.xlu0 %3631
      %3633 = vrot.lane.b32.xlu0 %v3567, 48
      %v3634 = vpop.permute.xlu0 %3633
      %3635 = vrot.lane.b32.xlu0 %v3568, 48
      %v3636 = vpop.permute.xlu0 %3635
      %3637 = vrot.lane.b32.xlu0 %v3569, 48
      %v3638 = vpop.permute.xlu0 %3637
      %3639 = vrot.lane.b32.xlu0 %v3570, 48
      %v3640 = vpop.permute.xlu0 %3639
      %3641 = vrot.lane.b32.xlu0 %v3571, 48
      %v3642 = vpop.permute.xlu0 %3641
      %3643 = vrot.lane.b32.xlu0 %v3572, 48
      %v3644 = vpop.permute.xlu0 %3643
      %3645 = vrot.lane.b32.xlu0 %v3573, 48
      %v3646 = vpop.permute.xlu0 %3645
      %3647 = vrot.lane.b32.xlu0 %v3574, 48
      %v3648 = vpop.permute.xlu0 %3647
      %3649 = vrot.lane.b32.xlu0 %v3575, 48
      %v3650 = vpop.permute.xlu0 %3649
      %3651 = vrot.lane.b32.xlu0 %v3576, 48
      %v3652 = vpop.permute.xlu0 %3651
      %3653 = vrot.lane.b32.xlu0 %v3577, 48
      %v3654 = vpop.permute.xlu0 %3653
      %3655 = vrot.lane.b32.xlu0 %v3578, 48
      %v3656 = vpop.permute.xlu0 %3655
      %3657 = vrot.lane.b32.xlu0 %v3579, 48
      %v3658 = vpop.permute.xlu0 %3657
      %3659 = vrot.lane.b32.xlu0 %v3580, 48
      %v3660 = vpop.permute.xlu0 %3659
      %3661 = vrot.lane.b32.xlu0 %v3581, 48
      %v3662 = vpop.permute.xlu0 %3661
      %3663 = vrot.lane.b32.xlu0 %v3582, 48
      %v3664 = vpop.permute.xlu0 %3663
      %3665 = vrot.lane.b32.xlu0 %v3583, 48
      %v3666 = vpop.permute.xlu0 %3665
      %3667 = vrot.lane.b32.xlu0 %v3584, 48
      %v3668 = vpop.permute.xlu0 %3667
      %3669 = vrot.lane.b32.xlu0 %v3585, 48
      %v3670 = vpop.permute.xlu0 %3669
      %3671 = vrot.lane.b32.xlu0 %v3586, 48
      %v3672 = vpop.permute.xlu0 %3671
      %3673 = vrot.lane.b32.xlu0 %v3587, 48
      %v3674 = vpop.permute.xlu0 %3673
      %3675 = vrot.lane.b32.xlu0 %v3588, 48
      %v3676 = vpop.permute.xlu0 %3675
      %3677 = vrot.lane.b32.xlu0 %v3589, 48
      %v3678 = vpop.permute.xlu0 %3677
      %3679 = vrot.lane.b32.xlu0 %v3590, 48
      %v3680 = vpop.permute.xlu0 %3679
      %3681 = vrot.lane.b32.xlu0 %v3591, 48
      %v3682 = vpop.permute.xlu0 %3681
      %3683 = vrot.lane.b32.xlu0 %v3592, 48
      %v3684 = vpop.permute.xlu0 %3683
      %3685 = vrot.lane.b32.xlu0 %v3593, 48
      %v3686 = vpop.permute.xlu0 %3685
      %3687 = vrot.lane.b32.xlu0 %v3594, 48
      %v3688 = vpop.permute.xlu0 %3687
      %3689 = vrot.lane.b32.xlu0 %v3595, 48
      %v3690 = vpop.permute.xlu0 %3689
      %3691 = vrot.lane.b32.xlu0 %v3596, 48
      %v3692 = vpop.permute.xlu0 %3691
      %3725 = vst.msk [vmem:[#allocation3] sm:$0xff] %vm1617, %v3630
      %3726 = vst.msk [vmem:[#allocation3 + $0x8] sm:$0xff] %vm1617, %v3632
      %3727 = vst.msk [vmem:[#allocation3 + $0x10] sm:$0xff] %vm1617, %v3634
      %3728 = vst.msk [vmem:[#allocation3 + $0x18] sm:$0xff] %vm1617, %v3636
      %3729 = vst.msk [vmem:[#allocation3 + $0x20] sm:$0xff] %vm1617, %v3638
      %3730 = vst.msk [vmem:[#allocation3 + $0x28] sm:$0xff] %vm1617, %v3640
      %3731 = vst.msk [vmem:[#allocation3 + $0x30] sm:$0xff] %vm1617, %v3642
      %3732 = vst.msk [vmem:[#allocation3 + $0x38] sm:$0xff] %vm1617, %v3644
      %3733 = vst.msk [vmem:[#allocation3 + $0x40] sm:$0xff] %vm1617, %v3646
      %3734 = vst.msk [vmem:[#allocation3 + $0x48] sm:$0xff] %vm1617, %v3648
      %3735 = vst.msk [vmem:[#allocation3 + $0x50] sm:$0xff] %vm1617, %v3650
      %3736 = vst.msk [vmem:[#allocation3 + $0x58] sm:$0xff] %vm1617, %v3652
      %3737 = vst.msk [vmem:[#allocation3 + $0x60] sm:$0xff] %vm1617, %v3654
      %3738 = vst.msk [vmem:[#allocation3 + $0x68] sm:$0xff] %vm1617, %v3656
      %3739 = vst.msk [vmem:[#allocation3 + $0x70] sm:$0xff] %vm1617, %v3658
      %3740 = vst.msk [vmem:[#allocation3 + $0x78] sm:$0xff] %vm1617, %v3660
      %3741 = vst.msk [vmem:[#allocation3 + $0x80] sm:$0xff] %vm1617, %v3662
      %3742 = vst.msk [vmem:[#allocation3 + $0x88] sm:$0xff] %vm1617, %v3664
      %3743 = vst.msk [vmem:[#allocation3 + $0x90] sm:$0xff] %vm1617, %v3666
      %3744 = vst.msk [vmem:[#allocation3 + $0x98] sm:$0xff] %vm1617, %v3668
      %3745 = vst.msk [vmem:[#allocation3 + $0xa0] sm:$0xff] %vm1617, %v3670
      %3746 = vst.msk [vmem:[#allocation3 + $0xa8] sm:$0xff] %vm1617, %v3672
      %3747 = vst.msk [vmem:[#allocation3 + $0xb0] sm:$0xff] %vm1617, %v3674
      %3748 = vst.msk [vmem:[#allocation3 + $0xb8] sm:$0xff] %vm1617, %v3676
      %3749 = vst.msk [vmem:[#allocation3 + $0xc0] sm:$0xff] %vm1617, %v3678
      %3750 = vst.msk [vmem:[#allocation3 + $0xc8] sm:$0xff] %vm1617, %v3680
      %3751 = vst.msk [vmem:[#allocation3 + $0xd0] sm:$0xff] %vm1617, %v3682
      %3752 = vst.msk [vmem:[#allocation3 + $0xd8] sm:$0xff] %vm1617, %v3684
      %3753 = vst.msk [vmem:[#allocation3 + $0xe0] sm:$0xff] %vm1617, %v3686
      %3754 = vst.msk [vmem:[#allocation3 + $0xe8] sm:$0xff] %vm1617, %v3688
      %3755 = vst.msk [vmem:[#allocation3 + $0xf0] sm:$0xff] %vm1617, %v3690
      %3756 = vst.msk [vmem:[#allocation3 + $0xf8] sm:$0xff] %vm1617, %v3692
      %v3757 = vld [vmem:[%s1456 + $0x1] sm:$0xff]
      %v3758 = vld [vmem:[%s1456 + $0x9] sm:$0xff]
      %v3759 = vld [vmem:[%s1456 + $0x19] sm:$0xff]
      %v3760 = vld [vmem:[%s1456 + $0x21] sm:$0xff]
      %v3761 = vld [vmem:[%s1456 + $0x31] sm:$0xff]
      %v3762 = vld [vmem:[%s1456 + $0x39] sm:$0xff]
      %v3763 = vld [vmem:[%s1456 + $0x49] sm:$0xff]
      %v3764 = vld [vmem:[%s1456 + $0x51] sm:$0xff]
      %v3765 = vld [vmem:[%s1456 + $0x61] sm:$0xff]
      %v3766 = vld [vmem:[%s1456 + $0x69] sm:$0xff]
      %v3767 = vld [vmem:[%s1456 + $0x79] sm:$0xff]
      %v3768 = vld [vmem:[%s1456 + $0x81] sm:$0xff]
      %v3769 = vld [vmem:[%s1456 + $0x91] sm:$0xff]
      %v3770 = vld [vmem:[%s1456 + $0x99] sm:$0xff]
      %v3771 = vld [vmem:[%s1456 + $0xa9] sm:$0xff]
      %v3772 = vld [vmem:[%s1456 + $0xb1] sm:$0xff]
      %v3773 = vld [vmem:[%s1456 + $0xc1] sm:$0xff]
      %v3774 = vld [vmem:[%s1456 + $0xc9] sm:$0xff]
      %v3775 = vld [vmem:[%s1456 + $0xd9] sm:$0xff]
      %v3776 = vld [vmem:[%s1456 + $0xe1] sm:$0xff]
      %v3777 = vld [vmem:[%s1456 + $0xf1] sm:$0xff]
      %v3778 = vld [vmem:[%s1456 + $0xf9] sm:$0xff]
      %v3779 = vld [vmem:[%s1456 + $0x109] sm:$0xff]
      %v3780 = vld [vmem:[%s1456 + $0x111] sm:$0xff]
      %v3781 = vld [vmem:[%s1456 + $0x121] sm:$0xff]
      %v3782 = vld [vmem:[%s1456 + $0x129] sm:$0xff]
      %v3783 = vld [vmem:[%s1456 + $0x139] sm:$0xff]
      %v3784 = vld [vmem:[%s1456 + $0x141] sm:$0xff]
      %v3785 = vld [vmem:[%s1456 + $0x151] sm:$0xff]
      %v3786 = vld [vmem:[%s1456 + $0x159] sm:$0xff]
      %v3787 = vld [vmem:[%s1456 + $0x169] sm:$0xff]
      %v3788 = vld [vmem:[%s1456 + $0x171] sm:$0xff]
      %3821 = vrot.lane.b32.xlu0 %v3757, 56
      %v3822 = vpop.permute.xlu0 %3821
      %3823 = vrot.lane.b32.xlu0 %v3758, 56
      %v3824 = vpop.permute.xlu0 %3823
      %3825 = vrot.lane.b32.xlu0 %v3759, 56
      %v3826 = vpop.permute.xlu0 %3825
      %3827 = vrot.lane.b32.xlu0 %v3760, 56
      %v3828 = vpop.permute.xlu0 %3827
      %3829 = vrot.lane.b32.xlu0 %v3761, 56
      %v3830 = vpop.permute.xlu0 %3829
      %3831 = vrot.lane.b32.xlu0 %v3762, 56
      %v3832 = vpop.permute.xlu0 %3831
      %3833 = vrot.lane.b32.xlu0 %v3763, 56
      %v3834 = vpop.permute.xlu0 %3833
      %3835 = vrot.lane.b32.xlu0 %v3764, 56
      %v3836 = vpop.permute.xlu0 %3835
      %3837 = vrot.lane.b32.xlu0 %v3765, 56
      %v3838 = vpop.permute.xlu0 %3837
      %3839 = vrot.lane.b32.xlu0 %v3766, 56
      %v3840 = vpop.permute.xlu0 %3839
      %3841 = vrot.lane.b32.xlu0 %v3767, 56
      %v3842 = vpop.permute.xlu0 %3841
      %3843 = vrot.lane.b32.xlu0 %v3768, 56
      %v3844 = vpop.permute.xlu0 %3843
      %3845 = vrot.lane.b32.xlu0 %v3769, 56
      %v3846 = vpop.permute.xlu0 %3845
      %3847 = vrot.lane.b32.xlu0 %v3770, 56
      %v3848 = vpop.permute.xlu0 %3847
      %3849 = vrot.lane.b32.xlu0 %v3771, 56
      %v3850 = vpop.permute.xlu0 %3849
      %3851 = vrot.lane.b32.xlu0 %v3772, 56
      %v3852 = vpop.permute.xlu0 %3851
      %3853 = vrot.lane.b32.xlu0 %v3773, 56
      %v3854 = vpop.permute.xlu0 %3853
      %3855 = vrot.lane.b32.xlu0 %v3774, 56
      %v3856 = vpop.permute.xlu0 %3855
      %3857 = vrot.lane.b32.xlu0 %v3775, 56
      %v3858 = vpop.permute.xlu0 %3857
      %3859 = vrot.lane.b32.xlu0 %v3776, 56
      %v3860 = vpop.permute.xlu0 %3859
      %3861 = vrot.lane.b32.xlu0 %v3777, 56
      %v3862 = vpop.permute.xlu0 %3861
      %3863 = vrot.lane.b32.xlu0 %v3778, 56
      %v3864 = vpop.permute.xlu0 %3863
      %3865 = vrot.lane.b32.xlu0 %v3779, 56
      %v3866 = vpop.permute.xlu0 %3865
      %3867 = vrot.lane.b32.xlu0 %v3780, 56
      %v3868 = vpop.permute.xlu0 %3867
      %3869 = vrot.lane.b32.xlu0 %v3781, 56
      %v3870 = vpop.permute.xlu0 %3869
      %3871 = vrot.lane.b32.xlu0 %v3782, 56
      %v3872 = vpop.permute.xlu0 %3871
      %3873 = vrot.lane.b32.xlu0 %v3783, 56
      %v3874 = vpop.permute.xlu0 %3873
      %3875 = vrot.lane.b32.xlu0 %v3784, 56
      %v3876 = vpop.permute.xlu0 %3875
      %3877 = vrot.lane.b32.xlu0 %v3785, 56
      %v3878 = vpop.permute.xlu0 %3877
      %3879 = vrot.lane.b32.xlu0 %v3786, 56
      %v3880 = vpop.permute.xlu0 %3879
      %3881 = vrot.lane.b32.xlu0 %v3787, 56
      %v3882 = vpop.permute.xlu0 %3881
      %3883 = vrot.lane.b32.xlu0 %v3788, 56
      %v3884 = vpop.permute.xlu0 %3883
      %3917 = vst.msk [vmem:[#allocation3] sm:$0xff] %vm1810, %v3822
      %3918 = vst.msk [vmem:[#allocation3 + $0x8] sm:$0xff] %vm1810, %v3824
      %3919 = vst.msk [vmem:[#allocation3 + $0x10] sm:$0xff] %vm1810, %v3826
      %3920 = vst.msk [vmem:[#allocation3 + $0x18] sm:$0xff] %vm1810, %v3828
      %3921 = vst.msk [vmem:[#allocation3 + $0x20] sm:$0xff] %vm1810, %v3830
      %3922 = vst.msk [vmem:[#allocation3 + $0x28] sm:$0xff] %vm1810, %v3832
      %3923 = vst.msk [vmem:[#allocation3 + $0x30] sm:$0xff] %vm1810, %v3834
      %3924 = vst.msk [vmem:[#allocation3 + $0x38] sm:$0xff] %vm1810, %v3836
      %3925 = vst.msk [vmem:[#allocation3 + $0x40] sm:$0xff] %vm1810, %v3838
      %3926 = vst.msk [vmem:[#allocation3 + $0x48] sm:$0xff] %vm1810, %v3840
      %3927 = vst.msk [vmem:[#allocation3 + $0x50] sm:$0xff] %vm1810, %v3842
      %3928 = vst.msk [vmem:[#allocation3 + $0x58] sm:$0xff] %vm1810, %v3844
      %3929 = vst.msk [vmem:[#allocation3 + $0x60] sm:$0xff] %vm1810, %v3846
      %3930 = vst.msk [vmem:[#allocation3 + $0x68] sm:$0xff] %vm1810, %v3848
      %3931 = vst.msk [vmem:[#allocation3 + $0x70] sm:$0xff] %vm1810, %v3850
      %3932 = vst.msk [vmem:[#allocation3 + $0x78] sm:$0xff] %vm1810, %v3852
      %3933 = vst.msk [vmem:[#allocation3 + $0x80] sm:$0xff] %vm1810, %v3854
      %3934 = vst.msk [vmem:[#allocation3 + $0x88] sm:$0xff] %vm1810, %v3856
      %3935 = vst.msk [vmem:[#allocation3 + $0x90] sm:$0xff] %vm1810, %v3858
      %3936 = vst.msk [vmem:[#allocation3 + $0x98] sm:$0xff] %vm1810, %v3860
      %3937 = vst.msk [vmem:[#allocation3 + $0xa0] sm:$0xff] %vm1810, %v3862
      %3938 = vst.msk [vmem:[#allocation3 + $0xa8] sm:$0xff] %vm1810, %v3864
      %3939 = vst.msk [vmem:[#allocation3 + $0xb0] sm:$0xff] %vm1810, %v3866
      %3940 = vst.msk [vmem:[#allocation3 + $0xb8] sm:$0xff] %vm1810, %v3868
      %3941 = vst.msk [vmem:[#allocation3 + $0xc0] sm:$0xff] %vm1810, %v3870
      %3942 = vst.msk [vmem:[#allocation3 + $0xc8] sm:$0xff] %vm1810, %v3872
      %3943 = vst.msk [vmem:[#allocation3 + $0xd0] sm:$0xff] %vm1810, %v3874
      %3944 = vst.msk [vmem:[#allocation3 + $0xd8] sm:$0xff] %vm1810, %v3876
      %3945 = vst.msk [vmem:[#allocation3 + $0xe0] sm:$0xff] %vm1810, %v3878
      %3946 = vst.msk [vmem:[#allocation3 + $0xe8] sm:$0xff] %vm1810, %v3880
      %3947 = vst.msk [vmem:[#allocation3 + $0xf0] sm:$0xff] %vm1810, %v3882
      %3948 = vst.msk [vmem:[#allocation3 + $0xf8] sm:$0xff] %vm1810, %v3884
      %v3949 = vld [vmem:[%s1456 + $0x2] sm:$0xff]
      %v3950 = vld [vmem:[%s1456 + $0xa] sm:$0xff]
      %v3951 = vld [vmem:[%s1456 + $0x1a] sm:$0xff]
      %v3952 = vld [vmem:[%s1456 + $0x22] sm:$0xff]
      %v3953 = vld [vmem:[%s1456 + $0x32] sm:$0xff]
      %v3954 = vld [vmem:[%s1456 + $0x3a] sm:$0xff]
      %v3955 = vld [vmem:[%s1456 + $0x4a] sm:$0xff]
      %v3956 = vld [vmem:[%s1456 + $0x52] sm:$0xff]
      %v3957 = vld [vmem:[%s1456 + $0x62] sm:$0xff]
      %v3958 = vld [vmem:[%s1456 + $0x6a] sm:$0xff]
      %v3959 = vld [vmem:[%s1456 + $0x7a] sm:$0xff]
      %v3960 = vld [vmem:[%s1456 + $0x82] sm:$0xff]
      %v3961 = vld [vmem:[%s1456 + $0x92] sm:$0xff]
      %v3962 = vld [vmem:[%s1456 + $0x9a] sm:$0xff]
      %v3963 = vld [vmem:[%s1456 + $0xaa] sm:$0xff]
      %v3964 = vld [vmem:[%s1456 + $0xb2] sm:$0xff]
      %v3965 = vld [vmem:[%s1456 + $0xc2] sm:$0xff]
      %v3966 = vld [vmem:[%s1456 + $0xca] sm:$0xff]
      %v3967 = vld [vmem:[%s1456 + $0xda] sm:$0xff]
      %v3968 = vld [vmem:[%s1456 + $0xe2] sm:$0xff]
      %v3969 = vld [vmem:[%s1456 + $0xf2] sm:$0xff]
      %v3970 = vld [vmem:[%s1456 + $0xfa] sm:$0xff]
      %v3971 = vld [vmem:[%s1456 + $0x10a] sm:$0xff]
      %v3972 = vld [vmem:[%s1456 + $0x112] sm:$0xff]
      %v3973 = vld [vmem:[%s1456 + $0x122] sm:$0xff]
      %v3974 = vld [vmem:[%s1456 + $0x12a] sm:$0xff]
      %v3975 = vld [vmem:[%s1456 + $0x13a] sm:$0xff]
      %v3976 = vld [vmem:[%s1456 + $0x142] sm:$0xff]
      %v3977 = vld [vmem:[%s1456 + $0x152] sm:$0xff]
      %v3978 = vld [vmem:[%s1456 + $0x15a] sm:$0xff]
      %v3979 = vld [vmem:[%s1456 + $0x16a] sm:$0xff]
      %v3980 = vld [vmem:[%s1456 + $0x172] sm:$0xff]
      %4013 = vrot.lane.b32.xlu0 %v3949, 64
      %v4014 = vpop.permute.xlu0 %4013
      %4015 = vrot.lane.b32.xlu0 %v3950, 64
      %v4016 = vpop.permute.xlu0 %4015
      %4017 = vrot.lane.b32.xlu0 %v3951, 64
      %v4018 = vpop.permute.xlu0 %4017
      %4019 = vrot.lane.b32.xlu0 %v3952, 64
      %v4020 = vpop.permute.xlu0 %4019
      %4021 = vrot.lane.b32.xlu0 %v3953, 64
      %v4022 = vpop.permute.xlu0 %4021
      %4023 = vrot.lane.b32.xlu0 %v3954, 64
      %v4024 = vpop.permute.xlu0 %4023
      %4025 = vrot.lane.b32.xlu0 %v3955, 64
      %v4026 = vpop.permute.xlu0 %4025
      %4027 = vrot.lane.b32.xlu0 %v3956, 64
      %v4028 = vpop.permute.xlu0 %4027
      %4029 = vrot.lane.b32.xlu0 %v3957, 64
      %v4030 = vpop.permute.xlu0 %4029
      %4031 = vrot.lane.b32.xlu0 %v3958, 64
      %v4032 = vpop.permute.xlu0 %4031
      %4033 = vrot.lane.b32.xlu0 %v3959, 64
      %v4034 = vpop.permute.xlu0 %4033
      %4035 = vrot.lane.b32.xlu0 %v3960, 64
      %v4036 = vpop.permute.xlu0 %4035
      %4037 = vrot.lane.b32.xlu0 %v3961, 64
      %v4038 = vpop.permute.xlu0 %4037
      %4039 = vrot.lane.b32.xlu0 %v3962, 64
      %v4040 = vpop.permute.xlu0 %4039
      %4041 = vrot.lane.b32.xlu0 %v3963, 64
      %v4042 = vpop.permute.xlu0 %4041
      %4043 = vrot.lane.b32.xlu0 %v3964, 64
      %v4044 = vpop.permute.xlu0 %4043
      %4045 = vrot.lane.b32.xlu0 %v3965, 64
      %v4046 = vpop.permute.xlu0 %4045
      %4047 = vrot.lane.b32.xlu0 %v3966, 64
      %v4048 = vpop.permute.xlu0 %4047
      %4049 = vrot.lane.b32.xlu0 %v3967, 64
      %v4050 = vpop.permute.xlu0 %4049
      %4051 = vrot.lane.b32.xlu0 %v3968, 64
      %v4052 = vpop.permute.xlu0 %4051
      %4053 = vrot.lane.b32.xlu0 %v3969, 64
      %v4054 = vpop.permute.xlu0 %4053
      %4055 = vrot.lane.b32.xlu0 %v3970, 64
      %v4056 = vpop.permute.xlu0 %4055
      %4057 = vrot.lane.b32.xlu0 %v3971, 64
      %v4058 = vpop.permute.xlu0 %4057
      %4059 = vrot.lane.b32.xlu0 %v3972, 64
      %v4060 = vpop.permute.xlu0 %4059
      %4061 = vrot.lane.b32.xlu0 %v3973, 64
      %v4062 = vpop.permute.xlu0 %4061
      %4063 = vrot.lane.b32.xlu0 %v3974, 64
      %v4064 = vpop.permute.xlu0 %4063
      %4065 = vrot.lane.b32.xlu0 %v3975, 64
      %v4066 = vpop.permute.xlu0 %4065
      %4067 = vrot.lane.b32.xlu0 %v3976, 64
      %v4068 = vpop.permute.xlu0 %4067
      %4069 = vrot.lane.b32.xlu0 %v3977, 64
      %v4070 = vpop.permute.xlu0 %4069
      %4071 = vrot.lane.b32.xlu0 %v3978, 64
      %v4072 = vpop.permute.xlu0 %4071
      %4073 = vrot.lane.b32.xlu0 %v3979, 64
      %v4074 = vpop.permute.xlu0 %4073
      %4075 = vrot.lane.b32.xlu0 %v3980, 64
      %v4076 = vpop.permute.xlu0 %4075
      %4109 = vst.msk [vmem:[#allocation3] sm:$0xff] %vm2003, %v4014
      %4110 = vst.msk [vmem:[#allocation3 + $0x8] sm:$0xff] %vm2003, %v4016
      %4111 = vst.msk [vmem:[#allocation3 + $0x10] sm:$0xff] %vm2003, %v4018
      %4112 = vst.msk [vmem:[#allocation3 + $0x18] sm:$0xff] %vm2003, %v4020
      %4113 = vst.msk [vmem:[#allocation3 + $0x20] sm:$0xff] %vm2003, %v4022
      %4114 = vst.msk [vmem:[#allocation3 + $0x28] sm:$0xff] %vm2003, %v4024
      %4115 = vst.msk [vmem:[#allocation3 + $0x30] sm:$0xff] %vm2003, %v4026
      %4116 = vst.msk [vmem:[#allocation3 + $0x38] sm:$0xff] %vm2003, %v4028
      %4117 = vst.msk [vmem:[#allocation3 + $0x40] sm:$0xff] %vm2003, %v4030
      %4118 = vst.msk [vmem:[#allocation3 + $0x48] sm:$0xff] %vm2003, %v4032
      %4119 = vst.msk [vmem:[#allocation3 + $0x50] sm:$0xff] %vm2003, %v4034
      %4120 = vst.msk [vmem:[#allocation3 + $0x58] sm:$0xff] %vm2003, %v4036
      %4121 = vst.msk [vmem:[#allocation3 + $0x60] sm:$0xff] %vm2003, %v4038
      %4122 = vst.msk [vmem:[#allocation3 + $0x68] sm:$0xff] %vm2003, %v4040
      %4123 = vst.msk [vmem:[#allocation3 + $0x70] sm:$0xff] %vm2003, %v4042
      %4124 = vst.msk [vmem:[#allocation3 + $0x78] sm:$0xff] %vm2003, %v4044
      %4125 = vst.msk [vmem:[#allocation3 + $0x80] sm:$0xff] %vm2003, %v4046
      %4126 = vst.msk [vmem:[#allocation3 + $0x88] sm:$0xff] %vm2003, %v4048
      %4127 = vst.msk [vmem:[#allocation3 + $0x90] sm:$0xff] %vm2003, %v4050
      %4128 = vst.msk [vmem:[#allocation3 + $0x98] sm:$0xff] %vm2003, %v4052
      %4129 = vst.msk [vmem:[#allocation3 + $0xa0] sm:$0xff] %vm2003, %v4054
      %4130 = vst.msk [vmem:[#allocation3 + $0xa8] sm:$0xff] %vm2003, %v4056
      %4131 = vst.msk [vmem:[#allocation3 + $0xb0] sm:$0xff] %vm2003, %v4058
      %4132 = vst.msk [vmem:[#allocation3 + $0xb8] sm:$0xff] %vm2003, %v4060
      %4133 = vst.msk [vmem:[#allocation3 + $0xc0] sm:$0xff] %vm2003, %v4062
      %4134 = vst.msk [vmem:[#allocation3 + $0xc8] sm:$0xff] %vm2003, %v4064
      %4135 = vst.msk [vmem:[#allocation3 + $0xd0] sm:$0xff] %vm2003, %v4066
      %4136 = vst.msk [vmem:[#allocation3 + $0xd8] sm:$0xff] %vm2003, %v4068
      %4137 = vst.msk [vmem:[#allocation3 + $0xe0] sm:$0xff] %vm2003, %v4070
      %4138 = vst.msk [vmem:[#allocation3 + $0xe8] sm:$0xff] %vm2003, %v4072
      %4139 = vst.msk [vmem:[#allocation3 + $0xf0] sm:$0xff] %vm2003, %v4074
      %4140 = vst.msk [vmem:[#allocation3 + $0xf8] sm:$0xff] %vm2003, %v4076
      %v4141 = vld [vmem:[#allocation3] sm:$0xff]
      %v4142 = vld [vmem:[#allocation3 + $0x8] sm:$0xff]
      %v4143 = vld [vmem:[#allocation3 + $0x10] sm:$0xff]
      %v4144 = vld [vmem:[#allocation3 + $0x18] sm:$0xff]
      %v4145 = vld [vmem:[#allocation3 + $0x20] sm:$0xff]
      %v4146 = vld [vmem:[#allocation3 + $0x28] sm:$0xff]
      %v4147 = vld [vmem:[#allocation3 + $0x30] sm:$0xff]
      %v4148 = vld [vmem:[#allocation3 + $0x38] sm:$0xff]
      %v4149 = vld [vmem:[#allocation3 + $0x40] sm:$0xff]
      %v4150 = vld [vmem:[#allocation3 + $0x48] sm:$0xff]
      %v4151 = vld [vmem:[#allocation3 + $0x50] sm:$0xff]
      %v4152 = vld [vmem:[#allocation3 + $0x58] sm:$0xff]
      %v4153 = vld [vmem:[#allocation3 + $0x60] sm:$0xff]
      %v4154 = vld [vmem:[#allocation3 + $0x68] sm:$0xff]
      %v4155 = vld [vmem:[#allocation3 + $0x70] sm:$0xff]
      %v4156 = vld [vmem:[#allocation3 + $0x78] sm:$0xff]
      %v4157 = vld [vmem:[#allocation3 + $0x80] sm:$0xff]
      %v4158 = vld [vmem:[#allocation3 + $0x88] sm:$0xff]
      %v4159 = vld [vmem:[#allocation3 + $0x90] sm:$0xff]
      %v4160 = vld [vmem:[#allocation3 + $0x98] sm:$0xff]
      %v4161 = vld [vmem:[#allocation3 + $0xa0] sm:$0xff]
      %v4162 = vld [vmem:[#allocation3 + $0xa8] sm:$0xff]
      %v4163 = vld [vmem:[#allocation3 + $0xb0] sm:$0xff]
      %v4164 = vld [vmem:[#allocation3 + $0xb8] sm:$0xff]
      %v4165 = vld [vmem:[#allocation3 + $0xc0] sm:$0xff]
      %v4166 = vld [vmem:[#allocation3 + $0xc8] sm:$0xff]
      %v4167 = vld [vmem:[#allocation3 + $0xd0] sm:$0xff]
      %v4168 = vld [vmem:[#allocation3 + $0xd8] sm:$0xff]
      %v4169 = vld [vmem:[#allocation3 + $0xe0] sm:$0xff]
      %v4170 = vld [vmem:[#allocation3 + $0xe8] sm:$0xff]
      %v4171 = vld [vmem:[#allocation3 + $0xf0] sm:$0xff]
      %v4172 = vld [vmem:[#allocation3 + $0xf8] sm:$0xff]
      %v4173 = vld [vmem:[%s4] sm:$0xff]
      %v4174 = vld [vmem:[%s4 + $0x8] sm:$0xff]
      %v4175 = vld [vmem:[%s4 + $0x10] sm:$0xff]
      %v4176 = vld [vmem:[%s4 + $0x18] sm:$0xff]
      %v4177 = vld [vmem:[%s4 + $0x20] sm:$0xff]
      %v4178 = vld [vmem:[%s4 + $0x28] sm:$0xff]
      %v4179 = vld [vmem:[%s4 + $0x30] sm:$0xff]
      %v4180 = vld [vmem:[%s4 + $0x38] sm:$0xff]
      %v4181 = vld [vmem:[%s4 + $0x40] sm:$0xff]
      %v4183 = vsel %vm2077, %v4141, 0
      %v4186 = vsel %vm2077, %v4142, 0
      %v4189 = vsel %vm2077, %v4143, 0
      %v4192 = vsel %vm2077, %v4144, 0
      %v4195 = vsel %vm2077, %v4145, 0
      %v4198 = vsel %vm2077, %v4146, 0
      %v4201 = vsel %vm2077, %v4147, 0
      %v4204 = vsel %vm2077, %v4148, 0
      %v4207 = vsel %vm2077, %v4149, 0
      %v4210 = vsel %vm2077, %v4150, 0
      %v4213 = vsel %vm2077, %v4151, 0
      %v4216 = vsel %vm2077, %v4152, 0
      %v4219 = vsel %vm2077, %v4153, 0
      %v4222 = vsel %vm2077, %v4154, 0
      %v4225 = vsel %vm2077, %v4155, 0
      %v4228 = vsel %vm2077, %v4156, 0
      %v4231 = vsel %vm2077, %v4157, 0
      %v4234 = vsel %vm2077, %v4158, 0
      %v4237 = vsel %vm2077, %v4159, 0
      %v4240 = vsel %vm2077, %v4160, 0
      %v4243 = vsel %vm2077, %v4161, 0
      %v4246 = vsel %vm2077, %v4162, 0
      %v4249 = vsel %vm2077, %v4163, 0
      %v4252 = vsel %vm2077, %v4164, 0
      %v4255 = vsel %vm2077, %v4165, 0
      %v4258 = vsel %vm2077, %v4166, 0
      %v4261 = vsel %vm2077, %v4167, 0
      %v4264 = vsel %vm2077, %v4168, 0
      %v4267 = vsel %vm2077, %v4169, 0
      %v4270 = vsel %vm2077, %v4170, 0
      %v4273 = vsel %vm2077, %v4171, 0
      %v4276 = vsel %vm2077, %v4172, 0
      %4278 = vmatprep.subr.mxu0 0.0
      %4279 = vmatpush1.msra.mxu0 %v4173
      %4280 = vmatprep.subr.mxu0 0.0
      %4281 = vmatpush1.msra.mxu0 %v4174
      %4282 = vmatprep.subr.mxu0 0.0
      %4283 = vmatpush1.msra.mxu0 %v4175
      %4284 = vmatprep.subr.mxu0 0.0
      %4285 = vmatpush1.msra.mxu0 %v4176
      %4286 = vmatprep.subr.mxu0 0.0
      %4287 = vmatpush1.msra.mxu0 %v4177
      %4288 = vmatprep.subr.mxu0 0.0
      %4289 = vmatpush1.msra.mxu0 %v4178
      %4290 = vmatprep.subr.mxu0 0.0
      %4291 = vmatpush1.msra.mxu0 %v4179
      %4292 = vmatprep.subr.mxu0 0.0
      %4293 = vmatpush1.msra.mxu0 %v4180
      %4294 = vmatprep.subr.mxu0 0.0
      %4295 = vmatpush1.msra.mxu0 %v4181
      %4296 = vmatprep.subr.mxu0 0.0
      %4297 = vmatpush1.msra.mxu0 0.0
      %4298 = vmatprep.subr.mxu0 0.0
      %4299 = vmatpush1.msra.mxu0 0.0
      %4300 = vmatprep.subr.mxu0 0.0
      %4301 = vmatpush1.msra.mxu0 0.0
      %4302 = vmatprep.subr.mxu0 0.0
      %4303 = vmatpush1.msra.mxu0 0.0
      %4304 = vmatprep.subr.mxu0 0.0
      %4305 = vmatpush1.msra.mxu0 0.0
      %4306 = vmatprep.subr.mxu0 0.0
      %4307 = vmatpush1.msra.mxu0 0.0
      %4308 = vmatprep.subr.mxu0 0.0
      %4309 = vmatpush1.msra.mxu0 0.0
      %4310 = vmatprep.subr.mxu0 0.0
      %4311 = vmatpush1.msra.mxu0 0.0
      %4312 = vmatprep.subr.mxu0 0.0
      %4313 = vmatpush1.msra.mxu0 0.0
      %4314 = vmatprep.subr.mxu0 0.0
      %4315 = vmatpush1.msra.mxu0 0.0
      %4316 = vmatprep.subr.mxu0 0.0
      %4317 = vmatpush1.msra.mxu0 0.0
      %4318 = vmatprep.subr.mxu0 0.0
      %4319 = vmatpush1.msra.mxu0 0.0
      %4320 = vmatprep.subr.mxu0 0.0
      %4321 = vmatpush1.msra.mxu0 0.0
      %4322 = vmatprep.subr.mxu0 0.0
      %4323 = vmatpush1.msra.mxu0 0.0
      %4324 = vmatprep.subr.mxu0 0.0
      %4325 = vmatpush1.msra.mxu0 0.0
      %4326 = vmatprep.subr.mxu0 0.0
      %4327 = vmatpush1.msra.mxu0 0.0
      %4328 = vmatprep.subr.mxu0 0.0
      %4329 = vmatpush1.msra.mxu0 0.0
      %4330 = vmatprep.subr.mxu0 0.0
      %4331 = vmatpush1.msra.mxu0 0.0
      %4332 = vmatprep.subr.mxu0 0.0
      %4333 = vmatpush1.msra.mxu0 0.0
      %4334 = vmatprep.subr.mxu0 0.0
      %4335 = vmatpush1.msra.mxu0 0.0
      %4336 = vmatprep.subr.mxu0 0.0
      %4337 = vmatpush1.msra.mxu0 0.0
      %4338 = vmatprep.subr.mxu0 0.0
      %4339 = vmatpush1.msra.mxu0 0.0
      %4340 = vmatprep.subr.mxu0 0.0
      %4341 = vmatpush1.msra.mxu0 0.0
      %4342 = vmatprep.mubr.f32.mxu0 0.0
      %4343 = vmatmul.mubr.f32.gmra.mrb[0].mxu0 %v4183
      %v4344 = vpop.f32.mrb[0].mxu0
      %v4345 = vadd.f32 0.0, %v4344
      %v4346 = vpop.f32.mrb[0].mxu0
      %4347 = vmatprep.mubr.f32.mxu0 0.0
      %4348 = vmatmul.mubr.f32.gmra.mrb[0].mxu0 %v4186
      %v4349 = vpop.f32.mrb[0].mxu0
      %v4350 = vadd.f32 0.0, %v4349
      %v4351 = vpop.f32.mrb[0].mxu0
      %4352 = vmatprep.mubr.f32.mxu0 0.0
      %4353 = vmatmul.mubr.f32.gmra.mrb[0].mxu0 %v4189
      %v4354 = vpop.f32.mrb[0].mxu0
      %v4355 = vadd.f32 0.0, %v4354
      %v4356 = vpop.f32.mrb[0].mxu0
      %4357 = vmatprep.mubr.f32.mxu0 0.0
      %4358 = vmatmul.mubr.f32.gmra.mrb[0].mxu0 %v4192
      %v4359 = vpop.f32.mrb[0].mxu0
      %v4360 = vadd.f32 0.0, %v4359
      %v4361 = vpop.f32.mrb[0].mxu0
      %4362 = vmatprep.mubr.f32.mxu0 0.0
      %4363 = vmatmul.mubr.f32.gmra.mrb[0].mxu0 %v4195
      %v4364 = vpop.f32.mrb[0].mxu0
      %v4365 = vadd.f32 0.0, %v4364
      %v4366 = vpop.f32.mrb[0].mxu0
      %4367 = vmatprep.mubr.f32.mxu0 0.0
      %4368 = vmatmul.mubr.f32.gmra.mrb[0].mxu0 %v4198
      %v4369 = vpop.f32.mrb[0].mxu0
      %v4370 = vadd.f32 0.0, %v4369
      %v4371 = vpop.f32.mrb[0].mxu0
      %4372 = vmatprep.mubr.f32.mxu0 0.0
      %4373 = vmatmul.mubr.f32.gmra.mrb[0].mxu0 %v4201
      %v4374 = vpop.f32.mrb[0].mxu0
      %v4375 = vadd.f32 0.0, %v4374
      %v4376 = vpop.f32.mrb[0].mxu0
      %4377 = vmatprep.mubr.f32.mxu0 0.0
      %4378 = vmatmul.mubr.f32.gmra.mrb[0].mxu0 %v4204
      %v4379 = vpop.f32.mrb[0].mxu0
      %v4380 = vadd.f32 0.0, %v4379
      %v4381 = vpop.f32.mrb[0].mxu0
      %4382 = vmatprep.mubr.f32.mxu0 0.0
      %4383 = vmatmul.mubr.f32.gmra.mrb[0].mxu0 %v4207
      %v4384 = vpop.f32.mrb[0].mxu0
      %v4385 = vadd.f32 0.0, %v4384
      %v4386 = vpop.f32.mrb[0].mxu0
      %4387 = vmatprep.mubr.f32.mxu0 0.0
      %4388 = vmatmul.mubr.f32.gmra.mrb[0].mxu0 %v4210
      %v4389 = vpop.f32.mrb[0].mxu0
      %v4390 = vadd.f32 0.0, %v4389
      %v4391 = vpop.f32.mrb[0].mxu0
      %4392 = vmatprep.mubr.f32.mxu0 0.0
      %4393 = vmatmul.mubr.f32.gmra.mrb[0].mxu0 %v4213
      %v4394 = vpop.f32.mrb[0].mxu0
      %v4395 = vadd.f32 0.0, %v4394
      %v4396 = vpop.f32.mrb[0].mxu0
      %4397 = vmatprep.mubr.f32.mxu0 0.0
      %4398 = vmatmul.mubr.f32.gmra.mrb[0].mxu0 %v4216
      %v4399 = vpop.f32.mrb[0].mxu0
      %v4400 = vadd.f32 0.0, %v4399
      %v4401 = vpop.f32.mrb[0].mxu0
      %4402 = vmatprep.mubr.f32.mxu0 0.0
      %4403 = vmatmul.mubr.f32.gmra.mrb[0].mxu0 %v4219
      %v4404 = vpop.f32.mrb[0].mxu0
      %v4405 = vadd.f32 0.0, %v4404
      %v4406 = vpop.f32.mrb[0].mxu0
      %4407 = vmatprep.mubr.f32.mxu0 0.0
      %4408 = vmatmul.mubr.f32.gmra.mrb[0].mxu0 %v4222
      %v4409 = vpop.f32.mrb[0].mxu0
      %v4410 = vadd.f32 0.0, %v4409
      %v4411 = vpop.f32.mrb[0].mxu0
      %4412 = vmatprep.mubr.f32.mxu0 0.0
      %4413 = vmatmul.mubr.f32.gmra.mrb[0].mxu0 %v4225
      %v4414 = vpop.f32.mrb[0].mxu0
      %v4415 = vadd.f32 0.0, %v4414
      %v4416 = vpop.f32.mrb[0].mxu0
      %4417 = vmatprep.mubr.f32.mxu0 0.0
      %4418 = vmatmul.mubr.f32.gmra.mrb[0].mxu0 %v4228
      %v4419 = vpop.f32.mrb[0].mxu0
      %v4420 = vadd.f32 0.0, %v4419
      %v4421 = vpop.f32.mrb[0].mxu0
      %4422 = vmatprep.mubr.f32.mxu0 0.0
      %4423 = vmatmul.mubr.f32.gmra.mrb[0].mxu0 %v4231
      %v4424 = vpop.f32.mrb[0].mxu0
      %v4425 = vadd.f32 0.0, %v4424
      %v4426 = vpop.f32.mrb[0].mxu0
      %4427 = vmatprep.mubr.f32.mxu0 0.0
      %4428 = vmatmul.mubr.f32.gmra.mrb[0].mxu0 %v4234
      %v4429 = vpop.f32.mrb[0].mxu0
      %v4430 = vadd.f32 0.0, %v4429
      %v4431 = vpop.f32.mrb[0].mxu0
      %4432 = vmatprep.mubr.f32.mxu0 0.0
      %4433 = vmatmul.mubr.f32.gmra.mrb[0].mxu0 %v4237
      %v4434 = vpop.f32.mrb[0].mxu0
      %v4435 = vadd.f32 0.0, %v4434
      %v4436 = vpop.f32.mrb[0].mxu0
      %4437 = vmatprep.mubr.f32.mxu0 0.0
      %4438 = vmatmul.mubr.f32.gmra.mrb[0].mxu0 %v4240
      %v4439 = vpop.f32.mrb[0].mxu0
      %v4440 = vadd.f32 0.0, %v4439
      %v4441 = vpop.f32.mrb[0].mxu0
      %4442 = vmatprep.mubr.f32.mxu0 0.0
      %4443 = vmatmul.mubr.f32.gmra.mrb[0].mxu0 %v4243
      %v4444 = vpop.f32.mrb[0].mxu0
      %v4445 = vadd.f32 0.0, %v4444
      %v4446 = vpop.f32.mrb[0].mxu0
      %4447 = vmatprep.mubr.f32.mxu0 0.0
      %4448 = vmatmul.mubr.f32.gmra.mrb[0].mxu0 %v4246
      %v4449 = vpop.f32.mrb[0].mxu0
      %v4450 = vadd.f32 0.0, %v4449
      %v4451 = vpop.f32.mrb[0].mxu0
      %4452 = vmatprep.mubr.f32.mxu0 0.0
      %4453 = vmatmul.mubr.f32.gmra.mrb[0].mxu0 %v4249
      %v4454 = vpop.f32.mrb[0].mxu0
      %v4455 = vadd.f32 0.0, %v4454
      %v4456 = vpop.f32.mrb[0].mxu0
      %4457 = vmatprep.mubr.f32.mxu0 0.0
      %4458 = vmatmul.mubr.f32.gmra.mrb[0].mxu0 %v4252
      %v4459 = vpop.f32.mrb[0].mxu0
      %v4460 = vadd.f32 0.0, %v4459
      %v4461 = vpop.f32.mrb[0].mxu0
      %4462 = vmatprep.mubr.f32.mxu0 0.0
      %4463 = vmatmul.mubr.f32.gmra.mrb[0].mxu0 %v4255
      %v4464 = vpop.f32.mrb[0].mxu0
      %v4465 = vadd.f32 0.0, %v4464
      %v4466 = vpop.f32.mrb[0].mxu0
      %4467 = vmatprep.mubr.f32.mxu0 0.0
      %4468 = vmatmul.mubr.f32.gmra.mrb[0].mxu0 %v4258
      %v4469 = vpop.f32.mrb[0].mxu0
      %v4470 = vadd.f32 0.0, %v4469
      %v4471 = vpop.f32.mrb[0].mxu0
      %4472 = vmatprep.mubr.f32.mxu0 0.0
      %4473 = vmatmul.mubr.f32.gmra.mrb[0].mxu0 %v4261
      %v4474 = vpop.f32.mrb[0].mxu0
      %v4475 = vadd.f32 0.0, %v4474
      %v4476 = vpop.f32.mrb[0].mxu0
      %4477 = vmatprep.mubr.f32.mxu0 0.0
      %4478 = vmatmul.mubr.f32.gmra.mrb[0].mxu0 %v4264
      %v4479 = vpop.f32.mrb[0].mxu0
      %v4480 = vadd.f32 0.0, %v4479
      %v4481 = vpop.f32.mrb[0].mxu0
      %4482 = vmatprep.mubr.f32.mxu0 0.0
      %4483 = vmatmul.mubr.f32.gmra.mrb[0].mxu0 %v4267
      %v4484 = vpop.f32.mrb[0].mxu0
      %v4485 = vadd.f32 0.0, %v4484
      %v4486 = vpop.f32.mrb[0].mxu0
      %4487 = vmatprep.mubr.f32.mxu0 0.0
      %4488 = vmatmul.mubr.f32.gmra.mrb[0].mxu0 %v4270
      %v4489 = vpop.f32.mrb[0].mxu0
      %v4490 = vadd.f32 0.0, %v4489
      %v4491 = vpop.f32.mrb[0].mxu0
      %4492 = vmatprep.mubr.f32.mxu0 0.0
      %4493 = vmatmul.mubr.f32.gmra.mrb[0].mxu0 %v4273
      %v4494 = vpop.f32.mrb[0].mxu0
      %v4495 = vadd.f32 0.0, %v4494
      %v4496 = vpop.f32.mrb[0].mxu0
      %4497 = vmatprep.mubr.f32.mxu0 0.0
      %4498 = vmatmul.mubr.f32.gmra.mrb[0].mxu0 %v4276
      %v4499 = vpop.f32.mrb[0].mxu0
      %v4500 = vadd.f32 0.0, %v4499
      %v4501 = vpop.f32.mrb[0].mxu0
      %4502 = vdwg.mxu0
      %v4503 = vld [vmem:[%s5] sm:$0x1]
      %v4505 = vlaneseq
      %v4506 = vshrl.u32 %v4505, 7
      %v4507 = vsub.s32 0, %v4506
      %v4508 = vrot.slane %v4503, %v4507
      %v4510 = vmul.f32 %v4345, %v4508
      %v4511 = vmul.f32 %v4350, %v4508
      %v4512 = vmul.f32 %v4355, %v4508
      %v4513 = vmul.f32 %v4360, %v4508
      %v4514 = vmul.f32 %v4365, %v4508
      %v4515 = vmul.f32 %v4370, %v4508
      %v4516 = vmul.f32 %v4375, %v4508
      %v4517 = vmul.f32 %v4380, %v4508
      %v4518 = vmul.f32 %v4385, %v4508
      %v4519 = vmul.f32 %v4390, %v4508
      %v4520 = vmul.f32 %v4395, %v4508
      %v4521 = vmul.f32 %v4400, %v4508
      %v4522 = vmul.f32 %v4405, %v4508
      %v4523 = vmul.f32 %v4410, %v4508
      %v4524 = vmul.f32 %v4415, %v4508
      %v4525 = vmul.f32 %v4420, %v4508
      %v4526 = vmul.f32 %v4425, %v4508
      %v4527 = vmul.f32 %v4430, %v4508
      %v4528 = vmul.f32 %v4435, %v4508
      %v4529 = vmul.f32 %v4440, %v4508
      %v4530 = vmul.f32 %v4445, %v4508
      %v4531 = vmul.f32 %v4450, %v4508
      %v4532 = vmul.f32 %v4455, %v4508
      %v4533 = vmul.f32 %v4460, %v4508
      %v4534 = vmul.f32 %v4465, %v4508
      %v4535 = vmul.f32 %v4470, %v4508
      %v4536 = vmul.f32 %v4475, %v4508
      %v4537 = vmul.f32 %v4480, %v4508
      %v4538 = vmul.f32 %v4485, %v4508
      %v4539 = vmul.f32 %v4490, %v4508
      %v4540 = vmul.f32 %v4495, %v4508
      %v4541 = vmul.f32 %v4500, %v4508
      %v4542 = vld [vmem:[%s6] sm:$0x1]
      %v4544 = vlaneseq
      %v4545 = vshrl.u32 %v4544, 7
      %v4546 = vsub.s32 0, %v4545
      %v4547 = vrot.slane %v4542, %v4546
      %v4549 = vadd.f32 %v4510, %v4547
      %v4550 = vadd.f32 %v4511, %v4547
      %v4551 = vadd.f32 %v4512, %v4547
      %v4552 = vadd.f32 %v4513, %v4547
      %v4553 = vadd.f32 %v4514, %v4547
      %v4554 = vadd.f32 %v4515, %v4547
      %v4555 = vadd.f32 %v4516, %v4547
      %v4556 = vadd.f32 %v4517, %v4547
      %v4557 = vadd.f32 %v4518, %v4547
      %v4558 = vadd.f32 %v4519, %v4547
      %v4559 = vadd.f32 %v4520, %v4547
      %v4560 = vadd.f32 %v4521, %v4547
      %v4561 = vadd.f32 %v4522, %v4547
      %v4562 = vadd.f32 %v4523, %v4547
      %v4563 = vadd.f32 %v4524, %v4547
      %v4564 = vadd.f32 %v4525, %v4547
      %v4565 = vadd.f32 %v4526, %v4547
      %v4566 = vadd.f32 %v4527, %v4547
      %v4567 = vadd.f32 %v4528, %v4547
      %v4568 = vadd.f32 %v4529, %v4547
      %v4569 = vadd.f32 %v4530, %v4547
      %v4570 = vadd.f32 %v4531, %v4547
      %v4571 = vadd.f32 %v4532, %v4547
      %v4572 = vadd.f32 %v4533, %v4547
      %v4573 = vadd.f32 %v4534, %v4547
      %v4574 = vadd.f32 %v4535, %v4547
      %v4575 = vadd.f32 %v4536, %v4547
      %v4576 = vadd.f32 %v4537, %v4547
      %v4577 = vadd.f32 %v4538, %v4547
      %v4578 = vadd.f32 %v4539, %v4547
      %v4579 = vadd.f32 %v4540, %v4547
      %v4580 = vadd.f32 %v4541, %v4547
      %v4581 = vmax.f32 %v4549, 0.0
      %v4582 = vmax.f32 %v4550, 0.0
      %v4583 = vmax.f32 %v4551, 0.0
      %v4584 = vmax.f32 %v4552, 0.0
      %v4585 = vmax.f32 %v4553, 0.0
      %v4586 = vmax.f32 %v4554, 0.0
      %v4587 = vmax.f32 %v4555, 0.0
      %v4588 = vmax.f32 %v4556, 0.0
      %v4589 = vmax.f32 %v4557, 0.0
      %v4590 = vmax.f32 %v4558, 0.0
      %v4591 = vmax.f32 %v4559, 0.0
      %v4592 = vmax.f32 %v4560, 0.0
      %v4593 = vmax.f32 %v4561, 0.0
      %v4594 = vmax.f32 %v4562, 0.0
      %v4595 = vmax.f32 %v4563, 0.0
      %v4596 = vmax.f32 %v4564, 0.0
      %v4597 = vmax.f32 %v4565, 0.0
      %v4598 = vmax.f32 %v4566, 0.0
      %v4599 = vmax.f32 %v4567, 0.0
      %v4600 = vmax.f32 %v4568, 0.0
      %v4601 = vmax.f32 %v4569, 0.0
      %v4602 = vmax.f32 %v4570, 0.0
      %v4603 = vmax.f32 %v4571, 0.0
      %v4604 = vmax.f32 %v4572, 0.0
      %v4605 = vmax.f32 %v4573, 0.0
      %v4606 = vmax.f32 %v4574, 0.0
      %v4607 = vmax.f32 %v4575, 0.0
      %v4608 = vmax.f32 %v4576, 0.0
      %v4609 = vmax.f32 %v4577, 0.0
      %v4610 = vmax.f32 %v4578, 0.0
      %v4611 = vmax.f32 %v4579, 0.0
      %v4612 = vmax.f32 %v4580, 0.0
      %4613 = vst.msk [vmem:[%s394 + $0x1] sm:$0xff] %vm306, %v4581
      %4614 = vst.msk [vmem:[%s394 + $0x9] sm:$0xff] %vm306, %v4582
      %4615 = vst.msk [vmem:[%s394 + $0x19] sm:$0xff] %vm306, %v4583
      %4616 = vst.msk [vmem:[%s394 + $0x21] sm:$0xff] %vm306, %v4584
      %4617 = vst.msk [vmem:[%s394 + $0x31] sm:$0xff] %vm306, %v4585
      %4618 = vst.msk [vmem:[%s394 + $0x39] sm:$0xff] %vm306, %v4586
      %4619 = vst.msk [vmem:[%s394 + $0x49] sm:$0xff] %vm306, %v4587
      %4620 = vst.msk [vmem:[%s394 + $0x51] sm:$0xff] %vm306, %v4588
      %4621 = vst.msk [vmem:[%s394 + $0x61] sm:$0xff] %vm306, %v4589
      %4622 = vst.msk [vmem:[%s394 + $0x69] sm:$0xff] %vm306, %v4590
      %4623 = vst.msk [vmem:[%s394 + $0x79] sm:$0xff] %vm306, %v4591
      %4624 = vst.msk [vmem:[%s394 + $0x81] sm:$0xff] %vm306, %v4592
      %4625 = vst.msk [vmem:[%s394 + $0x91] sm:$0xff] %vm306, %v4593
      %4626 = vst.msk [vmem:[%s394 + $0x99] sm:$0xff] %vm306, %v4594
      %4627 = vst.msk [vmem:[%s394 + $0xa9] sm:$0xff] %vm306, %v4595
      %4628 = vst.msk [vmem:[%s394 + $0xb1] sm:$0xff] %vm306, %v4596
      %4629 = vst.msk [vmem:[%s394 + $0xc1] sm:$0xff] %vm306, %v4597
      %4630 = vst.msk [vmem:[%s394 + $0xc9] sm:$0xff] %vm306, %v4598
      %4631 = vst.msk [vmem:[%s394 + $0xd9] sm:$0xff] %vm306, %v4599
      %4632 = vst.msk [vmem:[%s394 + $0xe1] sm:$0xff] %vm306, %v4600
      %4633 = vst.msk [vmem:[%s394 + $0xf1] sm:$0xff] %vm306, %v4601
      %4634 = vst.msk [vmem:[%s394 + $0xf9] sm:$0xff] %vm306, %v4602
      %4635 = vst.msk [vmem:[%s394 + $0x109] sm:$0xff] %vm306, %v4603
      %4636 = vst.msk [vmem:[%s394 + $0x111] sm:$0xff] %vm306, %v4604
      %4637 = vst.msk [vmem:[%s394 + $0x121] sm:$0xff] %vm306, %v4605
      %4638 = vst.msk [vmem:[%s394 + $0x129] sm:$0xff] %vm306, %v4606
      %4639 = vst.msk [vmem:[%s394 + $0x139] sm:$0xff] %vm306, %v4607
      %4640 = vst.msk [vmem:[%s394 + $0x141] sm:$0xff] %vm306, %v4608
      %4641 = vst.msk [vmem:[%s394 + $0x151] sm:$0xff] %vm306, %v4609
      %4642 = vst.msk [vmem:[%s394 + $0x159] sm:$0xff] %vm306, %v4610
      %4643 = vst.msk [vmem:[%s394 + $0x169] sm:$0xff] %vm306, %v4611
      %4644 = vst.msk [vmem:[%s394 + $0x171] sm:$0xff] %vm306, %v4612
      %v4645 = vld [vmem:[#allocation2] sm:$0xff]
      %v4646 = vld [vmem:[#allocation2 + $0x8] sm:$0xff]
      %v4647 = vld [vmem:[#allocation2 + $0x18] sm:$0xff]
      %v4648 = vld [vmem:[#allocation2 + $0x20] sm:$0xff]
      %v4649 = vld [vmem:[#allocation2 + $0x30] sm:$0xff]
      %v4650 = vld [vmem:[#allocation2 + $0x38] sm:$0xff]
      %v4651 = vld [vmem:[#allocation2 + $0x48] sm:$0xff]
      %v4652 = vld [vmem:[#allocation2 + $0x50] sm:$0xff]
      %v4653 = vld [vmem:[#allocation2 + $0x60] sm:$0xff]
      %v4654 = vld [vmem:[#allocation2 + $0x68] sm:$0xff]
      %v4655 = vld [vmem:[#allocation2 + $0x78] sm:$0xff]
      %v4656 = vld [vmem:[#allocation2 + $0x80] sm:$0xff]
      %v4657 = vld [vmem:[#allocation2 + $0x90] sm:$0xff]
      %v4658 = vld [vmem:[#allocation2 + $0x98] sm:$0xff]
      %v4659 = vld [vmem:[#allocation2 + $0xa8] sm:$0xff]
      %v4660 = vld [vmem:[#allocation2 + $0xb0] sm:$0xff]
      %v4661 = vld [vmem:[#allocation2 + $0xc0] sm:$0xff]
      %v4662 = vld [vmem:[#allocation2 + $0xc8] sm:$0xff]
      %v4663 = vld [vmem:[#allocation2 + $0xd8] sm:$0xff]
      %v4664 = vld [vmem:[#allocation2 + $0xe0] sm:$0xff]
      %v4665 = vld [vmem:[#allocation2 + $0xf0] sm:$0xff]
      %v4666 = vld [vmem:[#allocation2 + $0xf8] sm:$0xff]
      %v4667 = vld [vmem:[#allocation2 + $0x108] sm:$0xff]
      %v4668 = vld [vmem:[#allocation2 + $0x110] sm:$0xff]
      %v4669 = vld [vmem:[#allocation2 + $0x120] sm:$0xff]
      %v4670 = vld [vmem:[#allocation2 + $0x128] sm:$0xff]
      %v4671 = vld [vmem:[#allocation2 + $0x138] sm:$0xff]
      %v4672 = vld [vmem:[#allocation2 + $0x140] sm:$0xff]
      %v4673 = vld [vmem:[#allocation2 + $0x150] sm:$0xff]
      %v4674 = vld [vmem:[#allocation2 + $0x158] sm:$0xff]
      %v4675 = vld [vmem:[#allocation2 + $0x168] sm:$0xff]
      %v4676 = vld [vmem:[#allocation2 + $0x170] sm:$0xff]
      %4677 = vst.msk [vmem:[#allocation3] sm:$0xff] %vm306, %v4645
      %4678 = vst.msk [vmem:[#allocation3 + $0x8] sm:$0xff] %vm306, %v4646
      %4679 = vst.msk [vmem:[#allocation3 + $0x10] sm:$0xff] %vm306, %v4647
      %4680 = vst.msk [vmem:[#allocation3 + $0x18] sm:$0xff] %vm306, %v4648
      %4681 = vst.msk [vmem:[#allocation3 + $0x20] sm:$0xff] %vm306, %v4649
      %4682 = vst.msk [vmem:[#allocation3 + $0x28] sm:$0xff] %vm306, %v4650
      %4683 = vst.msk [vmem:[#allocation3 + $0x30] sm:$0xff] %vm306, %v4651
      %4684 = vst.msk [vmem:[#allocation3 + $0x38] sm:$0xff] %vm306, %v4652
      %4685 = vst.msk [vmem:[#allocation3 + $0x40] sm:$0xff] %vm306, %v4653
      %4686 = vst.msk [vmem:[#allocation3 + $0x48] sm:$0xff] %vm306, %v4654
      %4687 = vst.msk [vmem:[#allocation3 + $0x50] sm:$0xff] %vm306, %v4655
      %4688 = vst.msk [vmem:[#allocation3 + $0x58] sm:$0xff] %vm306, %v4656
      %4689 = vst.msk [vmem:[#allocation3 + $0x60] sm:$0xff] %vm306, %v4657
      %4690 = vst.msk [vmem:[#allocation3 + $0x68] sm:$0xff] %vm306, %v4658
      %4691 = vst.msk [vmem:[#allocation3 + $0x70] sm:$0xff] %vm306, %v4659
      %4692 = vst.msk [vmem:[#allocation3 + $0x78] sm:$0xff] %vm306, %v4660
      %4693 = vst.msk [vmem:[#allocation3 + $0x80] sm:$0xff] %vm306, %v4661
      %4694 = vst.msk [vmem:[#allocation3 + $0x88] sm:$0xff] %vm306, %v4662
      %4695 = vst.msk [vmem:[#allocation3 + $0x90] sm:$0xff] %vm306, %v4663
      %4696 = vst.msk [vmem:[#allocation3 + $0x98] sm:$0xff] %vm306, %v4664
      %4697 = vst.msk [vmem:[#allocation3 + $0xa0] sm:$0xff] %vm306, %v4665
      %4698 = vst.msk [vmem:[#allocation3 + $0xa8] sm:$0xff] %vm306, %v4666
      %4699 = vst.msk [vmem:[#allocation3 + $0xb0] sm:$0xff] %vm306, %v4667
      %4700 = vst.msk [vmem:[#allocation3 + $0xb8] sm:$0xff] %vm306, %v4668
      %4701 = vst.msk [vmem:[#allocation3 + $0xc0] sm:$0xff] %vm306, %v4669
      %4702 = vst.msk [vmem:[#allocation3 + $0xc8] sm:$0xff] %vm306, %v4670
      %4703 = vst.msk [vmem:[#allocation3 + $0xd0] sm:$0xff] %vm306, %v4671
      %4704 = vst.msk [vmem:[#allocation3 + $0xd8] sm:$0xff] %vm306, %v4672
      %4705 = vst.msk [vmem:[#allocation3 + $0xe0] sm:$0xff] %vm306, %v4673
      %4706 = vst.msk [vmem:[#allocation3 + $0xe8] sm:$0xff] %vm306, %v4674
      %4707 = vst.msk [vmem:[#allocation3 + $0xf0] sm:$0xff] %vm306, %v4675
      %4708 = vst.msk [vmem:[#allocation3 + $0xf8] sm:$0xff] %vm306, %v4676
      %v4709 = vld [vmem:[#allocation2 + $0x1] sm:$0xff]
      %v4710 = vld [vmem:[#allocation2 + $0x9] sm:$0xff]
      %v4711 = vld [vmem:[#allocation2 + $0x19] sm:$0xff]
      %v4712 = vld [vmem:[#allocation2 + $0x21] sm:$0xff]
      %v4713 = vld [vmem:[#allocation2 + $0x31] sm:$0xff]
      %v4714 = vld [vmem:[#allocation2 + $0x39] sm:$0xff]
      %v4715 = vld [vmem:[#allocation2 + $0x49] sm:$0xff]
      %v4716 = vld [vmem:[#allocation2 + $0x51] sm:$0xff]
      %v4717 = vld [vmem:[#allocation2 + $0x61] sm:$0xff]
      %v4718 = vld [vmem:[#allocation2 + $0x69] sm:$0xff]
      %v4719 = vld [vmem:[#allocation2 + $0x79] sm:$0xff]
      %v4720 = vld [vmem:[#allocation2 + $0x81] sm:$0xff]
      %v4721 = vld [vmem:[#allocation2 + $0x91] sm:$0xff]
      %v4722 = vld [vmem:[#allocation2 + $0x99] sm:$0xff]
      %v4723 = vld [vmem:[#allocation2 + $0xa9] sm:$0xff]
      %v4724 = vld [vmem:[#allocation2 + $0xb1] sm:$0xff]
      %v4725 = vld [vmem:[#allocation2 + $0xc1] sm:$0xff]
      %v4726 = vld [vmem:[#allocation2 + $0xc9] sm:$0xff]
      %v4727 = vld [vmem:[#allocation2 + $0xd9] sm:$0xff]
      %v4728 = vld [vmem:[#allocation2 + $0xe1] sm:$0xff]
      %v4729 = vld [vmem:[#allocation2 + $0xf1] sm:$0xff]
      %v4730 = vld [vmem:[#allocation2 + $0xf9] sm:$0xff]
      %v4731 = vld [vmem:[#allocation2 + $0x109] sm:$0xff]
      %v4732 = vld [vmem:[#allocation2 + $0x111] sm:$0xff]
      %v4733 = vld [vmem:[#allocation2 + $0x121] sm:$0xff]
      %v4734 = vld [vmem:[#allocation2 + $0x129] sm:$0xff]
      %v4735 = vld [vmem:[#allocation2 + $0x139] sm:$0xff]
      %v4736 = vld [vmem:[#allocation2 + $0x141] sm:$0xff]
      %v4737 = vld [vmem:[#allocation2 + $0x151] sm:$0xff]
      %v4738 = vld [vmem:[#allocation2 + $0x159] sm:$0xff]
      %v4739 = vld [vmem:[#allocation2 + $0x169] sm:$0xff]
      %v4740 = vld [vmem:[#allocation2 + $0x171] sm:$0xff]
      %4773 = vrot.lane.b32.xlu0 %v4709, 8
      %v4774 = vpop.permute.xlu0 %4773
      %4775 = vrot.lane.b32.xlu0 %v4710, 8
      %v4776 = vpop.permute.xlu0 %4775
      %4777 = vrot.lane.b32.xlu0 %v4711, 8
      %v4778 = vpop.permute.xlu0 %4777
      %4779 = vrot.lane.b32.xlu0 %v4712, 8
      %v4780 = vpop.permute.xlu0 %4779
      %4781 = vrot.lane.b32.xlu0 %v4713, 8
      %v4782 = vpop.permute.xlu0 %4781
      %4783 = vrot.lane.b32.xlu0 %v4714, 8
      %v4784 = vpop.permute.xlu0 %4783
      %4785 = vrot.lane.b32.xlu0 %v4715, 8
      %v4786 = vpop.permute.xlu0 %4785
      %4787 = vrot.lane.b32.xlu0 %v4716, 8
      %v4788 = vpop.permute.xlu0 %4787
      %4789 = vrot.lane.b32.xlu0 %v4717, 8
      %v4790 = vpop.permute.xlu0 %4789
      %4791 = vrot.lane.b32.xlu0 %v4718, 8
      %v4792 = vpop.permute.xlu0 %4791
      %4793 = vrot.lane.b32.xlu0 %v4719, 8
      %v4794 = vpop.permute.xlu0 %4793
      %4795 = vrot.lane.b32.xlu0 %v4720, 8
      %v4796 = vpop.permute.xlu0 %4795
      %4797 = vrot.lane.b32.xlu0 %v4721, 8
      %v4798 = vpop.permute.xlu0 %4797
      %4799 = vrot.lane.b32.xlu0 %v4722, 8
      %v4800 = vpop.permute.xlu0 %4799
      %4801 = vrot.lane.b32.xlu0 %v4723, 8
      %v4802 = vpop.permute.xlu0 %4801
      %4803 = vrot.lane.b32.xlu0 %v4724, 8
      %v4804 = vpop.permute.xlu0 %4803
      %4805 = vrot.lane.b32.xlu0 %v4725, 8
      %v4806 = vpop.permute.xlu0 %4805
      %4807 = vrot.lane.b32.xlu0 %v4726, 8
      %v4808 = vpop.permute.xlu0 %4807
      %4809 = vrot.lane.b32.xlu0 %v4727, 8
      %v4810 = vpop.permute.xlu0 %4809
      %4811 = vrot.lane.b32.xlu0 %v4728, 8
      %v4812 = vpop.permute.xlu0 %4811
      %4813 = vrot.lane.b32.xlu0 %v4729, 8
      %v4814 = vpop.permute.xlu0 %4813
      %4815 = vrot.lane.b32.xlu0 %v4730, 8
      %v4816 = vpop.permute.xlu0 %4815
      %4817 = vrot.lane.b32.xlu0 %v4731, 8
      %v4818 = vpop.permute.xlu0 %4817
      %4819 = vrot.lane.b32.xlu0 %v4732, 8
      %v4820 = vpop.permute.xlu0 %4819
      %4821 = vrot.lane.b32.xlu0 %v4733, 8
      %v4822 = vpop.permute.xlu0 %4821
      %4823 = vrot.lane.b32.xlu0 %v4734, 8
      %v4824 = vpop.permute.xlu0 %4823
      %4825 = vrot.lane.b32.xlu0 %v4735, 8
      %v4826 = vpop.permute.xlu0 %4825
      %4827 = vrot.lane.b32.xlu0 %v4736, 8
      %v4828 = vpop.permute.xlu0 %4827
      %4829 = vrot.lane.b32.xlu0 %v4737, 8
      %v4830 = vpop.permute.xlu0 %4829
      %4831 = vrot.lane.b32.xlu0 %v4738, 8
      %v4832 = vpop.permute.xlu0 %4831
      %4833 = vrot.lane.b32.xlu0 %v4739, 8
      %v4834 = vpop.permute.xlu0 %4833
      %4835 = vrot.lane.b32.xlu0 %v4740, 8
      %v4836 = vpop.permute.xlu0 %4835
      %4869 = vst.msk [vmem:[#allocation3] sm:$0xff] %vm651, %v4774
      %4870 = vst.msk [vmem:[#allocation3 + $0x8] sm:$0xff] %vm651, %v4776
      %4871 = vst.msk [vmem:[#allocation3 + $0x10] sm:$0xff] %vm651, %v4778
      %4872 = vst.msk [vmem:[#allocation3 + $0x18] sm:$0xff] %vm651, %v4780
      %4873 = vst.msk [vmem:[#allocation3 + $0x20] sm:$0xff] %vm651, %v4782
      %4874 = vst.msk [vmem:[#allocation3 + $0x28] sm:$0xff] %vm651, %v4784
      %4875 = vst.msk [vmem:[#allocation3 + $0x30] sm:$0xff] %vm651, %v4786
      %4876 = vst.msk [vmem:[#allocation3 + $0x38] sm:$0xff] %vm651, %v4788
      %4877 = vst.msk [vmem:[#allocation3 + $0x40] sm:$0xff] %vm651, %v4790
      %4878 = vst.msk [vmem:[#allocation3 + $0x48] sm:$0xff] %vm651, %v4792
      %4879 = vst.msk [vmem:[#allocation3 + $0x50] sm:$0xff] %vm651, %v4794
      %4880 = vst.msk [vmem:[#allocation3 + $0x58] sm:$0xff] %vm651, %v4796
      %4881 = vst.msk [vmem:[#allocation3 + $0x60] sm:$0xff] %vm651, %v4798
      %4882 = vst.msk [vmem:[#allocation3 + $0x68] sm:$0xff] %vm651, %v4800
      %4883 = vst.msk [vmem:[#allocation3 + $0x70] sm:$0xff] %vm651, %v4802
      %4884 = vst.msk [vmem:[#allocation3 + $0x78] sm:$0xff] %vm651, %v4804
      %4885 = vst.msk [vmem:[#allocation3 + $0x80] sm:$0xff] %vm651, %v4806
      %4886 = vst.msk [vmem:[#allocation3 + $0x88] sm:$0xff] %vm651, %v4808
      %4887 = vst.msk [vmem:[#allocation3 + $0x90] sm:$0xff] %vm651, %v4810
      %4888 = vst.msk [vmem:[#allocation3 + $0x98] sm:$0xff] %vm651, %v4812
      %4889 = vst.msk [vmem:[#allocation3 + $0xa0] sm:$0xff] %vm651, %v4814
      %4890 = vst.msk [vmem:[#allocation3 + $0xa8] sm:$0xff] %vm651, %v4816
      %4891 = vst.msk [vmem:[#allocation3 + $0xb0] sm:$0xff] %vm651, %v4818
      %4892 = vst.msk [vmem:[#allocation3 + $0xb8] sm:$0xff] %vm651, %v4820
      %4893 = vst.msk [vmem:[#allocation3 + $0xc0] sm:$0xff] %vm651, %v4822
      %4894 = vst.msk [vmem:[#allocation3 + $0xc8] sm:$0xff] %vm651, %v4824
      %4895 = vst.msk [vmem:[#allocation3 + $0xd0] sm:$0xff] %vm651, %v4826
      %4896 = vst.msk [vmem:[#allocation3 + $0xd8] sm:$0xff] %vm651, %v4828
      %4897 = vst.msk [vmem:[#allocation3 + $0xe0] sm:$0xff] %vm651, %v4830
      %4898 = vst.msk [vmem:[#allocation3 + $0xe8] sm:$0xff] %vm651, %v4832
      %4899 = vst.msk [vmem:[#allocation3 + $0xf0] sm:$0xff] %vm651, %v4834
      %4900 = vst.msk [vmem:[#allocation3 + $0xf8] sm:$0xff] %vm651, %v4836
      %v4901 = vld [vmem:[#allocation2 + $0x2] sm:$0xff]
      %v4902 = vld [vmem:[#allocation2 + $0xa] sm:$0xff]
      %v4903 = vld [vmem:[#allocation2 + $0x1a] sm:$0xff]
      %v4904 = vld [vmem:[#allocation2 + $0x22] sm:$0xff]
      %v4905 = vld [vmem:[#allocation2 + $0x32] sm:$0xff]
      %v4906 = vld [vmem:[#allocation2 + $0x3a] sm:$0xff]
      %v4907 = vld [vmem:[#allocation2 + $0x4a] sm:$0xff]
      %v4908 = vld [vmem:[#allocation2 + $0x52] sm:$0xff]
      %v4909 = vld [vmem:[#allocation2 + $0x62] sm:$0xff]
      %v4910 = vld [vmem:[#allocation2 + $0x6a] sm:$0xff]
      %v4911 = vld [vmem:[#allocation2 + $0x7a] sm:$0xff]
      %v4912 = vld [vmem:[#allocation2 + $0x82] sm:$0xff]
      %v4913 = vld [vmem:[#allocation2 + $0x92] sm:$0xff]
      %v4914 = vld [vmem:[#allocation2 + $0x9a] sm:$0xff]
      %v4915 = vld [vmem:[#allocation2 + $0xaa] sm:$0xff]
      %v4916 = vld [vmem:[#allocation2 + $0xb2] sm:$0xff]
      %v4917 = vld [vmem:[#allocation2 + $0xc2] sm:$0xff]
      %v4918 = vld [vmem:[#allocation2 + $0xca] sm:$0xff]
      %v4919 = vld [vmem:[#allocation2 + $0xda] sm:$0xff]
      %v4920 = vld [vmem:[#allocation2 + $0xe2] sm:$0xff]
      %v4921 = vld [vmem:[#allocation2 + $0xf2] sm:$0xff]
      %v4922 = vld [vmem:[#allocation2 + $0xfa] sm:$0xff]
      %v4923 = vld [vmem:[#allocation2 + $0x10a] sm:$0xff]
      %v4924 = vld [vmem:[#allocation2 + $0x112] sm:$0xff]
      %v4925 = vld [vmem:[#allocation2 + $0x122] sm:$0xff]
      %v4926 = vld [vmem:[#allocation2 + $0x12a] sm:$0xff]
      %v4927 = vld [vmem:[#allocation2 + $0x13a] sm:$0xff]
      %v4928 = vld [vmem:[#allocation2 + $0x142] sm:$0xff]
      %v4929 = vld [vmem:[#allocation2 + $0x152] sm:$0xff]
      %v4930 = vld [vmem:[#allocation2 + $0x15a] sm:$0xff]
      %v4931 = vld [vmem:[#allocation2 + $0x16a] sm:$0xff]
      %v4932 = vld [vmem:[#allocation2 + $0x172] sm:$0xff]
      %4965 = vrot.lane.b32.xlu0 %v4901, 16
      %v4966 = vpop.permute.xlu0 %4965
      %4967 = vrot.lane.b32.xlu0 %v4902, 16
      %v4968 = vpop.permute.xlu0 %4967
      %4969 = vrot.lane.b32.xlu0 %v4903, 16
      %v4970 = vpop.permute.xlu0 %4969
      %4971 = vrot.lane.b32.xlu0 %v4904, 16
      %v4972 = vpop.permute.xlu0 %4971
      %4973 = vrot.lane.b32.xlu0 %v4905, 16
      %v4974 = vpop.permute.xlu0 %4973
      %4975 = vrot.lane.b32.xlu0 %v4906, 16
      %v4976 = vpop.permute.xlu0 %4975
      %4977 = vrot.lane.b32.xlu0 %v4907, 16
      %v4978 = vpop.permute.xlu0 %4977
      %4979 = vrot.lane.b32.xlu0 %v4908, 16
      %v4980 = vpop.permute.xlu0 %4979
      %4981 = vrot.lane.b32.xlu0 %v4909, 16
      %v4982 = vpop.permute.xlu0 %4981
      %4983 = vrot.lane.b32.xlu0 %v4910, 16
      %v4984 = vpop.permute.xlu0 %4983
      %4985 = vrot.lane.b32.xlu0 %v4911, 16
      %v4986 = vpop.permute.xlu0 %4985
      %4987 = vrot.lane.b32.xlu0 %v4912, 16
      %v4988 = vpop.permute.xlu0 %4987
      %4989 = vrot.lane.b32.xlu0 %v4913, 16
      %v4990 = vpop.permute.xlu0 %4989
      %4991 = vrot.lane.b32.xlu0 %v4914, 16
      %v4992 = vpop.permute.xlu0 %4991
      %4993 = vrot.lane.b32.xlu0 %v4915, 16
      %v4994 = vpop.permute.xlu0 %4993
      %4995 = vrot.lane.b32.xlu0 %v4916, 16
      %v4996 = vpop.permute.xlu0 %4995
      %4997 = vrot.lane.b32.xlu0 %v4917, 16
      %v4998 = vpop.permute.xlu0 %4997
      %4999 = vrot.lane.b32.xlu0 %v4918, 16
      %v5000 = vpop.permute.xlu0 %4999
      %5001 = vrot.lane.b32.xlu0 %v4919, 16
      %v5002 = vpop.permute.xlu0 %5001
      %5003 = vrot.lane.b32.xlu0 %v4920, 16
      %v5004 = vpop.permute.xlu0 %5003
      %5005 = vrot.lane.b32.xlu0 %v4921, 16
      %v5006 = vpop.permute.xlu0 %5005
      %5007 = vrot.lane.b32.xlu0 %v4922, 16
      %v5008 = vpop.permute.xlu0 %5007
      %5009 = vrot.lane.b32.xlu0 %v4923, 16
      %v5010 = vpop.permute.xlu0 %5009
      %5011 = vrot.lane.b32.xlu0 %v4924, 16
      %v5012 = vpop.permute.xlu0 %5011
      %5013 = vrot.lane.b32.xlu0 %v4925, 16
      %v5014 = vpop.permute.xlu0 %5013
      %5015 = vrot.lane.b32.xlu0 %v4926, 16
      %v5016 = vpop.permute.xlu0 %5015
      %5017 = vrot.lane.b32.xlu0 %v4927, 16
      %v5018 = vpop.permute.xlu0 %5017
      %5019 = vrot.lane.b32.xlu0 %v4928, 16
      %v5020 = vpop.permute.xlu0 %5019
      %5021 = vrot.lane.b32.xlu0 %v4929, 16
      %v5022 = vpop.permute.xlu0 %5021
      %5023 = vrot.lane.b32.xlu0 %v4930, 16
      %v5024 = vpop.permute.xlu0 %5023
      %5025 = vrot.lane.b32.xlu0 %v4931, 16
      %v5026 = vpop.permute.xlu0 %5025
      %5027 = vrot.lane.b32.xlu0 %v4932, 16
      %v5028 = vpop.permute.xlu0 %5027
      %5061 = vst.msk [vmem:[#allocation3] sm:$0xff] %vm844, %v4966
      %5062 = vst.msk [vmem:[#allocation3 + $0x8] sm:$0xff] %vm844, %v4968
      %5063 = vst.msk [vmem:[#allocation3 + $0x10] sm:$0xff] %vm844, %v4970
      %5064 = vst.msk [vmem:[#allocation3 + $0x18] sm:$0xff] %vm844, %v4972
      %5065 = vst.msk [vmem:[#allocation3 + $0x20] sm:$0xff] %vm844, %v4974
      %5066 = vst.msk [vmem:[#allocation3 + $0x28] sm:$0xff] %vm844, %v4976
      %5067 = vst.msk [vmem:[#allocation3 + $0x30] sm:$0xff] %vm844, %v4978
      %5068 = vst.msk [vmem:[#allocation3 + $0x38] sm:$0xff] %vm844, %v4980
      %5069 = vst.msk [vmem:[#allocation3 + $0x40] sm:$0xff] %vm844, %v4982
      %5070 = vst.msk [vmem:[#allocation3 + $0x48] sm:$0xff] %vm844, %v4984
      %5071 = vst.msk [vmem:[#allocation3 + $0x50] sm:$0xff] %vm844, %v4986
      %5072 = vst.msk [vmem:[#allocation3 + $0x58] sm:$0xff] %vm844, %v4988
      %5073 = vst.msk [vmem:[#allocation3 + $0x60] sm:$0xff] %vm844, %v4990
      %5074 = vst.msk [vmem:[#allocation3 + $0x68] sm:$0xff] %vm844, %v4992
      %5075 = vst.msk [vmem:[#allocation3 + $0x70] sm:$0xff] %vm844, %v4994
      %5076 = vst.msk [vmem:[#allocation3 + $0x78] sm:$0xff] %vm844, %v4996
      %5077 = vst.msk [vmem:[#allocation3 + $0x80] sm:$0xff] %vm844, %v4998
      %5078 = vst.msk [vmem:[#allocation3 + $0x88] sm:$0xff] %vm844, %v5000
      %5079 = vst.msk [vmem:[#allocation3 + $0x90] sm:$0xff] %vm844, %v5002
      %5080 = vst.msk [vmem:[#allocation3 + $0x98] sm:$0xff] %vm844, %v5004
      %5081 = vst.msk [vmem:[#allocation3 + $0xa0] sm:$0xff] %vm844, %v5006
      %5082 = vst.msk [vmem:[#allocation3 + $0xa8] sm:$0xff] %vm844, %v5008
      %5083 = vst.msk [vmem:[#allocation3 + $0xb0] sm:$0xff] %vm844, %v5010
      %5084 = vst.msk [vmem:[#allocation3 + $0xb8] sm:$0xff] %vm844, %v5012
      %5085 = vst.msk [vmem:[#allocation3 + $0xc0] sm:$0xff] %vm844, %v5014
      %5086 = vst.msk [vmem:[#allocation3 + $0xc8] sm:$0xff] %vm844, %v5016
      %5087 = vst.msk [vmem:[#allocation3 + $0xd0] sm:$0xff] %vm844, %v5018
      %5088 = vst.msk [vmem:[#allocation3 + $0xd8] sm:$0xff] %vm844, %v5020
      %5089 = vst.msk [vmem:[#allocation3 + $0xe0] sm:$0xff] %vm844, %v5022
      %5090 = vst.msk [vmem:[#allocation3 + $0xe8] sm:$0xff] %vm844, %v5024
      %5091 = vst.msk [vmem:[#allocation3 + $0xf0] sm:$0xff] %vm844, %v5026
      %5092 = vst.msk [vmem:[#allocation3 + $0xf8] sm:$0xff] %vm844, %v5028
      %v5093 = vld [vmem:[%s394] sm:$0xff]
      %v5094 = vld [vmem:[%s394 + $0x8] sm:$0xff]
      %v5095 = vld [vmem:[%s394 + $0x18] sm:$0xff]
      %v5096 = vld [vmem:[%s394 + $0x20] sm:$0xff]
      %v5097 = vld [vmem:[%s394 + $0x30] sm:$0xff]
      %v5098 = vld [vmem:[%s394 + $0x38] sm:$0xff]
      %v5099 = vld [vmem:[%s394 + $0x48] sm:$0xff]
      %v5100 = vld [vmem:[%s394 + $0x50] sm:$0xff]
      %v5101 = vld [vmem:[%s394 + $0x60] sm:$0xff]
      %v5102 = vld [vmem:[%s394 + $0x68] sm:$0xff]
      %v5103 = vld [vmem:[%s394 + $0x78] sm:$0xff]
      %v5104 = vld [vmem:[%s394 + $0x80] sm:$0xff]
      %v5105 = vld [vmem:[%s394 + $0x90] sm:$0xff]
      %v5106 = vld [vmem:[%s394 + $0x98] sm:$0xff]
      %v5107 = vld [vmem:[%s394 + $0xa8] sm:$0xff]
      %v5108 = vld [vmem:[%s394 + $0xb0] sm:$0xff]
      %v5109 = vld [vmem:[%s394 + $0xc0] sm:$0xff]
      %v5110 = vld [vmem:[%s394 + $0xc8] sm:$0xff]
      %v5111 = vld [vmem:[%s394 + $0xd8] sm:$0xff]
      %v5112 = vld [vmem:[%s394 + $0xe0] sm:$0xff]
      %v5113 = vld [vmem:[%s394 + $0xf0] sm:$0xff]
      %v5114 = vld [vmem:[%s394 + $0xf8] sm:$0xff]
      %v5115 = vld [vmem:[%s394 + $0x108] sm:$0xff]
      %v5116 = vld [vmem:[%s394 + $0x110] sm:$0xff]
      %v5117 = vld [vmem:[%s394 + $0x120] sm:$0xff]
      %v5118 = vld [vmem:[%s394 + $0x128] sm:$0xff]
      %v5119 = vld [vmem:[%s394 + $0x138] sm:$0xff]
      %v5120 = vld [vmem:[%s394 + $0x140] sm:$0xff]
      %v5121 = vld [vmem:[%s394 + $0x150] sm:$0xff]
      %v5122 = vld [vmem:[%s394 + $0x158] sm:$0xff]
      %v5123 = vld [vmem:[%s394 + $0x168] sm:$0xff]
      %v5124 = vld [vmem:[%s394 + $0x170] sm:$0xff]
      %5157 = vrot.lane.b32.xlu0 %v5093, 24
      %v5158 = vpop.permute.xlu0 %5157
      %5159 = vrot.lane.b32.xlu0 %v5094, 24
      %v5160 = vpop.permute.xlu0 %5159
      %5161 = vrot.lane.b32.xlu0 %v5095, 24
      %v5162 = vpop.permute.xlu0 %5161
      %5163 = vrot.lane.b32.xlu0 %v5096, 24
      %v5164 = vpop.permute.xlu0 %5163
      %5165 = vrot.lane.b32.xlu0 %v5097, 24
      %v5166 = vpop.permute.xlu0 %5165
      %5167 = vrot.lane.b32.xlu0 %v5098, 24
      %v5168 = vpop.permute.xlu0 %5167
      %5169 = vrot.lane.b32.xlu0 %v5099, 24
      %v5170 = vpop.permute.xlu0 %5169
      %5171 = vrot.lane.b32.xlu0 %v5100, 24
      %v5172 = vpop.permute.xlu0 %5171
      %5173 = vrot.lane.b32.xlu0 %v5101, 24
      %v5174 = vpop.permute.xlu0 %5173
      %5175 = vrot.lane.b32.xlu0 %v5102, 24
      %v5176 = vpop.permute.xlu0 %5175
      %5177 = vrot.lane.b32.xlu0 %v5103, 24
      %v5178 = vpop.permute.xlu0 %5177
      %5179 = vrot.lane.b32.xlu0 %v5104, 24
      %v5180 = vpop.permute.xlu0 %5179
      %5181 = vrot.lane.b32.xlu0 %v5105, 24
      %v5182 = vpop.permute.xlu0 %5181
      %5183 = vrot.lane.b32.xlu0 %v5106, 24
      %v5184 = vpop.permute.xlu0 %5183
      %5185 = vrot.lane.b32.xlu0 %v5107, 24
      %v5186 = vpop.permute.xlu0 %5185
      %5187 = vrot.lane.b32.xlu0 %v5108, 24
      %v5188 = vpop.permute.xlu0 %5187
      %5189 = vrot.lane.b32.xlu0 %v5109, 24
      %v5190 = vpop.permute.xlu0 %5189
      %5191 = vrot.lane.b32.xlu0 %v5110, 24
      %v5192 = vpop.permute.xlu0 %5191
      %5193 = vrot.lane.b32.xlu0 %v5111, 24
      %v5194 = vpop.permute.xlu0 %5193
      %5195 = vrot.lane.b32.xlu0 %v5112, 24
      %v5196 = vpop.permute.xlu0 %5195
      %5197 = vrot.lane.b32.xlu0 %v5113, 24
      %v5198 = vpop.permute.xlu0 %5197
      %5199 = vrot.lane.b32.xlu0 %v5114, 24
      %v5200 = vpop.permute.xlu0 %5199
      %5201 = vrot.lane.b32.xlu0 %v5115, 24
      %v5202 = vpop.permute.xlu0 %5201
      %5203 = vrot.lane.b32.xlu0 %v5116, 24
      %v5204 = vpop.permute.xlu0 %5203
      %5205 = vrot.lane.b32.xlu0 %v5117, 24
      %v5206 = vpop.permute.xlu0 %5205
      %5207 = vrot.lane.b32.xlu0 %v5118, 24
      %v5208 = vpop.permute.xlu0 %5207
      %5209 = vrot.lane.b32.xlu0 %v5119, 24
      %v5210 = vpop.permute.xlu0 %5209
      %5211 = vrot.lane.b32.xlu0 %v5120, 24
      %v5212 = vpop.permute.xlu0 %5211
      %5213 = vrot.lane.b32.xlu0 %v5121, 24
      %v5214 = vpop.permute.xlu0 %5213
      %5215 = vrot.lane.b32.xlu0 %v5122, 24
      %v5216 = vpop.permute.xlu0 %5215
      %5217 = vrot.lane.b32.xlu0 %v5123, 24
      %v5218 = vpop.permute.xlu0 %5217
      %5219 = vrot.lane.b32.xlu0 %v5124, 24
      %v5220 = vpop.permute.xlu0 %5219
      %5253 = vst.msk [vmem:[#allocation3] sm:$0xff] %vm1037, %v5158
      %5254 = vst.msk [vmem:[#allocation3 + $0x8] sm:$0xff] %vm1037, %v5160
      %5255 = vst.msk [vmem:[#allocation3 + $0x10] sm:$0xff] %vm1037, %v5162
      %5256 = vst.msk [vmem:[#allocation3 + $0x18] sm:$0xff] %vm1037, %v5164
      %5257 = vst.msk [vmem:[#allocation3 + $0x20] sm:$0xff] %vm1037, %v5166
      %5258 = vst.msk [vmem:[#allocation3 + $0x28] sm:$0xff] %vm1037, %v5168
      %5259 = vst.msk [vmem:[#allocation3 + $0x30] sm:$0xff] %vm1037, %v5170
      %5260 = vst.msk [vmem:[#allocation3 + $0x38] sm:$0xff] %vm1037, %v5172
      %5261 = vst.msk [vmem:[#allocation3 + $0x40] sm:$0xff] %vm1037, %v5174
      %5262 = vst.msk [vmem:[#allocation3 + $0x48] sm:$0xff] %vm1037, %v5176
      %5263 = vst.msk [vmem:[#allocation3 + $0x50] sm:$0xff] %vm1037, %v5178
      %5264 = vst.msk [vmem:[#allocation3 + $0x58] sm:$0xff] %vm1037, %v5180
      %5265 = vst.msk [vmem:[#allocation3 + $0x60] sm:$0xff] %vm1037, %v5182
      %5266 = vst.msk [vmem:[#allocation3 + $0x68] sm:$0xff] %vm1037, %v5184
      %5267 = vst.msk [vmem:[#allocation3 + $0x70] sm:$0xff] %vm1037, %v5186
      %5268 = vst.msk [vmem:[#allocation3 + $0x78] sm:$0xff] %vm1037, %v5188
      %5269 = vst.msk [vmem:[#allocation3 + $0x80] sm:$0xff] %vm1037, %v5190
      %5270 = vst.msk [vmem:[#allocation3 + $0x88] sm:$0xff] %vm1037, %v5192
      %5271 = vst.msk [vmem:[#allocation3 + $0x90] sm:$0xff] %vm1037, %v5194
      %5272 = vst.msk [vmem:[#allocation3 + $0x98] sm:$0xff] %vm1037, %v5196
      %5273 = vst.msk [vmem:[#allocation3 + $0xa0] sm:$0xff] %vm1037, %v5198
      %5274 = vst.msk [vmem:[#allocation3 + $0xa8] sm:$0xff] %vm1037, %v5200
      %5275 = vst.msk [vmem:[#allocation3 + $0xb0] sm:$0xff] %vm1037, %v5202
      %5276 = vst.msk [vmem:[#allocation3 + $0xb8] sm:$0xff] %vm1037, %v5204
      %5277 = vst.msk [vmem:[#allocation3 + $0xc0] sm:$0xff] %vm1037, %v5206
      %5278 = vst.msk [vmem:[#allocation3 + $0xc8] sm:$0xff] %vm1037, %v5208
      %5279 = vst.msk [vmem:[#allocation3 + $0xd0] sm:$0xff] %vm1037, %v5210
      %5280 = vst.msk [vmem:[#allocation3 + $0xd8] sm:$0xff] %vm1037, %v5212
      %5281 = vst.msk [vmem:[#allocation3 + $0xe0] sm:$0xff] %vm1037, %v5214
      %5282 = vst.msk [vmem:[#allocation3 + $0xe8] sm:$0xff] %vm1037, %v5216
      %5283 = vst.msk [vmem:[#allocation3 + $0xf0] sm:$0xff] %vm1037, %v5218
      %5284 = vst.msk [vmem:[#allocation3 + $0xf8] sm:$0xff] %vm1037, %v5220
      %v5285 = vld [vmem:[%s394 + $0x1] sm:$0xff]
      %v5286 = vld [vmem:[%s394 + $0x9] sm:$0xff]
      %v5287 = vld [vmem:[%s394 + $0x19] sm:$0xff]
      %v5288 = vld [vmem:[%s394 + $0x21] sm:$0xff]
      %v5289 = vld [vmem:[%s394 + $0x31] sm:$0xff]
      %v5290 = vld [vmem:[%s394 + $0x39] sm:$0xff]
      %v5291 = vld [vmem:[%s394 + $0x49] sm:$0xff]
      %v5292 = vld [vmem:[%s394 + $0x51] sm:$0xff]
      %v5293 = vld [vmem:[%s394 + $0x61] sm:$0xff]
      %v5294 = vld [vmem:[%s394 + $0x69] sm:$0xff]
      %v5295 = vld [vmem:[%s394 + $0x79] sm:$0xff]
      %v5296 = vld [vmem:[%s394 + $0x81] sm:$0xff]
      %v5297 = vld [vmem:[%s394 + $0x91] sm:$0xff]
      %v5298 = vld [vmem:[%s394 + $0x99] sm:$0xff]
      %v5299 = vld [vmem:[%s394 + $0xa9] sm:$0xff]
      %v5300 = vld [vmem:[%s394 + $0xb1] sm:$0xff]
      %v5301 = vld [vmem:[%s394 + $0xc1] sm:$0xff]
      %v5302 = vld [vmem:[%s394 + $0xc9] sm:$0xff]
      %v5303 = vld [vmem:[%s394 + $0xd9] sm:$0xff]
      %v5304 = vld [vmem:[%s394 + $0xe1] sm:$0xff]
      %v5305 = vld [vmem:[%s394 + $0xf1] sm:$0xff]
      %v5306 = vld [vmem:[%s394 + $0xf9] sm:$0xff]
      %v5307 = vld [vmem:[%s394 + $0x109] sm:$0xff]
      %v5308 = vld [vmem:[%s394 + $0x111] sm:$0xff]
      %v5309 = vld [vmem:[%s394 + $0x121] sm:$0xff]
      %v5310 = vld [vmem:[%s394 + $0x129] sm:$0xff]
      %v5311 = vld [vmem:[%s394 + $0x139] sm:$0xff]
      %v5312 = vld [vmem:[%s394 + $0x141] sm:$0xff]
      %v5313 = vld [vmem:[%s394 + $0x151] sm:$0xff]
      %v5314 = vld [vmem:[%s394 + $0x159] sm:$0xff]
      %v5315 = vld [vmem:[%s394 + $0x169] sm:$0xff]
      %v5316 = vld [vmem:[%s394 + $0x171] sm:$0xff]
      %5349 = vrot.lane.b32.xlu0 %v5285, 32
      %v5350 = vpop.permute.xlu0 %5349
      %5351 = vrot.lane.b32.xlu0 %v5286, 32
      %v5352 = vpop.permute.xlu0 %5351
      %5353 = vrot.lane.b32.xlu0 %v5287, 32
      %v5354 = vpop.permute.xlu0 %5353
      %5355 = vrot.lane.b32.xlu0 %v5288, 32
      %v5356 = vpop.permute.xlu0 %5355
      %5357 = vrot.lane.b32.xlu0 %v5289, 32
      %v5358 = vpop.permute.xlu0 %5357
      %5359 = vrot.lane.b32.xlu0 %v5290, 32
      %v5360 = vpop.permute.xlu0 %5359
      %5361 = vrot.lane.b32.xlu0 %v5291, 32
      %v5362 = vpop.permute.xlu0 %5361
      %5363 = vrot.lane.b32.xlu0 %v5292, 32
      %v5364 = vpop.permute.xlu0 %5363
      %5365 = vrot.lane.b32.xlu0 %v5293, 32
      %v5366 = vpop.permute.xlu0 %5365
      %5367 = vrot.lane.b32.xlu0 %v5294, 32
      %v5368 = vpop.permute.xlu0 %5367
      %5369 = vrot.lane.b32.xlu0 %v5295, 32
      %v5370 = vpop.permute.xlu0 %5369
      %5371 = vrot.lane.b32.xlu0 %v5296, 32
      %v5372 = vpop.permute.xlu0 %5371
      %5373 = vrot.lane.b32.xlu0 %v5297, 32
      %v5374 = vpop.permute.xlu0 %5373
      %5375 = vrot.lane.b32.xlu0 %v5298, 32
      %v5376 = vpop.permute.xlu0 %5375
      %5377 = vrot.lane.b32.xlu0 %v5299, 32
      %v5378 = vpop.permute.xlu0 %5377
      %5379 = vrot.lane.b32.xlu0 %v5300, 32
      %v5380 = vpop.permute.xlu0 %5379
      %5381 = vrot.lane.b32.xlu0 %v5301, 32
      %v5382 = vpop.permute.xlu0 %5381
      %5383 = vrot.lane.b32.xlu0 %v5302, 32
      %v5384 = vpop.permute.xlu0 %5383
      %5385 = vrot.lane.b32.xlu0 %v5303, 32
      %v5386 = vpop.permute.xlu0 %5385
      %5387 = vrot.lane.b32.xlu0 %v5304, 32
      %v5388 = vpop.permute.xlu0 %5387
      %5389 = vrot.lane.b32.xlu0 %v5305, 32
      %v5390 = vpop.permute.xlu0 %5389
      %5391 = vrot.lane.b32.xlu0 %v5306, 32
      %v5392 = vpop.permute.xlu0 %5391
      %5393 = vrot.lane.b32.xlu0 %v5307, 32
      %v5394 = vpop.permute.xlu0 %5393
      %5395 = vrot.lane.b32.xlu0 %v5308, 32
      %v5396 = vpop.permute.xlu0 %5395
      %5397 = vrot.lane.b32.xlu0 %v5309, 32
      %v5398 = vpop.permute.xlu0 %5397
      %5399 = vrot.lane.b32.xlu0 %v5310, 32
      %v5400 = vpop.permute.xlu0 %5399
      %5401 = vrot.lane.b32.xlu0 %v5311, 32
      %v5402 = vpop.permute.xlu0 %5401
      %5403 = vrot.lane.b32.xlu0 %v5312, 32
      %v5404 = vpop.permute.xlu0 %5403
      %5405 = vrot.lane.b32.xlu0 %v5313, 32
      %v5406 = vpop.permute.xlu0 %5405
      %5407 = vrot.lane.b32.xlu0 %v5314, 32
      %v5408 = vpop.permute.xlu0 %5407
      %5409 = vrot.lane.b32.xlu0 %v5315, 32
      %v5410 = vpop.permute.xlu0 %5409
      %5411 = vrot.lane.b32.xlu0 %v5316, 32
      %v5412 = vpop.permute.xlu0 %5411
      %5445 = vst.msk [vmem:[#allocation3] sm:$0xff] %vm1230, %v5350
      %5446 = vst.msk [vmem:[#allocation3 + $0x8] sm:$0xff] %vm1230, %v5352
      %5447 = vst.msk [vmem:[#allocation3 + $0x10] sm:$0xff] %vm1230, %v5354
      %5448 = vst.msk [vmem:[#allocation3 + $0x18] sm:$0xff] %vm1230, %v5356
      %5449 = vst.msk [vmem:[#allocation3 + $0x20] sm:$0xff] %vm1230, %v5358
      %5450 = vst.msk [vmem:[#allocation3 + $0x28] sm:$0xff] %vm1230, %v5360
      %5451 = vst.msk [vmem:[#allocation3 + $0x30] sm:$0xff] %vm1230, %v5362
      %5452 = vst.msk [vmem:[#allocation3 + $0x38] sm:$0xff] %vm1230, %v5364
      %5453 = vst.msk [vmem:[#allocation3 + $0x40] sm:$0xff] %vm1230, %v5366
      %5454 = vst.msk [vmem:[#allocation3 + $0x48] sm:$0xff] %vm1230, %v5368
      %5455 = vst.msk [vmem:[#allocation3 + $0x50] sm:$0xff] %vm1230, %v5370
      %5456 = vst.msk [vmem:[#allocation3 + $0x58] sm:$0xff] %vm1230, %v5372
      %5457 = vst.msk [vmem:[#allocation3 + $0x60] sm:$0xff] %vm1230, %v5374
      %5458 = vst.msk [vmem:[#allocation3 + $0x68] sm:$0xff] %vm1230, %v5376
      %5459 = vst.msk [vmem:[#allocation3 + $0x70] sm:$0xff] %vm1230, %v5378
      %5460 = vst.msk [vmem:[#allocation3 + $0x78] sm:$0xff] %vm1230, %v5380
      %5461 = vst.msk [vmem:[#allocation3 + $0x80] sm:$0xff] %vm1230, %v5382
      %5462 = vst.msk [vmem:[#allocation3 + $0x88] sm:$0xff] %vm1230, %v5384
      %5463 = vst.msk [vmem:[#allocation3 + $0x90] sm:$0xff] %vm1230, %v5386
      %5464 = vst.msk [vmem:[#allocation3 + $0x98] sm:$0xff] %vm1230, %v5388
      %5465 = vst.msk [vmem:[#allocation3 + $0xa0] sm:$0xff] %vm1230, %v5390
      %5466 = vst.msk [vmem:[#allocation3 + $0xa8] sm:$0xff] %vm1230, %v5392
      %5467 = vst.msk [vmem:[#allocation3 + $0xb0] sm:$0xff] %vm1230, %v5394
      %5468 = vst.msk [vmem:[#allocation3 + $0xb8] sm:$0xff] %vm1230, %v5396
      %5469 = vst.msk [vmem:[#allocation3 + $0xc0] sm:$0xff] %vm1230, %v5398
      %5470 = vst.msk [vmem:[#allocation3 + $0xc8] sm:$0xff] %vm1230, %v5400
      %5471 = vst.msk [vmem:[#allocation3 + $0xd0] sm:$0xff] %vm1230, %v5402
      %5472 = vst.msk [vmem:[#allocation3 + $0xd8] sm:$0xff] %vm1230, %v5404
      %5473 = vst.msk [vmem:[#allocation3 + $0xe0] sm:$0xff] %vm1230, %v5406
      %5474 = vst.msk [vmem:[#allocation3 + $0xe8] sm:$0xff] %vm1230, %v5408
      %5475 = vst.msk [vmem:[#allocation3 + $0xf0] sm:$0xff] %vm1230, %v5410
      %5476 = vst.msk [vmem:[#allocation3 + $0xf8] sm:$0xff] %vm1230, %v5412
      %v5477 = vld [vmem:[%s394 + $0x2] sm:$0xff]
      %v5478 = vld [vmem:[%s394 + $0xa] sm:$0xff]
      %v5479 = vld [vmem:[%s394 + $0x1a] sm:$0xff]
      %v5480 = vld [vmem:[%s394 + $0x22] sm:$0xff]
      %v5481 = vld [vmem:[%s394 + $0x32] sm:$0xff]
      %v5482 = vld [vmem:[%s394 + $0x3a] sm:$0xff]
      %v5483 = vld [vmem:[%s394 + $0x4a] sm:$0xff]
      %v5484 = vld [vmem:[%s394 + $0x52] sm:$0xff]
      %v5485 = vld [vmem:[%s394 + $0x62] sm:$0xff]
      %v5486 = vld [vmem:[%s394 + $0x6a] sm:$0xff]
      %v5487 = vld [vmem:[%s394 + $0x7a] sm:$0xff]
      %v5488 = vld [vmem:[%s394 + $0x82] sm:$0xff]
      %v5489 = vld [vmem:[%s394 + $0x92] sm:$0xff]
      %v5490 = vld [vmem:[%s394 + $0x9a] sm:$0xff]
      %v5491 = vld [vmem:[%s394 + $0xaa] sm:$0xff]
      %v5492 = vld [vmem:[%s394 + $0xb2] sm:$0xff]
      %v5493 = vld [vmem:[%s394 + $0xc2] sm:$0xff]
      %v5494 = vld [vmem:[%s394 + $0xca] sm:$0xff]
      %v5495 = vld [vmem:[%s394 + $0xda] sm:$0xff]
      %v5496 = vld [vmem:[%s394 + $0xe2] sm:$0xff]
      %v5497 = vld [vmem:[%s394 + $0xf2] sm:$0xff]
      %v5498 = vld [vmem:[%s394 + $0xfa] sm:$0xff]
      %v5499 = vld [vmem:[%s394 + $0x10a] sm:$0xff]
      %v5500 = vld [vmem:[%s394 + $0x112] sm:$0xff]
      %v5501 = vld [vmem:[%s394 + $0x122] sm:$0xff]
      %v5502 = vld [vmem:[%s394 + $0x12a] sm:$0xff]
      %v5503 = vld [vmem:[%s394 + $0x13a] sm:$0xff]
      %v5504 = vld [vmem:[%s394 + $0x142] sm:$0xff]
      %v5505 = vld [vmem:[%s394 + $0x152] sm:$0xff]
      %v5506 = vld [vmem:[%s394 + $0x15a] sm:$0xff]
      %v5507 = vld [vmem:[%s394 + $0x16a] sm:$0xff]
      %v5508 = vld [vmem:[%s394 + $0x172] sm:$0xff]
      %5541 = vrot.lane.b32.xlu0 %v5477, 40
      %v5542 = vpop.permute.xlu0 %5541
      %5543 = vrot.lane.b32.xlu0 %v5478, 40
      %v5544 = vpop.permute.xlu0 %5543
      %5545 = vrot.lane.b32.xlu0 %v5479, 40
      %v5546 = vpop.permute.xlu0 %5545
      %5547 = vrot.lane.b32.xlu0 %v5480, 40
      %v5548 = vpop.permute.xlu0 %5547
      %5549 = vrot.lane.b32.xlu0 %v5481, 40
      %v5550 = vpop.permute.xlu0 %5549
      %5551 = vrot.lane.b32.xlu0 %v5482, 40
      %v5552 = vpop.permute.xlu0 %5551
      %5553 = vrot.lane.b32.xlu0 %v5483, 40
      %v5554 = vpop.permute.xlu0 %5553
      %5555 = vrot.lane.b32.xlu0 %v5484, 40
      %v5556 = vpop.permute.xlu0 %5555
      %5557 = vrot.lane.b32.xlu0 %v5485, 40
      %v5558 = vpop.permute.xlu0 %5557
      %5559 = vrot.lane.b32.xlu0 %v5486, 40
      %v5560 = vpop.permute.xlu0 %5559
      %5561 = vrot.lane.b32.xlu0 %v5487, 40
      %v5562 = vpop.permute.xlu0 %5561
      %5563 = vrot.lane.b32.xlu0 %v5488, 40
      %v5564 = vpop.permute.xlu0 %5563
      %5565 = vrot.lane.b32.xlu0 %v5489, 40
      %v5566 = vpop.permute.xlu0 %5565
      %5567 = vrot.lane.b32.xlu0 %v5490, 40
      %v5568 = vpop.permute.xlu0 %5567
      %5569 = vrot.lane.b32.xlu0 %v5491, 40
      %v5570 = vpop.permute.xlu0 %5569
      %5571 = vrot.lane.b32.xlu0 %v5492, 40
      %v5572 = vpop.permute.xlu0 %5571
      %5573 = vrot.lane.b32.xlu0 %v5493, 40
      %v5574 = vpop.permute.xlu0 %5573
      %5575 = vrot.lane.b32.xlu0 %v5494, 40
      %v5576 = vpop.permute.xlu0 %5575
      %5577 = vrot.lane.b32.xlu0 %v5495, 40
      %v5578 = vpop.permute.xlu0 %5577
      %5579 = vrot.lane.b32.xlu0 %v5496, 40
      %v5580 = vpop.permute.xlu0 %5579
      %5581 = vrot.lane.b32.xlu0 %v5497, 40
      %v5582 = vpop.permute.xlu0 %5581
      %5583 = vrot.lane.b32.xlu0 %v5498, 40
      %v5584 = vpop.permute.xlu0 %5583
      %5585 = vrot.lane.b32.xlu0 %v5499, 40
      %v5586 = vpop.permute.xlu0 %5585
      %5587 = vrot.lane.b32.xlu0 %v5500, 40
      %v5588 = vpop.permute.xlu0 %5587
      %5589 = vrot.lane.b32.xlu0 %v5501, 40
      %v5590 = vpop.permute.xlu0 %5589
      %5591 = vrot.lane.b32.xlu0 %v5502, 40
      %v5592 = vpop.permute.xlu0 %5591
      %5593 = vrot.lane.b32.xlu0 %v5503, 40
      %v5594 = vpop.permute.xlu0 %5593
      %5595 = vrot.lane.b32.xlu0 %v5504, 40
      %v5596 = vpop.permute.xlu0 %5595
      %5597 = vrot.lane.b32.xlu0 %v5505, 40
      %v5598 = vpop.permute.xlu0 %5597
      %5599 = vrot.lane.b32.xlu0 %v5506, 40
      %v5600 = vpop.permute.xlu0 %5599
      %5601 = vrot.lane.b32.xlu0 %v5507, 40
      %v5602 = vpop.permute.xlu0 %5601
      %5603 = vrot.lane.b32.xlu0 %v5508, 40
      %v5604 = vpop.permute.xlu0 %5603
      %5637 = vst.msk [vmem:[#allocation3] sm:$0xff] %vm1423, %v5542
      %5638 = vst.msk [vmem:[#allocation3 + $0x8] sm:$0xff] %vm1423, %v5544
      %5639 = vst.msk [vmem:[#allocation3 + $0x10] sm:$0xff] %vm1423, %v5546
      %5640 = vst.msk [vmem:[#allocation3 + $0x18] sm:$0xff] %vm1423, %v5548
      %5641 = vst.msk [vmem:[#allocation3 + $0x20] sm:$0xff] %vm1423, %v5550
      %5642 = vst.msk [vmem:[#allocation3 + $0x28] sm:$0xff] %vm1423, %v5552
      %5643 = vst.msk [vmem:[#allocation3 + $0x30] sm:$0xff] %vm1423, %v5554
      %5644 = vst.msk [vmem:[#allocation3 + $0x38] sm:$0xff] %vm1423, %v5556
      %5645 = vst.msk [vmem:[#allocation3 + $0x40] sm:$0xff] %vm1423, %v5558
      %5646 = vst.msk [vmem:[#allocation3 + $0x48] sm:$0xff] %vm1423, %v5560
      %5647 = vst.msk [vmem:[#allocation3 + $0x50] sm:$0xff] %vm1423, %v5562
      %5648 = vst.msk [vmem:[#allocation3 + $0x58] sm:$0xff] %vm1423, %v5564
      %5649 = vst.msk [vmem:[#allocation3 + $0x60] sm:$0xff] %vm1423, %v5566
      %5650 = vst.msk [vmem:[#allocation3 + $0x68] sm:$0xff] %vm1423, %v5568
      %5651 = vst.msk [vmem:[#allocation3 + $0x70] sm:$0xff] %vm1423, %v5570
      %5652 = vst.msk [vmem:[#allocation3 + $0x78] sm:$0xff] %vm1423, %v5572
      %5653 = vst.msk [vmem:[#allocation3 + $0x80] sm:$0xff] %vm1423, %v5574
      %5654 = vst.msk [vmem:[#allocation3 + $0x88] sm:$0xff] %vm1423, %v5576
      %5655 = vst.msk [vmem:[#allocation3 + $0x90] sm:$0xff] %vm1423, %v5578
      %5656 = vst.msk [vmem:[#allocation3 + $0x98] sm:$0xff] %vm1423, %v5580
      %5657 = vst.msk [vmem:[#allocation3 + $0xa0] sm:$0xff] %vm1423, %v5582
      %5658 = vst.msk [vmem:[#allocation3 + $0xa8] sm:$0xff] %vm1423, %v5584
      %5659 = vst.msk [vmem:[#allocation3 + $0xb0] sm:$0xff] %vm1423, %v5586
      %5660 = vst.msk [vmem:[#allocation3 + $0xb8] sm:$0xff] %vm1423, %v5588
      %5661 = vst.msk [vmem:[#allocation3 + $0xc0] sm:$0xff] %vm1423, %v5590
      %5662 = vst.msk [vmem:[#allocation3 + $0xc8] sm:$0xff] %vm1423, %v5592
      %5663 = vst.msk [vmem:[#allocation3 + $0xd0] sm:$0xff] %vm1423, %v5594
      %5664 = vst.msk [vmem:[#allocation3 + $0xd8] sm:$0xff] %vm1423, %v5596
      %5665 = vst.msk [vmem:[#allocation3 + $0xe0] sm:$0xff] %vm1423, %v5598
      %5666 = vst.msk [vmem:[#allocation3 + $0xe8] sm:$0xff] %vm1423, %v5600
      %5667 = vst.msk [vmem:[#allocation3 + $0xf0] sm:$0xff] %vm1423, %v5602
      %5668 = vst.msk [vmem:[#allocation3 + $0xf8] sm:$0xff] %vm1423, %v5604
      %v5669 = vld [vmem:[%s1456] sm:$0xff]
      %v5670 = vld [vmem:[%s1456 + $0x8] sm:$0xff]
      %v5671 = vld [vmem:[%s1456 + $0x18] sm:$0xff]
      %v5672 = vld [vmem:[%s1456 + $0x20] sm:$0xff]
      %v5673 = vld [vmem:[%s1456 + $0x30] sm:$0xff]
      %v5674 = vld [vmem:[%s1456 + $0x38] sm:$0xff]
      %v5675 = vld [vmem:[%s1456 + $0x48] sm:$0xff]
      %v5676 = vld [vmem:[%s1456 + $0x50] sm:$0xff]
      %v5677 = vld [vmem:[%s1456 + $0x60] sm:$0xff]
      %v5678 = vld [vmem:[%s1456 + $0x68] sm:$0xff]
      %v5679 = vld [vmem:[%s1456 + $0x78] sm:$0xff]
      %v5680 = vld [vmem:[%s1456 + $0x80] sm:$0xff]
      %v5681 = vld [vmem:[%s1456 + $0x90] sm:$0xff]
      %v5682 = vld [vmem:[%s1456 + $0x98] sm:$0xff]
      %v5683 = vld [vmem:[%s1456 + $0xa8] sm:$0xff]
      %v5684 = vld [vmem:[%s1456 + $0xb0] sm:$0xff]
      %v5685 = vld [vmem:[%s1456 + $0xc0] sm:$0xff]
      %v5686 = vld [vmem:[%s1456 + $0xc8] sm:$0xff]
      %v5687 = vld [vmem:[%s1456 + $0xd8] sm:$0xff]
      %v5688 = vld [vmem:[%s1456 + $0xe0] sm:$0xff]
      %v5689 = vld [vmem:[%s1456 + $0xf0] sm:$0xff]
      %v5690 = vld [vmem:[%s1456 + $0xf8] sm:$0xff]
      %v5691 = vld [vmem:[%s1456 + $0x108] sm:$0xff]
      %v5692 = vld [vmem:[%s1456 + $0x110] sm:$0xff]
      %v5693 = vld [vmem:[%s1456 + $0x120] sm:$0xff]
      %v5694 = vld [vmem:[%s1456 + $0x128] sm:$0xff]
      %v5695 = vld [vmem:[%s1456 + $0x138] sm:$0xff]
      %v5696 = vld [vmem:[%s1456 + $0x140] sm:$0xff]
      %v5697 = vld [vmem:[%s1456 + $0x150] sm:$0xff]
      %v5698 = vld [vmem:[%s1456 + $0x158] sm:$0xff]
      %v5699 = vld [vmem:[%s1456 + $0x168] sm:$0xff]
      %v5700 = vld [vmem:[%s1456 + $0x170] sm:$0xff]
      %5733 = vrot.lane.b32.xlu0 %v5669, 48
      %v5734 = vpop.permute.xlu0 %5733
      %5735 = vrot.lane.b32.xlu0 %v5670, 48
      %v5736 = vpop.permute.xlu0 %5735
      %5737 = vrot.lane.b32.xlu0 %v5671, 48
      %v5738 = vpop.permute.xlu0 %5737
      %5739 = vrot.lane.b32.xlu0 %v5672, 48
      %v5740 = vpop.permute.xlu0 %5739
      %5741 = vrot.lane.b32.xlu0 %v5673, 48
      %v5742 = vpop.permute.xlu0 %5741
      %5743 = vrot.lane.b32.xlu0 %v5674, 48
      %v5744 = vpop.permute.xlu0 %5743
      %5745 = vrot.lane.b32.xlu0 %v5675, 48
      %v5746 = vpop.permute.xlu0 %5745
      %5747 = vrot.lane.b32.xlu0 %v5676, 48
      %v5748 = vpop.permute.xlu0 %5747
      %5749 = vrot.lane.b32.xlu0 %v5677, 48
      %v5750 = vpop.permute.xlu0 %5749
      %5751 = vrot.lane.b32.xlu0 %v5678, 48
      %v5752 = vpop.permute.xlu0 %5751
      %5753 = vrot.lane.b32.xlu0 %v5679, 48
      %v5754 = vpop.permute.xlu0 %5753
      %5755 = vrot.lane.b32.xlu0 %v5680, 48
      %v5756 = vpop.permute.xlu0 %5755
      %5757 = vrot.lane.b32.xlu0 %v5681, 48
      %v5758 = vpop.permute.xlu0 %5757
      %5759 = vrot.lane.b32.xlu0 %v5682, 48
      %v5760 = vpop.permute.xlu0 %5759
      %5761 = vrot.lane.b32.xlu0 %v5683, 48
      %v5762 = vpop.permute.xlu0 %5761
      %5763 = vrot.lane.b32.xlu0 %v5684, 48
      %v5764 = vpop.permute.xlu0 %5763
      %5765 = vrot.lane.b32.xlu0 %v5685, 48
      %v5766 = vpop.permute.xlu0 %5765
      %5767 = vrot.lane.b32.xlu0 %v5686, 48
      %v5768 = vpop.permute.xlu0 %5767
      %5769 = vrot.lane.b32.xlu0 %v5687, 48
      %v5770 = vpop.permute.xlu0 %5769
      %5771 = vrot.lane.b32.xlu0 %v5688, 48
      %v5772 = vpop.permute.xlu0 %5771
      %5773 = vrot.lane.b32.xlu0 %v5689, 48
      %v5774 = vpop.permute.xlu0 %5773
      %5775 = vrot.lane.b32.xlu0 %v5690, 48
      %v5776 = vpop.permute.xlu0 %5775
      %5777 = vrot.lane.b32.xlu0 %v5691, 48
      %v5778 = vpop.permute.xlu0 %5777
      %5779 = vrot.lane.b32.xlu0 %v5692, 48
      %v5780 = vpop.permute.xlu0 %5779
      %5781 = vrot.lane.b32.xlu0 %v5693, 48
      %v5782 = vpop.permute.xlu0 %5781
      %5783 = vrot.lane.b32.xlu0 %v5694, 48
      %v5784 = vpop.permute.xlu0 %5783
      %5785 = vrot.lane.b32.xlu0 %v5695, 48
      %v5786 = vpop.permute.xlu0 %5785
      %5787 = vrot.lane.b32.xlu0 %v5696, 48
      %v5788 = vpop.permute.xlu0 %5787
      %5789 = vrot.lane.b32.xlu0 %v5697, 48
      %v5790 = vpop.permute.xlu0 %5789
      %5791 = vrot.lane.b32.xlu0 %v5698, 48
      %v5792 = vpop.permute.xlu0 %5791
      %5793 = vrot.lane.b32.xlu0 %v5699, 48
      %v5794 = vpop.permute.xlu0 %5793
      %5795 = vrot.lane.b32.xlu0 %v5700, 48
      %v5796 = vpop.permute.xlu0 %5795
      %5829 = vst.msk [vmem:[#allocation3] sm:$0xff] %vm1617, %v5734
      %5830 = vst.msk [vmem:[#allocation3 + $0x8] sm:$0xff] %vm1617, %v5736
      %5831 = vst.msk [vmem:[#allocation3 + $0x10] sm:$0xff] %vm1617, %v5738
      %5832 = vst.msk [vmem:[#allocation3 + $0x18] sm:$0xff] %vm1617, %v5740
      %5833 = vst.msk [vmem:[#allocation3 + $0x20] sm:$0xff] %vm1617, %v5742
      %5834 = vst.msk [vmem:[#allocation3 + $0x28] sm:$0xff] %vm1617, %v5744
      %5835 = vst.msk [vmem:[#allocation3 + $0x30] sm:$0xff] %vm1617, %v5746
      %5836 = vst.msk [vmem:[#allocation3 + $0x38] sm:$0xff] %vm1617, %v5748
      %5837 = vst.msk [vmem:[#allocation3 + $0x40] sm:$0xff] %vm1617, %v5750
      %5838 = vst.msk [vmem:[#allocation3 + $0x48] sm:$0xff] %vm1617, %v5752
      %5839 = vst.msk [vmem:[#allocation3 + $0x50] sm:$0xff] %vm1617, %v5754
      %5840 = vst.msk [vmem:[#allocation3 + $0x58] sm:$0xff] %vm1617, %v5756
      %5841 = vst.msk [vmem:[#allocation3 + $0x60] sm:$0xff] %vm1617, %v5758
      %5842 = vst.msk [vmem:[#allocation3 + $0x68] sm:$0xff] %vm1617, %v5760
      %5843 = vst.msk [vmem:[#allocation3 + $0x70] sm:$0xff] %vm1617, %v5762
      %5844 = vst.msk [vmem:[#allocation3 + $0x78] sm:$0xff] %vm1617, %v5764
      %5845 = vst.msk [vmem:[#allocation3 + $0x80] sm:$0xff] %vm1617, %v5766
      %5846 = vst.msk [vmem:[#allocation3 + $0x88] sm:$0xff] %vm1617, %v5768
      %5847 = vst.msk [vmem:[#allocation3 + $0x90] sm:$0xff] %vm1617, %v5770
      %5848 = vst.msk [vmem:[#allocation3 + $0x98] sm:$0xff] %vm1617, %v5772
      %5849 = vst.msk [vmem:[#allocation3 + $0xa0] sm:$0xff] %vm1617, %v5774
      %5850 = vst.msk [vmem:[#allocation3 + $0xa8] sm:$0xff] %vm1617, %v5776
      %5851 = vst.msk [vmem:[#allocation3 + $0xb0] sm:$0xff] %vm1617, %v5778
      %5852 = vst.msk [vmem:[#allocation3 + $0xb8] sm:$0xff] %vm1617, %v5780
      %5853 = vst.msk [vmem:[#allocation3 + $0xc0] sm:$0xff] %vm1617, %v5782
      %5854 = vst.msk [vmem:[#allocation3 + $0xc8] sm:$0xff] %vm1617, %v5784
      %5855 = vst.msk [vmem:[#allocation3 + $0xd0] sm:$0xff] %vm1617, %v5786
      %5856 = vst.msk [vmem:[#allocation3 + $0xd8] sm:$0xff] %vm1617, %v5788
      %5857 = vst.msk [vmem:[#allocation3 + $0xe0] sm:$0xff] %vm1617, %v5790
      %5858 = vst.msk [vmem:[#allocation3 + $0xe8] sm:$0xff] %vm1617, %v5792
      %5859 = vst.msk [vmem:[#allocation3 + $0xf0] sm:$0xff] %vm1617, %v5794
      %5860 = vst.msk [vmem:[#allocation3 + $0xf8] sm:$0xff] %vm1617, %v5796
      %v5861 = vld [vmem:[%s1456 + $0x1] sm:$0xff]
      %v5862 = vld [vmem:[%s1456 + $0x9] sm:$0xff]
      %v5863 = vld [vmem:[%s1456 + $0x19] sm:$0xff]
      %v5864 = vld [vmem:[%s1456 + $0x21] sm:$0xff]
      %v5865 = vld [vmem:[%s1456 + $0x31] sm:$0xff]
      %v5866 = vld [vmem:[%s1456 + $0x39] sm:$0xff]
      %v5867 = vld [vmem:[%s1456 + $0x49] sm:$0xff]
      %v5868 = vld [vmem:[%s1456 + $0x51] sm:$0xff]
      %v5869 = vld [vmem:[%s1456 + $0x61] sm:$0xff]
      %v5870 = vld [vmem:[%s1456 + $0x69] sm:$0xff]
      %v5871 = vld [vmem:[%s1456 + $0x79] sm:$0xff]
      %v5872 = vld [vmem:[%s1456 + $0x81] sm:$0xff]
      %v5873 = vld [vmem:[%s1456 + $0x91] sm:$0xff]
      %v5874 = vld [vmem:[%s1456 + $0x99] sm:$0xff]
      %v5875 = vld [vmem:[%s1456 + $0xa9] sm:$0xff]
      %v5876 = vld [vmem:[%s1456 + $0xb1] sm:$0xff]
      %v5877 = vld [vmem:[%s1456 + $0xc1] sm:$0xff]
      %v5878 = vld [vmem:[%s1456 + $0xc9] sm:$0xff]
      %v5879 = vld [vmem:[%s1456 + $0xd9] sm:$0xff]
      %v5880 = vld [vmem:[%s1456 + $0xe1] sm:$0xff]
      %v5881 = vld [vmem:[%s1456 + $0xf1] sm:$0xff]
      %v5882 = vld [vmem:[%s1456 + $0xf9] sm:$0xff]
      %v5883 = vld [vmem:[%s1456 + $0x109] sm:$0xff]
      %v5884 = vld [vmem:[%s1456 + $0x111] sm:$0xff]
      %v5885 = vld [vmem:[%s1456 + $0x121] sm:$0xff]
      %v5886 = vld [vmem:[%s1456 + $0x129] sm:$0xff]
      %v5887 = vld [vmem:[%s1456 + $0x139] sm:$0xff]
      %v5888 = vld [vmem:[%s1456 + $0x141] sm:$0xff]
      %v5889 = vld [vmem:[%s1456 + $0x151] sm:$0xff]
      %v5890 = vld [vmem:[%s1456 + $0x159] sm:$0xff]
      %v5891 = vld [vmem:[%s1456 + $0x169] sm:$0xff]
      %v5892 = vld [vmem:[%s1456 + $0x171] sm:$0xff]
      %5925 = vrot.lane.b32.xlu0 %v5861, 56
      %v5926 = vpop.permute.xlu0 %5925
      %5927 = vrot.lane.b32.xlu0 %v5862, 56
      %v5928 = vpop.permute.xlu0 %5927
      %5929 = vrot.lane.b32.xlu0 %v5863, 56
      %v5930 = vpop.permute.xlu0 %5929
      %5931 = vrot.lane.b32.xlu0 %v5864, 56
      %v5932 = vpop.permute.xlu0 %5931
      %5933 = vrot.lane.b32.xlu0 %v5865, 56
      %v5934 = vpop.permute.xlu0 %5933
      %5935 = vrot.lane.b32.xlu0 %v5866, 56
      %v5936 = vpop.permute.xlu0 %5935
      %5937 = vrot.lane.b32.xlu0 %v5867, 56
      %v5938 = vpop.permute.xlu0 %5937
      %5939 = vrot.lane.b32.xlu0 %v5868, 56
      %v5940 = vpop.permute.xlu0 %5939
      %5941 = vrot.lane.b32.xlu0 %v5869, 56
      %v5942 = vpop.permute.xlu0 %5941
      %5943 = vrot.lane.b32.xlu0 %v5870, 56
      %v5944 = vpop.permute.xlu0 %5943
      %5945 = vrot.lane.b32.xlu0 %v5871, 56
      %v5946 = vpop.permute.xlu0 %5945
      %5947 = vrot.lane.b32.xlu0 %v5872, 56
      %v5948 = vpop.permute.xlu0 %5947
      %5949 = vrot.lane.b32.xlu0 %v5873, 56
      %v5950 = vpop.permute.xlu0 %5949
      %5951 = vrot.lane.b32.xlu0 %v5874, 56
      %v5952 = vpop.permute.xlu0 %5951
      %5953 = vrot.lane.b32.xlu0 %v5875, 56
      %v5954 = vpop.permute.xlu0 %5953
      %5955 = vrot.lane.b32.xlu0 %v5876, 56
      %v5956 = vpop.permute.xlu0 %5955
      %5957 = vrot.lane.b32.xlu0 %v5877, 56
      %v5958 = vpop.permute.xlu0 %5957
      %5959 = vrot.lane.b32.xlu0 %v5878, 56
      %v5960 = vpop.permute.xlu0 %5959
      %5961 = vrot.lane.b32.xlu0 %v5879, 56
      %v5962 = vpop.permute.xlu0 %5961
      %5963 = vrot.lane.b32.xlu0 %v5880, 56
      %v5964 = vpop.permute.xlu0 %5963
      %5965 = vrot.lane.b32.xlu0 %v5881, 56
      %v5966 = vpop.permute.xlu0 %5965
      %5967 = vrot.lane.b32.xlu0 %v5882, 56
      %v5968 = vpop.permute.xlu0 %5967
      %5969 = vrot.lane.b32.xlu0 %v5883, 56
      %v5970 = vpop.permute.xlu0 %5969
      %5971 = vrot.lane.b32.xlu0 %v5884, 56
      %v5972 = vpop.permute.xlu0 %5971
      %5973 = vrot.lane.b32.xlu0 %v5885, 56
      %v5974 = vpop.permute.xlu0 %5973
      %5975 = vrot.lane.b32.xlu0 %v5886, 56
      %v5976 = vpop.permute.xlu0 %5975
      %5977 = vrot.lane.b32.xlu0 %v5887, 56
      %v5978 = vpop.permute.xlu0 %5977
      %5979 = vrot.lane.b32.xlu0 %v5888, 56
      %v5980 = vpop.permute.xlu0 %5979
      %5981 = vrot.lane.b32.xlu0 %v5889, 56
      %v5982 = vpop.permute.xlu0 %5981
      %5983 = vrot.lane.b32.xlu0 %v5890, 56
      %v5984 = vpop.permute.xlu0 %5983
      %5985 = vrot.lane.b32.xlu0 %v5891, 56
      %v5986 = vpop.permute.xlu0 %5985
      %5987 = vrot.lane.b32.xlu0 %v5892, 56
      %v5988 = vpop.permute.xlu0 %5987
      %6021 = vst.msk [vmem:[#allocation3] sm:$0xff] %vm1810, %v5926
      %6022 = vst.msk [vmem:[#allocation3 + $0x8] sm:$0xff] %vm1810, %v5928
      %6023 = vst.msk [vmem:[#allocation3 + $0x10] sm:$0xff] %vm1810, %v5930
      %6024 = vst.msk [vmem:[#allocation3 + $0x18] sm:$0xff] %vm1810, %v5932
      %6025 = vst.msk [vmem:[#allocation3 + $0x20] sm:$0xff] %vm1810, %v5934
      %6026 = vst.msk [vmem:[#allocation3 + $0x28] sm:$0xff] %vm1810, %v5936
      %6027 = vst.msk [vmem:[#allocation3 + $0x30] sm:$0xff] %vm1810, %v5938
      %6028 = vst.msk [vmem:[#allocation3 + $0x38] sm:$0xff] %vm1810, %v5940
      %6029 = vst.msk [vmem:[#allocation3 + $0x40] sm:$0xff] %vm1810, %v5942
      %6030 = vst.msk [vmem:[#allocation3 + $0x48] sm:$0xff] %vm1810, %v5944
      %6031 = vst.msk [vmem:[#allocation3 + $0x50] sm:$0xff] %vm1810, %v5946
      %6032 = vst.msk [vmem:[#allocation3 + $0x58] sm:$0xff] %vm1810, %v5948
      %6033 = vst.msk [vmem:[#allocation3 + $0x60] sm:$0xff] %vm1810, %v5950
      %6034 = vst.msk [vmem:[#allocation3 + $0x68] sm:$0xff] %vm1810, %v5952
      %6035 = vst.msk [vmem:[#allocation3 + $0x70] sm:$0xff] %vm1810, %v5954
      %6036 = vst.msk [vmem:[#allocation3 + $0x78] sm:$0xff] %vm1810, %v5956
      %6037 = vst.msk [vmem:[#allocation3 + $0x80] sm:$0xff] %vm1810, %v5958
      %6038 = vst.msk [vmem:[#allocation3 + $0x88] sm:$0xff] %vm1810, %v5960
      %6039 = vst.msk [vmem:[#allocation3 + $0x90] sm:$0xff] %vm1810, %v5962
      %6040 = vst.msk [vmem:[#allocation3 + $0x98] sm:$0xff] %vm1810, %v5964
      %6041 = vst.msk [vmem:[#allocation3 + $0xa0] sm:$0xff] %vm1810, %v5966
      %6042 = vst.msk [vmem:[#allocation3 + $0xa8] sm:$0xff] %vm1810, %v5968
      %6043 = vst.msk [vmem:[#allocation3 + $0xb0] sm:$0xff] %vm1810, %v5970
      %6044 = vst.msk [vmem:[#allocation3 + $0xb8] sm:$0xff] %vm1810, %v5972
      %6045 = vst.msk [vmem:[#allocation3 + $0xc0] sm:$0xff] %vm1810, %v5974
      %6046 = vst.msk [vmem:[#allocation3 + $0xc8] sm:$0xff] %vm1810, %v5976
      %6047 = vst.msk [vmem:[#allocation3 + $0xd0] sm:$0xff] %vm1810, %v5978
      %6048 = vst.msk [vmem:[#allocation3 + $0xd8] sm:$0xff] %vm1810, %v5980
      %6049 = vst.msk [vmem:[#allocation3 + $0xe0] sm:$0xff] %vm1810, %v5982
      %6050 = vst.msk [vmem:[#allocation3 + $0xe8] sm:$0xff] %vm1810, %v5984
      %6051 = vst.msk [vmem:[#allocation3 + $0xf0] sm:$0xff] %vm1810, %v5986
      %6052 = vst.msk [vmem:[#allocation3 + $0xf8] sm:$0xff] %vm1810, %v5988
      %v6053 = vld [vmem:[%s1456 + $0x2] sm:$0xff]
      %v6054 = vld [vmem:[%s1456 + $0xa] sm:$0xff]
      %v6055 = vld [vmem:[%s1456 + $0x1a] sm:$0xff]
      %v6056 = vld [vmem:[%s1456 + $0x22] sm:$0xff]
      %v6057 = vld [vmem:[%s1456 + $0x32] sm:$0xff]
      %v6058 = vld [vmem:[%s1456 + $0x3a] sm:$0xff]
      %v6059 = vld [vmem:[%s1456 + $0x4a] sm:$0xff]
      %v6060 = vld [vmem:[%s1456 + $0x52] sm:$0xff]
      %v6061 = vld [vmem:[%s1456 + $0x62] sm:$0xff]
      %v6062 = vld [vmem:[%s1456 + $0x6a] sm:$0xff]
      %v6063 = vld [vmem:[%s1456 + $0x7a] sm:$0xff]
      %v6064 = vld [vmem:[%s1456 + $0x82] sm:$0xff]
      %v6065 = vld [vmem:[%s1456 + $0x92] sm:$0xff]
      %v6066 = vld [vmem:[%s1456 + $0x9a] sm:$0xff]
      %v6067 = vld [vmem:[%s1456 + $0xaa] sm:$0xff]
      %v6068 = vld [vmem:[%s1456 + $0xb2] sm:$0xff]
      %v6069 = vld [vmem:[%s1456 + $0xc2] sm:$0xff]
      %v6070 = vld [vmem:[%s1456 + $0xca] sm:$0xff]
      %v6071 = vld [vmem:[%s1456 + $0xda] sm:$0xff]
      %v6072 = vld [vmem:[%s1456 + $0xe2] sm:$0xff]
      %v6073 = vld [vmem:[%s1456 + $0xf2] sm:$0xff]
      %v6074 = vld [vmem:[%s1456 + $0xfa] sm:$0xff]
      %v6075 = vld [vmem:[%s1456 + $0x10a] sm:$0xff]
      %v6076 = vld [vmem:[%s1456 + $0x112] sm:$0xff]
      %v6077 = vld [vmem:[%s1456 + $0x122] sm:$0xff]
      %v6078 = vld [vmem:[%s1456 + $0x12a] sm:$0xff]
      %v6079 = vld [vmem:[%s1456 + $0x13a] sm:$0xff]
      %v6080 = vld [vmem:[%s1456 + $0x142] sm:$0xff]
      %v6081 = vld [vmem:[%s1456 + $0x152] sm:$0xff]
      %v6082 = vld [vmem:[%s1456 + $0x15a] sm:$0xff]
      %v6083 = vld [vmem:[%s1456 + $0x16a] sm:$0xff]
      %v6084 = vld [vmem:[%s1456 + $0x172] sm:$0xff]
      %6117 = vrot.lane.b32.xlu0 %v6053, 64
      %v6118 = vpop.permute.xlu0 %6117
      %6119 = vrot.lane.b32.xlu0 %v6054, 64
      %v6120 = vpop.permute.xlu0 %6119
      %6121 = vrot.lane.b32.xlu0 %v6055, 64
      %v6122 = vpop.permute.xlu0 %6121
      %6123 = vrot.lane.b32.xlu0 %v6056, 64
      %v6124 = vpop.permute.xlu0 %6123
      %6125 = vrot.lane.b32.xlu0 %v6057, 64
      %v6126 = vpop.permute.xlu0 %6125
      %6127 = vrot.lane.b32.xlu0 %v6058, 64
      %v6128 = vpop.permute.xlu0 %6127
      %6129 = vrot.lane.b32.xlu0 %v6059, 64
      %v6130 = vpop.permute.xlu0 %6129
      %6131 = vrot.lane.b32.xlu0 %v6060, 64
      %v6132 = vpop.permute.xlu0 %6131
      %6133 = vrot.lane.b32.xlu0 %v6061, 64
      %v6134 = vpop.permute.xlu0 %6133
      %6135 = vrot.lane.b32.xlu0 %v6062, 64
      %v6136 = vpop.permute.xlu0 %6135
      %6137 = vrot.lane.b32.xlu0 %v6063, 64
      %v6138 = vpop.permute.xlu0 %6137
      %6139 = vrot.lane.b32.xlu0 %v6064, 64
      %v6140 = vpop.permute.xlu0 %6139
      %6141 = vrot.lane.b32.xlu0 %v6065, 64
      %v6142 = vpop.permute.xlu0 %6141
      %6143 = vrot.lane.b32.xlu0 %v6066, 64
      %v6144 = vpop.permute.xlu0 %6143
      %6145 = vrot.lane.b32.xlu0 %v6067, 64
      %v6146 = vpop.permute.xlu0 %6145
      %6147 = vrot.lane.b32.xlu0 %v6068, 64
      %v6148 = vpop.permute.xlu0 %6147
      %6149 = vrot.lane.b32.xlu0 %v6069, 64
      %v6150 = vpop.permute.xlu0 %6149
      %6151 = vrot.lane.b32.xlu0 %v6070, 64
      %v6152 = vpop.permute.xlu0 %6151
      %6153 = vrot.lane.b32.xlu0 %v6071, 64
      %v6154 = vpop.permute.xlu0 %6153
      %6155 = vrot.lane.b32.xlu0 %v6072, 64
      %v6156 = vpop.permute.xlu0 %6155
      %6157 = vrot.lane.b32.xlu0 %v6073, 64
      %v6158 = vpop.permute.xlu0 %6157
      %6159 = vrot.lane.b32.xlu0 %v6074, 64
      %v6160 = vpop.permute.xlu0 %6159
      %6161 = vrot.lane.b32.xlu0 %v6075, 64
      %v6162 = vpop.permute.xlu0 %6161
      %6163 = vrot.lane.b32.xlu0 %v6076, 64
      %v6164 = vpop.permute.xlu0 %6163
      %6165 = vrot.lane.b32.xlu0 %v6077, 64
      %v6166 = vpop.permute.xlu0 %6165
      %6167 = vrot.lane.b32.xlu0 %v6078, 64
      %v6168 = vpop.permute.xlu0 %6167
      %6169 = vrot.lane.b32.xlu0 %v6079, 64
      %v6170 = vpop.permute.xlu0 %6169
      %6171 = vrot.lane.b32.xlu0 %v6080, 64
      %v6172 = vpop.permute.xlu0 %6171
      %6173 = vrot.lane.b32.xlu0 %v6081, 64
      %v6174 = vpop.permute.xlu0 %6173
      %6175 = vrot.lane.b32.xlu0 %v6082, 64
      %v6176 = vpop.permute.xlu0 %6175
      %6177 = vrot.lane.b32.xlu0 %v6083, 64
      %v6178 = vpop.permute.xlu0 %6177
      %6179 = vrot.lane.b32.xlu0 %v6084, 64
      %v6180 = vpop.permute.xlu0 %6179
      %6213 = vst.msk [vmem:[#allocation3] sm:$0xff] %vm2003, %v6118
      %6214 = vst.msk [vmem:[#allocation3 + $0x8] sm:$0xff] %vm2003, %v6120
      %6215 = vst.msk [vmem:[#allocation3 + $0x10] sm:$0xff] %vm2003, %v6122
      %6216 = vst.msk [vmem:[#allocation3 + $0x18] sm:$0xff] %vm2003, %v6124
      %6217 = vst.msk [vmem:[#allocation3 + $0x20] sm:$0xff] %vm2003, %v6126
      %6218 = vst.msk [vmem:[#allocation3 + $0x28] sm:$0xff] %vm2003, %v6128
      %6219 = vst.msk [vmem:[#allocation3 + $0x30] sm:$0xff] %vm2003, %v6130
      %6220 = vst.msk [vmem:[#allocation3 + $0x38] sm:$0xff] %vm2003, %v6132
      %6221 = vst.msk [vmem:[#allocation3 + $0x40] sm:$0xff] %vm2003, %v6134
      %6222 = vst.msk [vmem:[#allocation3 + $0x48] sm:$0xff] %vm2003, %v6136
      %6223 = vst.msk [vmem:[#allocation3 + $0x50] sm:$0xff] %vm2003, %v6138
      %6224 = vst.msk [vmem:[#allocation3 + $0x58] sm:$0xff] %vm2003, %v6140
      %6225 = vst.msk [vmem:[#allocation3 + $0x60] sm:$0xff] %vm2003, %v6142
      %6226 = vst.msk [vmem:[#allocation3 + $0x68] sm:$0xff] %vm2003, %v6144
      %6227 = vst.msk [vmem:[#allocation3 + $0x70] sm:$0xff] %vm2003, %v6146
      %6228 = vst.msk [vmem:[#allocation3 + $0x78] sm:$0xff] %vm2003, %v6148
      %6229 = vst.msk [vmem:[#allocation3 + $0x80] sm:$0xff] %vm2003, %v6150
      %6230 = vst.msk [vmem:[#allocation3 + $0x88] sm:$0xff] %vm2003, %v6152
      %6231 = vst.msk [vmem:[#allocation3 + $0x90] sm:$0xff] %vm2003, %v6154
      %6232 = vst.msk [vmem:[#allocation3 + $0x98] sm:$0xff] %vm2003, %v6156
      %6233 = vst.msk [vmem:[#allocation3 + $0xa0] sm:$0xff] %vm2003, %v6158
      %6234 = vst.msk [vmem:[#allocation3 + $0xa8] sm:$0xff] %vm2003, %v6160
      %6235 = vst.msk [vmem:[#allocation3 + $0xb0] sm:$0xff] %vm2003, %v6162
      %6236 = vst.msk [vmem:[#allocation3 + $0xb8] sm:$0xff] %vm2003, %v6164
      %6237 = vst.msk [vmem:[#allocation3 + $0xc0] sm:$0xff] %vm2003, %v6166
      %6238 = vst.msk [vmem:[#allocation3 + $0xc8] sm:$0xff] %vm2003, %v6168
      %6239 = vst.msk [vmem:[#allocation3 + $0xd0] sm:$0xff] %vm2003, %v6170
      %6240 = vst.msk [vmem:[#allocation3 + $0xd8] sm:$0xff] %vm2003, %v6172
      %6241 = vst.msk [vmem:[#allocation3 + $0xe0] sm:$0xff] %vm2003, %v6174
      %6242 = vst.msk [vmem:[#allocation3 + $0xe8] sm:$0xff] %vm2003, %v6176
      %6243 = vst.msk [vmem:[#allocation3 + $0xf0] sm:$0xff] %vm2003, %v6178
      %6244 = vst.msk [vmem:[#allocation3 + $0xf8] sm:$0xff] %vm2003, %v6180
      %v6245 = vld [vmem:[%s7] sm:$0xff]
      %v6246 = vld [vmem:[%s7 + $0x8] sm:$0xff]
      %v6247 = vld [vmem:[#allocation3] sm:$0xff]
      %v6248 = vld [vmem:[#allocation3 + $0x8] sm:$0xff]
      %v6249 = vld [vmem:[#allocation3 + $0x10] sm:$0xff]
      %v6250 = vld [vmem:[#allocation3 + $0x18] sm:$0xff]
      %v6251 = vld [vmem:[#allocation3 + $0x20] sm:$0xff]
      %v6252 = vld [vmem:[#allocation3 + $0x28] sm:$0xff]
      %v6253 = vld [vmem:[#allocation3 + $0x30] sm:$0xff]
      %v6254 = vld [vmem:[#allocation3 + $0x38] sm:$0xff]
      %v6255 = vld [vmem:[#allocation3 + $0x40] sm:$0xff]
      %v6256 = vld [vmem:[#allocation3 + $0x48] sm:$0xff]
      %v6257 = vld [vmem:[#allocation3 + $0x50] sm:$0xff]
      %v6258 = vld [vmem:[#allocation3 + $0x58] sm:$0xff]
      %v6259 = vld [vmem:[#allocation3 + $0x60] sm:$0xff]
      %v6260 = vld [vmem:[#allocation3 + $0x68] sm:$0xff]
      %v6261 = vld [vmem:[#allocation3 + $0x70] sm:$0xff]
      %v6262 = vld [vmem:[#allocation3 + $0x78] sm:$0xff]
      %v6263 = vld [vmem:[#allocation3 + $0x80] sm:$0xff]
      %v6264 = vld [vmem:[#allocation3 + $0x88] sm:$0xff]
      %v6265 = vld [vmem:[#allocation3 + $0x90] sm:$0xff]
      %v6266 = vld [vmem:[#allocation3 + $0x98] sm:$0xff]
      %v6267 = vld [vmem:[#allocation3 + $0xa0] sm:$0xff]
      %v6268 = vld [vmem:[#allocation3 + $0xa8] sm:$0xff]
      %v6269 = vld [vmem:[#allocation3 + $0xb0] sm:$0xff]
      %v6270 = vld [vmem:[#allocation3 + $0xb8] sm:$0xff]
      %v6271 = vld [vmem:[#allocation3 + $0xc0] sm:$0xff]
      %v6272 = vld [vmem:[#allocation3 + $0xc8] sm:$0xff]
      %v6273 = vld [vmem:[#allocation3 + $0xd0] sm:$0xff]
      %v6274 = vld [vmem:[#allocation3 + $0xd8] sm:$0xff]
      %v6275 = vld [vmem:[#allocation3 + $0xe0] sm:$0xff]
      %v6276 = vld [vmem:[#allocation3 + $0xe8] sm:$0xff]
      %v6277 = vld [vmem:[#allocation3 + $0xf0] sm:$0xff]
      %v6278 = vld [vmem:[#allocation3 + $0xf8] sm:$0xff]
      %v6280 = vsel %vm2077, %v6245, 0
      %v6283 = vsel %vm2077, %v6246, 0
      %v6286 = vsel %vm2077, %v6247, 0
      %v6289 = vsel %vm2077, %v6248, 0
      %v6292 = vsel %vm2077, %v6249, 0
      %v6295 = vsel %vm2077, %v6250, 0
      %v6298 = vsel %vm2077, %v6251, 0
      %v6301 = vsel %vm2077, %v6252, 0
      %v6304 = vsel %vm2077, %v6253, 0
      %v6307 = vsel %vm2077, %v6254, 0
      %v6310 = vsel %vm2077, %v6255, 0
      %v6313 = vsel %vm2077, %v6256, 0
      %v6316 = vsel %vm2077, %v6257, 0
      %v6319 = vsel %vm2077, %v6258, 0
      %v6322 = vsel %vm2077, %v6259, 0
      %v6325 = vsel %vm2077, %v6260, 0
      %v6328 = vsel %vm2077, %v6261, 0
      %v6331 = vsel %vm2077, %v6262, 0
      %v6334 = vsel %vm2077, %v6263, 0
      %v6337 = vsel %vm2077, %v6264, 0
      %v6340 = vsel %vm2077, %v6265, 0
      %v6343 = vsel %vm2077, %v6266, 0
      %v6346 = vsel %vm2077, %v6267, 0
      %v6349 = vsel %vm2077, %v6268, 0
      %v6352 = vsel %vm2077, %v6269, 0
      %v6355 = vsel %vm2077, %v6270, 0
      %v6358 = vsel %vm2077, %v6271, 0
      %v6361 = vsel %vm2077, %v6272, 0
      %v6364 = vsel %vm2077, %v6273, 0
      %v6367 = vsel %vm2077, %v6274, 0
      %v6370 = vsel %vm2077, %v6275, 0
      %v6373 = vsel %vm2077, %v6276, 0
      %v6376 = vsel %vm2077, %v6277, 0
      %v6379 = vsel %vm2077, %v6278, 0
      %6381 = vmatprep.subr.mxu0 0.0
      %6382 = vmatpush1.xpose.msra.mxu0 %v6286
      %6383 = vmatprep.subr.mxu0 0.0
      %6384 = vmatpush1.xpose.msra.mxu0 %v6289
      %6385 = vmatprep.subr.mxu0 0.0
      %6386 = vmatpush1.xpose.msra.mxu0 %v6292
      %6387 = vmatprep.subr.mxu0 0.0
      %6388 = vmatpush1.xpose.msra.mxu0 %v6295
      %6389 = vmatprep.subr.mxu0 0.0
      %6390 = vmatpush1.xpose.msra.mxu0 %v6298
      %6391 = vmatprep.subr.mxu0 0.0
      %6392 = vmatpush1.xpose.msra.mxu0 %v6301
      %6393 = vmatprep.subr.mxu0 0.0
      %6394 = vmatpush1.xpose.msra.mxu0 %v6304
      %6395 = vmatprep.subr.mxu0 0.0
      %6396 = vmatpush1.xpose.msra.mxu0 %v6307
      %6397 = vmatprep.subr.mxu0 0.0
      %6398 = vmatpush1.xpose.msra.mxu0 %v6310
      %6399 = vmatprep.subr.mxu0 0.0
      %6400 = vmatpush1.xpose.msra.mxu0 %v6313
      %6401 = vmatprep.subr.mxu0 0.0
      %6402 = vmatpush1.xpose.msra.mxu0 %v6316
      %6403 = vmatprep.subr.mxu0 0.0
      %6404 = vmatpush1.xpose.msra.mxu0 %v6319
      %6405 = vmatprep.subr.mxu0 0.0
      %6406 = vmatpush1.xpose.msra.mxu0 %v6322
      %6407 = vmatprep.subr.mxu0 0.0
      %6408 = vmatpush1.xpose.msra.mxu0 %v6325
      %6409 = vmatprep.subr.mxu0 0.0
      %6410 = vmatpush1.xpose.msra.mxu0 %v6328
      %6411 = vmatprep.subr.mxu0 0.0
      %6412 = vmatpush1.xpose.msra.mxu0 %v6331
      %6413 = vmatprep.subr.mxu0 0.0
      %6414 = vmatpush1.xpose.msra.mxu0 %v6334
      %6415 = vmatprep.subr.mxu0 0.0
      %6416 = vmatpush1.xpose.msra.mxu0 %v6337
      %6417 = vmatprep.subr.mxu0 0.0
      %6418 = vmatpush1.xpose.msra.mxu0 %v6340
      %6419 = vmatprep.subr.mxu0 0.0
      %6420 = vmatpush1.xpose.msra.mxu0 %v6343
      %6421 = vmatprep.subr.mxu0 0.0
      %6422 = vmatpush1.xpose.msra.mxu0 %v6346
      %6423 = vmatprep.subr.mxu0 0.0
      %6424 = vmatpush1.xpose.msra.mxu0 %v6349
      %6425 = vmatprep.subr.mxu0 0.0
      %6426 = vmatpush1.xpose.msra.mxu0 %v6352
      %6427 = vmatprep.subr.mxu0 0.0
      %6428 = vmatpush1.xpose.msra.mxu0 %v6355
      %6429 = vmatprep.subr.mxu0 0.0
      %6430 = vmatpush1.xpose.msra.mxu0 %v6358
      %6431 = vmatprep.subr.mxu0 0.0
      %6432 = vmatpush1.xpose.msra.mxu0 %v6361
      %6433 = vmatprep.subr.mxu0 0.0
      %6434 = vmatpush1.xpose.msra.mxu0 %v6364
      %6435 = vmatprep.subr.mxu0 0.0
      %6436 = vmatpush1.xpose.msra.mxu0 %v6367
      %6437 = vmatprep.subr.mxu0 0.0
      %6438 = vmatpush1.xpose.msra.mxu0 %v6370
      %6439 = vmatprep.subr.mxu0 0.0
      %6440 = vmatpush1.xpose.msra.mxu0 %v6373
      %6441 = vmatprep.subr.mxu0 0.0
      %6442 = vmatpush1.xpose.msra.mxu0 %v6376
      %6443 = vmatprep.subr.mxu0 0.0
      %6444 = vmatpush1.xpose.msra.mxu0 %v6379
      %6445 = vmatprep.mubr.f32.mxu0 0.0
      %6446 = vmatmul.mubr.f32.gmra.mrb[0].mxu0 %v6280
      %v6447 = vpop.f32.mrb[0].mxu0
      %v6448 = vadd.f32 0.0, %v6447
      %v6449 = vpop.f32.mrb[0].mxu0
      %v6450 = vadd.f32 0.0, %v6449
      %6451 = vmatprep.mubr.f32.mxu0 0.0
      %6452 = vmatmul.mubr.f32.gmra.mrb[0].mxu0 %v6283
      %v6453 = vpop.f32.mrb[0].mxu0
      %v6454 = vadd.f32 0.0, %v6453
      %v6455 = vpop.f32.mrb[0].mxu0
      %v6456 = vadd.f32 0.0, %v6455
      %6457 = vdwg.mxu0
      %6458 = vst [vmem:[%s305] sm:$0xff] %v6448
      %6459 = vst [vmem:[%s305 + $0x8] sm:$0xff] %v6450
      %6460 = vst [vmem:[%s305 + $0x10] sm:$0xff] %v6454
      %6461 = vst [vmem:[%s305 + $0x18] sm:$0xff] %v6456
      %p6462 = scmp.lt.s32.totalorder %s19, 1
      %s6463 = scalar_select %p6462, %s19, 1
      %s6464 = smul.addr %s6463, 4
      %s6465 = smul.addr %s6464, 8
      %s6466 = scalar_lea.vmem %s8, %s6465
      // Predicated region
      $region53: #{up_block_forward.1} parent=51 // pred_check
        %p6467 = pneg %p210
      $region54: #{up_block_forward.1} parent=51 // pred_check_branch
        %6469 = sbr.rel (%p6467) target = $region56
      $region55: #{up_block_forward.1} parent=51 // pred_region
        _
      $region56: #{up_block_forward.1} parent=51 // pred_fallthru
        _
    $region52: #{up_block_forward.1} parent=5 // pred_fallthru
      _
    %p6470 = scmp.le.s32.totalorder 2, %s14
    // Predicated region
    $region57: #{up_block_forward.1} parent=5 // pred_check
      %p6471 = pneg %p6470
    $region58: #{up_block_forward.1} parent=5 // pred_check_branch
      %6473 = sbr.rel (%p6471) target = $region60
    $region59: #{up_block_forward.1} parent=5 // pred_region
      %s6474 = ssub.s32 %s14, 2
      // Predicated region
      $region61: #{up_block_forward.1} parent=59 // pred_check
        %p6475 = pneg %p216
      $region62: #{up_block_forward.1} parent=59 // pred_check_branch
        %6477 = sbr.rel (%p6475) target = $region64
      $region63: #{up_block_forward.1} parent=59 // pred_region
        %p6478 = scmp.lt.s32.totalorder %s20, 1
        %s6479 = scalar_select %p6478, %s20, 1
        %s6480 = smul.addr %s6479, 4
        %s6481 = smul.addr %s6480, 8
        %s6482 = scalar_lea.vmem %s8, %s6481
      $region64: #{up_block_forward.1} parent=59 // pred_fallthru
        _
    $region60: #{up_block_forward.1} parent=5 // pred_fallthru
      _
  $region6: #{up_block_forward.1} parent=0 // loop_footer
    %s18 = sadd.s32 1, %s14
  $region7: #{up_block_forward.1} parent=0 // loop_footer_branch
    %13 = sbr.rel target = $region3
  $region8: #{up_block_forward.1} parent=0 // loop_exit
    _

</llo_original>
